<compile_context>
chip_gen: v7x
topology: tpu7x:2x2x1
jax: 0.10.0
libtpu: 0.0.40
codegen_flags: <defaults>
</compile_context>

<pallas_src>
import functools
import numpy as np

import jax
import jax.numpy as jnp
from jax.experimental import pallas as pl
from jax.experimental.pallas import tpu as pltpu


def _round_up(x, m):
    return ((x + m - 1) // m) * m


# -----------------------------------------------------------------------------
# Pallas kernel 1: fused VQ nearest-neighbour search + embedding lookup
# -----------------------------------------------------------------------------
def _vq_quantize_kernel(x_ref, e_ref, esq_ref, q_ref):
    # x_ref:   (TILE_N, C)  flattened feature rows for this grid step
    # e_ref:   (Vp, C)      codebook, vocab padded to a multiple of 128
    # esq_ref: (1, Vp)      per-code |e|^2 (padded rows = +huge -> never chosen)
    # q_ref:   (TILE_N, C)  quantized rows (embedding lookup fused in-kernel)
    x = x_ref[...]
    e = e_ref[...]
    # -2 * x @ e^T on the MXU (contract last dims of both).  Kept in f32: bf16
    # would cut MXU passes but can flip near-tie argmins vs the torch reference,
    # and v5e has no bf16 VPU path for the surrounding elementwise math.
    xe = jax.lax.dot_general(
        x, e, (((1,), (1,)), ((), ())), preferred_element_type=jnp.float32
    )                                                               # (TN, Vp)
    # |x|^2 dropped: constant per row, cannot change the argmin.
    dist = esq_ref[...] - 2.0 * xe                                  # (TN, Vp)
    min_val = jnp.min(dist, axis=1, keepdims=True)                  # (TN, 1)
    vp = dist.shape[1]
    lane_iota = jax.lax.broadcasted_iota(jnp.int32, dist.shape, 1)
    # First-minimum tie-break (matches torch.argmin).
    cand = jnp.where(dist <= min_val, lane_iota, jnp.int32(vp))
    argmin = jnp.min(cand, axis=1, keepdims=True)                   # (TN, 1)
    onehot = (lane_iota == argmin).astype(jnp.float32)              # (TN, Vp)
    # Exact embedding gather as a one-hot matmul on the MXU (codebook resident
    # in VMEM) -> (TN, C) output, no XLA gather round trip.
    q_ref[...] = jnp.dot(onehot, e, preferred_element_type=jnp.float32)


def vq_quantize(x_flat, e_pad, esq_pad):
    """x_flat: (N, C) f32; e_pad: (Vp, C); esq_pad: (1, Vp) -> (N, C) quantized."""
    n, c = x_flat.shape
    vp = e_pad.shape[0]
    # Row tile: big enough to amortize the ~0.35us per-grid-step overhead, small
    # enough to keep >= 4 grid steps (pipeline depth, and both TensorCores on
    # v7x via the "parallel" axis).  For production N, raise toward 1024+.
    tile = max(8, min(512, (n // 4) // 8 * 8))
    n_pad = _round_up(n, tile)
    if n_pad != n:
        # Pad rows instead of the old whole-array single-block fallback (which
        # could exceed VMEM at production N).  Padded rows are sliced off below.
        x_flat = jnp.concatenate(
            [x_flat, jnp.zeros((n_pad - n, c), jnp.float32)], axis=0)
    grid = (n_pad // tile,)
    out = pl.pallas_call(
        _vq_quantize_kernel,
        grid=grid,
        in_specs=[
            pl.BlockSpec((tile, c), lambda i: (i, 0)),   # rows: pipelined over grid
            pl.BlockSpec((vp, c), lambda i: (0, 0)),     # codebook resident
            pl.BlockSpec((1, vp), lambda i: (0, 0)),     # |e|^2 resident
        ],
        out_specs=pl.BlockSpec((tile, c), lambda i: (i, 0)),
        out_shape=jax.ShapeDtypeStruct((n_pad, c), jnp.float32),
        compiler_params=pltpu.CompilerParams(dimension_semantics=("parallel",)),
    )(x_flat, e_pad, esq_pad)
    # TODO(synk): for production vocab sizes (V >= 4096) add a trailing
    # "arbitrary" vocab-chunk grid axis with a running (min, argmin) in scratch
    # so the (tile, Vp) intermediates stay bounded on v7x's 64 MiB VMEM.
    # TODO(synk): lane-dense (N/4, 128) output view once the (tile,32)->(tile/4,128)
    # in-kernel relayout is confirmed supported by the local Mosaic build.
    return out[:n] if n_pad != n else out


# -----------------------------------------------------------------------------
# Pallas kernel 2: fused Phi refinement + recon/residual update
#   phi_out = (1 - r) * emb + r * (Conv3x3(emb) + bias)
#   recon  += phi_out ;  residual -= phi_out      (in place via aliasing)
# -----------------------------------------------------------------------------
def _make_phi_fused_kernel(H, W, C, ratio, apply_conv):
    one_minus = 1.0 - ratio
    HW = H * W

    def kernel(emb_ref, res_ref, rec_ref, w_ref, b_ref,
               rec_out_ref, res_out_ref, xpad_s):
        # emb_ref/res_ref/rec_ref: (1, H, W, C) one batch element each
        # w_ref: (3, 3, Cin, Cout), b_ref: (1, Cout)
        # xpad_s: VMEM (1, H+2, W+2, C) zero-padded staging for the conv taps
        x4 = emb_ref[...]                              # (1, H, W, C)
        x2 = x4.reshape(HW, C)
        if apply_conv:
            # In-VMEM zero pad (replaces the old HBM-level jnp.pad copy, saving
            # a full padded-tensor HBM write + read per scale).
            xpad_s[...] = jnp.zeros((1, H + 2, W + 2, C), jnp.float32)
            xpad_s[:, 1:H + 1, 1:W + 1, :] = x4
            w = w_ref[...]                             # (3, 3, C, C)
            # 3x3 same-conv as 9 shifted matmuls accumulated in a LOCAL value
            # (register / MXU accumulation) -- no per-tap VMEM round trip.
            # Taps are read via static Ref slices of the scratch (free views).
            # TODO(synk): fold dx taps into a K=3C matmul once unaligned
            # lane-dim concatenation is confirmed supported by Mosaic.
            acc = jnp.zeros((HW, C), jnp.float32)
            for dy in range(3):
                for dx in range(3):
                    patch = xpad_s[:, dy:dy + H, dx:dx + W, :].reshape(HW, C)
                    acc = acc + jnp.dot(
                        patch, w[dy, dx], preferred_element_type=jnp.float32)
            conv = acc + b_ref[...]                    # (HW, C)
            phi_out = x2 * one_minus + conv * ratio
        else:
            phi_out = x2                               # nn.Identity branch
        # Fused per-scale glue: saves ~4 separate full-tensor XLA passes/scale.
        rec_new = rec_ref[...].reshape(HW, C) + phi_out
        res_new = res_ref[...].reshape(HW, C) - phi_out
        rec_out_ref[...] = rec_new.reshape(1, H, W, C)
        res_out_ref[...] = res_new.reshape(1, H, W, C)

    return kernel


def phi_fused_apply(emb_nhwc, residual, recon, weight, bias, ratio):
    """emb/residual/recon: (B,H,W,C); weight: (3,3,Cin,Cout); bias: (Cout,).

    Returns (recon + phi(emb), residual - phi(emb)); recon/residual buffers are
    reused in place via input_output_aliases.
    """
    B, H, W, C = emb_nhwc.shape
    r = max(0.0, min(1.0, abs(float(ratio))))
    apply_conv = abs(float(ratio)) > 1e-6
    kernel = _make_phi_fused_kernel(H, W, C, r, apply_conv)
    # TODO(synk): for production spatial sizes on v7x (64 MiB VMEM), tile over
    # H slabs with a 1-row halo (manual DMA / pl.Element) instead of whole
    # (H, W, C) planes, and set vmem_limit_bytes explicitly.
    # TODO(synk): lane-dense (1, H, W*C) output view + SMEM per-scale squared
    # error output once validated on the local Mosaic build.
    rec_out, res_out = pl.pallas_call(
        kernel,
        grid=(B,),
        in_specs=[
            pl.BlockSpec((1, H, W, C), lambda b: (b, 0, 0, 0)),   # emb (upsampled)
            pl.BlockSpec((1, H, W, C), lambda b: (b, 0, 0, 0)),   # residual in
            pl.BlockSpec((1, H, W, C), lambda b: (b, 0, 0, 0)),   # recon in
            pl.BlockSpec((3, 3, C, C), lambda b: (0, 0, 0, 0)),   # weight resident
            pl.BlockSpec((1, C), lambda b: (0, 0)),               # bias resident
        ],
        out_specs=(
            pl.BlockSpec((1, H, W, C), lambda b: (b, 0, 0, 0)),   # recon out
            pl.BlockSpec((1, H, W, C), lambda b: (b, 0, 0, 0)),   # residual out
        ),
        out_shape=(
            jax.ShapeDtypeStruct((B, H, W, C), jnp.float32),
            jax.ShapeDtypeStruct((B, H, W, C), jnp.float32),
        ),
        scratch_shapes=[pltpu.VMEM((1, H + 2, W + 2, C), jnp.float32)],
        input_output_aliases={1: 1, 2: 0},   # residual->res_out, recon->rec_out
        compiler_params=pltpu.CompilerParams(dimension_semantics=("parallel",)),
    )(emb_nhwc, residual, recon, weight, bias.reshape(1, C))
    return rec_out, res_out


# -----------------------------------------------------------------------------
# Glue: area downsample in NHWC (exact block mean, matches F.interpolate 'area')
# -----------------------------------------------------------------------------
def area_downsample_nhwc(x, r):
    B, H, W, C = x.shape
    assert H % r == 0 and W % r == 0
    return x.reshape(B, r, H // r, r, W // r, C).mean(axis=(2, 4))


# -----------------------------------------------------------------------------
# Glue: bicubic upsample matrices matching PyTorch (A=-0.75, align_corners=False)
# -----------------------------------------------------------------------------
def _cubic_w(d, A=-0.75):
    d = abs(d)
    if d <= 1.0:
        return (A + 2.0) * d**3 - (A + 3.0) * d**2 + 1.0
    elif d < 2.0:
        return A * d**3 - 5.0 * A * d**2 + 8.0 * A * d - 4.0 * A
    return 0.0


def bicubic_matrix(out_size, in_size):
    M = np.zeros((out_size, in_size), dtype=np.float32)
    scale = in_size / out_size
    for o in range(out_size):
        src = (o + 0.5) * scale - 0.5
        fl = int(np.floor(src))
        t = src - fl
        for k in range(-1, 3):
            w = _cubic_w(t - k)
            idx = min(max(fl + k, 0), in_size - 1)  # edge clamp, same as torch
            M[o, idx] += w
    return jnp.asarray(M)


def bicubic_upsample_nhwc(x, H, W):
    _, h, w, _ = x.shape
    Mh = bicubic_matrix(H, h)
    Mw = bicubic_matrix(W, w)
    return jnp.einsum("oh,bhwc,pw->bopc", Mh, x, Mw)


# -----------------------------------------------------------------------------
# MultiScaleVectorQuantizer forward
# -----------------------------------------------------------------------------
def init_params(key, num_codes, dim, num_scales, init_std=0.02):
    kE, kW, kB = jax.random.split(key, 3)
    embedding = init_std * jax.random.normal(kE, (num_codes, dim), jnp.float32)
    phi_w = 0.05 * jax.random.normal(kW, (num_scales, 3, 3, dim, dim), jnp.float32)
    phi_b = 0.01 * jax.random.normal(kB, (num_scales, dim), jnp.float32)
    return {"embedding": embedding, "phi_w": phi_w, "phi_b": phi_b}


def phi_index_for_scale(scale_idx, scales_count, num_phis):
    # Mirrors PhiNonShared.get_phi tick selection.
    ratio = scale_idx / (scales_count - 1) if scales_count - 1 > 0 else 1.0
    ratio = max(0.0, min(1.0, ratio))
    ticks = np.linspace(1 / (2 * num_phis), 1 - 1 / (2 * num_phis), num_phis)
    return int(np.argmin(np.abs(ticks - ratio)))


@functools.partial(
    jax.jit, static_argnames=("resolutions", "commitment", "quant_residual_ratio")
)
def msvq_forward(in_features, params, *, resolutions, commitment, quant_residual_ratio):
    """in_features: (B, C, H, W) float32 (NCHW, as in PyTorch)."""
    f_nchw = in_features.astype(jnp.float32)
    B, C, H, W = f_nchw.shape
    scales_count = len(resolutions)
    assert resolutions[-1] == H and resolutions[-1] == W

    # NHWC end-to-end inside the forward; transpose only at the boundaries.
    f = jnp.transpose(f_nchw, (0, 2, 3, 1))                          # (B,H,W,C)

    # Codebook prep (once per forward): pad vocab to a multiple of 128 lanes;
    # padded rows get a huge squared norm so they are never selected.
    emb = params["embedding"].astype(jnp.float32)
    V = emb.shape[0]
    Vp = max(128, _round_up(V, 128))
    e_pad = jnp.zeros((Vp, C), jnp.float32).at[:V].set(emb)
    esq = jnp.sum(emb * emb, axis=1)
    esq_pad = jnp.full((1, Vp), 1e30, jnp.float32).at[0, :V].set(esq)

    residual = f
    recon = jnp.zeros_like(f)
    total_loss = jnp.float32(0.0)

    for scale_idx, r in enumerate(resolutions):
        if scale_idx != scales_count - 1:
            curr = area_downsample_nhwc(residual, r)                 # (B,r,r,C)
        else:
            curr = residual
        flat = curr.reshape(-1, C)                                   # (B*r*r, C)

        # --- Pallas: fused nearest-code search + embedding lookup ---
        q = vq_quantize(flat, e_pad, esq_pad)                        # (B*r*r, C)
        emb_nhwc = q.reshape(B, r, r, C)

        if scale_idx != scales_count - 1:
            emb_nhwc = bicubic_upsample_nhwc(emb_nhwc, H, W)         # (B,H,W,C)

        # --- Pallas: fused Phi refinement + recon/residual update (in place) ---
        p = phi_index_for_scale(scale_idx, scales_count, scales_count)
        recon, residual = phi_fused_apply(
            emb_nhwc, residual, recon,
            params["phi_w"][p], params["phi_b"][p], quant_residual_ratio)

        # mse(recon, f) + commitment * mse(recon, f): forward-identical.
        # residual tracks f - recon, so mean(residual^2) == mse(recon, f)
        # (up to fp accumulation order); the next scale reads residual anyway
        # so XLA can fuse this reduction into that read.
        scale_loss = jnp.mean(jnp.square(residual)) * (1.0 + commitment)
        total_loss = total_loss + scale_loss

    total_loss = total_loss / float(scales_count)
    final_recon = jnp.transpose(recon, (0, 3, 1, 2))                 # back to NCHW
    # recon.data - f.detach() + f == recon numerically (straight-through trick).
    # TODO(synk): EMA vocab-hit tracking (stateful buffer) omitted; it does not
    # affect returned tensors when return_usage_stats=False.
    usage_percentages = None
    return final_recon, usage_percentages, total_loss


# -----------------------------------------------------------------------------
if __name__ == "__main__":
    # Module hyper-parameters (small, consistent with the PyTorch module)
    NUM_CODES = 64
    DIM = 32
    RESOLUTIONS = (4, 8, 16)
    COMMITMENT = 0.25
    QUANT_RESIDUAL_RATIO = 0.5

    B, C, H, W = 2, DIM, RESOLUTIONS[-1], RESOLUTIONS[-1]

    key = jax.random.PRNGKey(0)
    k_x, k_p = jax.random.split(key)
    x = jax.random.normal(k_x, (B, C, H, W), jnp.float32)
    params = init_params(k_p, NUM_CODES, DIM, len(RESOLUTIONS))

    recon, usage, loss = msvq_forward(
        x,
        params,
        resolutions=RESOLUTIONS,
        commitment=COMMITMENT,
        quant_residual_ratio=QUANT_RESIDUAL_RATIO,
    )
    recon = jax.block_until_ready(recon)
    loss = jax.block_until_ready(loss)

    assert recon.shape == (B, C, H, W)
    assert recon.dtype == jnp.float32
    assert bool(jnp.isfinite(loss))
    assert bool(jnp.all(jnp.isfinite(recon)))
    print("KERNEL_OK")
</pallas_src>

<mosaic_0001>
module attributes {stable_mosaic.version = 11 : i64} {
  func.func @_vq_quantize_kernel(%arg0: i32, %arg1: memref<8x32xf32, #tpu.memory_space<vmem>>, %arg2: memref<128x32xf32, #tpu.memory_space<vmem>>, %arg3: memref<1x128xf32, #tpu.memory_space<vmem>>, %arg4: memref<8x32xf32, #tpu.memory_space<vmem>>) attributes {dimension_semantics = [#tpu.dimension_semantics<parallel>], iteration_bounds = array<i64: 4>, scalar_prefetch = 0 : i64, scratch_operands = 0 : i64, tpu.core_type = #tpu.core_type<tc>, window_params = [{transform_indices = @transform_0, window_bounds = array<i64: 8, 32>}, {pipeline_mode = #tpu.pipeline_mode<synchronous>, transform_indices = @transform_1, window_bounds = array<i64: 128, 32>}, {pipeline_mode = #tpu.pipeline_mode<synchronous>, transform_indices = @transform_2, window_bounds = array<i64: 1, 128>}, {transform_indices = @transform_3, window_bounds = array<i64: 8, 32>}]} {
    %c0 = arith.constant 0 : index
    %c0_0 = arith.constant 0 : index
    %0 = vector.load %arg1[%c0, %c0_0] : memref<8x32xf32, #tpu.memory_space<vmem>>, vector<8x32xf32>
    %c0_1 = arith.constant 0 : index
    %c0_2 = arith.constant 0 : index
    %1 = vector.load %arg2[%c0_1, %c0_2] : memref<128x32xf32, #tpu.memory_space<vmem>>, vector<128x32xf32>
    %cst = arith.constant dense<0.000000e+00> : vector<8x128xf32>
    %2 = tpu.matmul %0, %1, %cst {dimension_numbers = #tpu.dot_dimension_numbers<[1], [1], [0], [0], [0, 0, 1, 0], [], []>} : vector<8x32xf32>, vector<128x32xf32>, vector<8x128xf32> -> vector<8x128xf32>
    %c0_3 = arith.constant 0 : index
    %c0_4 = arith.constant 0 : index
    %3 = vector.load %arg3[%c0_3, %c0_4] : memref<1x128xf32, #tpu.memory_space<vmem>>, vector<1x128xf32>
    %cst_5 = arith.constant 2.000000e+00 : f32
    %4 = vector.broadcast %cst_5 : f32 to vector<8x128xf32>
    %5 = arith.mulf %4, %2 : vector<8x128xf32>
    %6 = vector.broadcast %3 : vector<1x128xf32> to vector<8x128xf32>
    %7 = arith.subf %6, %5 : vector<8x128xf32>
    %cst_6 = arith.constant dense<0x7F800000> : vector<8xf32>
    %8 = vector.multi_reduction <minimumf>, %7, %cst_6 [1] : vector<8x128xf32> to vector<8xf32>
    %9 = vector.shape_cast %8 : vector<8xf32> to vector<8x1xf32>
    %10 = tpu.iota {dimensions = array<i32: 1>} : vector<8x128xi32>
    %11 = vector.broadcast %9 : vector<8x1xf32> to vector<8x128xf32>
    %12 = arith.cmpf ole, %7, %11 : vector<8x128xf32>
    %c128_i32 = arith.constant 128 : i32
    %13 = vector.broadcast %c128_i32 : i32 to vector<8x128xi32>
    %14 = arith.select %12, %10, %13 : vector<8x128xi1>, vector<8x128xi32>
    %cst_7 = arith.constant dense<2147483647> : vector<8xi32>
    %15 = vector.multi_reduction <minsi>, %14, %cst_7 [1] : vector<8x128xi32> to vector<8xi32>
    %16 = vector.shape_cast %15 : vector<8xi32> to vector<8x1xi32>
    %17 = vector.broadcast %16 : vector<8x1xi32> to vector<8x128xi32>
    %18 = arith.cmpi eq, %10, %17 : vector<8x128xi32>
    %19 = arith.extui %18 : vector<8x128xi1> to vector<8x128xi32>
    %20 = arith.sitofp %19 : vector<8x128xi32> to vector<8x128xf32>
    %cst_8 = arith.constant dense<0.000000e+00> : vector<8x32xf32>
    %21 = tpu.matmul %20, %1, %cst_8 {dimension_numbers = #tpu.dot_dimension_numbers<[1], [0], [0], [1], [0, 0, 1, 1], [], []>} : vector<8x128xf32>, vector<128x32xf32>, vector<8x32xf32> -> vector<8x32xf32>
    %c0_9 = arith.constant 0 : index
    %c0_10 = arith.constant 0 : index
    %22 = vector.load %arg4[%c0_9, %c0_10] : memref<8x32xf32, #tpu.memory_space<vmem>>, vector<8x32xf32>
    tpu.vector_store %arg4[%c0_9, %c0_10], %21 {strides = array<i32>} : memref<8x32xf32, #tpu.memory_space<vmem>>, vector<8x32xf32>,
    return
  }
  func.func @transform_0(%arg0: i32) -> (i32, i32) {
    %c0_i32 = arith.constant 0 : i32
    %c0_i32_0 = arith.constant 0 : i32
    return %arg0, %c0_i32 : i32, i32
  }
  func.func @transform_1(%arg0: i32) -> (i32, i32) {
    %c0_i32 = arith.constant 0 : i32
    %c0_i32_0 = arith.constant 0 : i32
    %c0_i32_1 = arith.constant 0 : i32
    return %c0_i32, %c0_i32_0 : i32, i32
  }
  func.func @transform_2(%arg0: i32) -> (i32, i32) {
    %c0_i32 = arith.constant 0 : i32
    %c0_i32_0 = arith.constant 0 : i32
    %c0_i32_1 = arith.constant 0 : i32
    return %c0_i32, %c0_i32_0 : i32, i32
  }
  func.func @transform_3(%arg0: i32) -> (i32, i32) {
    %c0_i32 = arith.constant 0 : i32
    %c0_i32_0 = arith.constant 0 : i32
    return %arg0, %c0_i32 : i32, i32
  }
}

module attributes {stable_mosaic.version = 11 : i64} {
  func.func @kernel(%arg0: i32, %arg1: memref<1x16x16x32xf32, #tpu.memory_space<vmem>>, %arg2: memref<1x16x16x32xf32, #tpu.memory_space<vmem>>, %arg3: memref<1x16x16x32xf32, #tpu.memory_space<vmem>>, %arg4: memref<3x3x32x32xf32, #tpu.memory_space<vmem>>, %arg5: memref<1x32xf32, #tpu.memory_space<vmem>>, %arg6: memref<1x16x16x32xf32, #tpu.memory_space<vmem>>, %arg7: memref<1x16x16x32xf32, #tpu.memory_space<vmem>>, %arg8: memref<1x18x18x32xf32, #tpu.memory_space<vmem>>) attributes {dimension_semantics = [#tpu.dimension_semantics<parallel>], iteration_bounds = array<i64: 2>, scalar_prefetch = 0 : i64, scratch_operands = 1 : i64, tpu.core_type = #tpu.core_type<tc>, window_params = [{transform_indices = @transform_0, window_bounds = array<i64: 1, 16, 16, 32>}, {transform_indices = @transform_1, window_bounds = array<i64: 1, 16, 16, 32>}, {transform_indices = @transform_2, window_bounds = array<i64: 1, 16, 16, 32>}, {pipeline_mode = #tpu.pipeline_mode<synchronous>, transform_indices = @transform_3, window_bounds = array<i64: 3, 3, 32, 32>}, {pipeline_mode = #tpu.pipeline_mode<synchronous>, transform_indices = @transform_4, window_bounds = array<i64: 1, 32>}, {transform_indices = @transform_5, window_bounds = array<i64: 1, 16, 16, 32>}, {transform_indices = @transform_6, window_bounds = array<i64: 1, 16, 16, 32>}]} {
    %c0 = arith.constant 0 : index
    %c0_0 = arith.constant 0 : index
    %c0_1 = arith.constant 0 : index
    %c0_2 = arith.constant 0 : index
    %0 = vector.load %arg1[%c0, %c0_0, %c0_1, %c0_2] : memref<1x16x16x32xf32, #tpu.memory_space<vmem>>, vector<1x16x16x32xf32>
    %1 = vector.shape_cast %0 : vector<1x16x16x32xf32> to vector<256x32xf32>
    %cst = arith.constant 0.000000e+00 : f32
    %2 = vector.broadcast %cst : f32 to vector<1x18x18x32xf32>
    %c0_3 = arith.constant 0 : index
    %c0_4 = arith.constant 0 : index
    %c0_5 = arith.constant 0 : index
    %c0_6 = arith.constant 0 : index
    %3 = vector.load %arg8[%c0_3, %c0_4, %c0_5, %c0_6] : memref<1x18x18x32xf32, #tpu.memory_space<vmem>>, vector<1x18x18x32xf32>
    tpu.vector_store %arg8[%c0_3, %c0_4, %c0_5, %c0_6], %2 {strides = array<i32>} : memref<1x18x18x32xf32, #tpu.memory_space<vmem>>, vector<1x18x18x32xf32>,
    %c0_7 = arith.constant 0 : index
    %c1 = arith.constant 1 : index
    %c1_8 = arith.constant 1 : index
    %c0_9 = arith.constant 0 : index
    %4 = vector.load %arg8[%c0_7, %c1, %c1_8, %c0_9] : memref<1x18x18x32xf32, #tpu.memory_space<vmem>>, vector<1x16x16x32xf32>
    tpu.vector_store %arg8[%c0_7, %c1, %c1_8, %c0_9], %0 {strides = array<i32>} : memref<1x18x18x32xf32, #tpu.memory_space<vmem>>, vector<1x16x16x32xf32>,
    %c0_10 = arith.constant 0 : index
    %c0_11 = arith.constant 0 : index
    %c0_12 = arith.constant 0 : index
    %c0_13 = arith.constant 0 : index
    %5 = vector.load %arg4[%c0_10, %c0_11, %c0_12, %c0_13] : memref<3x3x32x32xf32, #tpu.memory_space<vmem>>, vector<3x3x32x32xf32>
    %cst_14 = arith.constant 0.000000e+00 : f32
    %6 = vector.broadcast %cst_14 : f32 to vector<256x32xf32>
    %c0_15 = arith.constant 0 : index
    %c0_16 = arith.constant 0 : index
    %c0_17 = arith.constant 0 : index
    %c0_18 = arith.constant 0 : index
    %7 = vector.load %arg8[%c0_15, %c0_16, %c0_17, %c0_18] : memref<1x18x18x32xf32, #tpu.memory_space<vmem>>, vector<1x16x16x32xf32>
    %8 = vector.shape_cast %7 : vector<1x16x16x32xf32> to vector<256x32xf32>
    %9 = vector.extract_strided_slice %5 {offsets = [0, 0, 0, 0], sizes = [1, 1, 32, 32], strides = [1, 1, 1, 1]} : vector<3x3x32x32xf32> to vector<1x1x32x32xf32>
    %10 = vector.shape_cast %9 : vector<1x1x32x32xf32> to vector<32x32xf32>
    %cst_19 = arith.constant dense<0.000000e+00> : vector<256x32xf32>
    %11 = tpu.matmul %8, %10, %cst_19 {dimension_numbers = #tpu.dot_dimension_numbers<[1], [0], [0], [1], [0, 0, 1, 1], [], []>} : vector<256x32xf32>, vector<32x32xf32>, vector<256x32xf32> -> vector<256x32xf32>
    %12 = arith.addf %6, %11 : vector<256x32xf32>
    %c0_20 = arith.constant 0 : index
    %c0_21 = arith.constant 0 : index
    %c1_22 = arith.constant 1 : index
    %c0_23 = arith.constant 0 : index
    %13 = vector.load %arg8[%c0_20, %c0_21, %c1_22, %c0_23] : memref<1x18x18x32xf32, #tpu.memory_space<vmem>>, vector<1x16x16x32xf32>
    %14 = vector.shape_cast %13 : vector<1x16x16x32xf32> to vector<256x32xf32>
    %15 = vector.extract_strided_slice %5 {offsets = [0, 1, 0, 0], sizes = [1, 1, 32, 32], strides = [1, 1, 1, 1]} : vector<3x3x32x32xf32> to vector<1x1x32x32xf32>
    %16 = vector.shape_cast %15 : vector<1x1x32x32xf32> to vector<32x32xf32>
    %cst_24 = arith.constant dense<0.000000e+00> : vector<256x32xf32>
    %17 = tpu.matmul %14, %16, %cst_24 {dimension_numbers = #tpu.dot_dimension_numbers<[1], [0], [0], [1], [0, 0, 1, 1], [], []>} : vector<256x32xf32>, vector<32x32xf32>, vector<256x32xf32> -> vector<256x32xf32>
    %18 = arith.addf %12, %17 : vector<256x32xf32>
    %c0_25 = arith.constant 0 : index
    %c0_26 = arith.constant 0 : index
    %c2 = arith.constant 2 : index
    %c0_27 = arith.constant 0 : index
    %19 = vector.load %arg8[%c0_25, %c0_26, %c2, %c0_27] : memref<1x18x18x32xf32, #tpu.memory_space<vmem>>, vector<1x16x16x32xf32>
    %20 = vector.shape_cast %19 : vector<1x16x16x32xf32> to vector<256x32xf32>
    %21 = vector.extract_strided_slice %5 {offsets = [0, 2, 0, 0], sizes = [1, 1, 32, 32], strides = [1, 1, 1, 1]} : vector<3x3x32x32xf32> to vector<1x1x32x32xf32>
    %22 = vector.shape_cast %21 : vector<1x1x32x32xf32> to vector<32x32xf32>
    %cst_28 = arith.constant dense<0.000000e+00> : vector<256x32xf32>
    %23 = tpu.matmul %20, %22, %cst_28 {dimension_numbers = #tpu.dot_dimension_numbers<[1], [0], [0], [1], [0, 0, 1, 1], [], []>} : vector<256x32xf32>, vector<32x32xf32>, vector<256x32xf32> -> vector<256x32xf32>
    %24 = arith.addf %18, %23 : vector<256x32xf32>
    %c0_29 = arith.constant 0 : index
    %c1_30 = arith.constant 1 : index
    %c0_31 = arith.constant 0 : index
    %c0_32 = arith.constant 0 : index
    %25 = vector.load %arg8[%c0_29, %c1_30, %c0_31, %c0_32] : memref<1x18x18x32xf32, #tpu.memory_space<vmem>>, vector<1x16x16x32xf32>
    %26 = vector.shape_cast %25 : vector<1x16x16x32xf32> to vector<256x32xf32>
    %27 = vector.extract_strided_slice %5 {offsets = [1, 0, 0, 0], sizes = [1, 1, 32, 32], strides = [1, 1, 1, 1]} : vector<3x3x32x32xf32> to vector<1x1x32x32xf32>
    %28 = vector.shape_cast %27 : vector<1x1x32x32xf32> to vector<32x32xf32>
    %cst_33 = arith.constant dense<0.000000e+00> : vector<256x32xf32>
    %29 = tpu.matmul %26, %28, %cst_33 {dimension_numbers = #tpu.dot_dimension_numbers<[1], [0], [0], [1], [0, 0, 1, 1], [], []>} : vector<256x32xf32>, vector<32x32xf32>, vector<256x32xf32> -> vector<256x32xf32>
    %30 = arith.addf %24, %29 : vector<256x32xf32>
    %c0_34 = arith.constant 0 : index
    %c1_35 = arith.constant 1 : index
    %c1_36 = arith.constant 1 : index
    %c0_37 = arith.constant 0 : index
    %31 = vector.load %arg8[%c0_34, %c1_35, %c1_36, %c0_37] : memref<1x18x18x32xf32, #tpu.memory_space<vmem>>, vector<1x16x16x32xf32>
    %32 = vector.shape_cast %31 : vector<1x16x16x32xf32> to vector<256x32xf32>
    %33 = vector.extract_strided_slice %5 {offsets = [1, 1, 0, 0], sizes = [1, 1, 32, 32], strides = [1, 1, 1, 1]} : vector<3x3x32x32xf32> to vector<1x1x32x32xf32>
    %34 = vector.shape_cast %33 : vector<1x1x32x32xf32> to vector<32x32xf32>
    %cst_38 = arith.constant dense<0.000000e+00> : vector<256x32xf32>
    %35 = tpu.matmul %32, %34, %cst_38 {dimension_numbers = #tpu.dot_dimension_numbers<[1], [0], [0], [1], [0, 0, 1, 1], [], []>} : vector<256x32xf32>, vector<32x32xf32>, vector<256x32xf32> -> vector<256x32xf32>
    %36 = arith.addf %30, %35 : vector<256x32xf32>
    %c0_39 = arith.constant 0 : index
    %c1_40 = arith.constant 1 : index
    %c2_41 = arith.constant 2 : index
    %c0_42 = arith.constant 0 : index
    %37 = vector.load %arg8[%c0_39, %c1_40, %c2_41, %c0_42] : memref<1x18x18x32xf32, #tpu.memory_space<vmem>>, vector<1x16x16x32xf32>
    %38 = vector.shape_cast %37 : vector<1x16x16x32xf32> to vector<256x32xf32>
    %39 = vector.extract_strided_slice %5 {offsets = [1, 2, 0, 0], sizes = [1, 1, 32, 32], strides = [1, 1, 1, 1]} : vector<3x3x32x32xf32> to vector<1x1x32x32xf32>
    %40 = vector.shape_cast %39 : vector<1x1x32x32xf32> to vector<32x32xf32>
    %cst_43 = arith.constant dense<0.000000e+00> : vector<256x32xf32>
    %41 = tpu.matmul %38, %40, %cst_43 {dimension_numbers = #tpu.dot_dimension_numbers<[1], [0], [0], [1], [0, 0, 1, 1], [], []>} : vector<256x32xf32>, vector<32x32xf32>, vector<256x32xf32> -> vector<256x32xf32>
    %42 = arith.addf %36, %41 : vector<256x32xf32>
    %c0_44 = arith.constant 0 : index
    %c2_45 = arith.constant 2 : index
    %c0_46 = arith.constant 0 : index
    %c0_47 = arith.constant 0 : index
    %43 = vector.load %arg8[%c0_44, %c2_45, %c0_46, %c0_47] : memref<1x18x18x32xf32, #tpu.memory_space<vmem>>, vector<1x16x16x32xf32>
    %44 = vector.shape_cast %43 : vector<1x16x16x32xf32> to vector<256x32xf32>
    %45 = vector.extract_strided_slice %5 {offsets = [2, 0, 0, 0], sizes = [1, 1, 32, 32], strides = [1, 1, 1, 1]} : vector<3x3x32x32xf32> to vector<1x1x32x32xf32>
    %46 = vector.shape_cast %45 : vector<1x1x32x32xf32> to vector<32x32xf32>
    %cst_48 = arith.constant dense<0.000000e+00> : vector<256x32xf32>
    %47 = tpu.matmul %44, %46, %cst_48 {dimension_numbers = #tpu.dot_dimension_numbers<[1], [0], [0], [1], [0, 0, 1, 1], [], []>} : vector<256x32xf32>, vector<32x32xf32>, vector<256x32xf32> -> vector<256x32xf32>
    %48 = arith.addf %42, %47 : vector<256x32xf32>
    %c0_49 = arith.constant 0 : index
    %c2_50 = arith.constant 2 : index
    %c1_51 = arith.constant 1 : index
    %c0_52 = arith.constant 0 : index
    %49 = vector.load %arg8[%c0_49, %c2_50, %c1_51, %c0_52] : memref<1x18x18x32xf32, #tpu.memory_space<vmem>>, vector<1x16x16x32xf32>
    %50 = vector.shape_cast %49 : vector<1x16x16x32xf32> to vector<256x32xf32>
    %51 = vector.extract_strided_slice %5 {offsets = [2, 1, 0, 0], sizes = [1, 1, 32, 32], strides = [1, 1, 1, 1]} : vector<3x3x32x32xf32> to vector<1x1x32x32xf32>
    %52 = vector.shape_cast %51 : vector<1x1x32x32xf32> to vector<32x32xf32>
    %cst_53 = arith.constant dense<0.000000e+00> : vector<256x32xf32>
    %53 = tpu.matmul %50, %52, %cst_53 {dimension_numbers = #tpu.dot_dimension_numbers<[1], [0], [0], [1], [0, 0, 1, 1], [], []>} : vector<256x32xf32>, vector<32x32xf32>, vector<256x32xf32> -> vector<256x32xf32>
    %54 = arith.addf %48, %53 : vector<256x32xf32>
    %c0_54 = arith.constant 0 : index
    %c2_55 = arith.constant 2 : index
    %c2_56 = arith.constant 2 : index
    %c0_57 = arith.constant 0 : index
    %55 = vector.load %arg8[%c0_54, %c2_55, %c2_56, %c0_57] : memref<1x18x18x32xf32, #tpu.memory_space<vmem>>, vector<1x16x16x32xf32>
    %56 = vector.shape_cast %55 : vector<1x16x16x32xf32> to vector<256x32xf32>
    %57 = vector.extract_strided_slice %5 {offsets = [2, 2, 0, 0], sizes = [1, 1, 32, 32], strides = [1, 1, 1, 1]} : vector<3x3x32x32xf32> to vector<1x1x32x32xf32>
    %58 = vector.shape_cast %57 : vector<1x1x32x32xf32> to vector<32x32xf32>
    %cst_58 = arith.constant dense<0.000000e+00> : vector<256x32xf32>
    %59 = tpu.matmul %56, %58, %cst_58 {dimension_numbers = #tpu.dot_dimension_numbers<[1], [0], [0], [1], [0, 0, 1, 1], [], []>} : vector<256x32xf32>, vector<32x32xf32>, vector<256x32xf32> -> vector<256x32xf32>
    %60 = arith.addf %54, %59 : vector<256x32xf32>
    %c0_59 = arith.constant 0 : index
    %c0_60 = arith.constant 0 : index
    %61 = vector.load %arg5[%c0_59, %c0_60] : memref<1x32xf32, #tpu.memory_space<vmem>>, vector<1x32xf32>
    %62 = vector.broadcast %61 : vector<1x32xf32> to vector<256x32xf32>
    %63 = arith.addf %60, %62 : vector<256x32xf32>
    %cst_61 = arith.constant 5.000000e-01 : f32
    %64 = vector.broadcast %cst_61 : f32 to vector<256x32xf32>
    %65 = arith.mulf %1, %64 : vector<256x32xf32>
    %cst_62 = arith.constant 5.000000e-01 : f32
    %66 = vector.broadcast %cst_62 : f32 to vector<256x32xf32>
    %67 = arith.mulf %63, %66 : vector<256x32xf32>
    %68 = arith.addf %65, %67 : vector<256x32xf32>
    %c0_63 = arith.constant 0 : index
    %c0_64 = arith.constant 0 : index
    %c0_65 = arith.constant 0 : index
    %c0_66 = arith.constant 0 : index
    %69 = vector.load %arg3[%c0_63, %c0_64, %c0_65, %c0_66] : memref<1x16x16x32xf32, #tpu.memory_space<vmem>>, vector<1x16x16x32xf32>
    %70 = vector.shape_cast %69 : vector<1x16x16x32xf32> to vector<256x32xf32>
    %71 = arith.addf %70, %68 : vector<256x32xf32>
    %c0_67 = arith.constant 0 : index
    %c0_68 = arith.constant 0 : index
    %c0_69 = arith.constant 0 : index
    %c0_70 = arith.constant 0 : index
    %72 = vector.load %arg2[%c0_67, %c0_68, %c0_69, %c0_70] : memref<1x16x16x32xf32, #tpu.memory_space<vmem>>, vector<1x16x16x32xf32>
    %73 = vector.shape_cast %72 : vector<1x16x16x32xf32> to vector<256x32xf32>
    %74 = arith.subf %73, %68 : vector<256x32xf32>
    %75 = vector.shape_cast %71 : vector<256x32xf32> to vector<1x16x16x32xf32>
    %c0_71 = arith.constant 0 : index
    %c0_72 = arith.constant 0 : index
    %c0_73 = arith.constant 0 : index
    %c0_74 = arith.constant 0 : index
    %76 = vector.load %arg6[%c0_71, %c0_72, %c0_73, %c0_74] : memref<1x16x16x32xf32, #tpu.memory_space<vmem>>, vector<1x16x16x32xf32>
    tpu.vector_store %arg6[%c0_71, %c0_72, %c0_73, %c0_74], %75 {strides = array<i32>} : memref<1x16x16x32xf32, #tpu.memory_space<vmem>>, vector<1x16x16x32xf32>,
    %77 = vector.shape_cast %74 : vector<256x32xf32> to vector<1x16x16x32xf32>
    %c0_75 = arith.constant 0 : index
    %c0_76 = arith.constant 0 : index
    %c0_77 = arith.constant 0 : index
    %c0_78 = arith.constant 0 : index
    %78 = vector.load %arg7[%c0_75, %c0_76, %c0_77, %c0_78] : memref<1x16x16x32xf32, #tpu.memory_space<vmem>>, vector<1x16x16x32xf32>
    tpu.vector_store %arg7[%c0_75, %c0_76, %c0_77, %c0_78], %77 {strides = array<i32>} : memref<1x16x16x32xf32, #tpu.memory_space<vmem>>, vector<1x16x16x32xf32>,
    return
  }
  func.func @transform_0(%arg0: i32) -> (i32, i32, i32, i32) {
    %c0_i32 = arith.constant 0 : i32
    %c0_i32_0 = arith.constant 0 : i32
    %c0_i32_1 = arith.constant 0 : i32
    %c0_i32_2 = arith.constant 0 : i32
    return %arg0, %c0_i32, %c0_i32_0, %c0_i32_1 : i32, i32, i32, i32
  }
  func.func @transform_1(%arg0: i32) -> (i32, i32, i32, i32) {
    %c0_i32 = arith.constant 0 : i32
    %c0_i32_0 = arith.constant 0 : i32
    %c0_i32_1 = arith.constant 0 : i32
    %c0_i32_2 = arith.constant 0 : i32
    return %arg0, %c0_i32, %c0_i32_0, %c0_i32_1 : i32, i32, i32, i32
  }
  func.func @transform_2(%arg0: i32) -> (i32, i32, i32, i32) {
    %c0_i32 = arith.constant 0 : i32
    %c0_i32_0 = arith.constant 0 : i32
    %c0_i32_1 = arith.constant 0 : i32
    %c0_i32_2 = arith.constant 0 : i32
    return %arg0, %c0_i32, %c0_i32_0, %c0_i32_1 : i32, i32, i32, i32
  }
  func.func @transform_3(%arg0: i32) -> (i32, i32, i32, i32) {
    %c0_i32 = arith.constant 0 : i32
    %c0_i32_0 = arith.constant 0 : i32
    %c0_i32_1 = arith.constant 0 : i32
    %c0_i32_2 = arith.constant 0 : i32
    %c0_i32_3 = arith.constant 0 : i32
    return %c0_i32, %c0_i32_0, %c0_i32_1, %c0_i32_2 : i32, i32, i32, i32
  }
  func.func @transform_4(%arg0: i32) -> (i32, i32) {
    %c0_i32 = arith.constant 0 : i32
    %c0_i32_0 = arith.constant 0 : i32
    %c0_i32_1 = arith.constant 0 : i32
    return %c0_i32, %c0_i32_0 : i32, i32
  }
  func.func @transform_5(%arg0: i32) -> (i32, i32, i32, i32) {
    %c0_i32 = arith.constant 0 : i32
    %c0_i32_0 = arith.constant 0 : i32
    %c0_i32_1 = arith.constant 0 : i32
    %c0_i32_2 = arith.constant 0 : i32
    return %arg0, %c0_i32, %c0_i32_0, %c0_i32_1 : i32, i32, i32, i32
  }
  func.func @transform_6(%arg0: i32) -> (i32, i32, i32, i32) {
    %c0_i32 = arith.constant 0 : i32
    %c0_i32_0 = arith.constant 0 : i32
    %c0_i32_1 = arith.constant 0 : i32
    %c0_i32_2 = arith.constant 0 : i32
    return %arg0, %c0_i32, %c0_i32_0, %c0_i32_1 : i32, i32, i32, i32
  }
}

module attributes {stable_mosaic.version = 11 : i64} {
  func.func @_vq_quantize_kernel(%arg0: i32, %arg1: memref<32x32xf32, #tpu.memory_space<vmem>>, %arg2: memref<128x32xf32, #tpu.memory_space<vmem>>, %arg3: memref<1x128xf32, #tpu.memory_space<vmem>>, %arg4: memref<32x32xf32, #tpu.memory_space<vmem>>) attributes {dimension_semantics = [#tpu.dimension_semantics<parallel>], iteration_bounds = array<i64: 4>, scalar_prefetch = 0 : i64, scratch_operands = 0 : i64, tpu.core_type = #tpu.core_type<tc>, window_params = [{transform_indices = @transform_0, window_bounds = array<i64: 32, 32>}, {pipeline_mode = #tpu.pipeline_mode<synchronous>, transform_indices = @transform_1, window_bounds = array<i64: 128, 32>}, {pipeline_mode = #tpu.pipeline_mode<synchronous>, transform_indices = @transform_2, window_bounds = array<i64: 1, 128>}, {transform_indices = @transform_3, window_bounds = array<i64: 32, 32>}]} {
    %c0 = arith.constant 0 : index
    %c0_0 = arith.constant 0 : index
    %0 = vector.load %arg1[%c0, %c0_0] : memref<32x32xf32, #tpu.memory_space<vmem>>, vector<32x32xf32>
    %c0_1 = arith.constant 0 : index
    %c0_2 = arith.constant 0 : index
    %1 = vector.load %arg2[%c0_1, %c0_2] : memref<128x32xf32, #tpu.memory_space<vmem>>, vector<128x32xf32>
    %cst = arith.constant dense<0.000000e+00> : vector<32x128xf32>
    %2 = tpu.matmul %0, %1, %cst {dimension_numbers = #tpu.dot_dimension_numbers<[1], [1], [0], [0], [0, 0, 1, 0], [], []>} : vector<32x32xf32>, vector<128x32xf32>, vector<32x128xf32> -> vector<32x128xf32>
    %c0_3 = arith.constant 0 : index
    %c0_4 = arith.constant 0 : index
    %3 = vector.load %arg3[%c0_3, %c0_4] : memref<1x128xf32, #tpu.memory_space<vmem>>, vector<1x128xf32>
    %cst_5 = arith.constant 2.000000e+00 : f32
    %4 = vector.broadcast %cst_5 : f32 to vector<32x128xf32>
    %5 = arith.mulf %4, %2 : vector<32x128xf32>
    %6 = vector.broadcast %3 : vector<1x128xf32> to vector<32x128xf32>
    %7 = arith.subf %6, %5 : vector<32x128xf32>
    %cst_6 = arith.constant dense<0x7F800000> : vector<32xf32>
    %8 = vector.multi_reduction <minimumf>, %7, %cst_6 [1] : vector<32x128xf32> to vector<32xf32>
    %9 = vector.shape_cast %8 : vector<32xf32> to vector<32x1xf32>
    %10 = tpu.iota {dimensions = array<i32: 1>} : vector<32x128xi32>
    %11 = vector.broadcast %9 : vector<32x1xf32> to vector<32x128xf32>
    %12 = arith.cmpf ole, %7, %11 : vector<32x128xf32>
    %c128_i32 = arith.constant 128 : i32
    %13 = vector.broadcast %c128_i32 : i32 to vector<32x128xi32>
    %14 = arith.select %12, %10, %13 : vector<32x128xi1>, vector<32x128xi32>
    %cst_7 = arith.constant dense<2147483647> : vector<32xi32>
    %15 = vector.multi_reduction <minsi>, %14, %cst_7 [1] : vector<32x128xi32> to vector<32xi32>
    %16 = vector.shape_cast %15 : vector<32xi32> to vector<32x1xi32>
    %17 = vector.broadcast %16 : vector<32x1xi32> to vector<32x128xi32>
    %18 = arith.cmpi eq, %10, %17 : vector<32x128xi32>
    %19 = arith.extui %18 : vector<32x128xi1> to vector<32x128xi32>
    %20 = arith.sitofp %19 : vector<32x128xi32> to vector<32x128xf32>
    %cst_8 = arith.constant dense<0.000000e+00> : vector<32x32xf32>
    %21 = tpu.matmul %20, %1, %cst_8 {dimension_numbers = #tpu.dot_dimension_numbers<[1], [0], [0], [1], [0, 0, 1, 1], [], []>} : vector<32x128xf32>, vector<128x32xf32>, vector<32x32xf32> -> vector<32x32xf32>
    %c0_9 = arith.constant 0 : index
    %c0_10 = arith.constant 0 : index
    %22 = vector.load %arg4[%c0_9, %c0_10] : memref<32x32xf32, #tpu.memory_space<vmem>>, vector<32x32xf32>
    tpu.vector_store %arg4[%c0_9, %c0_10], %21 {strides = array<i32>} : memref<32x32xf32, #tpu.memory_space<vmem>>, vector<32x32xf32>,
    return
  }
  func.func @transform_0(%arg0: i32) -> (i32, i32) {
    %c0_i32 = arith.constant 0 : i32
    %c0_i32_0 = arith.constant 0 : i32
    return %arg0, %c0_i32 : i32, i32
  }
  func.func @transform_1(%arg0: i32) -> (i32, i32) {
    %c0_i32 = arith.constant 0 : i32
    %c0_i32_0 = arith.constant 0 : i32
    %c0_i32_1 = arith.constant 0 : i32
    return %c0_i32, %c0_i32_0 : i32, i32
  }
  func.func @transform_2(%arg0: i32) -> (i32, i32) {
    %c0_i32 = arith.constant 0 : i32
    %c0_i32_0 = arith.constant 0 : i32
    %c0_i32_1 = arith.constant 0 : i32
    return %c0_i32, %c0_i32_0 : i32, i32
  }
  func.func @transform_3(%arg0: i32) -> (i32, i32) {
    %c0_i32 = arith.constant 0 : i32
    %c0_i32_0 = arith.constant 0 : i32
    return %arg0, %c0_i32 : i32, i32
  }
}

module attributes {stable_mosaic.version = 11 : i64} {
  func.func @_vq_quantize_kernel(%arg0: i32, %arg1: memref<128x32xf32, #tpu.memory_space<vmem>>, %arg2: memref<128x32xf32, #tpu.memory_space<vmem>>, %arg3: memref<1x128xf32, #tpu.memory_space<vmem>>, %arg4: memref<128x32xf32, #tpu.memory_space<vmem>>) attributes {dimension_semantics = [#tpu.dimension_semantics<parallel>], iteration_bounds = array<i64: 4>, scalar_prefetch = 0 : i64, scratch_operands = 0 : i64, tpu.core_type = #tpu.core_type<tc>, window_params = [{transform_indices = @transform_0, window_bounds = array<i64: 128, 32>}, {pipeline_mode = #tpu.pipeline_mode<synchronous>, transform_indices = @transform_1, window_bounds = array<i64: 128, 32>}, {pipeline_mode = #tpu.pipeline_mode<synchronous>, transform_indices = @transform_2, window_bounds = array<i64: 1, 128>}, {transform_indices = @transform_3, window_bounds = array<i64: 128, 32>}]} {
    %c0 = arith.constant 0 : index
    %c0_0 = arith.constant 0 : index
    %0 = vector.load %arg1[%c0, %c0_0] : memref<128x32xf32, #tpu.memory_space<vmem>>, vector<128x32xf32>
    %c0_1 = arith.constant 0 : index
    %c0_2 = arith.constant 0 : index
    %1 = vector.load %arg2[%c0_1, %c0_2] : memref<128x32xf32, #tpu.memory_space<vmem>>, vector<128x32xf32>
    %cst = arith.constant dense<0.000000e+00> : vector<128x128xf32>
    %2 = tpu.matmul %0, %1, %cst {dimension_numbers = #tpu.dot_dimension_numbers<[1], [1], [0], [0], [0, 0, 1, 0], [], []>} : vector<128x32xf32>, vector<128x32xf32>, vector<128x128xf32> -> vector<128x128xf32>
    %c0_3 = arith.constant 0 : index
    %c0_4 = arith.constant 0 : index
    %3 = vector.load %arg3[%c0_3, %c0_4] : memref<1x128xf32, #tpu.memory_space<vmem>>, vector<1x128xf32>
    %cst_5 = arith.constant 2.000000e+00 : f32
    %4 = vector.broadcast %cst_5 : f32 to vector<128x128xf32>
    %5 = arith.mulf %4, %2 : vector<128x128xf32>
    %6 = vector.broadcast %3 : vector<1x128xf32> to vector<128x128xf32>
    %7 = arith.subf %6, %5 : vector<128x128xf32>
    %cst_6 = arith.constant dense<0x7F800000> : vector<128xf32>
    %8 = vector.multi_reduction <minimumf>, %7, %cst_6 [1] : vector<128x128xf32> to vector<128xf32>
    %9 = vector.shape_cast %8 : vector<128xf32> to vector<128x1xf32>
    %10 = tpu.iota {dimensions = array<i32: 1>} : vector<128x128xi32>
    %11 = vector.broadcast %9 : vector<128x1xf32> to vector<128x128xf32>
    %12 = arith.cmpf ole, %7, %11 : vector<128x128xf32>
    %c128_i32 = arith.constant 128 : i32
    %13 = vector.broadcast %c128_i32 : i32 to vector<128x128xi32>
    %14 = arith.select %12, %10, %13 : vector<128x128xi1>, vector<128x128xi32>
    %cst_7 = arith.constant dense<2147483647> : vector<128xi32>
    %15 = vector.multi_reduction <minsi>, %14, %cst_7 [1] : vector<128x128xi32> to vector<128xi32>
    %16 = vector.shape_cast %15 : vector<128xi32> to vector<128x1xi32>
    %17 = vector.broadcast %16 : vector<128x1xi32> to vector<128x128xi32>
    %18 = arith.cmpi eq, %10, %17 : vector<128x128xi32>
    %19 = arith.extui %18 : vector<128x128xi1> to vector<128x128xi32>
    %20 = arith.sitofp %19 : vector<128x128xi32> to vector<128x128xf32>
    %cst_8 = arith.constant dense<0.000000e+00> : vector<128x32xf32>
    %21 = tpu.matmul %20, %1, %cst_8 {dimension_numbers = #tpu.dot_dimension_numbers<[1], [0], [0], [1], [0, 0, 1, 1], [], []>} : vector<128x128xf32>, vector<128x32xf32>, vector<128x32xf32> -> vector<128x32xf32>
    %c0_9 = arith.constant 0 : index
    %c0_10 = arith.constant 0 : index
    %22 = vector.load %arg4[%c0_9, %c0_10] : memref<128x32xf32, #tpu.memory_space<vmem>>, vector<128x32xf32>
    tpu.vector_store %arg4[%c0_9, %c0_10], %21 {strides = array<i32>} : memref<128x32xf32, #tpu.memory_space<vmem>>, vector<128x32xf32>,
    return
  }
  func.func @transform_0(%arg0: i32) -> (i32, i32) {
    %c0_i32 = arith.constant 0 : i32
    %c0_i32_0 = arith.constant 0 : i32
    return %arg0, %c0_i32 : i32, i32
  }
  func.func @transform_1(%arg0: i32) -> (i32, i32) {
    %c0_i32 = arith.constant 0 : i32
    %c0_i32_0 = arith.constant 0 : i32
    %c0_i32_1 = arith.constant 0 : i32
    return %c0_i32, %c0_i32_0 : i32, i32
  }
  func.func @transform_2(%arg0: i32) -> (i32, i32) {
    %c0_i32 = arith.constant 0 : i32
    %c0_i32_0 = arith.constant 0 : i32
    %c0_i32_1 = arith.constant 0 : i32
    return %c0_i32, %c0_i32_0 : i32, i32
  }
  func.func @transform_3(%arg0: i32) -> (i32, i32) {
    %c0_i32 = arith.constant 0 : i32
    %c0_i32_0 = arith.constant 0 : i32
    return %arg0, %c0_i32 : i32, i32
  }
}

</mosaic_0001>

<llo_original>
// kernel: msvq_forward.6
$region0: #{msvq_forward.6}
  #allocation0 [shape = 'u32[]', space=smem, size = 0x4, offset = 0x4, fixed_abs, tag = 'smem constant byte address 0x4 - core index']
  #allocation1 [shape = 'u32[144,128]{1,0:T(1,128)}', space=vmem, size = 0x12000, scoped, tag = 'internal scratch']
  %s0 = inlined_call_operand.vmem [shape: f32[32,32], index: 0, kind: input, shape index: {}]
  %s1 = inlined_call_operand.vmem [shape: f32[128,32], index: 1, kind: input, shape index: {}]
  %s2 = inlined_call_operand.vmem [shape: f32[1,128], index: 2, kind: input, shape index: {}]
  %s3 = inlined_call_operand.vmem [shape: f32[32,32], index: 3, kind: output, shape index: {}]
  %s4 = sld [smem:[#allocation0]]
  $region45: #{msvq_forward.6} parent=0
    _
  %s6 = ssub.s32 1, %s4
  %s7 = scalar_select 0, %s6, %s4
  loop: start=0, step=1, limit=6
  $region2: #{msvq_forward.6} parent=0 // loop_pre_header
    _
  $region3: #{msvq_forward.6} parent=0 // loop_header
    %s9 = sphi 0, %s13
    %p10 = scmp.ge.s32.totalorder %s9, 6
    %s19 = sphi 0, %s21
    %s22 = sphi 0, %s19
    %s23 = sphi 0, %s22
    %s39 = sphi 0, %s23
    %s43 = sphi 0, %s43
    %s45 = sphi 0, %s43
    %s46 = sphi 0, %s45
    %s60 = sphi 0, %s46
    %s64 = sphi 0, %s64
    %s66 = sphi 0, %s64
    %s67 = sphi 0, %s66
    %s81 = sphi 0, %s67
    %s87 = sphi 0, %s89
    %s90 = sphi 0, %s87
    %s91 = sphi 0, %s90
    %s107 = sphi 0, %s91
  $region4: #{msvq_forward.6} parent=0 // loop_header_branch
    %12 = sbr.rel (%p10) target = $region8
  $region5: #{msvq_forward.6} parent=0 // loop_body
    %s14 = ssub.s32 %s9, 1
    %s15 = ssub.s32 %s9, 2
    %s16 = sadd.s32 %s9, 1
    %s17 = ssub.s32 %s9, %s16
    %p18 = scmp.eq.s32.totalorder %s17, 0
    %s20 = sadd.s32 %s19, 1
    %s21 = scalar_select %p18, %s19, %s20
    %p24 = pneg %p18
    %p25 = scmp.eq.s32.totalorder %s9, 3
    %p26 = por %p24, %p25
    %p27 = scmp.ne.s32.totalorder %s19, %s22
    %p28 = scmp.eq.s32.totalorder %s9, 0
    %p29 = por %p27, %p28
    %p30 = scmp.ne.s32.totalorder %s19, %s22
    %p31 = scmp.eq.s32.totalorder %s14, 3
    %p32 = por %p30, %p31
    %p33 = scmp.ne.s32.totalorder %s22, %s23
    %p34 = scmp.eq.s32.totalorder %s14, 0
    %p35 = por %p33, %p34
    %p36 = scmp.ne.s32.totalorder %s22, %s23
    %p37 = scmp.eq.s32.totalorder %s15, 3
    %p38 = por %p36, %p37
    %p40 = scmp.ne.s32.totalorder %s23, %s39
    %p41 = scmp.eq.s32.totalorder %s15, 0
    %p42 = por %p40, %p41
    %s44 = sadd.s32 %s43, 1
    %p47 = scmp.eq.s32.totalorder %s9, 3
    %p48 = scmp.ne.s32.totalorder %s43, %s45
    %p49 = scmp.eq.s32.totalorder %s9, 0
    %p50 = por %p48, %p49
    %p51 = scmp.ne.s32.totalorder %s43, %s45
    %p52 = scmp.eq.s32.totalorder %s14, 3
    %p53 = por %p51, %p52
    %p54 = scmp.ne.s32.totalorder %s45, %s46
    %p55 = scmp.eq.s32.totalorder %s14, 0
    %p56 = por %p54, %p55
    %p57 = scmp.ne.s32.totalorder %s45, %s46
    %p58 = scmp.eq.s32.totalorder %s15, 3
    %p59 = por %p57, %p58
    %p61 = scmp.ne.s32.totalorder %s46, %s60
    %p62 = scmp.eq.s32.totalorder %s15, 0
    %p63 = por %p61, %p62
    %s65 = sadd.s32 %s64, 1
    %p68 = scmp.eq.s32.totalorder %s9, 3
    %p69 = scmp.ne.s32.totalorder %s64, %s66
    %p70 = scmp.eq.s32.totalorder %s9, 0
    %p71 = por %p69, %p70
    %p72 = scmp.ne.s32.totalorder %s64, %s66
    %p73 = scmp.eq.s32.totalorder %s14, 3
    %p74 = por %p72, %p73
    %p75 = scmp.ne.s32.totalorder %s66, %s67
    %p76 = scmp.eq.s32.totalorder %s14, 0
    %p77 = por %p75, %p76
    %p78 = scmp.ne.s32.totalorder %s66, %s67
    %p79 = scmp.eq.s32.totalorder %s15, 3
    %p80 = por %p78, %p79
    %p82 = scmp.ne.s32.totalorder %s67, %s81
    %p83 = scmp.eq.s32.totalorder %s15, 0
    %p84 = por %p82, %p83
    %s85 = ssub.s32 %s9, %s16
    %p86 = scmp.eq.s32.totalorder %s85, 0
    %s88 = sadd.s32 %s87, 1
    %s89 = scalar_select %p86, %s87, %s88
    %p92 = pneg %p86
    %p93 = scmp.eq.s32.totalorder %s9, 3
    %p94 = por %p92, %p93
    %p95 = scmp.ne.s32.totalorder %s87, %s90
    %p96 = scmp.eq.s32.totalorder %s9, 0
    %p97 = por %p95, %p96
    %p98 = scmp.ne.s32.totalorder %s87, %s90
    %p99 = scmp.eq.s32.totalorder %s14, 3
    %p100 = por %p98, %p99
    %p101 = scmp.ne.s32.totalorder %s90, %s91
    %p102 = scmp.eq.s32.totalorder %s14, 0
    %p103 = por %p101, %p102
    %p104 = scmp.ne.s32.totalorder %s90, %s91
    %p105 = scmp.eq.s32.totalorder %s15, 3
    %p106 = por %p104, %p105
    %p108 = scmp.ne.s32.totalorder %s91, %s107
    %p109 = scmp.eq.s32.totalorder %s15, 0
    %p110 = por %p108, %p109
    %p111 = scmp.le.s32.totalorder 1, %s9
    %p112 = scmp.lt.s32.totalorder %s9, 5
    %p113 = pnand %p111, %p112
    %p114 = pneg %p113
    // Predicated region
    $region9: #{msvq_forward.6} parent=5 // pred_check
      _
    $region10: #{msvq_forward.6} parent=5 // pred_check_branch
      %116 = sbr.rel (%p113) target = $region12
    $region11: #{msvq_forward.6} parent=5 // pred_region
      %s117 = ssub.s32 %s9, 1
      // Predicated region
      $region13: #{msvq_forward.6} parent=11 // pred_check
        %p118 = pneg %p56
      $region14: #{msvq_forward.6} parent=11 // pred_check_branch
        %120 = sbr.rel (%p118) target = $region16
      $region15: #{msvq_forward.6} parent=11 // pred_region
        _
      $region16: #{msvq_forward.6} parent=11 // pred_fallthru
        _
      // Predicated region
      $region17: #{msvq_forward.6} parent=11 // pred_check
        %p121 = pneg %p77
      $region18: #{msvq_forward.6} parent=11 // pred_check_branch
        %123 = sbr.rel (%p121) target = $region20
      $region19: #{msvq_forward.6} parent=11 // pred_region
        _
      $region20: #{msvq_forward.6} parent=11 // pred_fallthru
        _
    $region12: #{msvq_forward.6} parent=5 // pred_fallthru
      _
    %p124 = scmp.lt.s32.totalorder %s9, 4
    // Predicated region
    $region21: #{msvq_forward.6} parent=5 // pred_check
      %p125 = pneg %p124
    $region22: #{msvq_forward.6} parent=5 // pred_check_branch
      %127 = sbr.rel (%p125) target = $region24
    $region23: #{msvq_forward.6} parent=5 // pred_region
      // Predicated region
      $region25: #{msvq_forward.6} parent=23 // pred_check
        %p128 = pneg %p29
      $region26: #{msvq_forward.6} parent=23 // pred_check_branch
        %130 = sbr.rel (%p128) target = $region28
      $region27: #{msvq_forward.6} parent=23 // pred_region
        %p131 = scmp.lt.s32.totalorder %s9, 3
        %s132 = scalar_select %p131, %s9, 3
        %s133 = smul.addr %s132, 8
        %s134 = scalar_lea.vmem %s0, %s133
      $region28: #{msvq_forward.6} parent=23 // pred_fallthru
        _
    $region24: #{msvq_forward.6} parent=5 // pred_fallthru
      _
    %p135 = scmp.le.s32.totalorder 1, %s9
    %p136 = scmp.lt.s32.totalorder %s9, 5
    %p137 = pnand %p135, %p136
    %p138 = pneg %p137
    // Predicated region
    $region29: #{msvq_forward.6} parent=5 // pred_check
      _
    $region30: #{msvq_forward.6} parent=5 // pred_check_branch
      %140 = sbr.rel (%p137) target = $region32
    $region31: #{msvq_forward.6} parent=5 // pred_region
      %s141 = ssub.s32 %s9, 1
      %p142 = scmp.lt.s32.totalorder %s14, 3
      %s143 = scalar_select %p142, %s14, 3
      %s144 = smul.addr %s143, 8
      %s145 = scalar_lea.vmem %s0, %s144
      %p146 = pneg %p35
      %p147 = pneg %p32
      %p148 = pneg %p56
      %p149 = pneg %p53
      %p150 = pneg %p77
      %p151 = pneg %p74
      %p152 = pneg %p103
      %p153 = pneg %p100
      %p154 = scmp.lt.s32.totalorder %s14, 3
      %s155 = scalar_select %p154, %s14, 3
      %s156 = smul.addr %s155, 8
      %s157 = scalar_lea.vmem %s3, %s156
      %p158 = scmp.lt.s32.totalorder %s14, 3
      %s159 = scalar_select %p158, %s14, 3
      %s160 = smul.addr %s159, 8
      %s161 = scalar_lea.vmem %s0, %s160
      %p162 = scmp.lt.s32.totalorder %s14, 3
      %s163 = scalar_select %p162, %s14, 3
      %s164 = smul.addr %s163, 8
      %s165 = scalar_lea.vmem %s3, %s164
      %v166 = vld [vmem:[%s161] sm:$0xff]
      %v167 = vld [vmem:[%s1] sm:$0xff]
      %v168 = vld [vmem:[%s1 + $0x8] sm:$0xff]
      %v169 = vld [vmem:[%s1 + $0x10] sm:$0xff]
      %v170 = vld [vmem:[%s1 + $0x18] sm:$0xff]
      %v171 = vld [vmem:[%s1 + $0x20] sm:$0xff]
      %v172 = vld [vmem:[%s1 + $0x28] sm:$0xff]
      %v173 = vld [vmem:[%s1 + $0x30] sm:$0xff]
      %v174 = vld [vmem:[%s1 + $0x38] sm:$0xff]
      %v175 = vld [vmem:[%s1 + $0x40] sm:$0xff]
      %v176 = vld [vmem:[%s1 + $0x48] sm:$0xff]
      %v177 = vld [vmem:[%s1 + $0x50] sm:$0xff]
      %v178 = vld [vmem:[%s1 + $0x58] sm:$0xff]
      %v179 = vld [vmem:[%s1 + $0x60] sm:$0xff]
      %v180 = vld [vmem:[%s1 + $0x68] sm:$0xff]
      %v181 = vld [vmem:[%s1 + $0x70] sm:$0xff]
      %v182 = vld [vmem:[%s1 + $0x78] sm:$0xff]
      %vm183 = vcmask 261120
      %v185 = vsel %vm183, %v166, 0
      %v188 = vsel %vm183, %v167, 0
      %v191 = vsel %vm183, %v168, 0
      %v194 = vsel %vm183, %v169, 0
      %v197 = vsel %vm183, %v170, 0
      %v200 = vsel %vm183, %v171, 0
      %v203 = vsel %vm183, %v172, 0
      %v206 = vsel %vm183, %v173, 0
      %v209 = vsel %vm183, %v174, 0
      %v212 = vsel %vm183, %v175, 0
      %v215 = vsel %vm183, %v176, 0
      %v218 = vsel %vm183, %v177, 0
      %v221 = vsel %vm183, %v178, 0
      %v224 = vsel %vm183, %v179, 0
      %v227 = vsel %vm183, %v180, 0
      %v230 = vsel %vm183, %v181, 0
      %v233 = vsel %vm183, %v182, 0
      %235 = vmatprep.subr.mxu0 0.0
      %236 = vmatpush1.xpose.msra.mxu0 %v188
      %237 = vmatprep.subr.mxu0 0.0
      %238 = vmatpush1.xpose.msra.mxu0 %v191
      %239 = vmatprep.subr.mxu0 0.0
      %240 = vmatpush1.xpose.msra.mxu0 %v194
      %241 = vmatprep.subr.mxu0 0.0
      %242 = vmatpush1.xpose.msra.mxu0 %v197
      %243 = vmatprep.subr.mxu0 0.0
      %244 = vmatpush1.xpose.msra.mxu0 %v200
      %245 = vmatprep.subr.mxu0 0.0
      %246 = vmatpush1.xpose.msra.mxu0 %v203
      %247 = vmatprep.subr.mxu0 0.0
      %248 = vmatpush1.xpose.msra.mxu0 %v206
      %249 = vmatprep.subr.mxu0 0.0
      %250 = vmatpush1.xpose.msra.mxu0 %v209
      %251 = vmatprep.subr.mxu0 0.0
      %252 = vmatpush1.xpose.msra.mxu0 %v212
      %253 = vmatprep.subr.mxu0 0.0
      %254 = vmatpush1.xpose.msra.mxu0 %v215
      %255 = vmatprep.subr.mxu0 0.0
      %256 = vmatpush1.xpose.msra.mxu0 %v218
      %257 = vmatprep.subr.mxu0 0.0
      %258 = vmatpush1.xpose.msra.mxu0 %v221
      %259 = vmatprep.subr.mxu0 0.0
      %260 = vmatpush1.xpose.msra.mxu0 %v224
      %261 = vmatprep.subr.mxu0 0.0
      %262 = vmatpush1.xpose.msra.mxu0 %v227
      %263 = vmatprep.subr.mxu0 0.0
      %264 = vmatpush1.xpose.msra.mxu0 %v230
      %265 = vmatprep.subr.mxu0 0.0
      %266 = vmatpush1.xpose.msra.mxu0 %v233
      %267 = vmatprep.subr.mxu0 0.0
      %268 = vmatpush1.xpose.msra.mxu0 0.0
      %269 = vmatprep.subr.mxu0 0.0
      %270 = vmatpush1.xpose.msra.mxu0 0.0
      %271 = vmatprep.subr.mxu0 0.0
      %272 = vmatpush1.xpose.msra.mxu0 0.0
      %273 = vmatprep.subr.mxu0 0.0
      %274 = vmatpush1.xpose.msra.mxu0 0.0
      %275 = vmatprep.subr.mxu0 0.0
      %276 = vmatpush1.xpose.msra.mxu0 0.0
      %277 = vmatprep.subr.mxu0 0.0
      %278 = vmatpush1.xpose.msra.mxu0 0.0
      %279 = vmatprep.subr.mxu0 0.0
      %280 = vmatpush1.xpose.msra.mxu0 0.0
      %281 = vmatprep.subr.mxu0 0.0
      %282 = vmatpush1.xpose.msra.mxu0 0.0
      %283 = vmatprep.subr.mxu0 0.0
      %284 = vmatpush1.xpose.msra.mxu0 0.0
      %285 = vmatprep.subr.mxu0 0.0
      %286 = vmatpush1.xpose.msra.mxu0 0.0
      %287 = vmatprep.subr.mxu0 0.0
      %288 = vmatpush1.xpose.msra.mxu0 0.0
      %289 = vmatprep.subr.mxu0 0.0
      %290 = vmatpush1.xpose.msra.mxu0 0.0
      %291 = vmatprep.subr.mxu0 0.0
      %292 = vmatpush1.xpose.msra.mxu0 0.0
      %293 = vmatprep.subr.mxu0 0.0
      %294 = vmatpush1.xpose.msra.mxu0 0.0
      %295 = vmatprep.subr.mxu0 0.0
      %296 = vmatpush1.xpose.msra.mxu0 0.0
      %297 = vmatprep.subr.mxu0 0.0
      %298 = vmatpush1.xpose.msra.mxu0 0.0
      %299 = vmatprep.mubr.f32.mxu0 0.0
      %300 = vmatmul.mubr.f32.gmra.mrb[0].mxu0 %v185
      %v301 = vpop.f32.mrb[0].mxu0
      %v302 = vadd.f32 0.0, %v301
      %v303 = vpop.f32.mrb[0].mxu0
      %304 = vdwg.mxu0
      %v305 = vld [vmem:[%s2] sm:$0x1]
      %v306 = vmul.f32 %v302, 2.0
      %v308 = vlaneseq
      %v309 = vshrl.u32 %v308, 7
      %v310 = vsub.s32 0, %v309
      %v311 = vrot.slane %v305, %v310
      %v313 = vsub.f32 %v311, %v306
      %314 = vmin.xlane.f32.xlu0 %v313
      %v315 = vpop.xlane.xlu0 %314
      %v316 = vlaneseq
      %v317 = vand.u32 %v316, 127
      %vm318 = vcmp.le.f32.partialorder %v313, %v315
      %v319 = vsel %vm318, %v317, 128
      %v320 = vand.u32 %v319, 65535
      %v321 = vshra.s32 %v319, 16
      %v322 = vcvt.s32.f32 %v320
      %v323 = vcvt.s32.f32 %v321
      %324 = vmin.xlane.f32.xlu0 %v323
      %v325 = vpop.xlane.xlu0 %324
      %vm326 = vcmp.eq.f32.partialorder %v323, %v325
      %v327 = vsel %vm326, %v322, inf
      %328 = vmin.xlane.f32.xlu0 %v327
      %v329 = vpop.xlane.xlu0 %328
      %v330 = vcvt.f32.s32 %v329
      %v331 = vcvt.f32.s32 %v325
      %v332 = vshll.u32 %v331, 16
      %v333 = vadd.s32 %v332, %v330
      %vm334 = vcmp.eq.s32.totalorder %v317, %v333
      %v335 = vsel %vm334, 1, 0
      %v336 = vcvt.s32.f32 %v335
      %337 = vmatprep.subr.mxu0 0.0
      %338 = vmatpush1.msra.mxu0 %v167
      %339 = vmatprep.subr.mxu0 0.0
      %340 = vmatpush1.msra.mxu0 %v168
      %341 = vmatprep.subr.mxu0 0.0
      %342 = vmatpush1.msra.mxu0 %v169
      %343 = vmatprep.subr.mxu0 0.0
      %344 = vmatpush1.msra.mxu0 %v170
      %345 = vmatprep.subr.mxu0 0.0
      %346 = vmatpush1.msra.mxu0 %v171
      %347 = vmatprep.subr.mxu0 0.0
      %348 = vmatpush1.msra.mxu0 %v172
      %349 = vmatprep.subr.mxu0 0.0
      %350 = vmatpush1.msra.mxu0 %v173
      %351 = vmatprep.subr.mxu0 0.0
      %352 = vmatpush1.msra.mxu0 %v174
      %353 = vmatprep.subr.mxu0 0.0
      %354 = vmatpush1.msra.mxu0 %v175
      %355 = vmatprep.subr.mxu0 0.0
      %356 = vmatpush1.msra.mxu0 %v176
      %357 = vmatprep.subr.mxu0 0.0
      %358 = vmatpush1.msra.mxu0 %v177
      %359 = vmatprep.subr.mxu0 0.0
      %360 = vmatpush1.msra.mxu0 %v178
      %361 = vmatprep.subr.mxu0 0.0
      %362 = vmatpush1.msra.mxu0 %v179
      %363 = vmatprep.subr.mxu0 0.0
      %364 = vmatpush1.msra.mxu0 %v180
      %365 = vmatprep.subr.mxu0 0.0
      %366 = vmatpush1.msra.mxu0 %v181
      %367 = vmatprep.subr.mxu0 0.0
      %368 = vmatpush1.msra.mxu0 %v182
      %369 = vmatprep.subr.mxu0 0.0
      %370 = vmatpush1.msra.mxu0 0.0
      %371 = vmatprep.subr.mxu0 0.0
      %372 = vmatpush1.msra.mxu0 0.0
      %373 = vmatprep.subr.mxu0 0.0
      %374 = vmatpush1.msra.mxu0 0.0
      %375 = vmatprep.subr.mxu0 0.0
      %376 = vmatpush1.msra.mxu0 0.0
      %377 = vmatprep.subr.mxu0 0.0
      %378 = vmatpush1.msra.mxu0 0.0
      %379 = vmatprep.subr.mxu0 0.0
      %380 = vmatpush1.msra.mxu0 0.0
      %381 = vmatprep.subr.mxu0 0.0
      %382 = vmatpush1.msra.mxu0 0.0
      %383 = vmatprep.subr.mxu0 0.0
      %384 = vmatpush1.msra.mxu0 0.0
      %385 = vmatprep.subr.mxu0 0.0
      %386 = vmatpush1.msra.mxu0 0.0
      %387 = vmatprep.subr.mxu0 0.0
      %388 = vmatpush1.msra.mxu0 0.0
      %389 = vmatprep.subr.mxu0 0.0
      %390 = vmatpush1.msra.mxu0 0.0
      %391 = vmatprep.subr.mxu0 0.0
      %392 = vmatpush1.msra.mxu0 0.0
      %393 = vmatprep.subr.mxu0 0.0
      %394 = vmatpush1.msra.mxu0 0.0
      %395 = vmatprep.subr.mxu0 0.0
      %396 = vmatpush1.msra.mxu0 0.0
      %397 = vmatprep.subr.mxu0 0.0
      %398 = vmatpush1.msra.mxu0 0.0
      %399 = vmatprep.subr.mxu0 0.0
      %400 = vmatpush1.msra.mxu0 0.0
      %401 = vmatprep.mubr.f32.mxu0 0.0
      %402 = vmatmul.mubr.f32.gmra.mrb[0].mxu0 %v336
      %v403 = vpop.f32.mrb[0].mxu0
      %v404 = vadd.f32 0.0, %v403
      %v405 = vpop.f32.mrb[0].mxu0
      %406 = vdwg.mxu0
      %407 = vst.msk [vmem:[%s165] sm:$0xff] %vm183, %v404
      %p408 = scmp.lt.s32.totalorder %s14, 3
      %s409 = scalar_select %p408, %s14, 3
      %s410 = smul.addr %s409, 8
      %s411 = scalar_lea.vmem %s3, %s410
      // Predicated region
      $region33: #{msvq_forward.6} parent=31 // pred_check
        %p412 = pneg %p100
      $region34: #{msvq_forward.6} parent=31 // pred_check_branch
        %414 = sbr.rel (%p412) target = $region36
      $region35: #{msvq_forward.6} parent=31 // pred_region
        _
      $region36: #{msvq_forward.6} parent=31 // pred_fallthru
        _
    $region32: #{msvq_forward.6} parent=5 // pred_fallthru
      _
    %p415 = scmp.le.s32.totalorder 2, %s9
    // Predicated region
    $region37: #{msvq_forward.6} parent=5 // pred_check
      %p416 = pneg %p415
    $region38: #{msvq_forward.6} parent=5 // pred_check_branch
      %418 = sbr.rel (%p416) target = $region40
    $region39: #{msvq_forward.6} parent=5 // pred_region
      %s419 = ssub.s32 %s9, 2
      // Predicated region
      $region41: #{msvq_forward.6} parent=39 // pred_check
        %p420 = pneg %p106
      $region42: #{msvq_forward.6} parent=39 // pred_check_branch
        %422 = sbr.rel (%p420) target = $region44
      $region43: #{msvq_forward.6} parent=39 // pred_region
        %p423 = scmp.lt.s32.totalorder %s15, 3
        %s424 = scalar_select %p423, %s15, 3
        %s425 = smul.addr %s424, 8
        %s426 = scalar_lea.vmem %s3, %s425
      $region44: #{msvq_forward.6} parent=39 // pred_fallthru
        _
    $region40: #{msvq_forward.6} parent=5 // pred_fallthru
      _
  $region6: #{msvq_forward.6} parent=0 // loop_footer
    %s13 = sadd.s32 1, %s9
  $region7: #{msvq_forward.6} parent=0 // loop_footer_branch
    %8 = sbr.rel target = $region3
  $region8: #{msvq_forward.6} parent=0 // loop_exit
    _

// kernel: msvq_forward.8
$region0: #{msvq_forward.8}
  #allocation0 [shape = 'u32[]', space=smem, size = 0x4, offset = 0x4, fixed_abs, tag = 'smem constant byte address 0x4 - core index']
  #allocation1 [shape = 'u32[144,128]{1,0:T(1,128)}', space=vmem, size = 0x12000, scoped, tag = 'internal scratch']
  %s0 = inlined_call_operand.vmem [shape: f32[128,32], index: 0, kind: input, shape index: {}]
  %s1 = inlined_call_operand.vmem [shape: f32[128,32], index: 1, kind: input, shape index: {}]
  %s2 = inlined_call_operand.vmem [shape: f32[1,128], index: 2, kind: input, shape index: {}]
  %s3 = inlined_call_operand.vmem [shape: f32[128,32], index: 3, kind: output, shape index: {}]
  %s4 = sld [smem:[#allocation0]]
  $region45: #{msvq_forward.8} parent=0
    _
  %s6 = ssub.s32 1, %s4
  %s7 = scalar_select 0, %s6, %s4
  loop: start=0, step=1, limit=6
  $region2: #{msvq_forward.8} parent=0 // loop_pre_header
    _
  $region3: #{msvq_forward.8} parent=0 // loop_header
    %s9 = sphi 0, %s13
    %p10 = scmp.ge.s32.totalorder %s9, 6
    %s19 = sphi 0, %s21
    %s22 = sphi 0, %s19
    %s23 = sphi 0, %s22
    %s39 = sphi 0, %s23
    %s43 = sphi 0, %s43
    %s45 = sphi 0, %s43
    %s46 = sphi 0, %s45
    %s60 = sphi 0, %s46
    %s64 = sphi 0, %s64
    %s66 = sphi 0, %s64
    %s67 = sphi 0, %s66
    %s81 = sphi 0, %s67
    %s87 = sphi 0, %s89
    %s90 = sphi 0, %s87
    %s91 = sphi 0, %s90
    %s107 = sphi 0, %s91
  $region4: #{msvq_forward.8} parent=0 // loop_header_branch
    %12 = sbr.rel (%p10) target = $region8
  $region5: #{msvq_forward.8} parent=0 // loop_body
    %s14 = ssub.s32 %s9, 1
    %s15 = ssub.s32 %s9, 2
    %s16 = sadd.s32 %s9, 1
    %s17 = ssub.s32 %s9, %s16
    %p18 = scmp.eq.s32.totalorder %s17, 0
    %s20 = sadd.s32 %s19, 1
    %s21 = scalar_select %p18, %s19, %s20
    %p24 = pneg %p18
    %p25 = scmp.eq.s32.totalorder %s9, 3
    %p26 = por %p24, %p25
    %p27 = scmp.ne.s32.totalorder %s19, %s22
    %p28 = scmp.eq.s32.totalorder %s9, 0
    %p29 = por %p27, %p28
    %p30 = scmp.ne.s32.totalorder %s19, %s22
    %p31 = scmp.eq.s32.totalorder %s14, 3
    %p32 = por %p30, %p31
    %p33 = scmp.ne.s32.totalorder %s22, %s23
    %p34 = scmp.eq.s32.totalorder %s14, 0
    %p35 = por %p33, %p34
    %p36 = scmp.ne.s32.totalorder %s22, %s23
    %p37 = scmp.eq.s32.totalorder %s15, 3
    %p38 = por %p36, %p37
    %p40 = scmp.ne.s32.totalorder %s23, %s39
    %p41 = scmp.eq.s32.totalorder %s15, 0
    %p42 = por %p40, %p41
    %s44 = sadd.s32 %s43, 1
    %p47 = scmp.eq.s32.totalorder %s9, 3
    %p48 = scmp.ne.s32.totalorder %s43, %s45
    %p49 = scmp.eq.s32.totalorder %s9, 0
    %p50 = por %p48, %p49
    %p51 = scmp.ne.s32.totalorder %s43, %s45
    %p52 = scmp.eq.s32.totalorder %s14, 3
    %p53 = por %p51, %p52
    %p54 = scmp.ne.s32.totalorder %s45, %s46
    %p55 = scmp.eq.s32.totalorder %s14, 0
    %p56 = por %p54, %p55
    %p57 = scmp.ne.s32.totalorder %s45, %s46
    %p58 = scmp.eq.s32.totalorder %s15, 3
    %p59 = por %p57, %p58
    %p61 = scmp.ne.s32.totalorder %s46, %s60
    %p62 = scmp.eq.s32.totalorder %s15, 0
    %p63 = por %p61, %p62
    %s65 = sadd.s32 %s64, 1
    %p68 = scmp.eq.s32.totalorder %s9, 3
    %p69 = scmp.ne.s32.totalorder %s64, %s66
    %p70 = scmp.eq.s32.totalorder %s9, 0
    %p71 = por %p69, %p70
    %p72 = scmp.ne.s32.totalorder %s64, %s66
    %p73 = scmp.eq.s32.totalorder %s14, 3
    %p74 = por %p72, %p73
    %p75 = scmp.ne.s32.totalorder %s66, %s67
    %p76 = scmp.eq.s32.totalorder %s14, 0
    %p77 = por %p75, %p76
    %p78 = scmp.ne.s32.totalorder %s66, %s67
    %p79 = scmp.eq.s32.totalorder %s15, 3
    %p80 = por %p78, %p79
    %p82 = scmp.ne.s32.totalorder %s67, %s81
    %p83 = scmp.eq.s32.totalorder %s15, 0
    %p84 = por %p82, %p83
    %s85 = ssub.s32 %s9, %s16
    %p86 = scmp.eq.s32.totalorder %s85, 0
    %s88 = sadd.s32 %s87, 1
    %s89 = scalar_select %p86, %s87, %s88
    %p92 = pneg %p86
    %p93 = scmp.eq.s32.totalorder %s9, 3
    %p94 = por %p92, %p93
    %p95 = scmp.ne.s32.totalorder %s87, %s90
    %p96 = scmp.eq.s32.totalorder %s9, 0
    %p97 = por %p95, %p96
    %p98 = scmp.ne.s32.totalorder %s87, %s90
    %p99 = scmp.eq.s32.totalorder %s14, 3
    %p100 = por %p98, %p99
    %p101 = scmp.ne.s32.totalorder %s90, %s91
    %p102 = scmp.eq.s32.totalorder %s14, 0
    %p103 = por %p101, %p102
    %p104 = scmp.ne.s32.totalorder %s90, %s91
    %p105 = scmp.eq.s32.totalorder %s15, 3
    %p106 = por %p104, %p105
    %p108 = scmp.ne.s32.totalorder %s91, %s107
    %p109 = scmp.eq.s32.totalorder %s15, 0
    %p110 = por %p108, %p109
    %p111 = scmp.le.s32.totalorder 1, %s9
    %p112 = scmp.lt.s32.totalorder %s9, 5
    %p113 = pnand %p111, %p112
    %p114 = pneg %p113
    // Predicated region
    $region9: #{msvq_forward.8} parent=5 // pred_check
      _
    $region10: #{msvq_forward.8} parent=5 // pred_check_branch
      %116 = sbr.rel (%p113) target = $region12
    $region11: #{msvq_forward.8} parent=5 // pred_region
      %s117 = ssub.s32 %s9, 1
      // Predicated region
      $region13: #{msvq_forward.8} parent=11 // pred_check
        %p118 = pneg %p56
      $region14: #{msvq_forward.8} parent=11 // pred_check_branch
        %120 = sbr.rel (%p118) target = $region16
      $region15: #{msvq_forward.8} parent=11 // pred_region
        _
      $region16: #{msvq_forward.8} parent=11 // pred_fallthru
        _
      // Predicated region
      $region17: #{msvq_forward.8} parent=11 // pred_check
        %p121 = pneg %p77
      $region18: #{msvq_forward.8} parent=11 // pred_check_branch
        %123 = sbr.rel (%p121) target = $region20
      $region19: #{msvq_forward.8} parent=11 // pred_region
        _
      $region20: #{msvq_forward.8} parent=11 // pred_fallthru
        _
    $region12: #{msvq_forward.8} parent=5 // pred_fallthru
      _
    %p124 = scmp.lt.s32.totalorder %s9, 4
    // Predicated region
    $region21: #{msvq_forward.8} parent=5 // pred_check
      %p125 = pneg %p124
    $region22: #{msvq_forward.8} parent=5 // pred_check_branch
      %127 = sbr.rel (%p125) target = $region24
    $region23: #{msvq_forward.8} parent=5 // pred_region
      // Predicated region
      $region25: #{msvq_forward.8} parent=23 // pred_check
        %p128 = pneg %p29
      $region26: #{msvq_forward.8} parent=23 // pred_check_branch
        %130 = sbr.rel (%p128) target = $region28
      $region27: #{msvq_forward.8} parent=23 // pred_region
        %s131 = smul.u32 4, %s9
        %p132 = scmp.lt.s32.totalorder %s131, 15
        %s133 = scalar_select %p132, %s131, 15
        %s134 = smul.addr %s133, 8
        %s135 = scalar_lea.vmem %s0, %s134
        %s136 = smul.u32 4, %s9
      $region28: #{msvq_forward.8} parent=23 // pred_fallthru
        _
    $region24: #{msvq_forward.8} parent=5 // pred_fallthru
      _
    %p137 = scmp.le.s32.totalorder 1, %s9
    %p138 = scmp.lt.s32.totalorder %s9, 5
    %p139 = pnand %p137, %p138
    %p140 = pneg %p139
    // Predicated region
    $region29: #{msvq_forward.8} parent=5 // pred_check
      _
    $region30: #{msvq_forward.8} parent=5 // pred_check_branch
      %142 = sbr.rel (%p139) target = $region32
    $region31: #{msvq_forward.8} parent=5 // pred_region
      %s143 = ssub.s32 %s9, 1
      %s144 = smul.u32 4, %s14
      %p145 = scmp.lt.s32.totalorder %s144, 15
      %s146 = scalar_select %p145, %s144, 15
      %s147 = smul.addr %s146, 8
      %s148 = scalar_lea.vmem %s0, %s147
      %p149 = pneg %p35
      %p150 = pneg %p32
      %p151 = pneg %p56
      %p152 = pneg %p53
      %p153 = pneg %p77
      %p154 = pneg %p74
      %p155 = pneg %p103
      %p156 = pneg %p100
      %s157 = smul.u32 4, %s14
      %p158 = scmp.lt.s32.totalorder %s157, 15
      %s159 = scalar_select %p158, %s157, 15
      %s160 = smul.addr %s159, 8
      %s161 = scalar_lea.vmem %s3, %s160
      %s162 = smul.u32 4, %s14
      %p163 = scmp.lt.s32.totalorder %s162, 15
      %s164 = scalar_select %p163, %s162, 15
      %s165 = smul.addr %s164, 8
      %s166 = scalar_lea.vmem %s0, %s165
      %s167 = smul.u32 4, %s14
      %s168 = smul.u32 4, %s14
      %p169 = scmp.lt.s32.totalorder %s168, 15
      %s170 = scalar_select %p169, %s168, 15
      %s171 = smul.addr %s170, 8
      %s172 = scalar_lea.vmem %s3, %s171
      %s173 = smul.u32 4, %s14
      %v174 = vld [vmem:[%s166] sm:$0xff]
      %v175 = vld [vmem:[%s166 + $0x8] sm:$0xff]
      %v176 = vld [vmem:[%s166 + $0x10] sm:$0xff]
      %v177 = vld [vmem:[%s166 + $0x18] sm:$0xff]
      %v178 = vld [vmem:[%s1] sm:$0xff]
      %v179 = vld [vmem:[%s1 + $0x8] sm:$0xff]
      %v180 = vld [vmem:[%s1 + $0x10] sm:$0xff]
      %v181 = vld [vmem:[%s1 + $0x18] sm:$0xff]
      %v182 = vld [vmem:[%s1 + $0x20] sm:$0xff]
      %v183 = vld [vmem:[%s1 + $0x28] sm:$0xff]
      %v184 = vld [vmem:[%s1 + $0x30] sm:$0xff]
      %v185 = vld [vmem:[%s1 + $0x38] sm:$0xff]
      %v186 = vld [vmem:[%s1 + $0x40] sm:$0xff]
      %v187 = vld [vmem:[%s1 + $0x48] sm:$0xff]
      %v188 = vld [vmem:[%s1 + $0x50] sm:$0xff]
      %v189 = vld [vmem:[%s1 + $0x58] sm:$0xff]
      %v190 = vld [vmem:[%s1 + $0x60] sm:$0xff]
      %v191 = vld [vmem:[%s1 + $0x68] sm:$0xff]
      %v192 = vld [vmem:[%s1 + $0x70] sm:$0xff]
      %v193 = vld [vmem:[%s1 + $0x78] sm:$0xff]
      %vm194 = vcmask 261120
      %v196 = vsel %vm194, %v174, 0
      %v199 = vsel %vm194, %v175, 0
      %v202 = vsel %vm194, %v176, 0
      %v205 = vsel %vm194, %v177, 0
      %v208 = vsel %vm194, %v178, 0
      %v211 = vsel %vm194, %v179, 0
      %v214 = vsel %vm194, %v180, 0
      %v217 = vsel %vm194, %v181, 0
      %v220 = vsel %vm194, %v182, 0
      %v223 = vsel %vm194, %v183, 0
      %v226 = vsel %vm194, %v184, 0
      %v229 = vsel %vm194, %v185, 0
      %v232 = vsel %vm194, %v186, 0
      %v235 = vsel %vm194, %v187, 0
      %v238 = vsel %vm194, %v188, 0
      %v241 = vsel %vm194, %v189, 0
      %v244 = vsel %vm194, %v190, 0
      %v247 = vsel %vm194, %v191, 0
      %v250 = vsel %vm194, %v192, 0
      %v253 = vsel %vm194, %v193, 0
      %255 = vmatprep.subr.mxu0 0.0
      %256 = vmatpush1.xpose.msra.mxu0 %v208
      %257 = vmatprep.subr.mxu0 0.0
      %258 = vmatpush1.xpose.msra.mxu0 %v211
      %259 = vmatprep.subr.mxu0 0.0
      %260 = vmatpush1.xpose.msra.mxu0 %v214
      %261 = vmatprep.subr.mxu0 0.0
      %262 = vmatpush1.xpose.msra.mxu0 %v217
      %263 = vmatprep.subr.mxu0 0.0
      %264 = vmatpush1.xpose.msra.mxu0 %v220
      %265 = vmatprep.subr.mxu0 0.0
      %266 = vmatpush1.xpose.msra.mxu0 %v223
      %267 = vmatprep.subr.mxu0 0.0
      %268 = vmatpush1.xpose.msra.mxu0 %v226
      %269 = vmatprep.subr.mxu0 0.0
      %270 = vmatpush1.xpose.msra.mxu0 %v229
      %271 = vmatprep.subr.mxu0 0.0
      %272 = vmatpush1.xpose.msra.mxu0 %v232
      %273 = vmatprep.subr.mxu0 0.0
      %274 = vmatpush1.xpose.msra.mxu0 %v235
      %275 = vmatprep.subr.mxu0 0.0
      %276 = vmatpush1.xpose.msra.mxu0 %v238
      %277 = vmatprep.subr.mxu0 0.0
      %278 = vmatpush1.xpose.msra.mxu0 %v241
      %279 = vmatprep.subr.mxu0 0.0
      %280 = vmatpush1.xpose.msra.mxu0 %v244
      %281 = vmatprep.subr.mxu0 0.0
      %282 = vmatpush1.xpose.msra.mxu0 %v247
      %283 = vmatprep.subr.mxu0 0.0
      %284 = vmatpush1.xpose.msra.mxu0 %v250
      %285 = vmatprep.subr.mxu0 0.0
      %286 = vmatpush1.xpose.msra.mxu0 %v253
      %287 = vmatprep.subr.mxu0 0.0
      %288 = vmatpush1.xpose.msra.mxu0 0.0
      %289 = vmatprep.subr.mxu0 0.0
      %290 = vmatpush1.xpose.msra.mxu0 0.0
      %291 = vmatprep.subr.mxu0 0.0
      %292 = vmatpush1.xpose.msra.mxu0 0.0
      %293 = vmatprep.subr.mxu0 0.0
      %294 = vmatpush1.xpose.msra.mxu0 0.0
      %295 = vmatprep.subr.mxu0 0.0
      %296 = vmatpush1.xpose.msra.mxu0 0.0
      %297 = vmatprep.subr.mxu0 0.0
      %298 = vmatpush1.xpose.msra.mxu0 0.0
      %299 = vmatprep.subr.mxu0 0.0
      %300 = vmatpush1.xpose.msra.mxu0 0.0
      %301 = vmatprep.subr.mxu0 0.0
      %302 = vmatpush1.xpose.msra.mxu0 0.0
      %303 = vmatprep.subr.mxu0 0.0
      %304 = vmatpush1.xpose.msra.mxu0 0.0
      %305 = vmatprep.subr.mxu0 0.0
      %306 = vmatpush1.xpose.msra.mxu0 0.0
      %307 = vmatprep.subr.mxu0 0.0
      %308 = vmatpush1.xpose.msra.mxu0 0.0
      %309 = vmatprep.subr.mxu0 0.0
      %310 = vmatpush1.xpose.msra.mxu0 0.0
      %311 = vmatprep.subr.mxu0 0.0
      %312 = vmatpush1.xpose.msra.mxu0 0.0
      %313 = vmatprep.subr.mxu0 0.0
      %314 = vmatpush1.xpose.msra.mxu0 0.0
      %315 = vmatprep.subr.mxu0 0.0
      %316 = vmatpush1.xpose.msra.mxu0 0.0
      %317 = vmatprep.subr.mxu0 0.0
      %318 = vmatpush1.xpose.msra.mxu0 0.0
      %319 = vmatprep.mubr.f32.mxu0 0.0
      %320 = vmatmul.mubr.f32.gmra.mrb[0].mxu0 %v196
      %v321 = vpop.f32.mrb[0].mxu0
      %v322 = vadd.f32 0.0, %v321
      %v323 = vpop.f32.mrb[0].mxu0
      %324 = vmatprep.mubr.f32.mxu0 0.0
      %325 = vmatmul.mubr.f32.gmra.mrb[0].mxu0 %v199
      %v326 = vpop.f32.mrb[0].mxu0
      %v327 = vadd.f32 0.0, %v326
      %v328 = vpop.f32.mrb[0].mxu0
      %329 = vmatprep.mubr.f32.mxu0 0.0
      %330 = vmatmul.mubr.f32.gmra.mrb[0].mxu0 %v202
      %v331 = vpop.f32.mrb[0].mxu0
      %v332 = vadd.f32 0.0, %v331
      %v333 = vpop.f32.mrb[0].mxu0
      %334 = vmatprep.mubr.f32.mxu0 0.0
      %335 = vmatmul.mubr.f32.gmra.mrb[0].mxu0 %v205
      %v336 = vpop.f32.mrb[0].mxu0
      %v337 = vadd.f32 0.0, %v336
      %v338 = vpop.f32.mrb[0].mxu0
      %339 = vdwg.mxu0
      %v340 = vld [vmem:[%s2] sm:$0x1]
      %v341 = vmul.f32 %v322, 2.0
      %v342 = vmul.f32 %v327, 2.0
      %v343 = vmul.f32 %v332, 2.0
      %v344 = vmul.f32 %v337, 2.0
      %v346 = vlaneseq
      %v347 = vshrl.u32 %v346, 7
      %v348 = vsub.s32 0, %v347
      %v349 = vrot.slane %v340, %v348
      %v351 = vsub.f32 %v349, %v341
      %v352 = vsub.f32 %v349, %v342
      %v353 = vsub.f32 %v349, %v343
      %v354 = vsub.f32 %v349, %v344
      %355 = vmin.xlane.f32.xlu0 %v351
      %v356 = vpop.xlane.xlu0 %355
      %357 = vmin.xlane.f32.xlu0 %v352
      %v358 = vpop.xlane.xlu0 %357
      %359 = vmin.xlane.f32.xlu0 %v353
      %v360 = vpop.xlane.xlu0 %359
      %361 = vmin.xlane.f32.xlu0 %v354
      %v362 = vpop.xlane.xlu0 %361
      %v363 = vlaneseq
      %v364 = vand.u32 %v363, 127
      %vm365 = vcmp.le.f32.partialorder %v351, %v356
      %vm366 = vcmp.le.f32.partialorder %v352, %v358
      %vm367 = vcmp.le.f32.partialorder %v353, %v360
      %vm368 = vcmp.le.f32.partialorder %v354, %v362
      %v369 = vsel %vm365, %v364, 128
      %v370 = vsel %vm366, %v364, 128
      %v371 = vsel %vm367, %v364, 128
      %v372 = vsel %vm368, %v364, 128
      %v373 = vand.u32 %v369, 65535
      %v374 = vshra.s32 %v369, 16
      %v375 = vcvt.s32.f32 %v373
      %v376 = vcvt.s32.f32 %v374
      %377 = vmin.xlane.f32.xlu0 %v376
      %v378 = vpop.xlane.xlu0 %377
      %vm379 = vcmp.eq.f32.partialorder %v376, %v378
      %v380 = vsel %vm379, %v375, inf
      %381 = vmin.xlane.f32.xlu0 %v380
      %v382 = vpop.xlane.xlu0 %381
      %v383 = vcvt.f32.s32 %v382
      %v384 = vcvt.f32.s32 %v378
      %v385 = vshll.u32 %v384, 16
      %v386 = vadd.s32 %v385, %v383
      %v387 = vand.u32 %v370, 65535
      %v388 = vshra.s32 %v370, 16
      %v389 = vcvt.s32.f32 %v387
      %v390 = vcvt.s32.f32 %v388
      %391 = vmin.xlane.f32.xlu0 %v390
      %v392 = vpop.xlane.xlu0 %391
      %vm393 = vcmp.eq.f32.partialorder %v390, %v392
      %v394 = vsel %vm393, %v389, inf
      %395 = vmin.xlane.f32.xlu0 %v394
      %v396 = vpop.xlane.xlu0 %395
      %v397 = vcvt.f32.s32 %v396
      %v398 = vcvt.f32.s32 %v392
      %v399 = vshll.u32 %v398, 16
      %v400 = vadd.s32 %v399, %v397
      %v401 = vand.u32 %v371, 65535
      %v402 = vshra.s32 %v371, 16
      %v403 = vcvt.s32.f32 %v401
      %v404 = vcvt.s32.f32 %v402
      %405 = vmin.xlane.f32.xlu0 %v404
      %v406 = vpop.xlane.xlu0 %405
      %vm407 = vcmp.eq.f32.partialorder %v404, %v406
      %v408 = vsel %vm407, %v403, inf
      %409 = vmin.xlane.f32.xlu0 %v408
      %v410 = vpop.xlane.xlu0 %409
      %v411 = vcvt.f32.s32 %v410
      %v412 = vcvt.f32.s32 %v406
      %v413 = vshll.u32 %v412, 16
      %v414 = vadd.s32 %v413, %v411
      %v415 = vand.u32 %v372, 65535
      %v416 = vshra.s32 %v372, 16
      %v417 = vcvt.s32.f32 %v415
      %v418 = vcvt.s32.f32 %v416
      %419 = vmin.xlane.f32.xlu0 %v418
      %v420 = vpop.xlane.xlu0 %419
      %vm421 = vcmp.eq.f32.partialorder %v418, %v420
      %v422 = vsel %vm421, %v417, inf
      %423 = vmin.xlane.f32.xlu0 %v422
      %v424 = vpop.xlane.xlu0 %423
      %v425 = vcvt.f32.s32 %v424
      %v426 = vcvt.f32.s32 %v420
      %v427 = vshll.u32 %v426, 16
      %v428 = vadd.s32 %v427, %v425
      %vm429 = vcmp.eq.s32.totalorder %v364, %v386
      %vm430 = vcmp.eq.s32.totalorder %v364, %v400
      %vm431 = vcmp.eq.s32.totalorder %v364, %v414
      %vm432 = vcmp.eq.s32.totalorder %v364, %v428
      %v433 = vsel %vm429, 1, 0
      %v434 = vsel %vm430, 1, 0
      %v435 = vsel %vm431, 1, 0
      %v436 = vsel %vm432, 1, 0
      %v437 = vcvt.s32.f32 %v433
      %v438 = vcvt.s32.f32 %v434
      %v439 = vcvt.s32.f32 %v435
      %v440 = vcvt.s32.f32 %v436
      %441 = vmatprep.subr.mxu0 0.0
      %442 = vmatpush1.msra.mxu0 %v178
      %443 = vmatprep.subr.mxu0 0.0
      %444 = vmatpush1.msra.mxu0 %v179
      %445 = vmatprep.subr.mxu0 0.0
      %446 = vmatpush1.msra.mxu0 %v180
      %447 = vmatprep.subr.mxu0 0.0
      %448 = vmatpush1.msra.mxu0 %v181
      %449 = vmatprep.subr.mxu0 0.0
      %450 = vmatpush1.msra.mxu0 %v182
      %451 = vmatprep.subr.mxu0 0.0
      %452 = vmatpush1.msra.mxu0 %v183
      %453 = vmatprep.subr.mxu0 0.0
      %454 = vmatpush1.msra.mxu0 %v184
      %455 = vmatprep.subr.mxu0 0.0
      %456 = vmatpush1.msra.mxu0 %v185
      %457 = vmatprep.subr.mxu0 0.0
      %458 = vmatpush1.msra.mxu0 %v186
      %459 = vmatprep.subr.mxu0 0.0
      %460 = vmatpush1.msra.mxu0 %v187
      %461 = vmatprep.subr.mxu0 0.0
      %462 = vmatpush1.msra.mxu0 %v188
      %463 = vmatprep.subr.mxu0 0.0
      %464 = vmatpush1.msra.mxu0 %v189
      %465 = vmatprep.subr.mxu0 0.0
      %466 = vmatpush1.msra.mxu0 %v190
      %467 = vmatprep.subr.mxu0 0.0
      %468 = vmatpush1.msra.mxu0 %v191
      %469 = vmatprep.subr.mxu0 0.0
      %470 = vmatpush1.msra.mxu0 %v192
      %471 = vmatprep.subr.mxu0 0.0
      %472 = vmatpush1.msra.mxu0 %v193
      %473 = vmatprep.subr.mxu0 0.0
      %474 = vmatpush1.msra.mxu0 0.0
      %475 = vmatprep.subr.mxu0 0.0
      %476 = vmatpush1.msra.mxu0 0.0
      %477 = vmatprep.subr.mxu0 0.0
      %478 = vmatpush1.msra.mxu0 0.0
      %479 = vmatprep.subr.mxu0 0.0
      %480 = vmatpush1.msra.mxu0 0.0
      %481 = vmatprep.subr.mxu0 0.0
      %482 = vmatpush1.msra.mxu0 0.0
      %483 = vmatprep.subr.mxu0 0.0
      %484 = vmatpush1.msra.mxu0 0.0
      %485 = vmatprep.subr.mxu0 0.0
      %486 = vmatpush1.msra.mxu0 0.0
      %487 = vmatprep.subr.mxu0 0.0
      %488 = vmatpush1.msra.mxu0 0.0
      %489 = vmatprep.subr.mxu0 0.0
      %490 = vmatpush1.msra.mxu0 0.0
      %491 = vmatprep.subr.mxu0 0.0
      %492 = vmatpush1.msra.mxu0 0.0
      %493 = vmatprep.subr.mxu0 0.0
      %494 = vmatpush1.msra.mxu0 0.0
      %495 = vmatprep.subr.mxu0 0.0
      %496 = vmatpush1.msra.mxu0 0.0
      %497 = vmatprep.subr.mxu0 0.0
      %498 = vmatpush1.msra.mxu0 0.0
      %499 = vmatprep.subr.mxu0 0.0
      %500 = vmatpush1.msra.mxu0 0.0
      %501 = vmatprep.subr.mxu0 0.0
      %502 = vmatpush1.msra.mxu0 0.0
      %503 = vmatprep.subr.mxu0 0.0
      %504 = vmatpush1.msra.mxu0 0.0
      %505 = vmatprep.mubr.f32.mxu0 0.0
      %506 = vmatmul.mubr.f32.gmra.mrb[0].mxu0 %v437
      %v507 = vpop.f32.mrb[0].mxu0
      %v508 = vadd.f32 0.0, %v507
      %v509 = vpop.f32.mrb[0].mxu0
      %510 = vmatprep.mubr.f32.mxu0 0.0
      %511 = vmatmul.mubr.f32.gmra.mrb[0].mxu0 %v438
      %v512 = vpop.f32.mrb[0].mxu0
      %v513 = vadd.f32 0.0, %v512
      %v514 = vpop.f32.mrb[0].mxu0
      %515 = vmatprep.mubr.f32.mxu0 0.0
      %516 = vmatmul.mubr.f32.gmra.mrb[0].mxu0 %v439
      %v517 = vpop.f32.mrb[0].mxu0
      %v518 = vadd.f32 0.0, %v517
      %v519 = vpop.f32.mrb[0].mxu0
      %520 = vmatprep.mubr.f32.mxu0 0.0
      %521 = vmatmul.mubr.f32.gmra.mrb[0].mxu0 %v440
      %v522 = vpop.f32.mrb[0].mxu0
      %v523 = vadd.f32 0.0, %v522
      %v524 = vpop.f32.mrb[0].mxu0
      %525 = vdwg.mxu0
      %526 = vst.msk [vmem:[%s172] sm:$0xff] %vm194, %v508
      %527 = vst.msk [vmem:[%s172 + $0x8] sm:$0xff] %vm194, %v513
      %528 = vst.msk [vmem:[%s172 + $0x10] sm:$0xff] %vm194, %v518
      %529 = vst.msk [vmem:[%s172 + $0x18] sm:$0xff] %vm194, %v523
      %s530 = smul.u32 4, %s14
      %p531 = scmp.lt.s32.totalorder %s530, 15
      %s532 = scalar_select %p531, %s530, 15
      %s533 = smul.addr %s532, 8
      %s534 = scalar_lea.vmem %s3, %s533
      // Predicated region
      $region33: #{msvq_forward.8} parent=31 // pred_check
        %p535 = pneg %p100
      $region34: #{msvq_forward.8} parent=31 // pred_check_branch
        %537 = sbr.rel (%p535) target = $region36
      $region35: #{msvq_forward.8} parent=31 // pred_region
        %s538 = smul.u32 4, %s14
      $region36: #{msvq_forward.8} parent=31 // pred_fallthru
        _
    $region32: #{msvq_forward.8} parent=5 // pred_fallthru
      _
    %p539 = scmp.le.s32.totalorder 2, %s9
    // Predicated region
    $region37: #{msvq_forward.8} parent=5 // pred_check
      %p540 = pneg %p539
    $region38: #{msvq_forward.8} parent=5 // pred_check_branch
      %542 = sbr.rel (%p540) target = $region40
    $region39: #{msvq_forward.8} parent=5 // pred_region
      %s543 = ssub.s32 %s9, 2
      // Predicated region
      $region41: #{msvq_forward.8} parent=39 // pred_check
        %p544 = pneg %p106
      $region42: #{msvq_forward.8} parent=39 // pred_check_branch
        %546 = sbr.rel (%p544) target = $region44
      $region43: #{msvq_forward.8} parent=39 // pred_region
        %s547 = smul.u32 4, %s15
        %p548 = scmp.lt.s32.totalorder %s547, 15
        %s549 = scalar_select %p548, %s547, 15
        %s550 = smul.addr %s549, 8
        %s551 = scalar_lea.vmem %s3, %s550
      $region44: #{msvq_forward.8} parent=39 // pred_fallthru
        _
    $region40: #{msvq_forward.8} parent=5 // pred_fallthru
      _
  $region6: #{msvq_forward.8} parent=0 // loop_footer
    %s13 = sadd.s32 1, %s9
  $region7: #{msvq_forward.8} parent=0 // loop_footer_branch
    %8 = sbr.rel target = $region3
  $region8: #{msvq_forward.8} parent=0 // loop_exit
    _

// kernel: msvq_forward.10
$region0: #{msvq_forward.10}
  #allocation0 [shape = 'u32[]', space=smem, size = 0x4, offset = 0x4, fixed_abs, tag = 'smem constant byte address 0x4 - core index']
  #allocation1 [shape = 'u32[144,128]{1,0:T(1,128)}', space=vmem, size = 0x12000, scoped, tag = 'internal scratch']
  %s0 = inlined_call_operand.vmem [shape: f32[512,32], index: 0, kind: input, shape index: {}]
  %s1 = inlined_call_operand.vmem [shape: f32[128,32], index: 1, kind: input, shape index: {}]
  %s2 = inlined_call_operand.vmem [shape: f32[1,128], index: 2, kind: input, shape index: {}]
  %s3 = inlined_call_operand.vmem [shape: f32[512,32], index: 3, kind: output, shape index: {}]
  %s4 = sld [smem:[#allocation0]]
  $region45: #{msvq_forward.10} parent=0
    _
  %s6 = ssub.s32 1, %s4
  %s7 = scalar_select 0, %s6, %s4
  loop: start=0, step=1, limit=6
  $region2: #{msvq_forward.10} parent=0 // loop_pre_header
    _
  $region3: #{msvq_forward.10} parent=0 // loop_header
    %s9 = sphi 0, %s13
    %p10 = scmp.ge.s32.totalorder %s9, 6
    %s19 = sphi 0, %s21
    %s22 = sphi 0, %s19
    %s23 = sphi 0, %s22
    %s39 = sphi 0, %s23
    %s43 = sphi 0, %s43
    %s45 = sphi 0, %s43
    %s46 = sphi 0, %s45
    %s60 = sphi 0, %s46
    %s64 = sphi 0, %s64
    %s66 = sphi 0, %s64
    %s67 = sphi 0, %s66
    %s81 = sphi 0, %s67
    %s87 = sphi 0, %s89
    %s90 = sphi 0, %s87
    %s91 = sphi 0, %s90
    %s107 = sphi 0, %s91
  $region4: #{msvq_forward.10} parent=0 // loop_header_branch
    %12 = sbr.rel (%p10) target = $region8
  $region5: #{msvq_forward.10} parent=0 // loop_body
    %s14 = ssub.s32 %s9, 1
    %s15 = ssub.s32 %s9, 2
    %s16 = sadd.s32 %s9, 1
    %s17 = ssub.s32 %s9, %s16
    %p18 = scmp.eq.s32.totalorder %s17, 0
    %s20 = sadd.s32 %s19, 1
    %s21 = scalar_select %p18, %s19, %s20
    %p24 = pneg %p18
    %p25 = scmp.eq.s32.totalorder %s9, 3
    %p26 = por %p24, %p25
    %p27 = scmp.ne.s32.totalorder %s19, %s22
    %p28 = scmp.eq.s32.totalorder %s9, 0
    %p29 = por %p27, %p28
    %p30 = scmp.ne.s32.totalorder %s19, %s22
    %p31 = scmp.eq.s32.totalorder %s14, 3
    %p32 = por %p30, %p31
    %p33 = scmp.ne.s32.totalorder %s22, %s23
    %p34 = scmp.eq.s32.totalorder %s14, 0
    %p35 = por %p33, %p34
    %p36 = scmp.ne.s32.totalorder %s22, %s23
    %p37 = scmp.eq.s32.totalorder %s15, 3
    %p38 = por %p36, %p37
    %p40 = scmp.ne.s32.totalorder %s23, %s39
    %p41 = scmp.eq.s32.totalorder %s15, 0
    %p42 = por %p40, %p41
    %s44 = sadd.s32 %s43, 1
    %p47 = scmp.eq.s32.totalorder %s9, 3
    %p48 = scmp.ne.s32.totalorder %s43, %s45
    %p49 = scmp.eq.s32.totalorder %s9, 0
    %p50 = por %p48, %p49
    %p51 = scmp.ne.s32.totalorder %s43, %s45
    %p52 = scmp.eq.s32.totalorder %s14, 3
    %p53 = por %p51, %p52
    %p54 = scmp.ne.s32.totalorder %s45, %s46
    %p55 = scmp.eq.s32.totalorder %s14, 0
    %p56 = por %p54, %p55
    %p57 = scmp.ne.s32.totalorder %s45, %s46
    %p58 = scmp.eq.s32.totalorder %s15, 3
    %p59 = por %p57, %p58
    %p61 = scmp.ne.s32.totalorder %s46, %s60
    %p62 = scmp.eq.s32.totalorder %s15, 0
    %p63 = por %p61, %p62
    %s65 = sadd.s32 %s64, 1
    %p68 = scmp.eq.s32.totalorder %s9, 3
    %p69 = scmp.ne.s32.totalorder %s64, %s66
    %p70 = scmp.eq.s32.totalorder %s9, 0
    %p71 = por %p69, %p70
    %p72 = scmp.ne.s32.totalorder %s64, %s66
    %p73 = scmp.eq.s32.totalorder %s14, 3
    %p74 = por %p72, %p73
    %p75 = scmp.ne.s32.totalorder %s66, %s67
    %p76 = scmp.eq.s32.totalorder %s14, 0
    %p77 = por %p75, %p76
    %p78 = scmp.ne.s32.totalorder %s66, %s67
    %p79 = scmp.eq.s32.totalorder %s15, 3
    %p80 = por %p78, %p79
    %p82 = scmp.ne.s32.totalorder %s67, %s81
    %p83 = scmp.eq.s32.totalorder %s15, 0
    %p84 = por %p82, %p83
    %s85 = ssub.s32 %s9, %s16
    %p86 = scmp.eq.s32.totalorder %s85, 0
    %s88 = sadd.s32 %s87, 1
    %s89 = scalar_select %p86, %s87, %s88
    %p92 = pneg %p86
    %p93 = scmp.eq.s32.totalorder %s9, 3
    %p94 = por %p92, %p93
    %p95 = scmp.ne.s32.totalorder %s87, %s90
    %p96 = scmp.eq.s32.totalorder %s9, 0
    %p97 = por %p95, %p96
    %p98 = scmp.ne.s32.totalorder %s87, %s90
    %p99 = scmp.eq.s32.totalorder %s14, 3
    %p100 = por %p98, %p99
    %p101 = scmp.ne.s32.totalorder %s90, %s91
    %p102 = scmp.eq.s32.totalorder %s14, 0
    %p103 = por %p101, %p102
    %p104 = scmp.ne.s32.totalorder %s90, %s91
    %p105 = scmp.eq.s32.totalorder %s15, 3
    %p106 = por %p104, %p105
    %p108 = scmp.ne.s32.totalorder %s91, %s107
    %p109 = scmp.eq.s32.totalorder %s15, 0
    %p110 = por %p108, %p109
    %p111 = scmp.le.s32.totalorder 1, %s9
    %p112 = scmp.lt.s32.totalorder %s9, 5
    %p113 = pnand %p111, %p112
    %p114 = pneg %p113
    // Predicated region
    $region9: #{msvq_forward.10} parent=5 // pred_check
      _
    $region10: #{msvq_forward.10} parent=5 // pred_check_branch
      %116 = sbr.rel (%p113) target = $region12
    $region11: #{msvq_forward.10} parent=5 // pred_region
      %s117 = ssub.s32 %s9, 1
      // Predicated region
      $region13: #{msvq_forward.10} parent=11 // pred_check
        %p118 = pneg %p56
      $region14: #{msvq_forward.10} parent=11 // pred_check_branch
        %120 = sbr.rel (%p118) target = $region16
      $region15: #{msvq_forward.10} parent=11 // pred_region
        _
      $region16: #{msvq_forward.10} parent=11 // pred_fallthru
        _
      // Predicated region
      $region17: #{msvq_forward.10} parent=11 // pred_check
        %p121 = pneg %p77
      $region18: #{msvq_forward.10} parent=11 // pred_check_branch
        %123 = sbr.rel (%p121) target = $region20
      $region19: #{msvq_forward.10} parent=11 // pred_region
        _
      $region20: #{msvq_forward.10} parent=11 // pred_fallthru
        _
    $region12: #{msvq_forward.10} parent=5 // pred_fallthru
      _
    %p124 = scmp.lt.s32.totalorder %s9, 4
    // Predicated region
    $region21: #{msvq_forward.10} parent=5 // pred_check
      %p125 = pneg %p124
    $region22: #{msvq_forward.10} parent=5 // pred_check_branch
      %127 = sbr.rel (%p125) target = $region24
    $region23: #{msvq_forward.10} parent=5 // pred_region
      // Predicated region
      $region25: #{msvq_forward.10} parent=23 // pred_check
        %p128 = pneg %p29
      $region26: #{msvq_forward.10} parent=23 // pred_check_branch
        %130 = sbr.rel (%p128) target = $region28
      $region27: #{msvq_forward.10} parent=23 // pred_region
        %s131 = smul.u32 16, %s9
        %p132 = scmp.lt.s32.totalorder %s131, 63
        %s133 = scalar_select %p132, %s131, 63
        %s134 = smul.addr %s133, 8
        %s135 = scalar_lea.vmem %s0, %s134
        %s136 = smul.u32 16, %s9
      $region28: #{msvq_forward.10} parent=23 // pred_fallthru
        _
    $region24: #{msvq_forward.10} parent=5 // pred_fallthru
      _
    %p137 = scmp.le.s32.totalorder 1, %s9
    %p138 = scmp.lt.s32.totalorder %s9, 5
    %p139 = pnand %p137, %p138
    %p140 = pneg %p139
    // Predicated region
    $region29: #{msvq_forward.10} parent=5 // pred_check
      _
    $region30: #{msvq_forward.10} parent=5 // pred_check_branch
      %142 = sbr.rel (%p139) target = $region32
    $region31: #{msvq_forward.10} parent=5 // pred_region
      %s143 = ssub.s32 %s9, 1
      %s144 = smul.u32 16, %s14
      %p145 = scmp.lt.s32.totalorder %s144, 63
      %s146 = scalar_select %p145, %s144, 63
      %s147 = smul.addr %s146, 8
      %s148 = scalar_lea.vmem %s0, %s147
      %p149 = pneg %p35
      %p150 = pneg %p32
      %p151 = pneg %p56
      %p152 = pneg %p53
      %p153 = pneg %p77
      %p154 = pneg %p74
      %p155 = pneg %p103
      %p156 = pneg %p100
      %s157 = smul.u32 16, %s14
      %p158 = scmp.lt.s32.totalorder %s157, 63
      %s159 = scalar_select %p158, %s157, 63
      %s160 = smul.addr %s159, 8
      %s161 = scalar_lea.vmem %s3, %s160
      %s162 = smul.u32 16, %s14
      %p163 = scmp.lt.s32.totalorder %s162, 63
      %s164 = scalar_select %p163, %s162, 63
      %s165 = smul.addr %s164, 8
      %s166 = scalar_lea.vmem %s0, %s165
      %s167 = smul.u32 16, %s14
      %s168 = smul.u32 16, %s14
      %p169 = scmp.lt.s32.totalorder %s168, 63
      %s170 = scalar_select %p169, %s168, 63
      %s171 = smul.addr %s170, 8
      %s172 = scalar_lea.vmem %s3, %s171
      %s173 = smul.u32 16, %s14
      %v174 = vld [vmem:[%s166] sm:$0xff]
      %v175 = vld [vmem:[%s166 + $0x8] sm:$0xff]
      %v176 = vld [vmem:[%s166 + $0x10] sm:$0xff]
      %v177 = vld [vmem:[%s166 + $0x18] sm:$0xff]
      %v178 = vld [vmem:[%s166 + $0x20] sm:$0xff]
      %v179 = vld [vmem:[%s166 + $0x28] sm:$0xff]
      %v180 = vld [vmem:[%s166 + $0x30] sm:$0xff]
      %v181 = vld [vmem:[%s166 + $0x38] sm:$0xff]
      %v182 = vld [vmem:[%s166 + $0x40] sm:$0xff]
      %v183 = vld [vmem:[%s166 + $0x48] sm:$0xff]
      %v184 = vld [vmem:[%s166 + $0x50] sm:$0xff]
      %v185 = vld [vmem:[%s166 + $0x58] sm:$0xff]
      %v186 = vld [vmem:[%s166 + $0x60] sm:$0xff]
      %v187 = vld [vmem:[%s166 + $0x68] sm:$0xff]
      %v188 = vld [vmem:[%s166 + $0x70] sm:$0xff]
      %v189 = vld [vmem:[%s166 + $0x78] sm:$0xff]
      %v190 = vld [vmem:[%s1] sm:$0xff]
      %v191 = vld [vmem:[%s1 + $0x8] sm:$0xff]
      %v192 = vld [vmem:[%s1 + $0x10] sm:$0xff]
      %v193 = vld [vmem:[%s1 + $0x18] sm:$0xff]
      %v194 = vld [vmem:[%s1 + $0x20] sm:$0xff]
      %v195 = vld [vmem:[%s1 + $0x28] sm:$0xff]
      %v196 = vld [vmem:[%s1 + $0x30] sm:$0xff]
      %v197 = vld [vmem:[%s1 + $0x38] sm:$0xff]
      %v198 = vld [vmem:[%s1 + $0x40] sm:$0xff]
      %v199 = vld [vmem:[%s1 + $0x48] sm:$0xff]
      %v200 = vld [vmem:[%s1 + $0x50] sm:$0xff]
      %v201 = vld [vmem:[%s1 + $0x58] sm:$0xff]
      %v202 = vld [vmem:[%s1 + $0x60] sm:$0xff]
      %v203 = vld [vmem:[%s1 + $0x68] sm:$0xff]
      %v204 = vld [vmem:[%s1 + $0x70] sm:$0xff]
      %v205 = vld [vmem:[%s1 + $0x78] sm:$0xff]
      %vm206 = vcmask 261120
      %v208 = vsel %vm206, %v174, 0
      %v211 = vsel %vm206, %v175, 0
      %v214 = vsel %vm206, %v176, 0
      %v217 = vsel %vm206, %v177, 0
      %v220 = vsel %vm206, %v178, 0
      %v223 = vsel %vm206, %v179, 0
      %v226 = vsel %vm206, %v180, 0
      %v229 = vsel %vm206, %v181, 0
      %v232 = vsel %vm206, %v182, 0
      %v235 = vsel %vm206, %v183, 0
      %v238 = vsel %vm206, %v184, 0
      %v241 = vsel %vm206, %v185, 0
      %v244 = vsel %vm206, %v186, 0
      %v247 = vsel %vm206, %v187, 0
      %v250 = vsel %vm206, %v188, 0
      %v253 = vsel %vm206, %v189, 0
      %v256 = vsel %vm206, %v190, 0
      %v259 = vsel %vm206, %v191, 0
      %v262 = vsel %vm206, %v192, 0
      %v265 = vsel %vm206, %v193, 0
      %v268 = vsel %vm206, %v194, 0
      %v271 = vsel %vm206, %v195, 0
      %v274 = vsel %vm206, %v196, 0
      %v277 = vsel %vm206, %v197, 0
      %v280 = vsel %vm206, %v198, 0
      %v283 = vsel %vm206, %v199, 0
      %v286 = vsel %vm206, %v200, 0
      %v289 = vsel %vm206, %v201, 0
      %v292 = vsel %vm206, %v202, 0
      %v295 = vsel %vm206, %v203, 0
      %v298 = vsel %vm206, %v204, 0
      %v301 = vsel %vm206, %v205, 0
      %303 = vmatprep.subr.mxu0 0.0
      %304 = vmatpush1.xpose.msra.mxu0 %v256
      %305 = vmatprep.subr.mxu0 0.0
      %306 = vmatpush1.xpose.msra.mxu0 %v259
      %307 = vmatprep.subr.mxu0 0.0
      %308 = vmatpush1.xpose.msra.mxu0 %v262
      %309 = vmatprep.subr.mxu0 0.0
      %310 = vmatpush1.xpose.msra.mxu0 %v265
      %311 = vmatprep.subr.mxu0 0.0
      %312 = vmatpush1.xpose.msra.mxu0 %v268
      %313 = vmatprep.subr.mxu0 0.0
      %314 = vmatpush1.xpose.msra.mxu0 %v271
      %315 = vmatprep.subr.mxu0 0.0
      %316 = vmatpush1.xpose.msra.mxu0 %v274
      %317 = vmatprep.subr.mxu0 0.0
      %318 = vmatpush1.xpose.msra.mxu0 %v277
      %319 = vmatprep.subr.mxu0 0.0
      %320 = vmatpush1.xpose.msra.mxu0 %v280
      %321 = vmatprep.subr.mxu0 0.0
      %322 = vmatpush1.xpose.msra.mxu0 %v283
      %323 = vmatprep.subr.mxu0 0.0
      %324 = vmatpush1.xpose.msra.mxu0 %v286
      %325 = vmatprep.subr.mxu0 0.0
      %326 = vmatpush1.xpose.msra.mxu0 %v289
      %327 = vmatprep.subr.mxu0 0.0
      %328 = vmatpush1.xpose.msra.mxu0 %v292
      %329 = vmatprep.subr.mxu0 0.0
      %330 = vmatpush1.xpose.msra.mxu0 %v295
      %331 = vmatprep.subr.mxu0 0.0
      %332 = vmatpush1.xpose.msra.mxu0 %v298
      %333 = vmatprep.subr.mxu0 0.0
      %334 = vmatpush1.xpose.msra.mxu0 %v301
      %335 = vmatprep.subr.mxu0 0.0
      %336 = vmatpush1.xpose.msra.mxu0 0.0
      %337 = vmatprep.subr.mxu0 0.0
      %338 = vmatpush1.xpose.msra.mxu0 0.0
      %339 = vmatprep.subr.mxu0 0.0
      %340 = vmatpush1.xpose.msra.mxu0 0.0
      %341 = vmatprep.subr.mxu0 0.0
      %342 = vmatpush1.xpose.msra.mxu0 0.0
      %343 = vmatprep.subr.mxu0 0.0
      %344 = vmatpush1.xpose.msra.mxu0 0.0
      %345 = vmatprep.subr.mxu0 0.0
      %346 = vmatpush1.xpose.msra.mxu0 0.0
      %347 = vmatprep.subr.mxu0 0.0
      %348 = vmatpush1.xpose.msra.mxu0 0.0
      %349 = vmatprep.subr.mxu0 0.0
      %350 = vmatpush1.xpose.msra.mxu0 0.0
      %351 = vmatprep.subr.mxu0 0.0
      %352 = vmatpush1.xpose.msra.mxu0 0.0
      %353 = vmatprep.subr.mxu0 0.0
      %354 = vmatpush1.xpose.msra.mxu0 0.0
      %355 = vmatprep.subr.mxu0 0.0
      %356 = vmatpush1.xpose.msra.mxu0 0.0
      %357 = vmatprep.subr.mxu0 0.0
      %358 = vmatpush1.xpose.msra.mxu0 0.0
      %359 = vmatprep.subr.mxu0 0.0
      %360 = vmatpush1.xpose.msra.mxu0 0.0
      %361 = vmatprep.subr.mxu0 0.0
      %362 = vmatpush1.xpose.msra.mxu0 0.0
      %363 = vmatprep.subr.mxu0 0.0
      %364 = vmatpush1.xpose.msra.mxu0 0.0
      %365 = vmatprep.subr.mxu0 0.0
      %366 = vmatpush1.xpose.msra.mxu0 0.0
      %367 = vmatprep.mubr.f32.mxu0 0.0
      %368 = vmatmul.mubr.f32.gmra.mrb[0].mxu0 %v208
      %v369 = vpop.f32.mrb[0].mxu0
      %v370 = vadd.f32 0.0, %v369
      %v371 = vpop.f32.mrb[0].mxu0
      %372 = vmatprep.mubr.f32.mxu0 0.0
      %373 = vmatmul.mubr.f32.gmra.mrb[0].mxu0 %v211
      %v374 = vpop.f32.mrb[0].mxu0
      %v375 = vadd.f32 0.0, %v374
      %v376 = vpop.f32.mrb[0].mxu0
      %377 = vmatprep.mubr.f32.mxu0 0.0
      %378 = vmatmul.mubr.f32.gmra.mrb[0].mxu0 %v214
      %v379 = vpop.f32.mrb[0].mxu0
      %v380 = vadd.f32 0.0, %v379
      %v381 = vpop.f32.mrb[0].mxu0
      %382 = vmatprep.mubr.f32.mxu0 0.0
      %383 = vmatmul.mubr.f32.gmra.mrb[0].mxu0 %v217
      %v384 = vpop.f32.mrb[0].mxu0
      %v385 = vadd.f32 0.0, %v384
      %v386 = vpop.f32.mrb[0].mxu0
      %387 = vmatprep.mubr.f32.mxu0 0.0
      %388 = vmatmul.mubr.f32.gmra.mrb[0].mxu0 %v220
      %v389 = vpop.f32.mrb[0].mxu0
      %v390 = vadd.f32 0.0, %v389
      %v391 = vpop.f32.mrb[0].mxu0
      %392 = vmatprep.mubr.f32.mxu0 0.0
      %393 = vmatmul.mubr.f32.gmra.mrb[0].mxu0 %v223
      %v394 = vpop.f32.mrb[0].mxu0
      %v395 = vadd.f32 0.0, %v394
      %v396 = vpop.f32.mrb[0].mxu0
      %397 = vmatprep.mubr.f32.mxu0 0.0
      %398 = vmatmul.mubr.f32.gmra.mrb[0].mxu0 %v226
      %v399 = vpop.f32.mrb[0].mxu0
      %v400 = vadd.f32 0.0, %v399
      %v401 = vpop.f32.mrb[0].mxu0
      %402 = vmatprep.mubr.f32.mxu0 0.0
      %403 = vmatmul.mubr.f32.gmra.mrb[0].mxu0 %v229
      %v404 = vpop.f32.mrb[0].mxu0
      %v405 = vadd.f32 0.0, %v404
      %v406 = vpop.f32.mrb[0].mxu0
      %407 = vmatprep.mubr.f32.mxu0 0.0
      %408 = vmatmul.mubr.f32.gmra.mrb[0].mxu0 %v232
      %v409 = vpop.f32.mrb[0].mxu0
      %v410 = vadd.f32 0.0, %v409
      %v411 = vpop.f32.mrb[0].mxu0
      %412 = vmatprep.mubr.f32.mxu0 0.0
      %413 = vmatmul.mubr.f32.gmra.mrb[0].mxu0 %v235
      %v414 = vpop.f32.mrb[0].mxu0
      %v415 = vadd.f32 0.0, %v414
      %v416 = vpop.f32.mrb[0].mxu0
      %417 = vmatprep.mubr.f32.mxu0 0.0
      %418 = vmatmul.mubr.f32.gmra.mrb[0].mxu0 %v238
      %v419 = vpop.f32.mrb[0].mxu0
      %v420 = vadd.f32 0.0, %v419
      %v421 = vpop.f32.mrb[0].mxu0
      %422 = vmatprep.mubr.f32.mxu0 0.0
      %423 = vmatmul.mubr.f32.gmra.mrb[0].mxu0 %v241
      %v424 = vpop.f32.mrb[0].mxu0
      %v425 = vadd.f32 0.0, %v424
      %v426 = vpop.f32.mrb[0].mxu0
      %427 = vmatprep.mubr.f32.mxu0 0.0
      %428 = vmatmul.mubr.f32.gmra.mrb[0].mxu0 %v244
      %v429 = vpop.f32.mrb[0].mxu0
      %v430 = vadd.f32 0.0, %v429
      %v431 = vpop.f32.mrb[0].mxu0
      %432 = vmatprep.mubr.f32.mxu0 0.0
      %433 = vmatmul.mubr.f32.gmra.mrb[0].mxu0 %v247
      %v434 = vpop.f32.mrb[0].mxu0
      %v435 = vadd.f32 0.0, %v434
      %v436 = vpop.f32.mrb[0].mxu0
      %437 = vmatprep.mubr.f32.mxu0 0.0
      %438 = vmatmul.mubr.f32.gmra.mrb[0].mxu0 %v250
      %v439 = vpop.f32.mrb[0].mxu0
      %v440 = vadd.f32 0.0, %v439
      %v441 = vpop.f32.mrb[0].mxu0
      %442 = vmatprep.mubr.f32.mxu0 0.0
      %443 = vmatmul.mubr.f32.gmra.mrb[0].mxu0 %v253
      %v444 = vpop.f32.mrb[0].mxu0
      %v445 = vadd.f32 0.0, %v444
      %v446 = vpop.f32.mrb[0].mxu0
      %447 = vdwg.mxu0
      %v448 = vld [vmem:[%s2] sm:$0x1]
      %v449 = vmul.f32 %v370, 2.0
      %v450 = vmul.f32 %v375, 2.0
      %v451 = vmul.f32 %v380, 2.0
      %v452 = vmul.f32 %v385, 2.0
      %v453 = vmul.f32 %v390, 2.0
      %v454 = vmul.f32 %v395, 2.0
      %v455 = vmul.f32 %v400, 2.0
      %v456 = vmul.f32 %v405, 2.0
      %v457 = vmul.f32 %v410, 2.0
      %v458 = vmul.f32 %v415, 2.0
      %v459 = vmul.f32 %v420, 2.0
      %v460 = vmul.f32 %v425, 2.0
      %v461 = vmul.f32 %v430, 2.0
      %v462 = vmul.f32 %v435, 2.0
      %v463 = vmul.f32 %v440, 2.0
      %v464 = vmul.f32 %v445, 2.0
      %v466 = vlaneseq
      %v467 = vshrl.u32 %v466, 7
      %v468 = vsub.s32 0, %v467
      %v469 = vrot.slane %v448, %v468
      %v471 = vsub.f32 %v469, %v449
      %v472 = vsub.f32 %v469, %v450
      %v473 = vsub.f32 %v469, %v451
      %v474 = vsub.f32 %v469, %v452
      %v475 = vsub.f32 %v469, %v453
      %v476 = vsub.f32 %v469, %v454
      %v477 = vsub.f32 %v469, %v455
      %v478 = vsub.f32 %v469, %v456
      %v479 = vsub.f32 %v469, %v457
      %v480 = vsub.f32 %v469, %v458
      %v481 = vsub.f32 %v469, %v459
      %v482 = vsub.f32 %v469, %v460
      %v483 = vsub.f32 %v469, %v461
      %v484 = vsub.f32 %v469, %v462
      %v485 = vsub.f32 %v469, %v463
      %v486 = vsub.f32 %v469, %v464
      %487 = vmin.xlane.f32.xlu0 %v471
      %v488 = vpop.xlane.xlu0 %487
      %489 = vmin.xlane.f32.xlu0 %v472
      %v490 = vpop.xlane.xlu0 %489
      %491 = vmin.xlane.f32.xlu0 %v473
      %v492 = vpop.xlane.xlu0 %491
      %493 = vmin.xlane.f32.xlu0 %v474
      %v494 = vpop.xlane.xlu0 %493
      %495 = vmin.xlane.f32.xlu0 %v475
      %v496 = vpop.xlane.xlu0 %495
      %497 = vmin.xlane.f32.xlu0 %v476
      %v498 = vpop.xlane.xlu0 %497
      %499 = vmin.xlane.f32.xlu0 %v477
      %v500 = vpop.xlane.xlu0 %499
      %501 = vmin.xlane.f32.xlu0 %v478
      %v502 = vpop.xlane.xlu0 %501
      %503 = vmin.xlane.f32.xlu0 %v479
      %v504 = vpop.xlane.xlu0 %503
      %505 = vmin.xlane.f32.xlu0 %v480
      %v506 = vpop.xlane.xlu0 %505
      %507 = vmin.xlane.f32.xlu0 %v481
      %v508 = vpop.xlane.xlu0 %507
      %509 = vmin.xlane.f32.xlu0 %v482
      %v510 = vpop.xlane.xlu0 %509
      %511 = vmin.xlane.f32.xlu0 %v483
      %v512 = vpop.xlane.xlu0 %511
      %513 = vmin.xlane.f32.xlu0 %v484
      %v514 = vpop.xlane.xlu0 %513
      %515 = vmin.xlane.f32.xlu0 %v485
      %v516 = vpop.xlane.xlu0 %515
      %517 = vmin.xlane.f32.xlu0 %v486
      %v518 = vpop.xlane.xlu0 %517
      %v519 = vlaneseq
      %v520 = vand.u32 %v519, 127
      %vm521 = vcmp.le.f32.partialorder %v471, %v488
      %vm522 = vcmp.le.f32.partialorder %v472, %v490
      %vm523 = vcmp.le.f32.partialorder %v473, %v492
      %vm524 = vcmp.le.f32.partialorder %v474, %v494
      %vm525 = vcmp.le.f32.partialorder %v475, %v496
      %vm526 = vcmp.le.f32.partialorder %v476, %v498
      %vm527 = vcmp.le.f32.partialorder %v477, %v500
      %vm528 = vcmp.le.f32.partialorder %v478, %v502
      %vm529 = vcmp.le.f32.partialorder %v479, %v504
      %vm530 = vcmp.le.f32.partialorder %v480, %v506
      %vm531 = vcmp.le.f32.partialorder %v481, %v508
      %vm532 = vcmp.le.f32.partialorder %v482, %v510
      %vm533 = vcmp.le.f32.partialorder %v483, %v512
      %vm534 = vcmp.le.f32.partialorder %v484, %v514
      %vm535 = vcmp.le.f32.partialorder %v485, %v516
      %vm536 = vcmp.le.f32.partialorder %v486, %v518
      %v537 = vsel %vm521, %v520, 128
      %v538 = vsel %vm522, %v520, 128
      %v539 = vsel %vm523, %v520, 128
      %v540 = vsel %vm524, %v520, 128
      %v541 = vsel %vm525, %v520, 128
      %v542 = vsel %vm526, %v520, 128
      %v543 = vsel %vm527, %v520, 128
      %v544 = vsel %vm528, %v520, 128
      %v545 = vsel %vm529, %v520, 128
      %v546 = vsel %vm530, %v520, 128
      %v547 = vsel %vm531, %v520, 128
      %v548 = vsel %vm532, %v520, 128
      %v549 = vsel %vm533, %v520, 128
      %v550 = vsel %vm534, %v520, 128
      %v551 = vsel %vm535, %v520, 128
      %v552 = vsel %vm536, %v520, 128
      %v553 = vand.u32 %v537, 65535
      %v554 = vshra.s32 %v537, 16
      %v555 = vcvt.s32.f32 %v553
      %v556 = vcvt.s32.f32 %v554
      %557 = vmin.xlane.f32.xlu0 %v556
      %v558 = vpop.xlane.xlu0 %557
      %vm559 = vcmp.eq.f32.partialorder %v556, %v558
      %v560 = vsel %vm559, %v555, inf
      %561 = vmin.xlane.f32.xlu0 %v560
      %v562 = vpop.xlane.xlu0 %561
      %v563 = vcvt.f32.s32 %v562
      %v564 = vcvt.f32.s32 %v558
      %v565 = vshll.u32 %v564, 16
      %v566 = vadd.s32 %v565, %v563
      %v567 = vand.u32 %v538, 65535
      %v568 = vshra.s32 %v538, 16
      %v569 = vcvt.s32.f32 %v567
      %v570 = vcvt.s32.f32 %v568
      %571 = vmin.xlane.f32.xlu0 %v570
      %v572 = vpop.xlane.xlu0 %571
      %vm573 = vcmp.eq.f32.partialorder %v570, %v572
      %v574 = vsel %vm573, %v569, inf
      %575 = vmin.xlane.f32.xlu0 %v574
      %v576 = vpop.xlane.xlu0 %575
      %v577 = vcvt.f32.s32 %v576
      %v578 = vcvt.f32.s32 %v572
      %v579 = vshll.u32 %v578, 16
      %v580 = vadd.s32 %v579, %v577
      %v581 = vand.u32 %v539, 65535
      %v582 = vshra.s32 %v539, 16
      %v583 = vcvt.s32.f32 %v581
      %v584 = vcvt.s32.f32 %v582
      %585 = vmin.xlane.f32.xlu0 %v584
      %v586 = vpop.xlane.xlu0 %585
      %vm587 = vcmp.eq.f32.partialorder %v584, %v586
      %v588 = vsel %vm587, %v583, inf
      %589 = vmin.xlane.f32.xlu0 %v588
      %v590 = vpop.xlane.xlu0 %589
      %v591 = vcvt.f32.s32 %v590
      %v592 = vcvt.f32.s32 %v586
      %v593 = vshll.u32 %v592, 16
      %v594 = vadd.s32 %v593, %v591
      %v595 = vand.u32 %v540, 65535
      %v596 = vshra.s32 %v540, 16
      %v597 = vcvt.s32.f32 %v595
      %v598 = vcvt.s32.f32 %v596
      %599 = vmin.xlane.f32.xlu0 %v598
      %v600 = vpop.xlane.xlu0 %599
      %vm601 = vcmp.eq.f32.partialorder %v598, %v600
      %v602 = vsel %vm601, %v597, inf
      %603 = vmin.xlane.f32.xlu0 %v602
      %v604 = vpop.xlane.xlu0 %603
      %v605 = vcvt.f32.s32 %v604
      %v606 = vcvt.f32.s32 %v600
      %v607 = vshll.u32 %v606, 16
      %v608 = vadd.s32 %v607, %v605
      %v609 = vand.u32 %v541, 65535
      %v610 = vshra.s32 %v541, 16
      %v611 = vcvt.s32.f32 %v609
      %v612 = vcvt.s32.f32 %v610
      %613 = vmin.xlane.f32.xlu0 %v612
      %v614 = vpop.xlane.xlu0 %613
      %vm615 = vcmp.eq.f32.partialorder %v612, %v614
      %v616 = vsel %vm615, %v611, inf
      %617 = vmin.xlane.f32.xlu0 %v616
      %v618 = vpop.xlane.xlu0 %617
      %v619 = vcvt.f32.s32 %v618
      %v620 = vcvt.f32.s32 %v614
      %v621 = vshll.u32 %v620, 16
      %v622 = vadd.s32 %v621, %v619
      %v623 = vand.u32 %v542, 65535
      %v624 = vshra.s32 %v542, 16
      %v625 = vcvt.s32.f32 %v623
      %v626 = vcvt.s32.f32 %v624
      %627 = vmin.xlane.f32.xlu0 %v626
      %v628 = vpop.xlane.xlu0 %627
      %vm629 = vcmp.eq.f32.partialorder %v626, %v628
      %v630 = vsel %vm629, %v625, inf
      %631 = vmin.xlane.f32.xlu0 %v630
      %v632 = vpop.xlane.xlu0 %631
      %v633 = vcvt.f32.s32 %v632
      %v634 = vcvt.f32.s32 %v628
      %v635 = vshll.u32 %v634, 16
      %v636 = vadd.s32 %v635, %v633
      %v637 = vand.u32 %v543, 65535
      %v638 = vshra.s32 %v543, 16
      %v639 = vcvt.s32.f32 %v637
      %v640 = vcvt.s32.f32 %v638
      %641 = vmin.xlane.f32.xlu0 %v640
      %v642 = vpop.xlane.xlu0 %641
      %vm643 = vcmp.eq.f32.partialorder %v640, %v642
      %v644 = vsel %vm643, %v639, inf
      %645 = vmin.xlane.f32.xlu0 %v644
      %v646 = vpop.xlane.xlu0 %645
      %v647 = vcvt.f32.s32 %v646
      %v648 = vcvt.f32.s32 %v642
      %v649 = vshll.u32 %v648, 16
      %v650 = vadd.s32 %v649, %v647
      %v651 = vand.u32 %v544, 65535
      %v652 = vshra.s32 %v544, 16
      %v653 = vcvt.s32.f32 %v651
      %v654 = vcvt.s32.f32 %v652
      %655 = vmin.xlane.f32.xlu0 %v654
      %v656 = vpop.xlane.xlu0 %655
      %vm657 = vcmp.eq.f32.partialorder %v654, %v656
      %v658 = vsel %vm657, %v653, inf
      %659 = vmin.xlane.f32.xlu0 %v658
      %v660 = vpop.xlane.xlu0 %659
      %v661 = vcvt.f32.s32 %v660
      %v662 = vcvt.f32.s32 %v656
      %v663 = vshll.u32 %v662, 16
      %v664 = vadd.s32 %v663, %v661
      %v665 = vand.u32 %v545, 65535
      %v666 = vshra.s32 %v545, 16
      %v667 = vcvt.s32.f32 %v665
      %v668 = vcvt.s32.f32 %v666
      %669 = vmin.xlane.f32.xlu0 %v668
      %v670 = vpop.xlane.xlu0 %669
      %vm671 = vcmp.eq.f32.partialorder %v668, %v670
      %v672 = vsel %vm671, %v667, inf
      %673 = vmin.xlane.f32.xlu0 %v672
      %v674 = vpop.xlane.xlu0 %673
      %v675 = vcvt.f32.s32 %v674
      %v676 = vcvt.f32.s32 %v670
      %v677 = vshll.u32 %v676, 16
      %v678 = vadd.s32 %v677, %v675
      %v679 = vand.u32 %v546, 65535
      %v680 = vshra.s32 %v546, 16
      %v681 = vcvt.s32.f32 %v679
      %v682 = vcvt.s32.f32 %v680
      %683 = vmin.xlane.f32.xlu0 %v682
      %v684 = vpop.xlane.xlu0 %683
      %vm685 = vcmp.eq.f32.partialorder %v682, %v684
      %v686 = vsel %vm685, %v681, inf
      %687 = vmin.xlane.f32.xlu0 %v686
      %v688 = vpop.xlane.xlu0 %687
      %v689 = vcvt.f32.s32 %v688
      %v690 = vcvt.f32.s32 %v684
      %v691 = vshll.u32 %v690, 16
      %v692 = vadd.s32 %v691, %v689
      %v693 = vand.u32 %v547, 65535
      %v694 = vshra.s32 %v547, 16
      %v695 = vcvt.s32.f32 %v693
      %v696 = vcvt.s32.f32 %v694
      %697 = vmin.xlane.f32.xlu0 %v696
      %v698 = vpop.xlane.xlu0 %697
      %vm699 = vcmp.eq.f32.partialorder %v696, %v698
      %v700 = vsel %vm699, %v695, inf
      %701 = vmin.xlane.f32.xlu0 %v700
      %v702 = vpop.xlane.xlu0 %701
      %v703 = vcvt.f32.s32 %v702
      %v704 = vcvt.f32.s32 %v698
      %v705 = vshll.u32 %v704, 16
      %v706 = vadd.s32 %v705, %v703
      %v707 = vand.u32 %v548, 65535
      %v708 = vshra.s32 %v548, 16
      %v709 = vcvt.s32.f32 %v707
      %v710 = vcvt.s32.f32 %v708
      %711 = vmin.xlane.f32.xlu0 %v710
      %v712 = vpop.xlane.xlu0 %711
      %vm713 = vcmp.eq.f32.partialorder %v710, %v712
      %v714 = vsel %vm713, %v709, inf
      %715 = vmin.xlane.f32.xlu0 %v714
      %v716 = vpop.xlane.xlu0 %715
      %v717 = vcvt.f32.s32 %v716
      %v718 = vcvt.f32.s32 %v712
      %v719 = vshll.u32 %v718, 16
      %v720 = vadd.s32 %v719, %v717
      %v721 = vand.u32 %v549, 65535
      %v722 = vshra.s32 %v549, 16
      %v723 = vcvt.s32.f32 %v721
      %v724 = vcvt.s32.f32 %v722
      %725 = vmin.xlane.f32.xlu0 %v724
      %v726 = vpop.xlane.xlu0 %725
      %vm727 = vcmp.eq.f32.partialorder %v724, %v726
      %v728 = vsel %vm727, %v723, inf
      %729 = vmin.xlane.f32.xlu0 %v728
      %v730 = vpop.xlane.xlu0 %729
      %v731 = vcvt.f32.s32 %v730
      %v732 = vcvt.f32.s32 %v726
      %v733 = vshll.u32 %v732, 16
      %v734 = vadd.s32 %v733, %v731
      %v735 = vand.u32 %v550, 65535
      %v736 = vshra.s32 %v550, 16
      %v737 = vcvt.s32.f32 %v735
      %v738 = vcvt.s32.f32 %v736
      %739 = vmin.xlane.f32.xlu0 %v738
      %v740 = vpop.xlane.xlu0 %739
      %vm741 = vcmp.eq.f32.partialorder %v738, %v740
      %v742 = vsel %vm741, %v737, inf
      %743 = vmin.xlane.f32.xlu0 %v742
      %v744 = vpop.xlane.xlu0 %743
      %v745 = vcvt.f32.s32 %v744
      %v746 = vcvt.f32.s32 %v740
      %v747 = vshll.u32 %v746, 16
      %v748 = vadd.s32 %v747, %v745
      %v749 = vand.u32 %v551, 65535
      %v750 = vshra.s32 %v551, 16
      %v751 = vcvt.s32.f32 %v749
      %v752 = vcvt.s32.f32 %v750
      %753 = vmin.xlane.f32.xlu0 %v752
      %v754 = vpop.xlane.xlu0 %753
      %vm755 = vcmp.eq.f32.partialorder %v752, %v754
      %v756 = vsel %vm755, %v751, inf
      %757 = vmin.xlane.f32.xlu0 %v756
      %v758 = vpop.xlane.xlu0 %757
      %v759 = vcvt.f32.s32 %v758
      %v760 = vcvt.f32.s32 %v754
      %v761 = vshll.u32 %v760, 16
      %v762 = vadd.s32 %v761, %v759
      %v763 = vand.u32 %v552, 65535
      %v764 = vshra.s32 %v552, 16
      %v765 = vcvt.s32.f32 %v763
      %v766 = vcvt.s32.f32 %v764
      %767 = vmin.xlane.f32.xlu0 %v766
      %v768 = vpop.xlane.xlu0 %767
      %vm769 = vcmp.eq.f32.partialorder %v766, %v768
      %v770 = vsel %vm769, %v765, inf
      %771 = vmin.xlane.f32.xlu0 %v770
      %v772 = vpop.xlane.xlu0 %771
      %v773 = vcvt.f32.s32 %v772
      %v774 = vcvt.f32.s32 %v768
      %v775 = vshll.u32 %v774, 16
      %v776 = vadd.s32 %v775, %v773
      %vm777 = vcmp.eq.s32.totalorder %v520, %v566
      %vm778 = vcmp.eq.s32.totalorder %v520, %v580
      %vm779 = vcmp.eq.s32.totalorder %v520, %v594
      %vm780 = vcmp.eq.s32.totalorder %v520, %v608
      %vm781 = vcmp.eq.s32.totalorder %v520, %v622
      %vm782 = vcmp.eq.s32.totalorder %v520, %v636
      %vm783 = vcmp.eq.s32.totalorder %v520, %v650
      %vm784 = vcmp.eq.s32.totalorder %v520, %v664
      %vm785 = vcmp.eq.s32.totalorder %v520, %v678
      %vm786 = vcmp.eq.s32.totalorder %v520, %v692
      %vm787 = vcmp.eq.s32.totalorder %v520, %v706
      %vm788 = vcmp.eq.s32.totalorder %v520, %v720
      %vm789 = vcmp.eq.s32.totalorder %v520, %v734
      %vm790 = vcmp.eq.s32.totalorder %v520, %v748
      %vm791 = vcmp.eq.s32.totalorder %v520, %v762
      %vm792 = vcmp.eq.s32.totalorder %v520, %v776
      %v793 = vsel %vm777, 1, 0
      %v794 = vsel %vm778, 1, 0
      %v795 = vsel %vm779, 1, 0
      %v796 = vsel %vm780, 1, 0
      %v797 = vsel %vm781, 1, 0
      %v798 = vsel %vm782, 1, 0
      %v799 = vsel %vm783, 1, 0
      %v800 = vsel %vm784, 1, 0
      %v801 = vsel %vm785, 1, 0
      %v802 = vsel %vm786, 1, 0
      %v803 = vsel %vm787, 1, 0
      %v804 = vsel %vm788, 1, 0
      %v805 = vsel %vm789, 1, 0
      %v806 = vsel %vm790, 1, 0
      %v807 = vsel %vm791, 1, 0
      %v808 = vsel %vm792, 1, 0
      %v809 = vcvt.s32.f32 %v793
      %v810 = vcvt.s32.f32 %v794
      %v811 = vcvt.s32.f32 %v795
      %v812 = vcvt.s32.f32 %v796
      %v813 = vcvt.s32.f32 %v797
      %v814 = vcvt.s32.f32 %v798
      %v815 = vcvt.s32.f32 %v799
      %v816 = vcvt.s32.f32 %v800
      %v817 = vcvt.s32.f32 %v801
      %v818 = vcvt.s32.f32 %v802
      %v819 = vcvt.s32.f32 %v803
      %v820 = vcvt.s32.f32 %v804
      %v821 = vcvt.s32.f32 %v805
      %v822 = vcvt.s32.f32 %v806
      %v823 = vcvt.s32.f32 %v807
      %v824 = vcvt.s32.f32 %v808
      %825 = vmatprep.subr.mxu0 0.0
      %826 = vmatpush1.msra.mxu0 %v190
      %827 = vmatprep.subr.mxu0 0.0
      %828 = vmatpush1.msra.mxu0 %v191
      %829 = vmatprep.subr.mxu0 0.0
      %830 = vmatpush1.msra.mxu0 %v192
      %831 = vmatprep.subr.mxu0 0.0
      %832 = vmatpush1.msra.mxu0 %v193
      %833 = vmatprep.subr.mxu0 0.0
      %834 = vmatpush1.msra.mxu0 %v194
      %835 = vmatprep.subr.mxu0 0.0
      %836 = vmatpush1.msra.mxu0 %v195
      %837 = vmatprep.subr.mxu0 0.0
      %838 = vmatpush1.msra.mxu0 %v196
      %839 = vmatprep.subr.mxu0 0.0
      %840 = vmatpush1.msra.mxu0 %v197
      %841 = vmatprep.subr.mxu0 0.0
      %842 = vmatpush1.msra.mxu0 %v198
      %843 = vmatprep.subr.mxu0 0.0
      %844 = vmatpush1.msra.mxu0 %v199
      %845 = vmatprep.subr.mxu0 0.0
      %846 = vmatpush1.msra.mxu0 %v200
      %847 = vmatprep.subr.mxu0 0.0
      %848 = vmatpush1.msra.mxu0 %v201
      %849 = vmatprep.subr.mxu0 0.0
      %850 = vmatpush1.msra.mxu0 %v202
      %851 = vmatprep.subr.mxu0 0.0
      %852 = vmatpush1.msra.mxu0 %v203
      %853 = vmatprep.subr.mxu0 0.0
      %854 = vmatpush1.msra.mxu0 %v204
      %855 = vmatprep.subr.mxu0 0.0
      %856 = vmatpush1.msra.mxu0 %v205
      %857 = vmatprep.subr.mxu0 0.0
      %858 = vmatpush1.msra.mxu0 0.0
      %859 = vmatprep.subr.mxu0 0.0
      %860 = vmatpush1.msra.mxu0 0.0
      %861 = vmatprep.subr.mxu0 0.0
      %862 = vmatpush1.msra.mxu0 0.0
      %863 = vmatprep.subr.mxu0 0.0
      %864 = vmatpush1.msra.mxu0 0.0
      %865 = vmatprep.subr.mxu0 0.0
      %866 = vmatpush1.msra.mxu0 0.0
      %867 = vmatprep.subr.mxu0 0.0
      %868 = vmatpush1.msra.mxu0 0.0
      %869 = vmatprep.subr.mxu0 0.0
      %870 = vmatpush1.msra.mxu0 0.0
      %871 = vmatprep.subr.mxu0 0.0
      %872 = vmatpush1.msra.mxu0 0.0
      %873 = vmatprep.subr.mxu0 0.0
      %874 = vmatpush1.msra.mxu0 0.0
      %875 = vmatprep.subr.mxu0 0.0
      %876 = vmatpush1.msra.mxu0 0.0
      %877 = vmatprep.subr.mxu0 0.0
      %878 = vmatpush1.msra.mxu0 0.0
      %879 = vmatprep.subr.mxu0 0.0
      %880 = vmatpush1.msra.mxu0 0.0
      %881 = vmatprep.subr.mxu0 0.0
      %882 = vmatpush1.msra.mxu0 0.0
      %883 = vmatprep.subr.mxu0 0.0
      %884 = vmatpush1.msra.mxu0 0.0
      %885 = vmatprep.subr.mxu0 0.0
      %886 = vmatpush1.msra.mxu0 0.0
      %887 = vmatprep.subr.mxu0 0.0
      %888 = vmatpush1.msra.mxu0 0.0
      %889 = vmatprep.mubr.f32.mxu0 0.0
      %890 = vmatmul.mubr.f32.gmra.mrb[0].mxu0 %v809
      %v891 = vpop.f32.mrb[0].mxu0
      %v892 = vadd.f32 0.0, %v891
      %v893 = vpop.f32.mrb[0].mxu0
      %894 = vmatprep.mubr.f32.mxu0 0.0
      %895 = vmatmul.mubr.f32.gmra.mrb[0].mxu0 %v810
      %v896 = vpop.f32.mrb[0].mxu0
      %v897 = vadd.f32 0.0, %v896
      %v898 = vpop.f32.mrb[0].mxu0
      %899 = vmatprep.mubr.f32.mxu0 0.0
      %900 = vmatmul.mubr.f32.gmra.mrb[0].mxu0 %v811
      %v901 = vpop.f32.mrb[0].mxu0
      %v902 = vadd.f32 0.0, %v901
      %v903 = vpop.f32.mrb[0].mxu0
      %904 = vmatprep.mubr.f32.mxu0 0.0
      %905 = vmatmul.mubr.f32.gmra.mrb[0].mxu0 %v812
      %v906 = vpop.f32.mrb[0].mxu0
      %v907 = vadd.f32 0.0, %v906
      %v908 = vpop.f32.mrb[0].mxu0
      %909 = vmatprep.mubr.f32.mxu0 0.0
      %910 = vmatmul.mubr.f32.gmra.mrb[0].mxu0 %v813
      %v911 = vpop.f32.mrb[0].mxu0
      %v912 = vadd.f32 0.0, %v911
      %v913 = vpop.f32.mrb[0].mxu0
      %914 = vmatprep.mubr.f32.mxu0 0.0
      %915 = vmatmul.mubr.f32.gmra.mrb[0].mxu0 %v814
      %v916 = vpop.f32.mrb[0].mxu0
      %v917 = vadd.f32 0.0, %v916
      %v918 = vpop.f32.mrb[0].mxu0
      %919 = vmatprep.mubr.f32.mxu0 0.0
      %920 = vmatmul.mubr.f32.gmra.mrb[0].mxu0 %v815
      %v921 = vpop.f32.mrb[0].mxu0
      %v922 = vadd.f32 0.0, %v921
      %v923 = vpop.f32.mrb[0].mxu0
      %924 = vmatprep.mubr.f32.mxu0 0.0
      %925 = vmatmul.mubr.f32.gmra.mrb[0].mxu0 %v816
      %v926 = vpop.f32.mrb[0].mxu0
      %v927 = vadd.f32 0.0, %v926
      %v928 = vpop.f32.mrb[0].mxu0
      %929 = vmatprep.mubr.f32.mxu0 0.0
      %930 = vmatmul.mubr.f32.gmra.mrb[0].mxu0 %v817
      %v931 = vpop.f32.mrb[0].mxu0
      %v932 = vadd.f32 0.0, %v931
      %v933 = vpop.f32.mrb[0].mxu0
      %934 = vmatprep.mubr.f32.mxu0 0.0
      %935 = vmatmul.mubr.f32.gmra.mrb[0].mxu0 %v818
      %v936 = vpop.f32.mrb[0].mxu0
      %v937 = vadd.f32 0.0, %v936
      %v938 = vpop.f32.mrb[0].mxu0
      %939 = vmatprep.mubr.f32.mxu0 0.0
      %940 = vmatmul.mubr.f32.gmra.mrb[0].mxu0 %v819
      %v941 = vpop.f32.mrb[0].mxu0
      %v942 = vadd.f32 0.0, %v941
      %v943 = vpop.f32.mrb[0].mxu0
      %944 = vmatprep.mubr.f32.mxu0 0.0
      %945 = vmatmul.mubr.f32.gmra.mrb[0].mxu0 %v820
      %v946 = vpop.f32.mrb[0].mxu0
      %v947 = vadd.f32 0.0, %v946
      %v948 = vpop.f32.mrb[0].mxu0
      %949 = vmatprep.mubr.f32.mxu0 0.0
      %950 = vmatmul.mubr.f32.gmra.mrb[0].mxu0 %v821
      %v951 = vpop.f32.mrb[0].mxu0
      %v952 = vadd.f32 0.0, %v951
      %v953 = vpop.f32.mrb[0].mxu0
      %954 = vmatprep.mubr.f32.mxu0 0.0
      %955 = vmatmul.mubr.f32.gmra.mrb[0].mxu0 %v822
      %v956 = vpop.f32.mrb[0].mxu0
      %v957 = vadd.f32 0.0, %v956
      %v958 = vpop.f32.mrb[0].mxu0
      %959 = vmatprep.mubr.f32.mxu0 0.0
      %960 = vmatmul.mubr.f32.gmra.mrb[0].mxu0 %v823
      %v961 = vpop.f32.mrb[0].mxu0
      %v962 = vadd.f32 0.0, %v961
      %v963 = vpop.f32.mrb[0].mxu0
      %964 = vmatprep.mubr.f32.mxu0 0.0
      %965 = vmatmul.mubr.f32.gmra.mrb[0].mxu0 %v824
      %v966 = vpop.f32.mrb[0].mxu0
      %v967 = vadd.f32 0.0, %v966
      %v968 = vpop.f32.mrb[0].mxu0
      %969 = vdwg.mxu0
      %970 = vst.msk [vmem:[%s172] sm:$0xff] %vm206, %v892
      %971 = vst.msk [vmem:[%s172 + $0x8] sm:$0xff] %vm206, %v897
      %972 = vst.msk [vmem:[%s172 + $0x10] sm:$0xff] %vm206, %v902
      %973 = vst.msk [vmem:[%s172 + $0x18] sm:$0xff] %vm206, %v907
      %974 = vst.msk [vmem:[%s172 + $0x20] sm:$0xff] %vm206, %v912
      %975 = vst.msk [vmem:[%s172 + $0x28] sm:$0xff] %vm206, %v917
      %976 = vst.msk [vmem:[%s172 + $0x30] sm:$0xff] %vm206, %v922
      %977 = vst.msk [vmem:[%s172 + $0x38] sm:$0xff] %vm206, %v927
      %978 = vst.msk [vmem:[%s172 + $0x40] sm:$0xff] %vm206, %v932
      %979 = vst.msk [vmem:[%s172 + $0x48] sm:$0xff] %vm206, %v937
      %980 = vst.msk [vmem:[%s172 + $0x50] sm:$0xff] %vm206, %v942
      %981 = vst.msk [vmem:[%s172 + $0x58] sm:$0xff] %vm206, %v947
      %982 = vst.msk [vmem:[%s172 + $0x60] sm:$0xff] %vm206, %v952
      %983 = vst.msk [vmem:[%s172 + $0x68] sm:$0xff] %vm206, %v957
      %984 = vst.msk [vmem:[%s172 + $0x70] sm:$0xff] %vm206, %v962
      %985 = vst.msk [vmem:[%s172 + $0x78] sm:$0xff] %vm206, %v967
      %s986 = smul.u32 16, %s14
      %p987 = scmp.lt.s32.totalorder %s986, 63
      %s988 = scalar_select %p987, %s986, 63
      %s989 = smul.addr %s988, 8
      %s990 = scalar_lea.vmem %s3, %s989
      // Predicated region
      $region33: #{msvq_forward.10} parent=31 // pred_check
        %p991 = pneg %p100
      $region34: #{msvq_forward.10} parent=31 // pred_check_branch
        %993 = sbr.rel (%p991) target = $region36
      $region35: #{msvq_forward.10} parent=31 // pred_region
        %s994 = smul.u32 16, %s14
      $region36: #{msvq_forward.10} parent=31 // pred_fallthru
        _
    $region32: #{msvq_forward.10} parent=5 // pred_fallthru
      _
    %p995 = scmp.le.s32.totalorder 2, %s9
    // Predicated region
    $region37: #{msvq_forward.10} parent=5 // pred_check
      %p996 = pneg %p995
    $region38: #{msvq_forward.10} parent=5 // pred_check_branch
      %998 = sbr.rel (%p996) target = $region40
    $region39: #{msvq_forward.10} parent=5 // pred_region
      %s999 = ssub.s32 %s9, 2
      // Predicated region
      $region41: #{msvq_forward.10} parent=39 // pred_check
        %p1000 = pneg %p106
      $region42: #{msvq_forward.10} parent=39 // pred_check_branch
        %1002 = sbr.rel (%p1000) target = $region44
      $region43: #{msvq_forward.10} parent=39 // pred_region
        %s1003 = smul.u32 16, %s15
        %p1004 = scmp.lt.s32.totalorder %s1003, 63
        %s1005 = scalar_select %p1004, %s1003, 63
        %s1006 = smul.addr %s1005, 8
        %s1007 = scalar_lea.vmem %s3, %s1006
      $region44: #{msvq_forward.10} parent=39 // pred_fallthru
        _
    $region40: #{msvq_forward.10} parent=5 // pred_fallthru
      _
  $region6: #{msvq_forward.10} parent=0 // loop_footer
    %s13 = sadd.s32 1, %s9
  $region7: #{msvq_forward.10} parent=0 // loop_footer_branch
    %8 = sbr.rel target = $region3
  $region8: #{msvq_forward.10} parent=0 // loop_exit
    _

// kernel: msvq_forward.7
$region0: #{msvq_forward.7}
  #allocation0 [shape = 'u32[]', space=smem, size = 0x4, offset = 0x4, fixed_abs, tag = 'smem constant byte address 0x4 - core index']
  #allocation1 [shape = 'u32[144,128]{1,0:T(1,128)}', space=vmem, size = 0x12000, scoped, tag = 'internal scratch']
  #allocation2 [shape = 'f32[1,18,18,32]{3,2,1,0:T(8,128)}', space=vmem, size = 0x36000, scoped, tag = 'scratch operand']
  %s0 = inlined_call_operand.vmem [shape: f32[2,16,16,32], index: 0, kind: input, shape index: {}]
  %s1 = inlined_call_operand.vmem [shape: f32[2,16,16,32], index: 1, kind: input, shape index: {}, may-alias: {1,6}]
  %s2 = inlined_call_operand.vmem [shape: f32[2,16,16,32], index: 2, kind: input, shape index: {}, may-alias: {2,5}]
  %s3 = inlined_call_operand.vmem [shape: f32[3,3,32,32], index: 3, kind: input, shape index: {}]
  %s4 = inlined_call_operand.vmem [shape: f32[1,32], index: 4, kind: input, shape index: {}]
  %s5 = inlined_call_operand.vmem [shape: f32[2,16,16,32], index: 5, kind: output, shape index: {0}, may-alias: {2,5}]
  %s6 = inlined_call_operand.vmem [shape: f32[2,16,16,32], index: 6, kind: output, shape index: {1}, may-alias: {1,6}]
  %7 = xla_tuple %s5, %s6
  %s8 = sld [smem:[#allocation0]]
  $region61: #{msvq_forward.7} parent=0
    _
  %s10 = ssub.s32 1, %s8
  %s11 = scalar_select 0, %s10, %s8
  loop: start=0, step=1, limit=4
  $region2: #{msvq_forward.7} parent=0 // loop_pre_header
    _
  $region3: #{msvq_forward.7} parent=0 // loop_header
    %s13 = sphi 0, %s17
    %p14 = scmp.ge.s32.totalorder %s13, 4
    %s23 = sphi 0, %s25
    %s26 = sphi 0, %s23
    %s27 = sphi 0, %s26
    %s43 = sphi 0, %s27
    %s49 = sphi 0, %s51
    %s52 = sphi 0, %s49
    %s53 = sphi 0, %s52
    %s69 = sphi 0, %s53
    %s75 = sphi 0, %s77
    %s78 = sphi 0, %s75
    %s79 = sphi 0, %s78
    %s95 = sphi 0, %s79
    %s99 = sphi 0, %s99
    %s101 = sphi 0, %s99
    %s102 = sphi 0, %s101
    %s116 = sphi 0, %s102
    %s120 = sphi 0, %s120
    %s122 = sphi 0, %s120
    %s123 = sphi 0, %s122
    %s137 = sphi 0, %s123
    %s143 = sphi 0, %s145
    %s146 = sphi 0, %s143
    %s147 = sphi 0, %s146
    %s163 = sphi 0, %s147
    %s169 = sphi 0, %s171
    %s172 = sphi 0, %s169
    %s173 = sphi 0, %s172
    %s189 = sphi 0, %s173
  $region4: #{msvq_forward.7} parent=0 // loop_header_branch
    %16 = sbr.rel (%p14) target = $region8
  $region5: #{msvq_forward.7} parent=0 // loop_body
    %s18 = ssub.s32 %s13, 1
    %s19 = ssub.s32 %s13, 2
    %s20 = sadd.s32 %s13, 1
    %s21 = ssub.s32 %s13, %s20
    %p22 = scmp.eq.s32.totalorder %s21, 0
    %s24 = sadd.s32 %s23, 1
    %s25 = scalar_select %p22, %s23, %s24
    %p28 = pneg %p22
    %p29 = scmp.eq.s32.totalorder %s13, 1
    %p30 = por %p28, %p29
    %p31 = scmp.ne.s32.totalorder %s23, %s26
    %p32 = scmp.eq.s32.totalorder %s13, 0
    %p33 = por %p31, %p32
    %p34 = scmp.ne.s32.totalorder %s23, %s26
    %p35 = scmp.eq.s32.totalorder %s18, 1
    %p36 = por %p34, %p35
    %p37 = scmp.ne.s32.totalorder %s26, %s27
    %p38 = scmp.eq.s32.totalorder %s18, 0
    %p39 = por %p37, %p38
    %p40 = scmp.ne.s32.totalorder %s26, %s27
    %p41 = scmp.eq.s32.totalorder %s19, 1
    %p42 = por %p40, %p41
    %p44 = scmp.ne.s32.totalorder %s27, %s43
    %p45 = scmp.eq.s32.totalorder %s19, 0
    %p46 = por %p44, %p45
    %s47 = ssub.s32 %s13, %s20
    %p48 = scmp.eq.s32.totalorder %s47, 0
    %s50 = sadd.s32 %s49, 1
    %s51 = scalar_select %p48, %s49, %s50
    %p54 = pneg %p48
    %p55 = scmp.eq.s32.totalorder %s13, 1
    %p56 = por %p54, %p55
    %p57 = scmp.ne.s32.totalorder %s49, %s52
    %p58 = scmp.eq.s32.totalorder %s13, 0
    %p59 = por %p57, %p58
    %p60 = scmp.ne.s32.totalorder %s49, %s52
    %p61 = scmp.eq.s32.totalorder %s18, 1
    %p62 = por %p60, %p61
    %p63 = scmp.ne.s32.totalorder %s52, %s53
    %p64 = scmp.eq.s32.totalorder %s18, 0
    %p65 = por %p63, %p64
    %p66 = scmp.ne.s32.totalorder %s52, %s53
    %p67 = scmp.eq.s32.totalorder %s19, 1
    %p68 = por %p66, %p67
    %p70 = scmp.ne.s32.totalorder %s53, %s69
    %p71 = scmp.eq.s32.totalorder %s19, 0
    %p72 = por %p70, %p71
    %s73 = ssub.s32 %s13, %s20
    %p74 = scmp.eq.s32.totalorder %s73, 0
    %s76 = sadd.s32 %s75, 1
    %s77 = scalar_select %p74, %s75, %s76
    %p80 = pneg %p74
    %p81 = scmp.eq.s32.totalorder %s13, 1
    %p82 = por %p80, %p81
    %p83 = scmp.ne.s32.totalorder %s75, %s78
    %p84 = scmp.eq.s32.totalorder %s13, 0
    %p85 = por %p83, %p84
    %p86 = scmp.ne.s32.totalorder %s75, %s78
    %p87 = scmp.eq.s32.totalorder %s18, 1
    %p88 = por %p86, %p87
    %p89 = scmp.ne.s32.totalorder %s78, %s79
    %p90 = scmp.eq.s32.totalorder %s18, 0
    %p91 = por %p89, %p90
    %p92 = scmp.ne.s32.totalorder %s78, %s79
    %p93 = scmp.eq.s32.totalorder %s19, 1
    %p94 = por %p92, %p93
    %p96 = scmp.ne.s32.totalorder %s79, %s95
    %p97 = scmp.eq.s32.totalorder %s19, 0
    %p98 = por %p96, %p97
    %s100 = sadd.s32 %s99, 1
    %p103 = scmp.eq.s32.totalorder %s13, 1
    %p104 = scmp.ne.s32.totalorder %s99, %s101
    %p105 = scmp.eq.s32.totalorder %s13, 0
    %p106 = por %p104, %p105
    %p107 = scmp.ne.s32.totalorder %s99, %s101
    %p108 = scmp.eq.s32.totalorder %s18, 1
    %p109 = por %p107, %p108
    %p110 = scmp.ne.s32.totalorder %s101, %s102
    %p111 = scmp.eq.s32.totalorder %s18, 0
    %p112 = por %p110, %p111
    %p113 = scmp.ne.s32.totalorder %s101, %s102
    %p114 = scmp.eq.s32.totalorder %s19, 1
    %p115 = por %p113, %p114
    %p117 = scmp.ne.s32.totalorder %s102, %s116
    %p118 = scmp.eq.s32.totalorder %s19, 0
    %p119 = por %p117, %p118
    %s121 = sadd.s32 %s120, 1
    %p124 = scmp.eq.s32.totalorder %s13, 1
    %p125 = scmp.ne.s32.totalorder %s120, %s122
    %p126 = scmp.eq.s32.totalorder %s13, 0
    %p127 = por %p125, %p126
    %p128 = scmp.ne.s32.totalorder %s120, %s122
    %p129 = scmp.eq.s32.totalorder %s18, 1
    %p130 = por %p128, %p129
    %p131 = scmp.ne.s32.totalorder %s122, %s123
    %p132 = scmp.eq.s32.totalorder %s18, 0
    %p133 = por %p131, %p132
    %p134 = scmp.ne.s32.totalorder %s122, %s123
    %p135 = scmp.eq.s32.totalorder %s19, 1
    %p136 = por %p134, %p135
    %p138 = scmp.ne.s32.totalorder %s123, %s137
    %p139 = scmp.eq.s32.totalorder %s19, 0
    %p140 = por %p138, %p139
    %s141 = ssub.s32 %s13, %s20
    %p142 = scmp.eq.s32.totalorder %s141, 0
    %s144 = sadd.s32 %s143, 1
    %s145 = scalar_select %p142, %s143, %s144
    %p148 = pneg %p142
    %p149 = scmp.eq.s32.totalorder %s13, 1
    %p150 = por %p148, %p149
    %p151 = scmp.ne.s32.totalorder %s143, %s146
    %p152 = scmp.eq.s32.totalorder %s13, 0
    %p153 = por %p151, %p152
    %p154 = scmp.ne.s32.totalorder %s143, %s146
    %p155 = scmp.eq.s32.totalorder %s18, 1
    %p156 = por %p154, %p155
    %p157 = scmp.ne.s32.totalorder %s146, %s147
    %p158 = scmp.eq.s32.totalorder %s18, 0
    %p159 = por %p157, %p158
    %p160 = scmp.ne.s32.totalorder %s146, %s147
    %p161 = scmp.eq.s32.totalorder %s19, 1
    %p162 = por %p160, %p161
    %p164 = scmp.ne.s32.totalorder %s147, %s163
    %p165 = scmp.eq.s32.totalorder %s19, 0
    %p166 = por %p164, %p165
    %s167 = ssub.s32 %s13, %s20
    %p168 = scmp.eq.s32.totalorder %s167, 0
    %s170 = sadd.s32 %s169, 1
    %s171 = scalar_select %p168, %s169, %s170
    %p174 = pneg %p168
    %p175 = scmp.eq.s32.totalorder %s13, 1
    %p176 = por %p174, %p175
    %p177 = scmp.ne.s32.totalorder %s169, %s172
    %p178 = scmp.eq.s32.totalorder %s13, 0
    %p179 = por %p177, %p178
    %p180 = scmp.ne.s32.totalorder %s169, %s172
    %p181 = scmp.eq.s32.totalorder %s18, 1
    %p182 = por %p180, %p181
    %p183 = scmp.ne.s32.totalorder %s172, %s173
    %p184 = scmp.eq.s32.totalorder %s18, 0
    %p185 = por %p183, %p184
    %p186 = scmp.ne.s32.totalorder %s172, %s173
    %p187 = scmp.eq.s32.totalorder %s19, 1
    %p188 = por %p186, %p187
    %p190 = scmp.ne.s32.totalorder %s173, %s189
    %p191 = scmp.eq.s32.totalorder %s19, 0
    %p192 = por %p190, %p191
    %p193 = scmp.le.s32.totalorder 1, %s13
    %p194 = scmp.lt.s32.totalorder %s13, 3
    %p195 = pnand %p193, %p194
    %p196 = pneg %p195
    // Predicated region
    $region9: #{msvq_forward.7} parent=5 // pred_check
      _
    $region10: #{msvq_forward.7} parent=5 // pred_check_branch
      %198 = sbr.rel (%p195) target = $region12
    $region11: #{msvq_forward.7} parent=5 // pred_region
      %s199 = ssub.s32 %s13, 1
      // Predicated region
      $region13: #{msvq_forward.7} parent=11 // pred_check
        %p200 = pneg %p112
      $region14: #{msvq_forward.7} parent=11 // pred_check_branch
        %202 = sbr.rel (%p200) target = $region16
      $region15: #{msvq_forward.7} parent=11 // pred_region
        _
      $region16: #{msvq_forward.7} parent=11 // pred_fallthru
        _
      // Predicated region
      $region17: #{msvq_forward.7} parent=11 // pred_check
        %p203 = pneg %p133
      $region18: #{msvq_forward.7} parent=11 // pred_check_branch
        %205 = sbr.rel (%p203) target = $region20
      $region19: #{msvq_forward.7} parent=11 // pred_region
        _
      $region20: #{msvq_forward.7} parent=11 // pred_fallthru
        _
    $region12: #{msvq_forward.7} parent=5 // pred_fallthru
      _
    %p206 = scmp.lt.s32.totalorder %s13, 2
    // Predicated region
    $region21: #{msvq_forward.7} parent=5 // pred_check
      %p207 = pneg %p206
    $region22: #{msvq_forward.7} parent=5 // pred_check_branch
      %209 = sbr.rel (%p207) target = $region24
    $region23: #{msvq_forward.7} parent=5 // pred_region
      // Predicated region
      $region25: #{msvq_forward.7} parent=23 // pred_check
        %p210 = pneg %p33
      $region26: #{msvq_forward.7} parent=23 // pred_check_branch
        %212 = sbr.rel (%p210) target = $region28
      $region27: #{msvq_forward.7} parent=23 // pred_region
        %p213 = scmp.lt.s32.totalorder %s13, 1
        %s214 = scalar_select %p213, %s13, 1
        %s215 = smul.addr %s214, 32
        %s216 = smul.addr %s215, 8
        %s217 = scalar_lea.vmem %s0, %s216
      $region28: #{msvq_forward.7} parent=23 // pred_fallthru
        _
      // Predicated region
      $region29: #{msvq_forward.7} parent=23 // pred_check
        %p218 = pneg %p59
      $region30: #{msvq_forward.7} parent=23 // pred_check_branch
        %220 = sbr.rel (%p218) target = $region32
      $region31: #{msvq_forward.7} parent=23 // pred_region
        %p221 = scmp.lt.s32.totalorder %s13, 1
        %s222 = scalar_select %p221, %s13, 1
        %s223 = smul.addr %s222, 32
        %s224 = smul.addr %s223, 8
        %s225 = scalar_lea.vmem %s1, %s224
      $region32: #{msvq_forward.7} parent=23 // pred_fallthru
        _
      // Predicated region
      $region33: #{msvq_forward.7} parent=23 // pred_check
        %p226 = pneg %p85
      $region34: #{msvq_forward.7} parent=23 // pred_check_branch
        %228 = sbr.rel (%p226) target = $region36
      $region35: #{msvq_forward.7} parent=23 // pred_region
        %p229 = scmp.lt.s32.totalorder %s13, 1
        %s230 = scalar_select %p229, %s13, 1
        %s231 = smul.addr %s230, 32
        %s232 = smul.addr %s231, 8
        %s233 = scalar_lea.vmem %s2, %s232
      $region36: #{msvq_forward.7} parent=23 // pred_fallthru
        _
    $region24: #{msvq_forward.7} parent=5 // pred_fallthru
      _
    %p234 = scmp.le.s32.totalorder 1, %s13
    %p235 = scmp.lt.s32.totalorder %s13, 3
    %p236 = pnand %p234, %p235
    %p237 = pneg %p236
    // Predicated region
    $region37: #{msvq_forward.7} parent=5 // pred_check
      _
    $region38: #{msvq_forward.7} parent=5 // pred_check_branch
      %239 = sbr.rel (%p236) target = $region40
    $region39: #{msvq_forward.7} parent=5 // pred_region
      %s240 = ssub.s32 %s13, 1
      %p241 = scmp.lt.s32.totalorder %s18, 1
      %s242 = scalar_select %p241, %s18, 1
      %s243 = smul.addr %s242, 32
      %s244 = smul.addr %s243, 8
      %s245 = scalar_lea.vmem %s0, %s244
      %p246 = pneg %p39
      %p247 = pneg %p36
      %p248 = scmp.lt.s32.totalorder %s18, 1
      %s249 = scalar_select %p248, %s18, 1
      %s250 = smul.addr %s249, 32
      %s251 = smul.addr %s250, 8
      %s252 = scalar_lea.vmem %s1, %s251
      %p253 = pneg %p65
      %p254 = pneg %p62
      %p255 = scmp.lt.s32.totalorder %s18, 1
      %s256 = scalar_select %p255, %s18, 1
      %s257 = smul.addr %s256, 32
      %s258 = smul.addr %s257, 8
      %s259 = scalar_lea.vmem %s2, %s258
      %p260 = pneg %p91
      %p261 = pneg %p88
      %p262 = pneg %p112
      %p263 = pneg %p109
      %p264 = pneg %p133
      %p265 = pneg %p130
      %p266 = pneg %p159
      %p267 = pneg %p156
      %p268 = scmp.lt.s32.totalorder %s18, 1
      %s269 = scalar_select %p268, %s18, 1
      %s270 = smul.addr %s269, 32
      %s271 = smul.addr %s270, 8
      %s272 = scalar_lea.vmem %s5, %s271
      %p273 = pneg %p185
      %p274 = pneg %p182
      %p275 = scmp.lt.s32.totalorder %s18, 1
      %s276 = scalar_select %p275, %s18, 1
      %s277 = smul.addr %s276, 32
      %s278 = smul.addr %s277, 8
      %s279 = scalar_lea.vmem %s6, %s278
      %p280 = scmp.lt.s32.totalorder %s18, 1
      %s281 = scalar_select %p280, %s18, 1
      %s282 = smul.addr %s281, 32
      %s283 = smul.addr %s282, 8
      %s284 = scalar_lea.vmem %s0, %s283
      %p285 = scmp.lt.s32.totalorder %s18, 1
      %s286 = scalar_select %p285, %s18, 1
      %s287 = smul.addr %s286, 32
      %s288 = smul.addr %s287, 8
      %s289 = scalar_lea.vmem %s1, %s288
      %p290 = scmp.lt.s32.totalorder %s18, 1
      %s291 = scalar_select %p290, %s18, 1
      %s292 = smul.addr %s291, 32
      %s293 = smul.addr %s292, 8
      %s294 = scalar_lea.vmem %s2, %s293
      %p295 = scmp.lt.s32.totalorder %s18, 1
      %s296 = scalar_select %p295, %s18, 1
      %s297 = smul.addr %s296, 32
      %s298 = smul.addr %s297, 8
      %s299 = scalar_lea.vmem %s5, %s298
      %p300 = scmp.lt.s32.totalorder %s18, 1
      %s301 = scalar_select %p300, %s18, 1
      %s302 = smul.addr %s301, 32
      %s303 = smul.addr %s302, 8
      %s304 = scalar_lea.vmem %s6, %s303
      %v305 = vld [vmem:[%s284] sm:$0xff]
      %v306 = vld [vmem:[%s284 + $0x8] sm:$0xff]
      %v307 = vld [vmem:[%s284 + $0x10] sm:$0xff]
      %v308 = vld [vmem:[%s284 + $0x18] sm:$0xff]
      %v309 = vld [vmem:[%s284 + $0x20] sm:$0xff]
      %v310 = vld [vmem:[%s284 + $0x28] sm:$0xff]
      %v311 = vld [vmem:[%s284 + $0x30] sm:$0xff]
      %v312 = vld [vmem:[%s284 + $0x38] sm:$0xff]
      %v313 = vld [vmem:[%s284 + $0x40] sm:$0xff]
      %v314 = vld [vmem:[%s284 + $0x48] sm:$0xff]
      %v315 = vld [vmem:[%s284 + $0x50] sm:$0xff]
      %v316 = vld [vmem:[%s284 + $0x58] sm:$0xff]
      %v317 = vld [vmem:[%s284 + $0x60] sm:$0xff]
      %v318 = vld [vmem:[%s284 + $0x68] sm:$0xff]
      %v319 = vld [vmem:[%s284 + $0x70] sm:$0xff]
      %v320 = vld [vmem:[%s284 + $0x78] sm:$0xff]
      %v321 = vld [vmem:[%s284 + $0x80] sm:$0xff]
      %v322 = vld [vmem:[%s284 + $0x88] sm:$0xff]
      %v323 = vld [vmem:[%s284 + $0x90] sm:$0xff]
      %v324 = vld [vmem:[%s284 + $0x98] sm:$0xff]
      %v325 = vld [vmem:[%s284 + $0xa0] sm:$0xff]
      %v326 = vld [vmem:[%s284 + $0xa8] sm:$0xff]
      %v327 = vld [vmem:[%s284 + $0xb0] sm:$0xff]
      %v328 = vld [vmem:[%s284 + $0xb8] sm:$0xff]
      %v329 = vld [vmem:[%s284 + $0xc0] sm:$0xff]
      %v330 = vld [vmem:[%s284 + $0xc8] sm:$0xff]
      %v331 = vld [vmem:[%s284 + $0xd0] sm:$0xff]
      %v332 = vld [vmem:[%s284 + $0xd8] sm:$0xff]
      %v333 = vld [vmem:[%s284 + $0xe0] sm:$0xff]
      %v334 = vld [vmem:[%s284 + $0xe8] sm:$0xff]
      %v335 = vld [vmem:[%s284 + $0xf0] sm:$0xff]
      %v336 = vld [vmem:[%s284 + $0xf8] sm:$0xff]
      %vm337 = vcmask 261120
      %338 = vst.msk [vmem:[#allocation2] sm:$0xff] %vm337, 0.0
      %339 = vst.msk [vmem:[#allocation2 + $0x8] sm:$0xff] %vm337, 0.0
      %vm340 = vcmask 254976
      %341 = vst.msk [vmem:[#allocation2 + $0x10] sm:$0x3] %vm340, 0.0
      %342 = vst.msk [vmem:[#allocation2 + $0x18] sm:$0xff] %vm337, 0.0
      %343 = vst.msk [vmem:[#allocation2 + $0x20] sm:$0xff] %vm337, 0.0
      %344 = vst.msk [vmem:[#allocation2 + $0x28] sm:$0x3] %vm340, 0.0
      %345 = vst.msk [vmem:[#allocation2 + $0x30] sm:$0xff] %vm337, 0.0
      %346 = vst.msk [vmem:[#allocation2 + $0x38] sm:$0xff] %vm337, 0.0
      %347 = vst.msk [vmem:[#allocation2 + $0x40] sm:$0x3] %vm340, 0.0
      %348 = vst.msk [vmem:[#allocation2 + $0x48] sm:$0xff] %vm337, 0.0
      %349 = vst.msk [vmem:[#allocation2 + $0x50] sm:$0xff] %vm337, 0.0
      %350 = vst.msk [vmem:[#allocation2 + $0x58] sm:$0x3] %vm340, 0.0
      %351 = vst.msk [vmem:[#allocation2 + $0x60] sm:$0xff] %vm337, 0.0
      %352 = vst.msk [vmem:[#allocation2 + $0x68] sm:$0xff] %vm337, 0.0
      %353 = vst.msk [vmem:[#allocation2 + $0x70] sm:$0x3] %vm340, 0.0
      %354 = vst.msk [vmem:[#allocation2 + $0x78] sm:$0xff] %vm337, 0.0
      %355 = vst.msk [vmem:[#allocation2 + $0x80] sm:$0xff] %vm337, 0.0
      %356 = vst.msk [vmem:[#allocation2 + $0x88] sm:$0x3] %vm340, 0.0
      %357 = vst.msk [vmem:[#allocation2 + $0x90] sm:$0xff] %vm337, 0.0
      %358 = vst.msk [vmem:[#allocation2 + $0x98] sm:$0xff] %vm337, 0.0
      %359 = vst.msk [vmem:[#allocation2 + $0xa0] sm:$0x3] %vm340, 0.0
      %360 = vst.msk [vmem:[#allocation2 + $0xa8] sm:$0xff] %vm337, 0.0
      %361 = vst.msk [vmem:[#allocation2 + $0xb0] sm:$0xff] %vm337, 0.0
      %362 = vst.msk [vmem:[#allocation2 + $0xb8] sm:$0x3] %vm340, 0.0
      %363 = vst.msk [vmem:[#allocation2 + $0xc0] sm:$0xff] %vm337, 0.0
      %364 = vst.msk [vmem:[#allocation2 + $0xc8] sm:$0xff] %vm337, 0.0
      %365 = vst.msk [vmem:[#allocation2 + $0xd0] sm:$0x3] %vm340, 0.0
      %366 = vst.msk [vmem:[#allocation2 + $0xd8] sm:$0xff] %vm337, 0.0
      %367 = vst.msk [vmem:[#allocation2 + $0xe0] sm:$0xff] %vm337, 0.0
      %368 = vst.msk [vmem:[#allocation2 + $0xe8] sm:$0x3] %vm340, 0.0
      %369 = vst.msk [vmem:[#allocation2 + $0xf0] sm:$0xff] %vm337, 0.0
      %370 = vst.msk [vmem:[#allocation2 + $0xf8] sm:$0xff] %vm337, 0.0
      %371 = vst.msk [vmem:[#allocation2 + $0x100] sm:$0x3] %vm340, 0.0
      %372 = vst.msk [vmem:[#allocation2 + $0x108] sm:$0xff] %vm337, 0.0
      %373 = vst.msk [vmem:[#allocation2 + $0x110] sm:$0xff] %vm337, 0.0
      %374 = vst.msk [vmem:[#allocation2 + $0x118] sm:$0x3] %vm340, 0.0
      %375 = vst.msk [vmem:[#allocation2 + $0x120] sm:$0xff] %vm337, 0.0
      %376 = vst.msk [vmem:[#allocation2 + $0x128] sm:$0xff] %vm337, 0.0
      %377 = vst.msk [vmem:[#allocation2 + $0x130] sm:$0x3] %vm340, 0.0
      %378 = vst.msk [vmem:[#allocation2 + $0x138] sm:$0xff] %vm337, 0.0
      %379 = vst.msk [vmem:[#allocation2 + $0x140] sm:$0xff] %vm337, 0.0
      %380 = vst.msk [vmem:[#allocation2 + $0x148] sm:$0x3] %vm340, 0.0
      %381 = vst.msk [vmem:[#allocation2 + $0x150] sm:$0xff] %vm337, 0.0
      %382 = vst.msk [vmem:[#allocation2 + $0x158] sm:$0xff] %vm337, 0.0
      %383 = vst.msk [vmem:[#allocation2 + $0x160] sm:$0x3] %vm340, 0.0
      %384 = vst.msk [vmem:[#allocation2 + $0x168] sm:$0xff] %vm337, 0.0
      %385 = vst.msk [vmem:[#allocation2 + $0x170] sm:$0xff] %vm337, 0.0
      %386 = vst.msk [vmem:[#allocation2 + $0x178] sm:$0x3] %vm340, 0.0
      %387 = vst.msk [vmem:[#allocation2 + $0x180] sm:$0xff] %vm337, 0.0
      %388 = vst.msk [vmem:[#allocation2 + $0x188] sm:$0xff] %vm337, 0.0
      %389 = vst.msk [vmem:[#allocation2 + $0x190] sm:$0x3] %vm340, 0.0
      %390 = vst.msk [vmem:[#allocation2 + $0x198] sm:$0xff] %vm337, 0.0
      %391 = vst.msk [vmem:[#allocation2 + $0x1a0] sm:$0xff] %vm337, 0.0
      %392 = vst.msk [vmem:[#allocation2 + $0x1a8] sm:$0x3] %vm340, 0.0
      %s393 = scalar_lea.vmem [#allocation2], 24
      %394 = vst.msk [vmem:[%s393 + $0x1] sm:$0xff] %vm337, %v305
      %395 = vst.msk [vmem:[%s393 + $0x9] sm:$0xff] %vm337, %v306
      %396 = vst.msk [vmem:[%s393 + $0x19] sm:$0xff] %vm337, %v307
      %397 = vst.msk [vmem:[%s393 + $0x21] sm:$0xff] %vm337, %v308
      %398 = vst.msk [vmem:[%s393 + $0x31] sm:$0xff] %vm337, %v309
      %399 = vst.msk [vmem:[%s393 + $0x39] sm:$0xff] %vm337, %v310
      %400 = vst.msk [vmem:[%s393 + $0x49] sm:$0xff] %vm337, %v311
      %401 = vst.msk [vmem:[%s393 + $0x51] sm:$0xff] %vm337, %v312
      %402 = vst.msk [vmem:[%s393 + $0x61] sm:$0xff] %vm337, %v313
      %403 = vst.msk [vmem:[%s393 + $0x69] sm:$0xff] %vm337, %v314
      %404 = vst.msk [vmem:[%s393 + $0x79] sm:$0xff] %vm337, %v315
      %405 = vst.msk [vmem:[%s393 + $0x81] sm:$0xff] %vm337, %v316
      %406 = vst.msk [vmem:[%s393 + $0x91] sm:$0xff] %vm337, %v317
      %407 = vst.msk [vmem:[%s393 + $0x99] sm:$0xff] %vm337, %v318
      %408 = vst.msk [vmem:[%s393 + $0xa9] sm:$0xff] %vm337, %v319
      %409 = vst.msk [vmem:[%s393 + $0xb1] sm:$0xff] %vm337, %v320
      %410 = vst.msk [vmem:[%s393 + $0xc1] sm:$0xff] %vm337, %v321
      %411 = vst.msk [vmem:[%s393 + $0xc9] sm:$0xff] %vm337, %v322
      %412 = vst.msk [vmem:[%s393 + $0xd9] sm:$0xff] %vm337, %v323
      %413 = vst.msk [vmem:[%s393 + $0xe1] sm:$0xff] %vm337, %v324
      %414 = vst.msk [vmem:[%s393 + $0xf1] sm:$0xff] %vm337, %v325
      %415 = vst.msk [vmem:[%s393 + $0xf9] sm:$0xff] %vm337, %v326
      %416 = vst.msk [vmem:[%s393 + $0x109] sm:$0xff] %vm337, %v327
      %417 = vst.msk [vmem:[%s393 + $0x111] sm:$0xff] %vm337, %v328
      %418 = vst.msk [vmem:[%s393 + $0x121] sm:$0xff] %vm337, %v329
      %419 = vst.msk [vmem:[%s393 + $0x129] sm:$0xff] %vm337, %v330
      %420 = vst.msk [vmem:[%s393 + $0x139] sm:$0xff] %vm337, %v331
      %421 = vst.msk [vmem:[%s393 + $0x141] sm:$0xff] %vm337, %v332
      %422 = vst.msk [vmem:[%s393 + $0x151] sm:$0xff] %vm337, %v333
      %423 = vst.msk [vmem:[%s393 + $0x159] sm:$0xff] %vm337, %v334
      %424 = vst.msk [vmem:[%s393 + $0x169] sm:$0xff] %vm337, %v335
      %425 = vst.msk [vmem:[%s393 + $0x171] sm:$0xff] %vm337, %v336
      %v426 = vld [vmem:[%s3] sm:$0xff]
      %v427 = vld [vmem:[%s3 + $0x8] sm:$0xff]
      %v428 = vld [vmem:[%s3 + $0x10] sm:$0xff]
      %v429 = vld [vmem:[%s3 + $0x18] sm:$0xff]
      %v430 = vld [vmem:[%s3 + $0x20] sm:$0xff]
      %v431 = vld [vmem:[%s3 + $0x28] sm:$0xff]
      %v432 = vld [vmem:[%s3 + $0x30] sm:$0xff]
      %v433 = vld [vmem:[%s3 + $0x38] sm:$0xff]
      %v434 = vld [vmem:[%s3 + $0x40] sm:$0xff]
      %v435 = vld [vmem:[%s3 + $0x48] sm:$0xff]
      %v436 = vld [vmem:[%s3 + $0x50] sm:$0xff]
      %v437 = vld [vmem:[%s3 + $0x58] sm:$0xff]
      %v438 = vld [vmem:[%s3 + $0x60] sm:$0xff]
      %v439 = vld [vmem:[%s3 + $0x68] sm:$0xff]
      %v440 = vld [vmem:[%s3 + $0x70] sm:$0xff]
      %v441 = vld [vmem:[%s3 + $0x78] sm:$0xff]
      %v442 = vld [vmem:[%s3 + $0x80] sm:$0xff]
      %v443 = vld [vmem:[%s3 + $0x88] sm:$0xff]
      %v444 = vld [vmem:[%s3 + $0x90] sm:$0xff]
      %v445 = vld [vmem:[%s3 + $0x98] sm:$0xff]
      %v446 = vld [vmem:[%s3 + $0xa0] sm:$0xff]
      %v447 = vld [vmem:[%s3 + $0xa8] sm:$0xff]
      %v448 = vld [vmem:[%s3 + $0xb0] sm:$0xff]
      %v449 = vld [vmem:[%s3 + $0xb8] sm:$0xff]
      %v450 = vld [vmem:[%s3 + $0xc0] sm:$0xff]
      %v451 = vld [vmem:[%s3 + $0xc8] sm:$0xff]
      %v452 = vld [vmem:[%s3 + $0xd0] sm:$0xff]
      %v453 = vld [vmem:[%s3 + $0xd8] sm:$0xff]
      %v454 = vld [vmem:[%s3 + $0xe0] sm:$0xff]
      %v455 = vld [vmem:[%s3 + $0xe8] sm:$0xff]
      %v456 = vld [vmem:[%s3 + $0xf0] sm:$0xff]
      %v457 = vld [vmem:[%s3 + $0xf8] sm:$0xff]
      %v458 = vld [vmem:[%s3 + $0x100] sm:$0xff]
      %v459 = vld [vmem:[%s3 + $0x108] sm:$0xff]
      %v460 = vld [vmem:[%s3 + $0x110] sm:$0xff]
      %v461 = vld [vmem:[%s3 + $0x118] sm:$0xff]
      %v462 = vld [vmem:[#allocation2] sm:$0xff]
      %v463 = vld [vmem:[#allocation2 + $0x8] sm:$0xff]
      %v464 = vld [vmem:[#allocation2 + $0x18] sm:$0xff]
      %v465 = vld [vmem:[#allocation2 + $0x20] sm:$0xff]
      %v466 = vld [vmem:[#allocation2 + $0x30] sm:$0xff]
      %v467 = vld [vmem:[#allocation2 + $0x38] sm:$0xff]
      %v468 = vld [vmem:[#allocation2 + $0x48] sm:$0xff]
      %v469 = vld [vmem:[#allocation2 + $0x50] sm:$0xff]
      %v470 = vld [vmem:[#allocation2 + $0x60] sm:$0xff]
      %v471 = vld [vmem:[#allocation2 + $0x68] sm:$0xff]
      %v472 = vld [vmem:[#allocation2 + $0x78] sm:$0xff]
      %v473 = vld [vmem:[#allocation2 + $0x80] sm:$0xff]
      %v474 = vld [vmem:[#allocation2 + $0x90] sm:$0xff]
      %v475 = vld [vmem:[#allocation2 + $0x98] sm:$0xff]
      %v476 = vld [vmem:[#allocation2 + $0xa8] sm:$0xff]
      %v477 = vld [vmem:[#allocation2 + $0xb0] sm:$0xff]
      %v478 = vld [vmem:[#allocation2 + $0xc0] sm:$0xff]
      %v479 = vld [vmem:[#allocation2 + $0xc8] sm:$0xff]
      %v480 = vld [vmem:[#allocation2 + $0xd8] sm:$0xff]
      %v481 = vld [vmem:[#allocation2 + $0xe0] sm:$0xff]
      %v482 = vld [vmem:[#allocation2 + $0xf0] sm:$0xff]
      %v483 = vld [vmem:[#allocation2 + $0xf8] sm:$0xff]
      %v484 = vld [vmem:[#allocation2 + $0x108] sm:$0xff]
      %v485 = vld [vmem:[#allocation2 + $0x110] sm:$0xff]
      %v486 = vld [vmem:[#allocation2 + $0x120] sm:$0xff]
      %v487 = vld [vmem:[#allocation2 + $0x128] sm:$0xff]
      %v488 = vld [vmem:[#allocation2 + $0x138] sm:$0xff]
      %v489 = vld [vmem:[#allocation2 + $0x140] sm:$0xff]
      %v490 = vld [vmem:[#allocation2 + $0x150] sm:$0xff]
      %v491 = vld [vmem:[#allocation2 + $0x158] sm:$0xff]
      %v492 = vld [vmem:[#allocation2 + $0x168] sm:$0xff]
      %v493 = vld [vmem:[#allocation2 + $0x170] sm:$0xff]
      %v494 = vld [vmem:[#allocation2 + $0x1] sm:$0xff]
      %v495 = vld [vmem:[#allocation2 + $0x9] sm:$0xff]
      %v496 = vld [vmem:[#allocation2 + $0x19] sm:$0xff]
      %v497 = vld [vmem:[#allocation2 + $0x21] sm:$0xff]
      %v498 = vld [vmem:[#allocation2 + $0x31] sm:$0xff]
      %v499 = vld [vmem:[#allocation2 + $0x39] sm:$0xff]
      %v500 = vld [vmem:[#allocation2 + $0x49] sm:$0xff]
      %v501 = vld [vmem:[#allocation2 + $0x51] sm:$0xff]
      %v502 = vld [vmem:[#allocation2 + $0x61] sm:$0xff]
      %v503 = vld [vmem:[#allocation2 + $0x69] sm:$0xff]
      %v504 = vld [vmem:[#allocation2 + $0x79] sm:$0xff]
      %v505 = vld [vmem:[#allocation2 + $0x81] sm:$0xff]
      %v506 = vld [vmem:[#allocation2 + $0x91] sm:$0xff]
      %v507 = vld [vmem:[#allocation2 + $0x99] sm:$0xff]
      %v508 = vld [vmem:[#allocation2 + $0xa9] sm:$0xff]
      %v509 = vld [vmem:[#allocation2 + $0xb1] sm:$0xff]
      %v510 = vld [vmem:[#allocation2 + $0xc1] sm:$0xff]
      %v511 = vld [vmem:[#allocation2 + $0xc9] sm:$0xff]
      %v512 = vld [vmem:[#allocation2 + $0xd9] sm:$0xff]
      %v513 = vld [vmem:[#allocation2 + $0xe1] sm:$0xff]
      %v514 = vld [vmem:[#allocation2 + $0xf1] sm:$0xff]
      %v515 = vld [vmem:[#allocation2 + $0xf9] sm:$0xff]
      %v516 = vld [vmem:[#allocation2 + $0x109] sm:$0xff]
      %v517 = vld [vmem:[#allocation2 + $0x111] sm:$0xff]
      %v518 = vld [vmem:[#allocation2 + $0x121] sm:$0xff]
      %v519 = vld [vmem:[#allocation2 + $0x129] sm:$0xff]
      %v520 = vld [vmem:[#allocation2 + $0x139] sm:$0xff]
      %v521 = vld [vmem:[#allocation2 + $0x141] sm:$0xff]
      %v522 = vld [vmem:[#allocation2 + $0x151] sm:$0xff]
      %v523 = vld [vmem:[#allocation2 + $0x159] sm:$0xff]
      %v524 = vld [vmem:[#allocation2 + $0x169] sm:$0xff]
      %v525 = vld [vmem:[#allocation2 + $0x171] sm:$0xff]
      %v527 = vsel %vm337, %v494, 0
      %v530 = vsel %vm337, %v495, 0
      %v533 = vsel %vm337, %v496, 0
      %v536 = vsel %vm337, %v497, 0
      %v539 = vsel %vm337, %v498, 0
      %v542 = vsel %vm337, %v499, 0
      %v545 = vsel %vm337, %v500, 0
      %v548 = vsel %vm337, %v501, 0
      %v551 = vsel %vm337, %v502, 0
      %v554 = vsel %vm337, %v503, 0
      %v557 = vsel %vm337, %v504, 0
      %v560 = vsel %vm337, %v505, 0
      %v563 = vsel %vm337, %v506, 0
      %v566 = vsel %vm337, %v507, 0
      %v569 = vsel %vm337, %v508, 0
      %v572 = vsel %vm337, %v509, 0
      %v575 = vsel %vm337, %v510, 0
      %v578 = vsel %vm337, %v511, 0
      %v581 = vsel %vm337, %v512, 0
      %v584 = vsel %vm337, %v513, 0
      %v587 = vsel %vm337, %v514, 0
      %v590 = vsel %vm337, %v515, 0
      %v593 = vsel %vm337, %v516, 0
      %v596 = vsel %vm337, %v517, 0
      %v599 = vsel %vm337, %v518, 0
      %v602 = vsel %vm337, %v519, 0
      %v605 = vsel %vm337, %v520, 0
      %v608 = vsel %vm337, %v521, 0
      %v611 = vsel %vm337, %v522, 0
      %v614 = vsel %vm337, %v523, 0
      %v617 = vsel %vm337, %v524, 0
      %v620 = vsel %vm337, %v525, 0
      %622 = vmatprep.subr.mxu0 0.0
      %623 = vmatpush1.msra.mxu0 %v430
      %624 = vmatprep.subr.mxu0 0.0
      %625 = vmatpush1.msra.mxu0 %v431
      %626 = vmatprep.subr.mxu0 0.0
      %627 = vmatpush1.msra.mxu0 %v432
      %628 = vmatprep.subr.mxu0 0.0
      %629 = vmatpush1.msra.mxu0 %v433
      %630 = vmatprep.subr.mxu0 0.0
      %631 = vmatpush1.msra.mxu0 0.0
      %632 = vmatprep.subr.mxu0 0.0
      %633 = vmatpush1.msra.mxu0 0.0
      %634 = vmatprep.subr.mxu0 0.0
      %635 = vmatpush1.msra.mxu0 0.0
      %636 = vmatprep.subr.mxu0 0.0
      %637 = vmatpush1.msra.mxu0 0.0
      %638 = vmatprep.subr.mxu0 0.0
      %639 = vmatpush1.msra.mxu0 0.0
      %640 = vmatprep.subr.mxu0 0.0
      %641 = vmatpush1.msra.mxu0 0.0
      %642 = vmatprep.subr.mxu0 0.0
      %643 = vmatpush1.msra.mxu0 0.0
      %644 = vmatprep.subr.mxu0 0.0
      %645 = vmatpush1.msra.mxu0 0.0
      %646 = vmatprep.subr.mxu0 0.0
      %647 = vmatpush1.msra.mxu0 0.0
      %648 = vmatprep.subr.mxu0 0.0
      %649 = vmatpush1.msra.mxu0 0.0
      %650 = vmatprep.subr.mxu0 0.0
      %651 = vmatpush1.msra.mxu0 0.0
      %652 = vmatprep.subr.mxu0 0.0
      %653 = vmatpush1.msra.mxu0 0.0
      %654 = vmatprep.subr.mxu0 0.0
      %655 = vmatpush1.msra.mxu0 0.0
      %656 = vmatprep.subr.mxu0 0.0
      %657 = vmatpush1.msra.mxu0 0.0
      %658 = vmatprep.subr.mxu0 0.0
      %659 = vmatpush1.msra.mxu0 0.0
      %660 = vmatprep.subr.mxu0 0.0
      %661 = vmatpush1.msra.mxu0 0.0
      %662 = vmatprep.subr.mxu0 0.0
      %663 = vmatpush1.msra.mxu0 0.0
      %664 = vmatprep.subr.mxu0 0.0
      %665 = vmatpush1.msra.mxu0 0.0
      %666 = vmatprep.subr.mxu0 0.0
      %667 = vmatpush1.msra.mxu0 0.0
      %668 = vmatprep.subr.mxu0 0.0
      %669 = vmatpush1.msra.mxu0 0.0
      %670 = vmatprep.subr.mxu0 0.0
      %671 = vmatpush1.msra.mxu0 0.0
      %672 = vmatprep.subr.mxu0 0.0
      %673 = vmatpush1.msra.mxu0 0.0
      %674 = vmatprep.subr.mxu0 0.0
      %675 = vmatpush1.msra.mxu0 0.0
      %676 = vmatprep.subr.mxu0 0.0
      %677 = vmatpush1.msra.mxu0 0.0
      %678 = vmatprep.subr.mxu0 0.0
      %679 = vmatpush1.msra.mxu0 0.0
      %680 = vmatprep.subr.mxu0 0.0
      %681 = vmatpush1.msra.mxu0 0.0
      %682 = vmatprep.subr.mxu0 0.0
      %683 = vmatpush1.msra.mxu0 0.0
      %684 = vmatprep.subr.mxu0 0.0
      %685 = vmatpush1.msra.mxu0 0.0
      %686 = vmatprep.mubr.f32.mxu0 0.0
      %687 = vmatmul.mubr.f32.gmra.mrb[0].mxu0 %v527
      %v688 = vpop.f32.mrb[0].mxu0
      %v689 = vadd.f32 0.0, %v688
      %v690 = vpop.f32.mrb[0].mxu0
      %691 = vmatprep.mubr.f32.mxu0 0.0
      %692 = vmatmul.mubr.f32.gmra.mrb[0].mxu0 %v530
      %v693 = vpop.f32.mrb[0].mxu0
      %v694 = vadd.f32 0.0, %v693
      %v695 = vpop.f32.mrb[0].mxu0
      %696 = vmatprep.mubr.f32.mxu0 0.0
      %697 = vmatmul.mubr.f32.gmra.mrb[0].mxu0 %v533
      %v698 = vpop.f32.mrb[0].mxu0
      %v699 = vadd.f32 0.0, %v698
      %v700 = vpop.f32.mrb[0].mxu0
      %701 = vmatprep.mubr.f32.mxu0 0.0
      %702 = vmatmul.mubr.f32.gmra.mrb[0].mxu0 %v536
      %v703 = vpop.f32.mrb[0].mxu0
      %v704 = vadd.f32 0.0, %v703
      %v705 = vpop.f32.mrb[0].mxu0
      %706 = vmatprep.mubr.f32.mxu0 0.0
      %707 = vmatmul.mubr.f32.gmra.mrb[0].mxu0 %v539
      %v708 = vpop.f32.mrb[0].mxu0
      %v709 = vadd.f32 0.0, %v708
      %v710 = vpop.f32.mrb[0].mxu0
      %711 = vmatprep.mubr.f32.mxu0 0.0
      %712 = vmatmul.mubr.f32.gmra.mrb[0].mxu0 %v542
      %v713 = vpop.f32.mrb[0].mxu0
      %v714 = vadd.f32 0.0, %v713
      %v715 = vpop.f32.mrb[0].mxu0
      %716 = vmatprep.mubr.f32.mxu0 0.0
      %717 = vmatmul.mubr.f32.gmra.mrb[0].mxu0 %v545
      %v718 = vpop.f32.mrb[0].mxu0
      %v719 = vadd.f32 0.0, %v718
      %v720 = vpop.f32.mrb[0].mxu0
      %721 = vmatprep.mubr.f32.mxu0 0.0
      %722 = vmatmul.mubr.f32.gmra.mrb[0].mxu0 %v548
      %v723 = vpop.f32.mrb[0].mxu0
      %v724 = vadd.f32 0.0, %v723
      %v725 = vpop.f32.mrb[0].mxu0
      %726 = vmatprep.mubr.f32.mxu0 0.0
      %727 = vmatmul.mubr.f32.gmra.mrb[0].mxu0 %v551
      %v728 = vpop.f32.mrb[0].mxu0
      %v729 = vadd.f32 0.0, %v728
      %v730 = vpop.f32.mrb[0].mxu0
      %731 = vmatprep.mubr.f32.mxu0 0.0
      %732 = vmatmul.mubr.f32.gmra.mrb[0].mxu0 %v554
      %v733 = vpop.f32.mrb[0].mxu0
      %v734 = vadd.f32 0.0, %v733
      %v735 = vpop.f32.mrb[0].mxu0
      %736 = vmatprep.mubr.f32.mxu0 0.0
      %737 = vmatmul.mubr.f32.gmra.mrb[0].mxu0 %v557
      %v738 = vpop.f32.mrb[0].mxu0
      %v739 = vadd.f32 0.0, %v738
      %v740 = vpop.f32.mrb[0].mxu0
      %741 = vmatprep.mubr.f32.mxu0 0.0
      %742 = vmatmul.mubr.f32.gmra.mrb[0].mxu0 %v560
      %v743 = vpop.f32.mrb[0].mxu0
      %v744 = vadd.f32 0.0, %v743
      %v745 = vpop.f32.mrb[0].mxu0
      %746 = vmatprep.mubr.f32.mxu0 0.0
      %747 = vmatmul.mubr.f32.gmra.mrb[0].mxu0 %v563
      %v748 = vpop.f32.mrb[0].mxu0
      %v749 = vadd.f32 0.0, %v748
      %v750 = vpop.f32.mrb[0].mxu0
      %751 = vmatprep.mubr.f32.mxu0 0.0
      %752 = vmatmul.mubr.f32.gmra.mrb[0].mxu0 %v566
      %v753 = vpop.f32.mrb[0].mxu0
      %v754 = vadd.f32 0.0, %v753
      %v755 = vpop.f32.mrb[0].mxu0
      %756 = vmatprep.mubr.f32.mxu0 0.0
      %757 = vmatmul.mubr.f32.gmra.mrb[0].mxu0 %v569
      %v758 = vpop.f32.mrb[0].mxu0
      %v759 = vadd.f32 0.0, %v758
      %v760 = vpop.f32.mrb[0].mxu0
      %761 = vmatprep.mubr.f32.mxu0 0.0
      %762 = vmatmul.mubr.f32.gmra.mrb[0].mxu0 %v572
      %v763 = vpop.f32.mrb[0].mxu0
      %v764 = vadd.f32 0.0, %v763
      %v765 = vpop.f32.mrb[0].mxu0
      %766 = vmatprep.mubr.f32.mxu0 0.0
      %767 = vmatmul.mubr.f32.gmra.mrb[0].mxu0 %v575
      %v768 = vpop.f32.mrb[0].mxu0
      %v769 = vadd.f32 0.0, %v768
      %v770 = vpop.f32.mrb[0].mxu0
      %771 = vmatprep.mubr.f32.mxu0 0.0
      %772 = vmatmul.mubr.f32.gmra.mrb[0].mxu0 %v578
      %v773 = vpop.f32.mrb[0].mxu0
      %v774 = vadd.f32 0.0, %v773
      %v775 = vpop.f32.mrb[0].mxu0
      %776 = vmatprep.mubr.f32.mxu0 0.0
      %777 = vmatmul.mubr.f32.gmra.mrb[0].mxu0 %v581
      %v778 = vpop.f32.mrb[0].mxu0
      %v779 = vadd.f32 0.0, %v778
      %v780 = vpop.f32.mrb[0].mxu0
      %781 = vmatprep.mubr.f32.mxu0 0.0
      %782 = vmatmul.mubr.f32.gmra.mrb[0].mxu0 %v584
      %v783 = vpop.f32.mrb[0].mxu0
      %v784 = vadd.f32 0.0, %v783
      %v785 = vpop.f32.mrb[0].mxu0
      %786 = vmatprep.mubr.f32.mxu0 0.0
      %787 = vmatmul.mubr.f32.gmra.mrb[0].mxu0 %v587
      %v788 = vpop.f32.mrb[0].mxu0
      %v789 = vadd.f32 0.0, %v788
      %v790 = vpop.f32.mrb[0].mxu0
      %791 = vmatprep.mubr.f32.mxu0 0.0
      %792 = vmatmul.mubr.f32.gmra.mrb[0].mxu0 %v590
      %v793 = vpop.f32.mrb[0].mxu0
      %v794 = vadd.f32 0.0, %v793
      %v795 = vpop.f32.mrb[0].mxu0
      %796 = vmatprep.mubr.f32.mxu0 0.0
      %797 = vmatmul.mubr.f32.gmra.mrb[0].mxu0 %v593
      %v798 = vpop.f32.mrb[0].mxu0
      %v799 = vadd.f32 0.0, %v798
      %v800 = vpop.f32.mrb[0].mxu0
      %801 = vmatprep.mubr.f32.mxu0 0.0
      %802 = vmatmul.mubr.f32.gmra.mrb[0].mxu0 %v596
      %v803 = vpop.f32.mrb[0].mxu0
      %v804 = vadd.f32 0.0, %v803
      %v805 = vpop.f32.mrb[0].mxu0
      %806 = vmatprep.mubr.f32.mxu0 0.0
      %807 = vmatmul.mubr.f32.gmra.mrb[0].mxu0 %v599
      %v808 = vpop.f32.mrb[0].mxu0
      %v809 = vadd.f32 0.0, %v808
      %v810 = vpop.f32.mrb[0].mxu0
      %811 = vmatprep.mubr.f32.mxu0 0.0
      %812 = vmatmul.mubr.f32.gmra.mrb[0].mxu0 %v602
      %v813 = vpop.f32.mrb[0].mxu0
      %v814 = vadd.f32 0.0, %v813
      %v815 = vpop.f32.mrb[0].mxu0
      %816 = vmatprep.mubr.f32.mxu0 0.0
      %817 = vmatmul.mubr.f32.gmra.mrb[0].mxu0 %v605
      %v818 = vpop.f32.mrb[0].mxu0
      %v819 = vadd.f32 0.0, %v818
      %v820 = vpop.f32.mrb[0].mxu0
      %821 = vmatprep.mubr.f32.mxu0 0.0
      %822 = vmatmul.mubr.f32.gmra.mrb[0].mxu0 %v608
      %v823 = vpop.f32.mrb[0].mxu0
      %v824 = vadd.f32 0.0, %v823
      %v825 = vpop.f32.mrb[0].mxu0
      %826 = vmatprep.mubr.f32.mxu0 0.0
      %827 = vmatmul.mubr.f32.gmra.mrb[0].mxu0 %v611
      %v828 = vpop.f32.mrb[0].mxu0
      %v829 = vadd.f32 0.0, %v828
      %v830 = vpop.f32.mrb[0].mxu0
      %831 = vmatprep.mubr.f32.mxu0 0.0
      %832 = vmatmul.mubr.f32.gmra.mrb[0].mxu0 %v614
      %v833 = vpop.f32.mrb[0].mxu0
      %v834 = vadd.f32 0.0, %v833
      %v835 = vpop.f32.mrb[0].mxu0
      %836 = vmatprep.mubr.f32.mxu0 0.0
      %837 = vmatmul.mubr.f32.gmra.mrb[0].mxu0 %v617
      %v838 = vpop.f32.mrb[0].mxu0
      %v839 = vadd.f32 0.0, %v838
      %v840 = vpop.f32.mrb[0].mxu0
      %841 = vmatprep.mubr.f32.mxu0 0.0
      %842 = vmatmul.mubr.f32.gmra.mrb[0].mxu0 %v620
      %v843 = vpop.f32.mrb[0].mxu0
      %v844 = vadd.f32 0.0, %v843
      %v845 = vpop.f32.mrb[0].mxu0
      %846 = vdwg.mxu0
      %v848 = vsel %vm337, %v462, 0
      %v851 = vsel %vm337, %v463, 0
      %v854 = vsel %vm337, %v464, 0
      %v857 = vsel %vm337, %v465, 0
      %v860 = vsel %vm337, %v466, 0
      %v863 = vsel %vm337, %v467, 0
      %v866 = vsel %vm337, %v468, 0
      %v869 = vsel %vm337, %v469, 0
      %v872 = vsel %vm337, %v470, 0
      %v875 = vsel %vm337, %v471, 0
      %v878 = vsel %vm337, %v472, 0
      %v881 = vsel %vm337, %v473, 0
      %v884 = vsel %vm337, %v474, 0
      %v887 = vsel %vm337, %v475, 0
      %v890 = vsel %vm337, %v476, 0
      %v893 = vsel %vm337, %v477, 0
      %v896 = vsel %vm337, %v478, 0
      %v899 = vsel %vm337, %v479, 0
      %v902 = vsel %vm337, %v480, 0
      %v905 = vsel %vm337, %v481, 0
      %v908 = vsel %vm337, %v482, 0
      %v911 = vsel %vm337, %v483, 0
      %v914 = vsel %vm337, %v484, 0
      %v917 = vsel %vm337, %v485, 0
      %v920 = vsel %vm337, %v486, 0
      %v923 = vsel %vm337, %v487, 0
      %v926 = vsel %vm337, %v488, 0
      %v929 = vsel %vm337, %v489, 0
      %v932 = vsel %vm337, %v490, 0
      %v935 = vsel %vm337, %v491, 0
      %v938 = vsel %vm337, %v492, 0
      %v941 = vsel %vm337, %v493, 0
      %943 = vmatprep.subr.mxu0 0.0
      %944 = vmatpush1.msra.mxu0 %v426
      %945 = vmatprep.subr.mxu0 0.0
      %946 = vmatpush1.msra.mxu0 %v427
      %947 = vmatprep.subr.mxu0 0.0
      %948 = vmatpush1.msra.mxu0 %v428
      %949 = vmatprep.subr.mxu0 0.0
      %950 = vmatpush1.msra.mxu0 %v429
      %951 = vmatprep.subr.mxu0 0.0
      %952 = vmatpush1.msra.mxu0 0.0
      %953 = vmatprep.subr.mxu0 0.0
      %954 = vmatpush1.msra.mxu0 0.0
      %955 = vmatprep.subr.mxu0 0.0
      %956 = vmatpush1.msra.mxu0 0.0
      %957 = vmatprep.subr.mxu0 0.0
      %958 = vmatpush1.msra.mxu0 0.0
      %959 = vmatprep.subr.mxu0 0.0
      %960 = vmatpush1.msra.mxu0 0.0
      %961 = vmatprep.subr.mxu0 0.0
      %962 = vmatpush1.msra.mxu0 0.0
      %963 = vmatprep.subr.mxu0 0.0
      %964 = vmatpush1.msra.mxu0 0.0
      %965 = vmatprep.subr.mxu0 0.0
      %966 = vmatpush1.msra.mxu0 0.0
      %967 = vmatprep.subr.mxu0 0.0
      %968 = vmatpush1.msra.mxu0 0.0
      %969 = vmatprep.subr.mxu0 0.0
      %970 = vmatpush1.msra.mxu0 0.0
      %971 = vmatprep.subr.mxu0 0.0
      %972 = vmatpush1.msra.mxu0 0.0
      %973 = vmatprep.subr.mxu0 0.0
      %974 = vmatpush1.msra.mxu0 0.0
      %975 = vmatprep.subr.mxu0 0.0
      %976 = vmatpush1.msra.mxu0 0.0
      %977 = vmatprep.subr.mxu0 0.0
      %978 = vmatpush1.msra.mxu0 0.0
      %979 = vmatprep.subr.mxu0 0.0
      %980 = vmatpush1.msra.mxu0 0.0
      %981 = vmatprep.subr.mxu0 0.0
      %982 = vmatpush1.msra.mxu0 0.0
      %983 = vmatprep.subr.mxu0 0.0
      %984 = vmatpush1.msra.mxu0 0.0
      %985 = vmatprep.subr.mxu0 0.0
      %986 = vmatpush1.msra.mxu0 0.0
      %987 = vmatprep.subr.mxu0 0.0
      %988 = vmatpush1.msra.mxu0 0.0
      %989 = vmatprep.subr.mxu0 0.0
      %990 = vmatpush1.msra.mxu0 0.0
      %991 = vmatprep.subr.mxu0 0.0
      %992 = vmatpush1.msra.mxu0 0.0
      %993 = vmatprep.subr.mxu0 0.0
      %994 = vmatpush1.msra.mxu0 0.0
      %995 = vmatprep.subr.mxu0 0.0
      %996 = vmatpush1.msra.mxu0 0.0
      %997 = vmatprep.subr.mxu0 0.0
      %998 = vmatpush1.msra.mxu0 0.0
      %999 = vmatprep.subr.mxu0 0.0
      %1000 = vmatpush1.msra.mxu0 0.0
      %1001 = vmatprep.subr.mxu0 0.0
      %1002 = vmatpush1.msra.mxu0 0.0
      %1003 = vmatprep.subr.mxu0 0.0
      %1004 = vmatpush1.msra.mxu0 0.0
      %1005 = vmatprep.subr.mxu0 0.0
      %1006 = vmatpush1.msra.mxu0 0.0
      %1007 = vmatprep.mubr.f32.mxu0 0.0
      %1008 = vmatmul.mubr.f32.gmra.mrb[0].mxu0 %v848
      %v1009 = vpop.f32.mrb[0].mxu0
      %v1010 = vadd.f32 %v689, %v1009
      %v1011 = vpop.f32.mrb[0].mxu0
      %1012 = vmatprep.mubr.f32.mxu0 0.0
      %1013 = vmatmul.mubr.f32.gmra.mrb[0].mxu0 %v851
      %v1014 = vpop.f32.mrb[0].mxu0
      %v1015 = vadd.f32 %v694, %v1014
      %v1016 = vpop.f32.mrb[0].mxu0
      %1017 = vmatprep.mubr.f32.mxu0 0.0
      %1018 = vmatmul.mubr.f32.gmra.mrb[0].mxu0 %v854
      %v1019 = vpop.f32.mrb[0].mxu0
      %v1020 = vadd.f32 %v699, %v1019
      %v1021 = vpop.f32.mrb[0].mxu0
      %1022 = vmatprep.mubr.f32.mxu0 0.0
      %1023 = vmatmul.mubr.f32.gmra.mrb[0].mxu0 %v857
      %v1024 = vpop.f32.mrb[0].mxu0
      %v1025 = vadd.f32 %v704, %v1024
      %v1026 = vpop.f32.mrb[0].mxu0
      %1027 = vmatprep.mubr.f32.mxu0 0.0
      %1028 = vmatmul.mubr.f32.gmra.mrb[0].mxu0 %v860
      %v1029 = vpop.f32.mrb[0].mxu0
      %v1030 = vadd.f32 %v709, %v1029
      %v1031 = vpop.f32.mrb[0].mxu0
      %1032 = vmatprep.mubr.f32.mxu0 0.0
      %1033 = vmatmul.mubr.f32.gmra.mrb[0].mxu0 %v863
      %v1034 = vpop.f32.mrb[0].mxu0
      %v1035 = vadd.f32 %v714, %v1034
      %v1036 = vpop.f32.mrb[0].mxu0
      %1037 = vmatprep.mubr.f32.mxu0 0.0
      %1038 = vmatmul.mubr.f32.gmra.mrb[0].mxu0 %v866
      %v1039 = vpop.f32.mrb[0].mxu0
      %v1040 = vadd.f32 %v719, %v1039
      %v1041 = vpop.f32.mrb[0].mxu0
      %1042 = vmatprep.mubr.f32.mxu0 0.0
      %1043 = vmatmul.mubr.f32.gmra.mrb[0].mxu0 %v869
      %v1044 = vpop.f32.mrb[0].mxu0
      %v1045 = vadd.f32 %v724, %v1044
      %v1046 = vpop.f32.mrb[0].mxu0
      %1047 = vmatprep.mubr.f32.mxu0 0.0
      %1048 = vmatmul.mubr.f32.gmra.mrb[0].mxu0 %v872
      %v1049 = vpop.f32.mrb[0].mxu0
      %v1050 = vadd.f32 %v729, %v1049
      %v1051 = vpop.f32.mrb[0].mxu0
      %1052 = vmatprep.mubr.f32.mxu0 0.0
      %1053 = vmatmul.mubr.f32.gmra.mrb[0].mxu0 %v875
      %v1054 = vpop.f32.mrb[0].mxu0
      %v1055 = vadd.f32 %v734, %v1054
      %v1056 = vpop.f32.mrb[0].mxu0
      %1057 = vmatprep.mubr.f32.mxu0 0.0
      %1058 = vmatmul.mubr.f32.gmra.mrb[0].mxu0 %v878
      %v1059 = vpop.f32.mrb[0].mxu0
      %v1060 = vadd.f32 %v739, %v1059
      %v1061 = vpop.f32.mrb[0].mxu0
      %1062 = vmatprep.mubr.f32.mxu0 0.0
      %1063 = vmatmul.mubr.f32.gmra.mrb[0].mxu0 %v881
      %v1064 = vpop.f32.mrb[0].mxu0
      %v1065 = vadd.f32 %v744, %v1064
      %v1066 = vpop.f32.mrb[0].mxu0
      %1067 = vmatprep.mubr.f32.mxu0 0.0
      %1068 = vmatmul.mubr.f32.gmra.mrb[0].mxu0 %v884
      %v1069 = vpop.f32.mrb[0].mxu0
      %v1070 = vadd.f32 %v749, %v1069
      %v1071 = vpop.f32.mrb[0].mxu0
      %1072 = vmatprep.mubr.f32.mxu0 0.0
      %1073 = vmatmul.mubr.f32.gmra.mrb[0].mxu0 %v887
      %v1074 = vpop.f32.mrb[0].mxu0
      %v1075 = vadd.f32 %v754, %v1074
      %v1076 = vpop.f32.mrb[0].mxu0
      %1077 = vmatprep.mubr.f32.mxu0 0.0
      %1078 = vmatmul.mubr.f32.gmra.mrb[0].mxu0 %v890
      %v1079 = vpop.f32.mrb[0].mxu0
      %v1080 = vadd.f32 %v759, %v1079
      %v1081 = vpop.f32.mrb[0].mxu0
      %1082 = vmatprep.mubr.f32.mxu0 0.0
      %1083 = vmatmul.mubr.f32.gmra.mrb[0].mxu0 %v893
      %v1084 = vpop.f32.mrb[0].mxu0
      %v1085 = vadd.f32 %v764, %v1084
      %v1086 = vpop.f32.mrb[0].mxu0
      %1087 = vmatprep.mubr.f32.mxu0 0.0
      %1088 = vmatmul.mubr.f32.gmra.mrb[0].mxu0 %v896
      %v1089 = vpop.f32.mrb[0].mxu0
      %v1090 = vadd.f32 %v769, %v1089
      %v1091 = vpop.f32.mrb[0].mxu0
      %1092 = vmatprep.mubr.f32.mxu0 0.0
      %1093 = vmatmul.mubr.f32.gmra.mrb[0].mxu0 %v899
      %v1094 = vpop.f32.mrb[0].mxu0
      %v1095 = vadd.f32 %v774, %v1094
      %v1096 = vpop.f32.mrb[0].mxu0
      %1097 = vmatprep.mubr.f32.mxu0 0.0
      %1098 = vmatmul.mubr.f32.gmra.mrb[0].mxu0 %v902
      %v1099 = vpop.f32.mrb[0].mxu0
      %v1100 = vadd.f32 %v779, %v1099
      %v1101 = vpop.f32.mrb[0].mxu0
      %1102 = vmatprep.mubr.f32.mxu0 0.0
      %1103 = vmatmul.mubr.f32.gmra.mrb[0].mxu0 %v905
      %v1104 = vpop.f32.mrb[0].mxu0
      %v1105 = vadd.f32 %v784, %v1104
      %v1106 = vpop.f32.mrb[0].mxu0
      %1107 = vmatprep.mubr.f32.mxu0 0.0
      %1108 = vmatmul.mubr.f32.gmra.mrb[0].mxu0 %v908
      %v1109 = vpop.f32.mrb[0].mxu0
      %v1110 = vadd.f32 %v789, %v1109
      %v1111 = vpop.f32.mrb[0].mxu0
      %1112 = vmatprep.mubr.f32.mxu0 0.0
      %1113 = vmatmul.mubr.f32.gmra.mrb[0].mxu0 %v911
      %v1114 = vpop.f32.mrb[0].mxu0
      %v1115 = vadd.f32 %v794, %v1114
      %v1116 = vpop.f32.mrb[0].mxu0
      %1117 = vmatprep.mubr.f32.mxu0 0.0
      %1118 = vmatmul.mubr.f32.gmra.mrb[0].mxu0 %v914
      %v1119 = vpop.f32.mrb[0].mxu0
      %v1120 = vadd.f32 %v799, %v1119
      %v1121 = vpop.f32.mrb[0].mxu0
      %1122 = vmatprep.mubr.f32.mxu0 0.0
      %1123 = vmatmul.mubr.f32.gmra.mrb[0].mxu0 %v917
      %v1124 = vpop.f32.mrb[0].mxu0
      %v1125 = vadd.f32 %v804, %v1124
      %v1126 = vpop.f32.mrb[0].mxu0
      %1127 = vmatprep.mubr.f32.mxu0 0.0
      %1128 = vmatmul.mubr.f32.gmra.mrb[0].mxu0 %v920
      %v1129 = vpop.f32.mrb[0].mxu0
      %v1130 = vadd.f32 %v809, %v1129
      %v1131 = vpop.f32.mrb[0].mxu0
      %1132 = vmatprep.mubr.f32.mxu0 0.0
      %1133 = vmatmul.mubr.f32.gmra.mrb[0].mxu0 %v923
      %v1134 = vpop.f32.mrb[0].mxu0
      %v1135 = vadd.f32 %v814, %v1134
      %v1136 = vpop.f32.mrb[0].mxu0
      %1137 = vmatprep.mubr.f32.mxu0 0.0
      %1138 = vmatmul.mubr.f32.gmra.mrb[0].mxu0 %v926
      %v1139 = vpop.f32.mrb[0].mxu0
      %v1140 = vadd.f32 %v819, %v1139
      %v1141 = vpop.f32.mrb[0].mxu0
      %1142 = vmatprep.mubr.f32.mxu0 0.0
      %1143 = vmatmul.mubr.f32.gmra.mrb[0].mxu0 %v929
      %v1144 = vpop.f32.mrb[0].mxu0
      %v1145 = vadd.f32 %v824, %v1144
      %v1146 = vpop.f32.mrb[0].mxu0
      %1147 = vmatprep.mubr.f32.mxu0 0.0
      %1148 = vmatmul.mubr.f32.gmra.mrb[0].mxu0 %v932
      %v1149 = vpop.f32.mrb[0].mxu0
      %v1150 = vadd.f32 %v829, %v1149
      %v1151 = vpop.f32.mrb[0].mxu0
      %1152 = vmatprep.mubr.f32.mxu0 0.0
      %1153 = vmatmul.mubr.f32.gmra.mrb[0].mxu0 %v935
      %v1154 = vpop.f32.mrb[0].mxu0
      %v1155 = vadd.f32 %v834, %v1154
      %v1156 = vpop.f32.mrb[0].mxu0
      %1157 = vmatprep.mubr.f32.mxu0 0.0
      %1158 = vmatmul.mubr.f32.gmra.mrb[0].mxu0 %v938
      %v1159 = vpop.f32.mrb[0].mxu0
      %v1160 = vadd.f32 %v839, %v1159
      %v1161 = vpop.f32.mrb[0].mxu0
      %1162 = vmatprep.mubr.f32.mxu0 0.0
      %1163 = vmatmul.mubr.f32.gmra.mrb[0].mxu0 %v941
      %v1164 = vpop.f32.mrb[0].mxu0
      %v1165 = vadd.f32 %v844, %v1164
      %v1166 = vpop.f32.mrb[0].mxu0
      %1167 = vdwg.mxu0
      %v1168 = vld [vmem:[#allocation2 + $0x2] sm:$0xff]
      %v1169 = vld [vmem:[#allocation2 + $0xa] sm:$0xff]
      %v1170 = vld [vmem:[#allocation2 + $0x1a] sm:$0xff]
      %v1171 = vld [vmem:[#allocation2 + $0x22] sm:$0xff]
      %v1172 = vld [vmem:[#allocation2 + $0x32] sm:$0xff]
      %v1173 = vld [vmem:[#allocation2 + $0x3a] sm:$0xff]
      %v1174 = vld [vmem:[#allocation2 + $0x4a] sm:$0xff]
      %v1175 = vld [vmem:[#allocation2 + $0x52] sm:$0xff]
      %v1176 = vld [vmem:[#allocation2 + $0x62] sm:$0xff]
      %v1177 = vld [vmem:[#allocation2 + $0x6a] sm:$0xff]
      %v1178 = vld [vmem:[#allocation2 + $0x7a] sm:$0xff]
      %v1179 = vld [vmem:[#allocation2 + $0x82] sm:$0xff]
      %v1180 = vld [vmem:[#allocation2 + $0x92] sm:$0xff]
      %v1181 = vld [vmem:[#allocation2 + $0x9a] sm:$0xff]
      %v1182 = vld [vmem:[#allocation2 + $0xaa] sm:$0xff]
      %v1183 = vld [vmem:[#allocation2 + $0xb2] sm:$0xff]
      %v1184 = vld [vmem:[#allocation2 + $0xc2] sm:$0xff]
      %v1185 = vld [vmem:[#allocation2 + $0xca] sm:$0xff]
      %v1186 = vld [vmem:[#allocation2 + $0xda] sm:$0xff]
      %v1187 = vld [vmem:[#allocation2 + $0xe2] sm:$0xff]
      %v1188 = vld [vmem:[#allocation2 + $0xf2] sm:$0xff]
      %v1189 = vld [vmem:[#allocation2 + $0xfa] sm:$0xff]
      %v1190 = vld [vmem:[#allocation2 + $0x10a] sm:$0xff]
      %v1191 = vld [vmem:[#allocation2 + $0x112] sm:$0xff]
      %v1192 = vld [vmem:[#allocation2 + $0x122] sm:$0xff]
      %v1193 = vld [vmem:[#allocation2 + $0x12a] sm:$0xff]
      %v1194 = vld [vmem:[#allocation2 + $0x13a] sm:$0xff]
      %v1195 = vld [vmem:[#allocation2 + $0x142] sm:$0xff]
      %v1196 = vld [vmem:[#allocation2 + $0x152] sm:$0xff]
      %v1197 = vld [vmem:[#allocation2 + $0x15a] sm:$0xff]
      %v1198 = vld [vmem:[#allocation2 + $0x16a] sm:$0xff]
      %v1199 = vld [vmem:[#allocation2 + $0x172] sm:$0xff]
      %v1201 = vsel %vm337, %v1168, 0
      %v1204 = vsel %vm337, %v1169, 0
      %v1207 = vsel %vm337, %v1170, 0
      %v1210 = vsel %vm337, %v1171, 0
      %v1213 = vsel %vm337, %v1172, 0
      %v1216 = vsel %vm337, %v1173, 0
      %v1219 = vsel %vm337, %v1174, 0
      %v1222 = vsel %vm337, %v1175, 0
      %v1225 = vsel %vm337, %v1176, 0
      %v1228 = vsel %vm337, %v1177, 0
      %v1231 = vsel %vm337, %v1178, 0
      %v1234 = vsel %vm337, %v1179, 0
      %v1237 = vsel %vm337, %v1180, 0
      %v1240 = vsel %vm337, %v1181, 0
      %v1243 = vsel %vm337, %v1182, 0
      %v1246 = vsel %vm337, %v1183, 0
      %v1249 = vsel %vm337, %v1184, 0
      %v1252 = vsel %vm337, %v1185, 0
      %v1255 = vsel %vm337, %v1186, 0
      %v1258 = vsel %vm337, %v1187, 0
      %v1261 = vsel %vm337, %v1188, 0
      %v1264 = vsel %vm337, %v1189, 0
      %v1267 = vsel %vm337, %v1190, 0
      %v1270 = vsel %vm337, %v1191, 0
      %v1273 = vsel %vm337, %v1192, 0
      %v1276 = vsel %vm337, %v1193, 0
      %v1279 = vsel %vm337, %v1194, 0
      %v1282 = vsel %vm337, %v1195, 0
      %v1285 = vsel %vm337, %v1196, 0
      %v1288 = vsel %vm337, %v1197, 0
      %v1291 = vsel %vm337, %v1198, 0
      %v1294 = vsel %vm337, %v1199, 0
      %1296 = vmatprep.subr.mxu0 0.0
      %1297 = vmatpush1.msra.mxu0 %v434
      %1298 = vmatprep.subr.mxu0 0.0
      %1299 = vmatpush1.msra.mxu0 %v435
      %1300 = vmatprep.subr.mxu0 0.0
      %1301 = vmatpush1.msra.mxu0 %v436
      %1302 = vmatprep.subr.mxu0 0.0
      %1303 = vmatpush1.msra.mxu0 %v437
      %1304 = vmatprep.subr.mxu0 0.0
      %1305 = vmatpush1.msra.mxu0 0.0
      %1306 = vmatprep.subr.mxu0 0.0
      %1307 = vmatpush1.msra.mxu0 0.0
      %1308 = vmatprep.subr.mxu0 0.0
      %1309 = vmatpush1.msra.mxu0 0.0
      %1310 = vmatprep.subr.mxu0 0.0
      %1311 = vmatpush1.msra.mxu0 0.0
      %1312 = vmatprep.subr.mxu0 0.0
      %1313 = vmatpush1.msra.mxu0 0.0
      %1314 = vmatprep.subr.mxu0 0.0
      %1315 = vmatpush1.msra.mxu0 0.0
      %1316 = vmatprep.subr.mxu0 0.0
      %1317 = vmatpush1.msra.mxu0 0.0
      %1318 = vmatprep.subr.mxu0 0.0
      %1319 = vmatpush1.msra.mxu0 0.0
      %1320 = vmatprep.subr.mxu0 0.0
      %1321 = vmatpush1.msra.mxu0 0.0
      %1322 = vmatprep.subr.mxu0 0.0
      %1323 = vmatpush1.msra.mxu0 0.0
      %1324 = vmatprep.subr.mxu0 0.0
      %1325 = vmatpush1.msra.mxu0 0.0
      %1326 = vmatprep.subr.mxu0 0.0
      %1327 = vmatpush1.msra.mxu0 0.0
      %1328 = vmatprep.subr.mxu0 0.0
      %1329 = vmatpush1.msra.mxu0 0.0
      %1330 = vmatprep.subr.mxu0 0.0
      %1331 = vmatpush1.msra.mxu0 0.0
      %1332 = vmatprep.subr.mxu0 0.0
      %1333 = vmatpush1.msra.mxu0 0.0
      %1334 = vmatprep.subr.mxu0 0.0
      %1335 = vmatpush1.msra.mxu0 0.0
      %1336 = vmatprep.subr.mxu0 0.0
      %1337 = vmatpush1.msra.mxu0 0.0
      %1338 = vmatprep.subr.mxu0 0.0
      %1339 = vmatpush1.msra.mxu0 0.0
      %1340 = vmatprep.subr.mxu0 0.0
      %1341 = vmatpush1.msra.mxu0 0.0
      %1342 = vmatprep.subr.mxu0 0.0
      %1343 = vmatpush1.msra.mxu0 0.0
      %1344 = vmatprep.subr.mxu0 0.0
      %1345 = vmatpush1.msra.mxu0 0.0
      %1346 = vmatprep.subr.mxu0 0.0
      %1347 = vmatpush1.msra.mxu0 0.0
      %1348 = vmatprep.subr.mxu0 0.0
      %1349 = vmatpush1.msra.mxu0 0.0
      %1350 = vmatprep.subr.mxu0 0.0
      %1351 = vmatpush1.msra.mxu0 0.0
      %1352 = vmatprep.subr.mxu0 0.0
      %1353 = vmatpush1.msra.mxu0 0.0
      %1354 = vmatprep.subr.mxu0 0.0
      %1355 = vmatpush1.msra.mxu0 0.0
      %1356 = vmatprep.subr.mxu0 0.0
      %1357 = vmatpush1.msra.mxu0 0.0
      %1358 = vmatprep.subr.mxu0 0.0
      %1359 = vmatpush1.msra.mxu0 0.0
      %1360 = vmatprep.mubr.f32.mxu0 0.0
      %1361 = vmatmul.mubr.f32.gmra.mrb[0].mxu0 %v1201
      %v1362 = vpop.f32.mrb[0].mxu0
      %v1363 = vadd.f32 0.0, %v1362
      %v1364 = vpop.f32.mrb[0].mxu0
      %1365 = vmatprep.mubr.f32.mxu0 0.0
      %1366 = vmatmul.mubr.f32.gmra.mrb[0].mxu0 %v1204
      %v1367 = vpop.f32.mrb[0].mxu0
      %v1368 = vadd.f32 0.0, %v1367
      %v1369 = vpop.f32.mrb[0].mxu0
      %1370 = vmatprep.mubr.f32.mxu0 0.0
      %1371 = vmatmul.mubr.f32.gmra.mrb[0].mxu0 %v1207
      %v1372 = vpop.f32.mrb[0].mxu0
      %v1373 = vadd.f32 0.0, %v1372
      %v1374 = vpop.f32.mrb[0].mxu0
      %1375 = vmatprep.mubr.f32.mxu0 0.0
      %1376 = vmatmul.mubr.f32.gmra.mrb[0].mxu0 %v1210
      %v1377 = vpop.f32.mrb[0].mxu0
      %v1378 = vadd.f32 0.0, %v1377
      %v1379 = vpop.f32.mrb[0].mxu0
      %1380 = vmatprep.mubr.f32.mxu0 0.0
      %1381 = vmatmul.mubr.f32.gmra.mrb[0].mxu0 %v1213
      %v1382 = vpop.f32.mrb[0].mxu0
      %v1383 = vadd.f32 0.0, %v1382
      %v1384 = vpop.f32.mrb[0].mxu0
      %1385 = vmatprep.mubr.f32.mxu0 0.0
      %1386 = vmatmul.mubr.f32.gmra.mrb[0].mxu0 %v1216
      %v1387 = vpop.f32.mrb[0].mxu0
      %v1388 = vadd.f32 0.0, %v1387
      %v1389 = vpop.f32.mrb[0].mxu0
      %1390 = vmatprep.mubr.f32.mxu0 0.0
      %1391 = vmatmul.mubr.f32.gmra.mrb[0].mxu0 %v1219
      %v1392 = vpop.f32.mrb[0].mxu0
      %v1393 = vadd.f32 0.0, %v1392
      %v1394 = vpop.f32.mrb[0].mxu0
      %1395 = vmatprep.mubr.f32.mxu0 0.0
      %1396 = vmatmul.mubr.f32.gmra.mrb[0].mxu0 %v1222
      %v1397 = vpop.f32.mrb[0].mxu0
      %v1398 = vadd.f32 0.0, %v1397
      %v1399 = vpop.f32.mrb[0].mxu0
      %1400 = vmatprep.mubr.f32.mxu0 0.0
      %1401 = vmatmul.mubr.f32.gmra.mrb[0].mxu0 %v1225
      %v1402 = vpop.f32.mrb[0].mxu0
      %v1403 = vadd.f32 0.0, %v1402
      %v1404 = vpop.f32.mrb[0].mxu0
      %1405 = vmatprep.mubr.f32.mxu0 0.0
      %1406 = vmatmul.mubr.f32.gmra.mrb[0].mxu0 %v1228
      %v1407 = vpop.f32.mrb[0].mxu0
      %v1408 = vadd.f32 0.0, %v1407
      %v1409 = vpop.f32.mrb[0].mxu0
      %1410 = vmatprep.mubr.f32.mxu0 0.0
      %1411 = vmatmul.mubr.f32.gmra.mrb[0].mxu0 %v1231
      %v1412 = vpop.f32.mrb[0].mxu0
      %v1413 = vadd.f32 0.0, %v1412
      %v1414 = vpop.f32.mrb[0].mxu0
      %1415 = vmatprep.mubr.f32.mxu0 0.0
      %1416 = vmatmul.mubr.f32.gmra.mrb[0].mxu0 %v1234
      %v1417 = vpop.f32.mrb[0].mxu0
      %v1418 = vadd.f32 0.0, %v1417
      %v1419 = vpop.f32.mrb[0].mxu0
      %1420 = vmatprep.mubr.f32.mxu0 0.0
      %1421 = vmatmul.mubr.f32.gmra.mrb[0].mxu0 %v1237
      %v1422 = vpop.f32.mrb[0].mxu0
      %v1423 = vadd.f32 0.0, %v1422
      %v1424 = vpop.f32.mrb[0].mxu0
      %1425 = vmatprep.mubr.f32.mxu0 0.0
      %1426 = vmatmul.mubr.f32.gmra.mrb[0].mxu0 %v1240
      %v1427 = vpop.f32.mrb[0].mxu0
      %v1428 = vadd.f32 0.0, %v1427
      %v1429 = vpop.f32.mrb[0].mxu0
      %1430 = vmatprep.mubr.f32.mxu0 0.0
      %1431 = vmatmul.mubr.f32.gmra.mrb[0].mxu0 %v1243
      %v1432 = vpop.f32.mrb[0].mxu0
      %v1433 = vadd.f32 0.0, %v1432
      %v1434 = vpop.f32.mrb[0].mxu0
      %1435 = vmatprep.mubr.f32.mxu0 0.0
      %1436 = vmatmul.mubr.f32.gmra.mrb[0].mxu0 %v1246
      %v1437 = vpop.f32.mrb[0].mxu0
      %v1438 = vadd.f32 0.0, %v1437
      %v1439 = vpop.f32.mrb[0].mxu0
      %1440 = vmatprep.mubr.f32.mxu0 0.0
      %1441 = vmatmul.mubr.f32.gmra.mrb[0].mxu0 %v1249
      %v1442 = vpop.f32.mrb[0].mxu0
      %v1443 = vadd.f32 0.0, %v1442
      %v1444 = vpop.f32.mrb[0].mxu0
      %1445 = vmatprep.mubr.f32.mxu0 0.0
      %1446 = vmatmul.mubr.f32.gmra.mrb[0].mxu0 %v1252
      %v1447 = vpop.f32.mrb[0].mxu0
      %v1448 = vadd.f32 0.0, %v1447
      %v1449 = vpop.f32.mrb[0].mxu0
      %1450 = vmatprep.mubr.f32.mxu0 0.0
      %1451 = vmatmul.mubr.f32.gmra.mrb[0].mxu0 %v1255
      %v1452 = vpop.f32.mrb[0].mxu0
      %v1453 = vadd.f32 0.0, %v1452
      %v1454 = vpop.f32.mrb[0].mxu0
      %1455 = vmatprep.mubr.f32.mxu0 0.0
      %1456 = vmatmul.mubr.f32.gmra.mrb[0].mxu0 %v1258
      %v1457 = vpop.f32.mrb[0].mxu0
      %v1458 = vadd.f32 0.0, %v1457
      %v1459 = vpop.f32.mrb[0].mxu0
      %1460 = vmatprep.mubr.f32.mxu0 0.0
      %1461 = vmatmul.mubr.f32.gmra.mrb[0].mxu0 %v1261
      %v1462 = vpop.f32.mrb[0].mxu0
      %v1463 = vadd.f32 0.0, %v1462
      %v1464 = vpop.f32.mrb[0].mxu0
      %1465 = vmatprep.mubr.f32.mxu0 0.0
      %1466 = vmatmul.mubr.f32.gmra.mrb[0].mxu0 %v1264
      %v1467 = vpop.f32.mrb[0].mxu0
      %v1468 = vadd.f32 0.0, %v1467
      %v1469 = vpop.f32.mrb[0].mxu0
      %1470 = vmatprep.mubr.f32.mxu0 0.0
      %1471 = vmatmul.mubr.f32.gmra.mrb[0].mxu0 %v1267
      %v1472 = vpop.f32.mrb[0].mxu0
      %v1473 = vadd.f32 0.0, %v1472
      %v1474 = vpop.f32.mrb[0].mxu0
      %1475 = vmatprep.mubr.f32.mxu0 0.0
      %1476 = vmatmul.mubr.f32.gmra.mrb[0].mxu0 %v1270
      %v1477 = vpop.f32.mrb[0].mxu0
      %v1478 = vadd.f32 0.0, %v1477
      %v1479 = vpop.f32.mrb[0].mxu0
      %1480 = vmatprep.mubr.f32.mxu0 0.0
      %1481 = vmatmul.mubr.f32.gmra.mrb[0].mxu0 %v1273
      %v1482 = vpop.f32.mrb[0].mxu0
      %v1483 = vadd.f32 0.0, %v1482
      %v1484 = vpop.f32.mrb[0].mxu0
      %1485 = vmatprep.mubr.f32.mxu0 0.0
      %1486 = vmatmul.mubr.f32.gmra.mrb[0].mxu0 %v1276
      %v1487 = vpop.f32.mrb[0].mxu0
      %v1488 = vadd.f32 0.0, %v1487
      %v1489 = vpop.f32.mrb[0].mxu0
      %1490 = vmatprep.mubr.f32.mxu0 0.0
      %1491 = vmatmul.mubr.f32.gmra.mrb[0].mxu0 %v1279
      %v1492 = vpop.f32.mrb[0].mxu0
      %v1493 = vadd.f32 0.0, %v1492
      %v1494 = vpop.f32.mrb[0].mxu0
      %1495 = vmatprep.mubr.f32.mxu0 0.0
      %1496 = vmatmul.mubr.f32.gmra.mrb[0].mxu0 %v1282
      %v1497 = vpop.f32.mrb[0].mxu0
      %v1498 = vadd.f32 0.0, %v1497
      %v1499 = vpop.f32.mrb[0].mxu0
      %1500 = vmatprep.mubr.f32.mxu0 0.0
      %1501 = vmatmul.mubr.f32.gmra.mrb[0].mxu0 %v1285
      %v1502 = vpop.f32.mrb[0].mxu0
      %v1503 = vadd.f32 0.0, %v1502
      %v1504 = vpop.f32.mrb[0].mxu0
      %1505 = vmatprep.mubr.f32.mxu0 0.0
      %1506 = vmatmul.mubr.f32.gmra.mrb[0].mxu0 %v1288
      %v1507 = vpop.f32.mrb[0].mxu0
      %v1508 = vadd.f32 0.0, %v1507
      %v1509 = vpop.f32.mrb[0].mxu0
      %1510 = vmatprep.mubr.f32.mxu0 0.0
      %1511 = vmatmul.mubr.f32.gmra.mrb[0].mxu0 %v1291
      %v1512 = vpop.f32.mrb[0].mxu0
      %v1513 = vadd.f32 0.0, %v1512
      %v1514 = vpop.f32.mrb[0].mxu0
      %1515 = vmatprep.mubr.f32.mxu0 0.0
      %1516 = vmatmul.mubr.f32.gmra.mrb[0].mxu0 %v1294
      %v1517 = vpop.f32.mrb[0].mxu0
      %v1518 = vadd.f32 0.0, %v1517
      %v1519 = vpop.f32.mrb[0].mxu0
      %1520 = vdwg.mxu0
      %v1521 = vadd.f32 %v1010, %v1363
      %v1522 = vadd.f32 %v1015, %v1368
      %v1523 = vadd.f32 %v1020, %v1373
      %v1524 = vadd.f32 %v1025, %v1378
      %v1525 = vadd.f32 %v1030, %v1383
      %v1526 = vadd.f32 %v1035, %v1388
      %v1527 = vadd.f32 %v1040, %v1393
      %v1528 = vadd.f32 %v1045, %v1398
      %v1529 = vadd.f32 %v1050, %v1403
      %v1530 = vadd.f32 %v1055, %v1408
      %v1531 = vadd.f32 %v1060, %v1413
      %v1532 = vadd.f32 %v1065, %v1418
      %v1533 = vadd.f32 %v1070, %v1423
      %v1534 = vadd.f32 %v1075, %v1428
      %v1535 = vadd.f32 %v1080, %v1433
      %v1536 = vadd.f32 %v1085, %v1438
      %v1537 = vadd.f32 %v1090, %v1443
      %v1538 = vadd.f32 %v1095, %v1448
      %v1539 = vadd.f32 %v1100, %v1453
      %v1540 = vadd.f32 %v1105, %v1458
      %v1541 = vadd.f32 %v1110, %v1463
      %v1542 = vadd.f32 %v1115, %v1468
      %v1543 = vadd.f32 %v1120, %v1473
      %v1544 = vadd.f32 %v1125, %v1478
      %v1545 = vadd.f32 %v1130, %v1483
      %v1546 = vadd.f32 %v1135, %v1488
      %v1547 = vadd.f32 %v1140, %v1493
      %v1548 = vadd.f32 %v1145, %v1498
      %v1549 = vadd.f32 %v1150, %v1503
      %v1550 = vadd.f32 %v1155, %v1508
      %v1551 = vadd.f32 %v1160, %v1513
      %v1552 = vadd.f32 %v1165, %v1518
      %v1553 = vld [vmem:[%s393] sm:$0xff]
      %v1554 = vld [vmem:[%s393 + $0x8] sm:$0xff]
      %v1555 = vld [vmem:[%s393 + $0x18] sm:$0xff]
      %v1556 = vld [vmem:[%s393 + $0x20] sm:$0xff]
      %v1557 = vld [vmem:[%s393 + $0x30] sm:$0xff]
      %v1558 = vld [vmem:[%s393 + $0x38] sm:$0xff]
      %v1559 = vld [vmem:[%s393 + $0x48] sm:$0xff]
      %v1560 = vld [vmem:[%s393 + $0x50] sm:$0xff]
      %v1561 = vld [vmem:[%s393 + $0x60] sm:$0xff]
      %v1562 = vld [vmem:[%s393 + $0x68] sm:$0xff]
      %v1563 = vld [vmem:[%s393 + $0x78] sm:$0xff]
      %v1564 = vld [vmem:[%s393 + $0x80] sm:$0xff]
      %v1565 = vld [vmem:[%s393 + $0x90] sm:$0xff]
      %v1566 = vld [vmem:[%s393 + $0x98] sm:$0xff]
      %v1567 = vld [vmem:[%s393 + $0xa8] sm:$0xff]
      %v1568 = vld [vmem:[%s393 + $0xb0] sm:$0xff]
      %v1569 = vld [vmem:[%s393 + $0xc0] sm:$0xff]
      %v1570 = vld [vmem:[%s393 + $0xc8] sm:$0xff]
      %v1571 = vld [vmem:[%s393 + $0xd8] sm:$0xff]
      %v1572 = vld [vmem:[%s393 + $0xe0] sm:$0xff]
      %v1573 = vld [vmem:[%s393 + $0xf0] sm:$0xff]
      %v1574 = vld [vmem:[%s393 + $0xf8] sm:$0xff]
      %v1575 = vld [vmem:[%s393 + $0x108] sm:$0xff]
      %v1576 = vld [vmem:[%s393 + $0x110] sm:$0xff]
      %v1577 = vld [vmem:[%s393 + $0x120] sm:$0xff]
      %v1578 = vld [vmem:[%s393 + $0x128] sm:$0xff]
      %v1579 = vld [vmem:[%s393 + $0x138] sm:$0xff]
      %v1580 = vld [vmem:[%s393 + $0x140] sm:$0xff]
      %v1581 = vld [vmem:[%s393 + $0x150] sm:$0xff]
      %v1582 = vld [vmem:[%s393 + $0x158] sm:$0xff]
      %v1583 = vld [vmem:[%s393 + $0x168] sm:$0xff]
      %v1584 = vld [vmem:[%s393 + $0x170] sm:$0xff]
      %v1586 = vsel %vm337, %v1553, 0
      %v1589 = vsel %vm337, %v1554, 0
      %v1592 = vsel %vm337, %v1555, 0
      %v1595 = vsel %vm337, %v1556, 0
      %v1598 = vsel %vm337, %v1557, 0
      %v1601 = vsel %vm337, %v1558, 0
      %v1604 = vsel %vm337, %v1559, 0
      %v1607 = vsel %vm337, %v1560, 0
      %v1610 = vsel %vm337, %v1561, 0
      %v1613 = vsel %vm337, %v1562, 0
      %v1616 = vsel %vm337, %v1563, 0
      %v1619 = vsel %vm337, %v1564, 0
      %v1622 = vsel %vm337, %v1565, 0
      %v1625 = vsel %vm337, %v1566, 0
      %v1628 = vsel %vm337, %v1567, 0
      %v1631 = vsel %vm337, %v1568, 0
      %v1634 = vsel %vm337, %v1569, 0
      %v1637 = vsel %vm337, %v1570, 0
      %v1640 = vsel %vm337, %v1571, 0
      %v1643 = vsel %vm337, %v1572, 0
      %v1646 = vsel %vm337, %v1573, 0
      %v1649 = vsel %vm337, %v1574, 0
      %v1652 = vsel %vm337, %v1575, 0
      %v1655 = vsel %vm337, %v1576, 0
      %v1658 = vsel %vm337, %v1577, 0
      %v1661 = vsel %vm337, %v1578, 0
      %v1664 = vsel %vm337, %v1579, 0
      %v1667 = vsel %vm337, %v1580, 0
      %v1670 = vsel %vm337, %v1581, 0
      %v1673 = vsel %vm337, %v1582, 0
      %v1676 = vsel %vm337, %v1583, 0
      %v1679 = vsel %vm337, %v1584, 0
      %1681 = vmatprep.subr.mxu0 0.0
      %1682 = vmatpush1.msra.mxu0 %v438
      %1683 = vmatprep.subr.mxu0 0.0
      %1684 = vmatpush1.msra.mxu0 %v439
      %1685 = vmatprep.subr.mxu0 0.0
      %1686 = vmatpush1.msra.mxu0 %v440
      %1687 = vmatprep.subr.mxu0 0.0
      %1688 = vmatpush1.msra.mxu0 %v441
      %1689 = vmatprep.subr.mxu0 0.0
      %1690 = vmatpush1.msra.mxu0 0.0
      %1691 = vmatprep.subr.mxu0 0.0
      %1692 = vmatpush1.msra.mxu0 0.0
      %1693 = vmatprep.subr.mxu0 0.0
      %1694 = vmatpush1.msra.mxu0 0.0
      %1695 = vmatprep.subr.mxu0 0.0
      %1696 = vmatpush1.msra.mxu0 0.0
      %1697 = vmatprep.subr.mxu0 0.0
      %1698 = vmatpush1.msra.mxu0 0.0
      %1699 = vmatprep.subr.mxu0 0.0
      %1700 = vmatpush1.msra.mxu0 0.0
      %1701 = vmatprep.subr.mxu0 0.0
      %1702 = vmatpush1.msra.mxu0 0.0
      %1703 = vmatprep.subr.mxu0 0.0
      %1704 = vmatpush1.msra.mxu0 0.0
      %1705 = vmatprep.subr.mxu0 0.0
      %1706 = vmatpush1.msra.mxu0 0.0
      %1707 = vmatprep.subr.mxu0 0.0
      %1708 = vmatpush1.msra.mxu0 0.0
      %1709 = vmatprep.subr.mxu0 0.0
      %1710 = vmatpush1.msra.mxu0 0.0
      %1711 = vmatprep.subr.mxu0 0.0
      %1712 = vmatpush1.msra.mxu0 0.0
      %1713 = vmatprep.subr.mxu0 0.0
      %1714 = vmatpush1.msra.mxu0 0.0
      %1715 = vmatprep.subr.mxu0 0.0
      %1716 = vmatpush1.msra.mxu0 0.0
      %1717 = vmatprep.subr.mxu0 0.0
      %1718 = vmatpush1.msra.mxu0 0.0
      %1719 = vmatprep.subr.mxu0 0.0
      %1720 = vmatpush1.msra.mxu0 0.0
      %1721 = vmatprep.subr.mxu0 0.0
      %1722 = vmatpush1.msra.mxu0 0.0
      %1723 = vmatprep.subr.mxu0 0.0
      %1724 = vmatpush1.msra.mxu0 0.0
      %1725 = vmatprep.subr.mxu0 0.0
      %1726 = vmatpush1.msra.mxu0 0.0
      %1727 = vmatprep.subr.mxu0 0.0
      %1728 = vmatpush1.msra.mxu0 0.0
      %1729 = vmatprep.subr.mxu0 0.0
      %1730 = vmatpush1.msra.mxu0 0.0
      %1731 = vmatprep.subr.mxu0 0.0
      %1732 = vmatpush1.msra.mxu0 0.0
      %1733 = vmatprep.subr.mxu0 0.0
      %1734 = vmatpush1.msra.mxu0 0.0
      %1735 = vmatprep.subr.mxu0 0.0
      %1736 = vmatpush1.msra.mxu0 0.0
      %1737 = vmatprep.subr.mxu0 0.0
      %1738 = vmatpush1.msra.mxu0 0.0
      %1739 = vmatprep.subr.mxu0 0.0
      %1740 = vmatpush1.msra.mxu0 0.0
      %1741 = vmatprep.subr.mxu0 0.0
      %1742 = vmatpush1.msra.mxu0 0.0
      %1743 = vmatprep.subr.mxu0 0.0
      %1744 = vmatpush1.msra.mxu0 0.0
      %1745 = vmatprep.mubr.f32.mxu0 0.0
      %1746 = vmatmul.mubr.f32.gmra.mrb[0].mxu0 %v1586
      %v1747 = vpop.f32.mrb[0].mxu0
      %v1748 = vadd.f32 0.0, %v1747
      %v1749 = vpop.f32.mrb[0].mxu0
      %1750 = vmatprep.mubr.f32.mxu0 0.0
      %1751 = vmatmul.mubr.f32.gmra.mrb[0].mxu0 %v1589
      %v1752 = vpop.f32.mrb[0].mxu0
      %v1753 = vadd.f32 0.0, %v1752
      %v1754 = vpop.f32.mrb[0].mxu0
      %1755 = vmatprep.mubr.f32.mxu0 0.0
      %1756 = vmatmul.mubr.f32.gmra.mrb[0].mxu0 %v1592
      %v1757 = vpop.f32.mrb[0].mxu0
      %v1758 = vadd.f32 0.0, %v1757
      %v1759 = vpop.f32.mrb[0].mxu0
      %1760 = vmatprep.mubr.f32.mxu0 0.0
      %1761 = vmatmul.mubr.f32.gmra.mrb[0].mxu0 %v1595
      %v1762 = vpop.f32.mrb[0].mxu0
      %v1763 = vadd.f32 0.0, %v1762
      %v1764 = vpop.f32.mrb[0].mxu0
      %1765 = vmatprep.mubr.f32.mxu0 0.0
      %1766 = vmatmul.mubr.f32.gmra.mrb[0].mxu0 %v1598
      %v1767 = vpop.f32.mrb[0].mxu0
      %v1768 = vadd.f32 0.0, %v1767
      %v1769 = vpop.f32.mrb[0].mxu0
      %1770 = vmatprep.mubr.f32.mxu0 0.0
      %1771 = vmatmul.mubr.f32.gmra.mrb[0].mxu0 %v1601
      %v1772 = vpop.f32.mrb[0].mxu0
      %v1773 = vadd.f32 0.0, %v1772
      %v1774 = vpop.f32.mrb[0].mxu0
      %1775 = vmatprep.mubr.f32.mxu0 0.0
      %1776 = vmatmul.mubr.f32.gmra.mrb[0].mxu0 %v1604
      %v1777 = vpop.f32.mrb[0].mxu0
      %v1778 = vadd.f32 0.0, %v1777
      %v1779 = vpop.f32.mrb[0].mxu0
      %1780 = vmatprep.mubr.f32.mxu0 0.0
      %1781 = vmatmul.mubr.f32.gmra.mrb[0].mxu0 %v1607
      %v1782 = vpop.f32.mrb[0].mxu0
      %v1783 = vadd.f32 0.0, %v1782
      %v1784 = vpop.f32.mrb[0].mxu0
      %1785 = vmatprep.mubr.f32.mxu0 0.0
      %1786 = vmatmul.mubr.f32.gmra.mrb[0].mxu0 %v1610
      %v1787 = vpop.f32.mrb[0].mxu0
      %v1788 = vadd.f32 0.0, %v1787
      %v1789 = vpop.f32.mrb[0].mxu0
      %1790 = vmatprep.mubr.f32.mxu0 0.0
      %1791 = vmatmul.mubr.f32.gmra.mrb[0].mxu0 %v1613
      %v1792 = vpop.f32.mrb[0].mxu0
      %v1793 = vadd.f32 0.0, %v1792
      %v1794 = vpop.f32.mrb[0].mxu0
      %1795 = vmatprep.mubr.f32.mxu0 0.0
      %1796 = vmatmul.mubr.f32.gmra.mrb[0].mxu0 %v1616
      %v1797 = vpop.f32.mrb[0].mxu0
      %v1798 = vadd.f32 0.0, %v1797
      %v1799 = vpop.f32.mrb[0].mxu0
      %1800 = vmatprep.mubr.f32.mxu0 0.0
      %1801 = vmatmul.mubr.f32.gmra.mrb[0].mxu0 %v1619
      %v1802 = vpop.f32.mrb[0].mxu0
      %v1803 = vadd.f32 0.0, %v1802
      %v1804 = vpop.f32.mrb[0].mxu0
      %1805 = vmatprep.mubr.f32.mxu0 0.0
      %1806 = vmatmul.mubr.f32.gmra.mrb[0].mxu0 %v1622
      %v1807 = vpop.f32.mrb[0].mxu0
      %v1808 = vadd.f32 0.0, %v1807
      %v1809 = vpop.f32.mrb[0].mxu0
      %1810 = vmatprep.mubr.f32.mxu0 0.0
      %1811 = vmatmul.mubr.f32.gmra.mrb[0].mxu0 %v1625
      %v1812 = vpop.f32.mrb[0].mxu0
      %v1813 = vadd.f32 0.0, %v1812
      %v1814 = vpop.f32.mrb[0].mxu0
      %1815 = vmatprep.mubr.f32.mxu0 0.0
      %1816 = vmatmul.mubr.f32.gmra.mrb[0].mxu0 %v1628
      %v1817 = vpop.f32.mrb[0].mxu0
      %v1818 = vadd.f32 0.0, %v1817
      %v1819 = vpop.f32.mrb[0].mxu0
      %1820 = vmatprep.mubr.f32.mxu0 0.0
      %1821 = vmatmul.mubr.f32.gmra.mrb[0].mxu0 %v1631
      %v1822 = vpop.f32.mrb[0].mxu0
      %v1823 = vadd.f32 0.0, %v1822
      %v1824 = vpop.f32.mrb[0].mxu0
      %1825 = vmatprep.mubr.f32.mxu0 0.0
      %1826 = vmatmul.mubr.f32.gmra.mrb[0].mxu0 %v1634
      %v1827 = vpop.f32.mrb[0].mxu0
      %v1828 = vadd.f32 0.0, %v1827
      %v1829 = vpop.f32.mrb[0].mxu0
      %1830 = vmatprep.mubr.f32.mxu0 0.0
      %1831 = vmatmul.mubr.f32.gmra.mrb[0].mxu0 %v1637
      %v1832 = vpop.f32.mrb[0].mxu0
      %v1833 = vadd.f32 0.0, %v1832
      %v1834 = vpop.f32.mrb[0].mxu0
      %1835 = vmatprep.mubr.f32.mxu0 0.0
      %1836 = vmatmul.mubr.f32.gmra.mrb[0].mxu0 %v1640
      %v1837 = vpop.f32.mrb[0].mxu0
      %v1838 = vadd.f32 0.0, %v1837
      %v1839 = vpop.f32.mrb[0].mxu0
      %1840 = vmatprep.mubr.f32.mxu0 0.0
      %1841 = vmatmul.mubr.f32.gmra.mrb[0].mxu0 %v1643
      %v1842 = vpop.f32.mrb[0].mxu0
      %v1843 = vadd.f32 0.0, %v1842
      %v1844 = vpop.f32.mrb[0].mxu0
      %1845 = vmatprep.mubr.f32.mxu0 0.0
      %1846 = vmatmul.mubr.f32.gmra.mrb[0].mxu0 %v1646
      %v1847 = vpop.f32.mrb[0].mxu0
      %v1848 = vadd.f32 0.0, %v1847
      %v1849 = vpop.f32.mrb[0].mxu0
      %1850 = vmatprep.mubr.f32.mxu0 0.0
      %1851 = vmatmul.mubr.f32.gmra.mrb[0].mxu0 %v1649
      %v1852 = vpop.f32.mrb[0].mxu0
      %v1853 = vadd.f32 0.0, %v1852
      %v1854 = vpop.f32.mrb[0].mxu0
      %1855 = vmatprep.mubr.f32.mxu0 0.0
      %1856 = vmatmul.mubr.f32.gmra.mrb[0].mxu0 %v1652
      %v1857 = vpop.f32.mrb[0].mxu0
      %v1858 = vadd.f32 0.0, %v1857
      %v1859 = vpop.f32.mrb[0].mxu0
      %1860 = vmatprep.mubr.f32.mxu0 0.0
      %1861 = vmatmul.mubr.f32.gmra.mrb[0].mxu0 %v1655
      %v1862 = vpop.f32.mrb[0].mxu0
      %v1863 = vadd.f32 0.0, %v1862
      %v1864 = vpop.f32.mrb[0].mxu0
      %1865 = vmatprep.mubr.f32.mxu0 0.0
      %1866 = vmatmul.mubr.f32.gmra.mrb[0].mxu0 %v1658
      %v1867 = vpop.f32.mrb[0].mxu0
      %v1868 = vadd.f32 0.0, %v1867
      %v1869 = vpop.f32.mrb[0].mxu0
      %1870 = vmatprep.mubr.f32.mxu0 0.0
      %1871 = vmatmul.mubr.f32.gmra.mrb[0].mxu0 %v1661
      %v1872 = vpop.f32.mrb[0].mxu0
      %v1873 = vadd.f32 0.0, %v1872
      %v1874 = vpop.f32.mrb[0].mxu0
      %1875 = vmatprep.mubr.f32.mxu0 0.0
      %1876 = vmatmul.mubr.f32.gmra.mrb[0].mxu0 %v1664
      %v1877 = vpop.f32.mrb[0].mxu0
      %v1878 = vadd.f32 0.0, %v1877
      %v1879 = vpop.f32.mrb[0].mxu0
      %1880 = vmatprep.mubr.f32.mxu0 0.0
      %1881 = vmatmul.mubr.f32.gmra.mrb[0].mxu0 %v1667
      %v1882 = vpop.f32.mrb[0].mxu0
      %v1883 = vadd.f32 0.0, %v1882
      %v1884 = vpop.f32.mrb[0].mxu0
      %1885 = vmatprep.mubr.f32.mxu0 0.0
      %1886 = vmatmul.mubr.f32.gmra.mrb[0].mxu0 %v1670
      %v1887 = vpop.f32.mrb[0].mxu0
      %v1888 = vadd.f32 0.0, %v1887
      %v1889 = vpop.f32.mrb[0].mxu0
      %1890 = vmatprep.mubr.f32.mxu0 0.0
      %1891 = vmatmul.mubr.f32.gmra.mrb[0].mxu0 %v1673
      %v1892 = vpop.f32.mrb[0].mxu0
      %v1893 = vadd.f32 0.0, %v1892
      %v1894 = vpop.f32.mrb[0].mxu0
      %1895 = vmatprep.mubr.f32.mxu0 0.0
      %1896 = vmatmul.mubr.f32.gmra.mrb[0].mxu0 %v1676
      %v1897 = vpop.f32.mrb[0].mxu0
      %v1898 = vadd.f32 0.0, %v1897
      %v1899 = vpop.f32.mrb[0].mxu0
      %1900 = vmatprep.mubr.f32.mxu0 0.0
      %1901 = vmatmul.mubr.f32.gmra.mrb[0].mxu0 %v1679
      %v1902 = vpop.f32.mrb[0].mxu0
      %v1903 = vadd.f32 0.0, %v1902
      %v1904 = vpop.f32.mrb[0].mxu0
      %1905 = vdwg.mxu0
      %v1906 = vadd.f32 %v1521, %v1748
      %v1907 = vadd.f32 %v1522, %v1753
      %v1908 = vadd.f32 %v1523, %v1758
      %v1909 = vadd.f32 %v1524, %v1763
      %v1910 = vadd.f32 %v1525, %v1768
      %v1911 = vadd.f32 %v1526, %v1773
      %v1912 = vadd.f32 %v1527, %v1778
      %v1913 = vadd.f32 %v1528, %v1783
      %v1914 = vadd.f32 %v1529, %v1788
      %v1915 = vadd.f32 %v1530, %v1793
      %v1916 = vadd.f32 %v1531, %v1798
      %v1917 = vadd.f32 %v1532, %v1803
      %v1918 = vadd.f32 %v1533, %v1808
      %v1919 = vadd.f32 %v1534, %v1813
      %v1920 = vadd.f32 %v1535, %v1818
      %v1921 = vadd.f32 %v1536, %v1823
      %v1922 = vadd.f32 %v1537, %v1828
      %v1923 = vadd.f32 %v1538, %v1833
      %v1924 = vadd.f32 %v1539, %v1838
      %v1925 = vadd.f32 %v1540, %v1843
      %v1926 = vadd.f32 %v1541, %v1848
      %v1927 = vadd.f32 %v1542, %v1853
      %v1928 = vadd.f32 %v1543, %v1858
      %v1929 = vadd.f32 %v1544, %v1863
      %v1930 = vadd.f32 %v1545, %v1868
      %v1931 = vadd.f32 %v1546, %v1873
      %v1932 = vadd.f32 %v1547, %v1878
      %v1933 = vadd.f32 %v1548, %v1883
      %v1934 = vadd.f32 %v1549, %v1888
      %v1935 = vadd.f32 %v1550, %v1893
      %v1936 = vadd.f32 %v1551, %v1898
      %v1937 = vadd.f32 %v1552, %v1903
      %v1938 = vld [vmem:[%s393 + $0x1] sm:$0xff]
      %v1939 = vld [vmem:[%s393 + $0x9] sm:$0xff]
      %v1940 = vld [vmem:[%s393 + $0x19] sm:$0xff]
      %v1941 = vld [vmem:[%s393 + $0x21] sm:$0xff]
      %v1942 = vld [vmem:[%s393 + $0x31] sm:$0xff]
      %v1943 = vld [vmem:[%s393 + $0x39] sm:$0xff]
      %v1944 = vld [vmem:[%s393 + $0x49] sm:$0xff]
      %v1945 = vld [vmem:[%s393 + $0x51] sm:$0xff]
      %v1946 = vld [vmem:[%s393 + $0x61] sm:$0xff]
      %v1947 = vld [vmem:[%s393 + $0x69] sm:$0xff]
      %v1948 = vld [vmem:[%s393 + $0x79] sm:$0xff]
      %v1949 = vld [vmem:[%s393 + $0x81] sm:$0xff]
      %v1950 = vld [vmem:[%s393 + $0x91] sm:$0xff]
      %v1951 = vld [vmem:[%s393 + $0x99] sm:$0xff]
      %v1952 = vld [vmem:[%s393 + $0xa9] sm:$0xff]
      %v1953 = vld [vmem:[%s393 + $0xb1] sm:$0xff]
      %v1954 = vld [vmem:[%s393 + $0xc1] sm:$0xff]
      %v1955 = vld [vmem:[%s393 + $0xc9] sm:$0xff]
      %v1956 = vld [vmem:[%s393 + $0xd9] sm:$0xff]
      %v1957 = vld [vmem:[%s393 + $0xe1] sm:$0xff]
      %v1958 = vld [vmem:[%s393 + $0xf1] sm:$0xff]
      %v1959 = vld [vmem:[%s393 + $0xf9] sm:$0xff]
      %v1960 = vld [vmem:[%s393 + $0x109] sm:$0xff]
      %v1961 = vld [vmem:[%s393 + $0x111] sm:$0xff]
      %v1962 = vld [vmem:[%s393 + $0x121] sm:$0xff]
      %v1963 = vld [vmem:[%s393 + $0x129] sm:$0xff]
      %v1964 = vld [vmem:[%s393 + $0x139] sm:$0xff]
      %v1965 = vld [vmem:[%s393 + $0x141] sm:$0xff]
      %v1966 = vld [vmem:[%s393 + $0x151] sm:$0xff]
      %v1967 = vld [vmem:[%s393 + $0x159] sm:$0xff]
      %v1968 = vld [vmem:[%s393 + $0x169] sm:$0xff]
      %v1969 = vld [vmem:[%s393 + $0x171] sm:$0xff]
      %v1971 = vsel %vm337, %v1938, 0
      %v1974 = vsel %vm337, %v1939, 0
      %v1977 = vsel %vm337, %v1940, 0
      %v1980 = vsel %vm337, %v1941, 0
      %v1983 = vsel %vm337, %v1942, 0
      %v1986 = vsel %vm337, %v1943, 0
      %v1989 = vsel %vm337, %v1944, 0
      %v1992 = vsel %vm337, %v1945, 0
      %v1995 = vsel %vm337, %v1946, 0
      %v1998 = vsel %vm337, %v1947, 0
      %v2001 = vsel %vm337, %v1948, 0
      %v2004 = vsel %vm337, %v1949, 0
      %v2007 = vsel %vm337, %v1950, 0
      %v2010 = vsel %vm337, %v1951, 0
      %v2013 = vsel %vm337, %v1952, 0
      %v2016 = vsel %vm337, %v1953, 0
      %v2019 = vsel %vm337, %v1954, 0
      %v2022 = vsel %vm337, %v1955, 0
      %v2025 = vsel %vm337, %v1956, 0
      %v2028 = vsel %vm337, %v1957, 0
      %v2031 = vsel %vm337, %v1958, 0
      %v2034 = vsel %vm337, %v1959, 0
      %v2037 = vsel %vm337, %v1960, 0
      %v2040 = vsel %vm337, %v1961, 0
      %v2043 = vsel %vm337, %v1962, 0
      %v2046 = vsel %vm337, %v1963, 0
      %v2049 = vsel %vm337, %v1964, 0
      %v2052 = vsel %vm337, %v1965, 0
      %v2055 = vsel %vm337, %v1966, 0
      %v2058 = vsel %vm337, %v1967, 0
      %v2061 = vsel %vm337, %v1968, 0
      %v2064 = vsel %vm337, %v1969, 0
      %2066 = vmatprep.subr.mxu0 0.0
      %2067 = vmatpush1.msra.mxu0 %v442
      %2068 = vmatprep.subr.mxu0 0.0
      %2069 = vmatpush1.msra.mxu0 %v443
      %2070 = vmatprep.subr.mxu0 0.0
      %2071 = vmatpush1.msra.mxu0 %v444
      %2072 = vmatprep.subr.mxu0 0.0
      %2073 = vmatpush1.msra.mxu0 %v445
      %2074 = vmatprep.subr.mxu0 0.0
      %2075 = vmatpush1.msra.mxu0 0.0
      %2076 = vmatprep.subr.mxu0 0.0
      %2077 = vmatpush1.msra.mxu0 0.0
      %2078 = vmatprep.subr.mxu0 0.0
      %2079 = vmatpush1.msra.mxu0 0.0
      %2080 = vmatprep.subr.mxu0 0.0
      %2081 = vmatpush1.msra.mxu0 0.0
      %2082 = vmatprep.subr.mxu0 0.0
      %2083 = vmatpush1.msra.mxu0 0.0
      %2084 = vmatprep.subr.mxu0 0.0
      %2085 = vmatpush1.msra.mxu0 0.0
      %2086 = vmatprep.subr.mxu0 0.0
      %2087 = vmatpush1.msra.mxu0 0.0
      %2088 = vmatprep.subr.mxu0 0.0
      %2089 = vmatpush1.msra.mxu0 0.0
      %2090 = vmatprep.subr.mxu0 0.0
      %2091 = vmatpush1.msra.mxu0 0.0
      %2092 = vmatprep.subr.mxu0 0.0
      %2093 = vmatpush1.msra.mxu0 0.0
      %2094 = vmatprep.subr.mxu0 0.0
      %2095 = vmatpush1.msra.mxu0 0.0
      %2096 = vmatprep.subr.mxu0 0.0
      %2097 = vmatpush1.msra.mxu0 0.0
      %2098 = vmatprep.subr.mxu0 0.0
      %2099 = vmatpush1.msra.mxu0 0.0
      %2100 = vmatprep.subr.mxu0 0.0
      %2101 = vmatpush1.msra.mxu0 0.0
      %2102 = vmatprep.subr.mxu0 0.0
      %2103 = vmatpush1.msra.mxu0 0.0
      %2104 = vmatprep.subr.mxu0 0.0
      %2105 = vmatpush1.msra.mxu0 0.0
      %2106 = vmatprep.subr.mxu0 0.0
      %2107 = vmatpush1.msra.mxu0 0.0
      %2108 = vmatprep.subr.mxu0 0.0
      %2109 = vmatpush1.msra.mxu0 0.0
      %2110 = vmatprep.subr.mxu0 0.0
      %2111 = vmatpush1.msra.mxu0 0.0
      %2112 = vmatprep.subr.mxu0 0.0
      %2113 = vmatpush1.msra.mxu0 0.0
      %2114 = vmatprep.subr.mxu0 0.0
      %2115 = vmatpush1.msra.mxu0 0.0
      %2116 = vmatprep.subr.mxu0 0.0
      %2117 = vmatpush1.msra.mxu0 0.0
      %2118 = vmatprep.subr.mxu0 0.0
      %2119 = vmatpush1.msra.mxu0 0.0
      %2120 = vmatprep.subr.mxu0 0.0
      %2121 = vmatpush1.msra.mxu0 0.0
      %2122 = vmatprep.subr.mxu0 0.0
      %2123 = vmatpush1.msra.mxu0 0.0
      %2124 = vmatprep.subr.mxu0 0.0
      %2125 = vmatpush1.msra.mxu0 0.0
      %2126 = vmatprep.subr.mxu0 0.0
      %2127 = vmatpush1.msra.mxu0 0.0
      %2128 = vmatprep.subr.mxu0 0.0
      %2129 = vmatpush1.msra.mxu0 0.0
      %2130 = vmatprep.mubr.f32.mxu0 0.0
      %2131 = vmatmul.mubr.f32.gmra.mrb[0].mxu0 %v1971
      %v2132 = vpop.f32.mrb[0].mxu0
      %v2133 = vadd.f32 0.0, %v2132
      %v2134 = vpop.f32.mrb[0].mxu0
      %2135 = vmatprep.mubr.f32.mxu0 0.0
      %2136 = vmatmul.mubr.f32.gmra.mrb[0].mxu0 %v1974
      %v2137 = vpop.f32.mrb[0].mxu0
      %v2138 = vadd.f32 0.0, %v2137
      %v2139 = vpop.f32.mrb[0].mxu0
      %2140 = vmatprep.mubr.f32.mxu0 0.0
      %2141 = vmatmul.mubr.f32.gmra.mrb[0].mxu0 %v1977
      %v2142 = vpop.f32.mrb[0].mxu0
      %v2143 = vadd.f32 0.0, %v2142
      %v2144 = vpop.f32.mrb[0].mxu0
      %2145 = vmatprep.mubr.f32.mxu0 0.0
      %2146 = vmatmul.mubr.f32.gmra.mrb[0].mxu0 %v1980
      %v2147 = vpop.f32.mrb[0].mxu0
      %v2148 = vadd.f32 0.0, %v2147
      %v2149 = vpop.f32.mrb[0].mxu0
      %2150 = vmatprep.mubr.f32.mxu0 0.0
      %2151 = vmatmul.mubr.f32.gmra.mrb[0].mxu0 %v1983
      %v2152 = vpop.f32.mrb[0].mxu0
      %v2153 = vadd.f32 0.0, %v2152
      %v2154 = vpop.f32.mrb[0].mxu0
      %2155 = vmatprep.mubr.f32.mxu0 0.0
      %2156 = vmatmul.mubr.f32.gmra.mrb[0].mxu0 %v1986
      %v2157 = vpop.f32.mrb[0].mxu0
      %v2158 = vadd.f32 0.0, %v2157
      %v2159 = vpop.f32.mrb[0].mxu0
      %2160 = vmatprep.mubr.f32.mxu0 0.0
      %2161 = vmatmul.mubr.f32.gmra.mrb[0].mxu0 %v1989
      %v2162 = vpop.f32.mrb[0].mxu0
      %v2163 = vadd.f32 0.0, %v2162
      %v2164 = vpop.f32.mrb[0].mxu0
      %2165 = vmatprep.mubr.f32.mxu0 0.0
      %2166 = vmatmul.mubr.f32.gmra.mrb[0].mxu0 %v1992
      %v2167 = vpop.f32.mrb[0].mxu0
      %v2168 = vadd.f32 0.0, %v2167
      %v2169 = vpop.f32.mrb[0].mxu0
      %2170 = vmatprep.mubr.f32.mxu0 0.0
      %2171 = vmatmul.mubr.f32.gmra.mrb[0].mxu0 %v1995
      %v2172 = vpop.f32.mrb[0].mxu0
      %v2173 = vadd.f32 0.0, %v2172
      %v2174 = vpop.f32.mrb[0].mxu0
      %2175 = vmatprep.mubr.f32.mxu0 0.0
      %2176 = vmatmul.mubr.f32.gmra.mrb[0].mxu0 %v1998
      %v2177 = vpop.f32.mrb[0].mxu0
      %v2178 = vadd.f32 0.0, %v2177
      %v2179 = vpop.f32.mrb[0].mxu0
      %2180 = vmatprep.mubr.f32.mxu0 0.0
      %2181 = vmatmul.mubr.f32.gmra.mrb[0].mxu0 %v2001
      %v2182 = vpop.f32.mrb[0].mxu0
      %v2183 = vadd.f32 0.0, %v2182
      %v2184 = vpop.f32.mrb[0].mxu0
      %2185 = vmatprep.mubr.f32.mxu0 0.0
      %2186 = vmatmul.mubr.f32.gmra.mrb[0].mxu0 %v2004
      %v2187 = vpop.f32.mrb[0].mxu0
      %v2188 = vadd.f32 0.0, %v2187
      %v2189 = vpop.f32.mrb[0].mxu0
      %2190 = vmatprep.mubr.f32.mxu0 0.0
      %2191 = vmatmul.mubr.f32.gmra.mrb[0].mxu0 %v2007
      %v2192 = vpop.f32.mrb[0].mxu0
      %v2193 = vadd.f32 0.0, %v2192
      %v2194 = vpop.f32.mrb[0].mxu0
      %2195 = vmatprep.mubr.f32.mxu0 0.0
      %2196 = vmatmul.mubr.f32.gmra.mrb[0].mxu0 %v2010
      %v2197 = vpop.f32.mrb[0].mxu0
      %v2198 = vadd.f32 0.0, %v2197
      %v2199 = vpop.f32.mrb[0].mxu0
      %2200 = vmatprep.mubr.f32.mxu0 0.0
      %2201 = vmatmul.mubr.f32.gmra.mrb[0].mxu0 %v2013
      %v2202 = vpop.f32.mrb[0].mxu0
      %v2203 = vadd.f32 0.0, %v2202
      %v2204 = vpop.f32.mrb[0].mxu0
      %2205 = vmatprep.mubr.f32.mxu0 0.0
      %2206 = vmatmul.mubr.f32.gmra.mrb[0].mxu0 %v2016
      %v2207 = vpop.f32.mrb[0].mxu0
      %v2208 = vadd.f32 0.0, %v2207
      %v2209 = vpop.f32.mrb[0].mxu0
      %2210 = vmatprep.mubr.f32.mxu0 0.0
      %2211 = vmatmul.mubr.f32.gmra.mrb[0].mxu0 %v2019
      %v2212 = vpop.f32.mrb[0].mxu0
      %v2213 = vadd.f32 0.0, %v2212
      %v2214 = vpop.f32.mrb[0].mxu0
      %2215 = vmatprep.mubr.f32.mxu0 0.0
      %2216 = vmatmul.mubr.f32.gmra.mrb[0].mxu0 %v2022
      %v2217 = vpop.f32.mrb[0].mxu0
      %v2218 = vadd.f32 0.0, %v2217
      %v2219 = vpop.f32.mrb[0].mxu0
      %2220 = vmatprep.mubr.f32.mxu0 0.0
      %2221 = vmatmul.mubr.f32.gmra.mrb[0].mxu0 %v2025
      %v2222 = vpop.f32.mrb[0].mxu0
      %v2223 = vadd.f32 0.0, %v2222
      %v2224 = vpop.f32.mrb[0].mxu0
      %2225 = vmatprep.mubr.f32.mxu0 0.0
      %2226 = vmatmul.mubr.f32.gmra.mrb[0].mxu0 %v2028
      %v2227 = vpop.f32.mrb[0].mxu0
      %v2228 = vadd.f32 0.0, %v2227
      %v2229 = vpop.f32.mrb[0].mxu0
      %2230 = vmatprep.mubr.f32.mxu0 0.0
      %2231 = vmatmul.mubr.f32.gmra.mrb[0].mxu0 %v2031
      %v2232 = vpop.f32.mrb[0].mxu0
      %v2233 = vadd.f32 0.0, %v2232
      %v2234 = vpop.f32.mrb[0].mxu0
      %2235 = vmatprep.mubr.f32.mxu0 0.0
      %2236 = vmatmul.mubr.f32.gmra.mrb[0].mxu0 %v2034
      %v2237 = vpop.f32.mrb[0].mxu0
      %v2238 = vadd.f32 0.0, %v2237
      %v2239 = vpop.f32.mrb[0].mxu0
      %2240 = vmatprep.mubr.f32.mxu0 0.0
      %2241 = vmatmul.mubr.f32.gmra.mrb[0].mxu0 %v2037
      %v2242 = vpop.f32.mrb[0].mxu0
      %v2243 = vadd.f32 0.0, %v2242
      %v2244 = vpop.f32.mrb[0].mxu0
      %2245 = vmatprep.mubr.f32.mxu0 0.0
      %2246 = vmatmul.mubr.f32.gmra.mrb[0].mxu0 %v2040
      %v2247 = vpop.f32.mrb[0].mxu0
      %v2248 = vadd.f32 0.0, %v2247
      %v2249 = vpop.f32.mrb[0].mxu0
      %2250 = vmatprep.mubr.f32.mxu0 0.0
      %2251 = vmatmul.mubr.f32.gmra.mrb[0].mxu0 %v2043
      %v2252 = vpop.f32.mrb[0].mxu0
      %v2253 = vadd.f32 0.0, %v2252
      %v2254 = vpop.f32.mrb[0].mxu0
      %2255 = vmatprep.mubr.f32.mxu0 0.0
      %2256 = vmatmul.mubr.f32.gmra.mrb[0].mxu0 %v2046
      %v2257 = vpop.f32.mrb[0].mxu0
      %v2258 = vadd.f32 0.0, %v2257
      %v2259 = vpop.f32.mrb[0].mxu0
      %2260 = vmatprep.mubr.f32.mxu0 0.0
      %2261 = vmatmul.mubr.f32.gmra.mrb[0].mxu0 %v2049
      %v2262 = vpop.f32.mrb[0].mxu0
      %v2263 = vadd.f32 0.0, %v2262
      %v2264 = vpop.f32.mrb[0].mxu0
      %2265 = vmatprep.mubr.f32.mxu0 0.0
      %2266 = vmatmul.mubr.f32.gmra.mrb[0].mxu0 %v2052
      %v2267 = vpop.f32.mrb[0].mxu0
      %v2268 = vadd.f32 0.0, %v2267
      %v2269 = vpop.f32.mrb[0].mxu0
      %2270 = vmatprep.mubr.f32.mxu0 0.0
      %2271 = vmatmul.mubr.f32.gmra.mrb[0].mxu0 %v2055
      %v2272 = vpop.f32.mrb[0].mxu0
      %v2273 = vadd.f32 0.0, %v2272
      %v2274 = vpop.f32.mrb[0].mxu0
      %2275 = vmatprep.mubr.f32.mxu0 0.0
      %2276 = vmatmul.mubr.f32.gmra.mrb[0].mxu0 %v2058
      %v2277 = vpop.f32.mrb[0].mxu0
      %v2278 = vadd.f32 0.0, %v2277
      %v2279 = vpop.f32.mrb[0].mxu0
      %2280 = vmatprep.mubr.f32.mxu0 0.0
      %2281 = vmatmul.mubr.f32.gmra.mrb[0].mxu0 %v2061
      %v2282 = vpop.f32.mrb[0].mxu0
      %v2283 = vadd.f32 0.0, %v2282
      %v2284 = vpop.f32.mrb[0].mxu0
      %2285 = vmatprep.mubr.f32.mxu0 0.0
      %2286 = vmatmul.mubr.f32.gmra.mrb[0].mxu0 %v2064
      %v2287 = vpop.f32.mrb[0].mxu0
      %v2288 = vadd.f32 0.0, %v2287
      %v2289 = vpop.f32.mrb[0].mxu0
      %2290 = vdwg.mxu0
      %v2291 = vadd.f32 %v1906, %v2133
      %v2292 = vadd.f32 %v1907, %v2138
      %v2293 = vadd.f32 %v1908, %v2143
      %v2294 = vadd.f32 %v1909, %v2148
      %v2295 = vadd.f32 %v1910, %v2153
      %v2296 = vadd.f32 %v1911, %v2158
      %v2297 = vadd.f32 %v1912, %v2163
      %v2298 = vadd.f32 %v1913, %v2168
      %v2299 = vadd.f32 %v1914, %v2173
      %v2300 = vadd.f32 %v1915, %v2178
      %v2301 = vadd.f32 %v1916, %v2183
      %v2302 = vadd.f32 %v1917, %v2188
      %v2303 = vadd.f32 %v1918, %v2193
      %v2304 = vadd.f32 %v1919, %v2198
      %v2305 = vadd.f32 %v1920, %v2203
      %v2306 = vadd.f32 %v1921, %v2208
      %v2307 = vadd.f32 %v1922, %v2213
      %v2308 = vadd.f32 %v1923, %v2218
      %v2309 = vadd.f32 %v1924, %v2223
      %v2310 = vadd.f32 %v1925, %v2228
      %v2311 = vadd.f32 %v1926, %v2233
      %v2312 = vadd.f32 %v1927, %v2238
      %v2313 = vadd.f32 %v1928, %v2243
      %v2314 = vadd.f32 %v1929, %v2248
      %v2315 = vadd.f32 %v1930, %v2253
      %v2316 = vadd.f32 %v1931, %v2258
      %v2317 = vadd.f32 %v1932, %v2263
      %v2318 = vadd.f32 %v1933, %v2268
      %v2319 = vadd.f32 %v1934, %v2273
      %v2320 = vadd.f32 %v1935, %v2278
      %v2321 = vadd.f32 %v1936, %v2283
      %v2322 = vadd.f32 %v1937, %v2288
      %v2323 = vld [vmem:[%s393 + $0x2] sm:$0xff]
      %v2324 = vld [vmem:[%s393 + $0xa] sm:$0xff]
      %v2325 = vld [vmem:[%s393 + $0x1a] sm:$0xff]
      %v2326 = vld [vmem:[%s393 + $0x22] sm:$0xff]
      %v2327 = vld [vmem:[%s393 + $0x32] sm:$0xff]
      %v2328 = vld [vmem:[%s393 + $0x3a] sm:$0xff]
      %v2329 = vld [vmem:[%s393 + $0x4a] sm:$0xff]
      %v2330 = vld [vmem:[%s393 + $0x52] sm:$0xff]
      %v2331 = vld [vmem:[%s393 + $0x62] sm:$0xff]
      %v2332 = vld [vmem:[%s393 + $0x6a] sm:$0xff]
      %v2333 = vld [vmem:[%s393 + $0x7a] sm:$0xff]
      %v2334 = vld [vmem:[%s393 + $0x82] sm:$0xff]
      %v2335 = vld [vmem:[%s393 + $0x92] sm:$0xff]
      %v2336 = vld [vmem:[%s393 + $0x9a] sm:$0xff]
      %v2337 = vld [vmem:[%s393 + $0xaa] sm:$0xff]
      %v2338 = vld [vmem:[%s393 + $0xb2] sm:$0xff]
      %v2339 = vld [vmem:[%s393 + $0xc2] sm:$0xff]
      %v2340 = vld [vmem:[%s393 + $0xca] sm:$0xff]
      %v2341 = vld [vmem:[%s393 + $0xda] sm:$0xff]
      %v2342 = vld [vmem:[%s393 + $0xe2] sm:$0xff]
      %v2343 = vld [vmem:[%s393 + $0xf2] sm:$0xff]
      %v2344 = vld [vmem:[%s393 + $0xfa] sm:$0xff]
      %v2345 = vld [vmem:[%s393 + $0x10a] sm:$0xff]
      %v2346 = vld [vmem:[%s393 + $0x112] sm:$0xff]
      %v2347 = vld [vmem:[%s393 + $0x122] sm:$0xff]
      %v2348 = vld [vmem:[%s393 + $0x12a] sm:$0xff]
      %v2349 = vld [vmem:[%s393 + $0x13a] sm:$0xff]
      %v2350 = vld [vmem:[%s393 + $0x142] sm:$0xff]
      %v2351 = vld [vmem:[%s393 + $0x152] sm:$0xff]
      %v2352 = vld [vmem:[%s393 + $0x15a] sm:$0xff]
      %v2353 = vld [vmem:[%s393 + $0x16a] sm:$0xff]
      %v2354 = vld [vmem:[%s393 + $0x172] sm:$0xff]
      %v2356 = vsel %vm337, %v2323, 0
      %v2359 = vsel %vm337, %v2324, 0
      %v2362 = vsel %vm337, %v2325, 0
      %v2365 = vsel %vm337, %v2326, 0
      %v2368 = vsel %vm337, %v2327, 0
      %v2371 = vsel %vm337, %v2328, 0
      %v2374 = vsel %vm337, %v2329, 0
      %v2377 = vsel %vm337, %v2330, 0
      %v2380 = vsel %vm337, %v2331, 0
      %v2383 = vsel %vm337, %v2332, 0
      %v2386 = vsel %vm337, %v2333, 0
      %v2389 = vsel %vm337, %v2334, 0
      %v2392 = vsel %vm337, %v2335, 0
      %v2395 = vsel %vm337, %v2336, 0
      %v2398 = vsel %vm337, %v2337, 0
      %v2401 = vsel %vm337, %v2338, 0
      %v2404 = vsel %vm337, %v2339, 0
      %v2407 = vsel %vm337, %v2340, 0
      %v2410 = vsel %vm337, %v2341, 0
      %v2413 = vsel %vm337, %v2342, 0
      %v2416 = vsel %vm337, %v2343, 0
      %v2419 = vsel %vm337, %v2344, 0
      %v2422 = vsel %vm337, %v2345, 0
      %v2425 = vsel %vm337, %v2346, 0
      %v2428 = vsel %vm337, %v2347, 0
      %v2431 = vsel %vm337, %v2348, 0
      %v2434 = vsel %vm337, %v2349, 0
      %v2437 = vsel %vm337, %v2350, 0
      %v2440 = vsel %vm337, %v2351, 0
      %v2443 = vsel %vm337, %v2352, 0
      %v2446 = vsel %vm337, %v2353, 0
      %v2449 = vsel %vm337, %v2354, 0
      %2451 = vmatprep.subr.mxu0 0.0
      %2452 = vmatpush1.msra.mxu0 %v446
      %2453 = vmatprep.subr.mxu0 0.0
      %2454 = vmatpush1.msra.mxu0 %v447
      %2455 = vmatprep.subr.mxu0 0.0
      %2456 = vmatpush1.msra.mxu0 %v448
      %2457 = vmatprep.subr.mxu0 0.0
      %2458 = vmatpush1.msra.mxu0 %v449
      %2459 = vmatprep.subr.mxu0 0.0
      %2460 = vmatpush1.msra.mxu0 0.0
      %2461 = vmatprep.subr.mxu0 0.0
      %2462 = vmatpush1.msra.mxu0 0.0
      %2463 = vmatprep.subr.mxu0 0.0
      %2464 = vmatpush1.msra.mxu0 0.0
      %2465 = vmatprep.subr.mxu0 0.0
      %2466 = vmatpush1.msra.mxu0 0.0
      %2467 = vmatprep.subr.mxu0 0.0
      %2468 = vmatpush1.msra.mxu0 0.0
      %2469 = vmatprep.subr.mxu0 0.0
      %2470 = vmatpush1.msra.mxu0 0.0
      %2471 = vmatprep.subr.mxu0 0.0
      %2472 = vmatpush1.msra.mxu0 0.0
      %2473 = vmatprep.subr.mxu0 0.0
      %2474 = vmatpush1.msra.mxu0 0.0
      %2475 = vmatprep.subr.mxu0 0.0
      %2476 = vmatpush1.msra.mxu0 0.0
      %2477 = vmatprep.subr.mxu0 0.0
      %2478 = vmatpush1.msra.mxu0 0.0
      %2479 = vmatprep.subr.mxu0 0.0
      %2480 = vmatpush1.msra.mxu0 0.0
      %2481 = vmatprep.subr.mxu0 0.0
      %2482 = vmatpush1.msra.mxu0 0.0
      %2483 = vmatprep.subr.mxu0 0.0
      %2484 = vmatpush1.msra.mxu0 0.0
      %2485 = vmatprep.subr.mxu0 0.0
      %2486 = vmatpush1.msra.mxu0 0.0
      %2487 = vmatprep.subr.mxu0 0.0
      %2488 = vmatpush1.msra.mxu0 0.0
      %2489 = vmatprep.subr.mxu0 0.0
      %2490 = vmatpush1.msra.mxu0 0.0
      %2491 = vmatprep.subr.mxu0 0.0
      %2492 = vmatpush1.msra.mxu0 0.0
      %2493 = vmatprep.subr.mxu0 0.0
      %2494 = vmatpush1.msra.mxu0 0.0
      %2495 = vmatprep.subr.mxu0 0.0
      %2496 = vmatpush1.msra.mxu0 0.0
      %2497 = vmatprep.subr.mxu0 0.0
      %2498 = vmatpush1.msra.mxu0 0.0
      %2499 = vmatprep.subr.mxu0 0.0
      %2500 = vmatpush1.msra.mxu0 0.0
      %2501 = vmatprep.subr.mxu0 0.0
      %2502 = vmatpush1.msra.mxu0 0.0
      %2503 = vmatprep.subr.mxu0 0.0
      %2504 = vmatpush1.msra.mxu0 0.0
      %2505 = vmatprep.subr.mxu0 0.0
      %2506 = vmatpush1.msra.mxu0 0.0
      %2507 = vmatprep.subr.mxu0 0.0
      %2508 = vmatpush1.msra.mxu0 0.0
      %2509 = vmatprep.subr.mxu0 0.0
      %2510 = vmatpush1.msra.mxu0 0.0
      %2511 = vmatprep.subr.mxu0 0.0
      %2512 = vmatpush1.msra.mxu0 0.0
      %2513 = vmatprep.subr.mxu0 0.0
      %2514 = vmatpush1.msra.mxu0 0.0
      %2515 = vmatprep.mubr.f32.mxu0 0.0
      %2516 = vmatmul.mubr.f32.gmra.mrb[0].mxu0 %v2356
      %v2517 = vpop.f32.mrb[0].mxu0
      %v2518 = vadd.f32 0.0, %v2517
      %v2519 = vpop.f32.mrb[0].mxu0
      %2520 = vmatprep.mubr.f32.mxu0 0.0
      %2521 = vmatmul.mubr.f32.gmra.mrb[0].mxu0 %v2359
      %v2522 = vpop.f32.mrb[0].mxu0
      %v2523 = vadd.f32 0.0, %v2522
      %v2524 = vpop.f32.mrb[0].mxu0
      %2525 = vmatprep.mubr.f32.mxu0 0.0
      %2526 = vmatmul.mubr.f32.gmra.mrb[0].mxu0 %v2362
      %v2527 = vpop.f32.mrb[0].mxu0
      %v2528 = vadd.f32 0.0, %v2527
      %v2529 = vpop.f32.mrb[0].mxu0
      %2530 = vmatprep.mubr.f32.mxu0 0.0
      %2531 = vmatmul.mubr.f32.gmra.mrb[0].mxu0 %v2365
      %v2532 = vpop.f32.mrb[0].mxu0
      %v2533 = vadd.f32 0.0, %v2532
      %v2534 = vpop.f32.mrb[0].mxu0
      %2535 = vmatprep.mubr.f32.mxu0 0.0
      %2536 = vmatmul.mubr.f32.gmra.mrb[0].mxu0 %v2368
      %v2537 = vpop.f32.mrb[0].mxu0
      %v2538 = vadd.f32 0.0, %v2537
      %v2539 = vpop.f32.mrb[0].mxu0
      %2540 = vmatprep.mubr.f32.mxu0 0.0
      %2541 = vmatmul.mubr.f32.gmra.mrb[0].mxu0 %v2371
      %v2542 = vpop.f32.mrb[0].mxu0
      %v2543 = vadd.f32 0.0, %v2542
      %v2544 = vpop.f32.mrb[0].mxu0
      %2545 = vmatprep.mubr.f32.mxu0 0.0
      %2546 = vmatmul.mubr.f32.gmra.mrb[0].mxu0 %v2374
      %v2547 = vpop.f32.mrb[0].mxu0
      %v2548 = vadd.f32 0.0, %v2547
      %v2549 = vpop.f32.mrb[0].mxu0
      %2550 = vmatprep.mubr.f32.mxu0 0.0
      %2551 = vmatmul.mubr.f32.gmra.mrb[0].mxu0 %v2377
      %v2552 = vpop.f32.mrb[0].mxu0
      %v2553 = vadd.f32 0.0, %v2552
      %v2554 = vpop.f32.mrb[0].mxu0
      %2555 = vmatprep.mubr.f32.mxu0 0.0
      %2556 = vmatmul.mubr.f32.gmra.mrb[0].mxu0 %v2380
      %v2557 = vpop.f32.mrb[0].mxu0
      %v2558 = vadd.f32 0.0, %v2557
      %v2559 = vpop.f32.mrb[0].mxu0
      %2560 = vmatprep.mubr.f32.mxu0 0.0
      %2561 = vmatmul.mubr.f32.gmra.mrb[0].mxu0 %v2383
      %v2562 = vpop.f32.mrb[0].mxu0
      %v2563 = vadd.f32 0.0, %v2562
      %v2564 = vpop.f32.mrb[0].mxu0
      %2565 = vmatprep.mubr.f32.mxu0 0.0
      %2566 = vmatmul.mubr.f32.gmra.mrb[0].mxu0 %v2386
      %v2567 = vpop.f32.mrb[0].mxu0
      %v2568 = vadd.f32 0.0, %v2567
      %v2569 = vpop.f32.mrb[0].mxu0
      %2570 = vmatprep.mubr.f32.mxu0 0.0
      %2571 = vmatmul.mubr.f32.gmra.mrb[0].mxu0 %v2389
      %v2572 = vpop.f32.mrb[0].mxu0
      %v2573 = vadd.f32 0.0, %v2572
      %v2574 = vpop.f32.mrb[0].mxu0
      %2575 = vmatprep.mubr.f32.mxu0 0.0
      %2576 = vmatmul.mubr.f32.gmra.mrb[0].mxu0 %v2392
      %v2577 = vpop.f32.mrb[0].mxu0
      %v2578 = vadd.f32 0.0, %v2577
      %v2579 = vpop.f32.mrb[0].mxu0
      %2580 = vmatprep.mubr.f32.mxu0 0.0
      %2581 = vmatmul.mubr.f32.gmra.mrb[0].mxu0 %v2395
      %v2582 = vpop.f32.mrb[0].mxu0
      %v2583 = vadd.f32 0.0, %v2582
      %v2584 = vpop.f32.mrb[0].mxu0
      %2585 = vmatprep.mubr.f32.mxu0 0.0
      %2586 = vmatmul.mubr.f32.gmra.mrb[0].mxu0 %v2398
      %v2587 = vpop.f32.mrb[0].mxu0
      %v2588 = vadd.f32 0.0, %v2587
      %v2589 = vpop.f32.mrb[0].mxu0
      %2590 = vmatprep.mubr.f32.mxu0 0.0
      %2591 = vmatmul.mubr.f32.gmra.mrb[0].mxu0 %v2401
      %v2592 = vpop.f32.mrb[0].mxu0
      %v2593 = vadd.f32 0.0, %v2592
      %v2594 = vpop.f32.mrb[0].mxu0
      %2595 = vmatprep.mubr.f32.mxu0 0.0
      %2596 = vmatmul.mubr.f32.gmra.mrb[0].mxu0 %v2404
      %v2597 = vpop.f32.mrb[0].mxu0
      %v2598 = vadd.f32 0.0, %v2597
      %v2599 = vpop.f32.mrb[0].mxu0
      %2600 = vmatprep.mubr.f32.mxu0 0.0
      %2601 = vmatmul.mubr.f32.gmra.mrb[0].mxu0 %v2407
      %v2602 = vpop.f32.mrb[0].mxu0
      %v2603 = vadd.f32 0.0, %v2602
      %v2604 = vpop.f32.mrb[0].mxu0
      %2605 = vmatprep.mubr.f32.mxu0 0.0
      %2606 = vmatmul.mubr.f32.gmra.mrb[0].mxu0 %v2410
      %v2607 = vpop.f32.mrb[0].mxu0
      %v2608 = vadd.f32 0.0, %v2607
      %v2609 = vpop.f32.mrb[0].mxu0
      %2610 = vmatprep.mubr.f32.mxu0 0.0
      %2611 = vmatmul.mubr.f32.gmra.mrb[0].mxu0 %v2413
      %v2612 = vpop.f32.mrb[0].mxu0
      %v2613 = vadd.f32 0.0, %v2612
      %v2614 = vpop.f32.mrb[0].mxu0
      %2615 = vmatprep.mubr.f32.mxu0 0.0
      %2616 = vmatmul.mubr.f32.gmra.mrb[0].mxu0 %v2416
      %v2617 = vpop.f32.mrb[0].mxu0
      %v2618 = vadd.f32 0.0, %v2617
      %v2619 = vpop.f32.mrb[0].mxu0
      %2620 = vmatprep.mubr.f32.mxu0 0.0
      %2621 = vmatmul.mubr.f32.gmra.mrb[0].mxu0 %v2419
      %v2622 = vpop.f32.mrb[0].mxu0
      %v2623 = vadd.f32 0.0, %v2622
      %v2624 = vpop.f32.mrb[0].mxu0
      %2625 = vmatprep.mubr.f32.mxu0 0.0
      %2626 = vmatmul.mubr.f32.gmra.mrb[0].mxu0 %v2422
      %v2627 = vpop.f32.mrb[0].mxu0
      %v2628 = vadd.f32 0.0, %v2627
      %v2629 = vpop.f32.mrb[0].mxu0
      %2630 = vmatprep.mubr.f32.mxu0 0.0
      %2631 = vmatmul.mubr.f32.gmra.mrb[0].mxu0 %v2425
      %v2632 = vpop.f32.mrb[0].mxu0
      %v2633 = vadd.f32 0.0, %v2632
      %v2634 = vpop.f32.mrb[0].mxu0
      %2635 = vmatprep.mubr.f32.mxu0 0.0
      %2636 = vmatmul.mubr.f32.gmra.mrb[0].mxu0 %v2428
      %v2637 = vpop.f32.mrb[0].mxu0
      %v2638 = vadd.f32 0.0, %v2637
      %v2639 = vpop.f32.mrb[0].mxu0
      %2640 = vmatprep.mubr.f32.mxu0 0.0
      %2641 = vmatmul.mubr.f32.gmra.mrb[0].mxu0 %v2431
      %v2642 = vpop.f32.mrb[0].mxu0
      %v2643 = vadd.f32 0.0, %v2642
      %v2644 = vpop.f32.mrb[0].mxu0
      %2645 = vmatprep.mubr.f32.mxu0 0.0
      %2646 = vmatmul.mubr.f32.gmra.mrb[0].mxu0 %v2434
      %v2647 = vpop.f32.mrb[0].mxu0
      %v2648 = vadd.f32 0.0, %v2647
      %v2649 = vpop.f32.mrb[0].mxu0
      %2650 = vmatprep.mubr.f32.mxu0 0.0
      %2651 = vmatmul.mubr.f32.gmra.mrb[0].mxu0 %v2437
      %v2652 = vpop.f32.mrb[0].mxu0
      %v2653 = vadd.f32 0.0, %v2652
      %v2654 = vpop.f32.mrb[0].mxu0
      %2655 = vmatprep.mubr.f32.mxu0 0.0
      %2656 = vmatmul.mubr.f32.gmra.mrb[0].mxu0 %v2440
      %v2657 = vpop.f32.mrb[0].mxu0
      %v2658 = vadd.f32 0.0, %v2657
      %v2659 = vpop.f32.mrb[0].mxu0
      %2660 = vmatprep.mubr.f32.mxu0 0.0
      %2661 = vmatmul.mubr.f32.gmra.mrb[0].mxu0 %v2443
      %v2662 = vpop.f32.mrb[0].mxu0
      %v2663 = vadd.f32 0.0, %v2662
      %v2664 = vpop.f32.mrb[0].mxu0
      %2665 = vmatprep.mubr.f32.mxu0 0.0
      %2666 = vmatmul.mubr.f32.gmra.mrb[0].mxu0 %v2446
      %v2667 = vpop.f32.mrb[0].mxu0
      %v2668 = vadd.f32 0.0, %v2667
      %v2669 = vpop.f32.mrb[0].mxu0
      %2670 = vmatprep.mubr.f32.mxu0 0.0
      %2671 = vmatmul.mubr.f32.gmra.mrb[0].mxu0 %v2449
      %v2672 = vpop.f32.mrb[0].mxu0
      %v2673 = vadd.f32 0.0, %v2672
      %v2674 = vpop.f32.mrb[0].mxu0
      %2675 = vdwg.mxu0
      %v2676 = vadd.f32 %v2291, %v2518
      %v2677 = vadd.f32 %v2292, %v2523
      %v2678 = vadd.f32 %v2293, %v2528
      %v2679 = vadd.f32 %v2294, %v2533
      %v2680 = vadd.f32 %v2295, %v2538
      %v2681 = vadd.f32 %v2296, %v2543
      %v2682 = vadd.f32 %v2297, %v2548
      %v2683 = vadd.f32 %v2298, %v2553
      %v2684 = vadd.f32 %v2299, %v2558
      %v2685 = vadd.f32 %v2300, %v2563
      %v2686 = vadd.f32 %v2301, %v2568
      %v2687 = vadd.f32 %v2302, %v2573
      %v2688 = vadd.f32 %v2303, %v2578
      %v2689 = vadd.f32 %v2304, %v2583
      %v2690 = vadd.f32 %v2305, %v2588
      %v2691 = vadd.f32 %v2306, %v2593
      %v2692 = vadd.f32 %v2307, %v2598
      %v2693 = vadd.f32 %v2308, %v2603
      %v2694 = vadd.f32 %v2309, %v2608
      %v2695 = vadd.f32 %v2310, %v2613
      %v2696 = vadd.f32 %v2311, %v2618
      %v2697 = vadd.f32 %v2312, %v2623
      %v2698 = vadd.f32 %v2313, %v2628
      %v2699 = vadd.f32 %v2314, %v2633
      %v2700 = vadd.f32 %v2315, %v2638
      %v2701 = vadd.f32 %v2316, %v2643
      %v2702 = vadd.f32 %v2317, %v2648
      %v2703 = vadd.f32 %v2318, %v2653
      %v2704 = vadd.f32 %v2319, %v2658
      %v2705 = vadd.f32 %v2320, %v2663
      %v2706 = vadd.f32 %v2321, %v2668
      %v2707 = vadd.f32 %v2322, %v2673
      %s2708 = scalar_lea.vmem [#allocation2], 48
      %v2709 = vld [vmem:[%s2708] sm:$0xff]
      %v2710 = vld [vmem:[%s2708 + $0x8] sm:$0xff]
      %v2711 = vld [vmem:[%s2708 + $0x18] sm:$0xff]
      %v2712 = vld [vmem:[%s2708 + $0x20] sm:$0xff]
      %v2713 = vld [vmem:[%s2708 + $0x30] sm:$0xff]
      %v2714 = vld [vmem:[%s2708 + $0x38] sm:$0xff]
      %v2715 = vld [vmem:[%s2708 + $0x48] sm:$0xff]
      %v2716 = vld [vmem:[%s2708 + $0x50] sm:$0xff]
      %v2717 = vld [vmem:[%s2708 + $0x60] sm:$0xff]
      %v2718 = vld [vmem:[%s2708 + $0x68] sm:$0xff]
      %v2719 = vld [vmem:[%s2708 + $0x78] sm:$0xff]
      %v2720 = vld [vmem:[%s2708 + $0x80] sm:$0xff]
      %v2721 = vld [vmem:[%s2708 + $0x90] sm:$0xff]
      %v2722 = vld [vmem:[%s2708 + $0x98] sm:$0xff]
      %v2723 = vld [vmem:[%s2708 + $0xa8] sm:$0xff]
      %v2724 = vld [vmem:[%s2708 + $0xb0] sm:$0xff]
      %v2725 = vld [vmem:[%s2708 + $0xc0] sm:$0xff]
      %v2726 = vld [vmem:[%s2708 + $0xc8] sm:$0xff]
      %v2727 = vld [vmem:[%s2708 + $0xd8] sm:$0xff]
      %v2728 = vld [vmem:[%s2708 + $0xe0] sm:$0xff]
      %v2729 = vld [vmem:[%s2708 + $0xf0] sm:$0xff]
      %v2730 = vld [vmem:[%s2708 + $0xf8] sm:$0xff]
      %v2731 = vld [vmem:[%s2708 + $0x108] sm:$0xff]
      %v2732 = vld [vmem:[%s2708 + $0x110] sm:$0xff]
      %v2733 = vld [vmem:[%s2708 + $0x120] sm:$0xff]
      %v2734 = vld [vmem:[%s2708 + $0x128] sm:$0xff]
      %v2735 = vld [vmem:[%s2708 + $0x138] sm:$0xff]
      %v2736 = vld [vmem:[%s2708 + $0x140] sm:$0xff]
      %v2737 = vld [vmem:[%s2708 + $0x150] sm:$0xff]
      %v2738 = vld [vmem:[%s2708 + $0x158] sm:$0xff]
      %v2739 = vld [vmem:[%s2708 + $0x168] sm:$0xff]
      %v2740 = vld [vmem:[%s2708 + $0x170] sm:$0xff]
      %v2742 = vsel %vm337, %v2709, 0
      %v2745 = vsel %vm337, %v2710, 0
      %v2748 = vsel %vm337, %v2711, 0
      %v2751 = vsel %vm337, %v2712, 0
      %v2754 = vsel %vm337, %v2713, 0
      %v2757 = vsel %vm337, %v2714, 0
      %v2760 = vsel %vm337, %v2715, 0
      %v2763 = vsel %vm337, %v2716, 0
      %v2766 = vsel %vm337, %v2717, 0
      %v2769 = vsel %vm337, %v2718, 0
      %v2772 = vsel %vm337, %v2719, 0
      %v2775 = vsel %vm337, %v2720, 0
      %v2778 = vsel %vm337, %v2721, 0
      %v2781 = vsel %vm337, %v2722, 0
      %v2784 = vsel %vm337, %v2723, 0
      %v2787 = vsel %vm337, %v2724, 0
      %v2790 = vsel %vm337, %v2725, 0
      %v2793 = vsel %vm337, %v2726, 0
      %v2796 = vsel %vm337, %v2727, 0
      %v2799 = vsel %vm337, %v2728, 0
      %v2802 = vsel %vm337, %v2729, 0
      %v2805 = vsel %vm337, %v2730, 0
      %v2808 = vsel %vm337, %v2731, 0
      %v2811 = vsel %vm337, %v2732, 0
      %v2814 = vsel %vm337, %v2733, 0
      %v2817 = vsel %vm337, %v2734, 0
      %v2820 = vsel %vm337, %v2735, 0
      %v2823 = vsel %vm337, %v2736, 0
      %v2826 = vsel %vm337, %v2737, 0
      %v2829 = vsel %vm337, %v2738, 0
      %v2832 = vsel %vm337, %v2739, 0
      %v2835 = vsel %vm337, %v2740, 0
      %2837 = vmatprep.subr.mxu0 0.0
      %2838 = vmatpush1.msra.mxu0 %v450
      %2839 = vmatprep.subr.mxu0 0.0
      %2840 = vmatpush1.msra.mxu0 %v451
      %2841 = vmatprep.subr.mxu0 0.0
      %2842 = vmatpush1.msra.mxu0 %v452
      %2843 = vmatprep.subr.mxu0 0.0
      %2844 = vmatpush1.msra.mxu0 %v453
      %2845 = vmatprep.subr.mxu0 0.0
      %2846 = vmatpush1.msra.mxu0 0.0
      %2847 = vmatprep.subr.mxu0 0.0
      %2848 = vmatpush1.msra.mxu0 0.0
      %2849 = vmatprep.subr.mxu0 0.0
      %2850 = vmatpush1.msra.mxu0 0.0
      %2851 = vmatprep.subr.mxu0 0.0
      %2852 = vmatpush1.msra.mxu0 0.0
      %2853 = vmatprep.subr.mxu0 0.0
      %2854 = vmatpush1.msra.mxu0 0.0
      %2855 = vmatprep.subr.mxu0 0.0
      %2856 = vmatpush1.msra.mxu0 0.0
      %2857 = vmatprep.subr.mxu0 0.0
      %2858 = vmatpush1.msra.mxu0 0.0
      %2859 = vmatprep.subr.mxu0 0.0
      %2860 = vmatpush1.msra.mxu0 0.0
      %2861 = vmatprep.subr.mxu0 0.0
      %2862 = vmatpush1.msra.mxu0 0.0
      %2863 = vmatprep.subr.mxu0 0.0
      %2864 = vmatpush1.msra.mxu0 0.0
      %2865 = vmatprep.subr.mxu0 0.0
      %2866 = vmatpush1.msra.mxu0 0.0
      %2867 = vmatprep.subr.mxu0 0.0
      %2868 = vmatpush1.msra.mxu0 0.0
      %2869 = vmatprep.subr.mxu0 0.0
      %2870 = vmatpush1.msra.mxu0 0.0
      %2871 = vmatprep.subr.mxu0 0.0
      %2872 = vmatpush1.msra.mxu0 0.0
      %2873 = vmatprep.subr.mxu0 0.0
      %2874 = vmatpush1.msra.mxu0 0.0
      %2875 = vmatprep.subr.mxu0 0.0
      %2876 = vmatpush1.msra.mxu0 0.0
      %2877 = vmatprep.subr.mxu0 0.0
      %2878 = vmatpush1.msra.mxu0 0.0
      %2879 = vmatprep.subr.mxu0 0.0
      %2880 = vmatpush1.msra.mxu0 0.0
      %2881 = vmatprep.subr.mxu0 0.0
      %2882 = vmatpush1.msra.mxu0 0.0
      %2883 = vmatprep.subr.mxu0 0.0
      %2884 = vmatpush1.msra.mxu0 0.0
      %2885 = vmatprep.subr.mxu0 0.0
      %2886 = vmatpush1.msra.mxu0 0.0
      %2887 = vmatprep.subr.mxu0 0.0
      %2888 = vmatpush1.msra.mxu0 0.0
      %2889 = vmatprep.subr.mxu0 0.0
      %2890 = vmatpush1.msra.mxu0 0.0
      %2891 = vmatprep.subr.mxu0 0.0
      %2892 = vmatpush1.msra.mxu0 0.0
      %2893 = vmatprep.subr.mxu0 0.0
      %2894 = vmatpush1.msra.mxu0 0.0
      %2895 = vmatprep.subr.mxu0 0.0
      %2896 = vmatpush1.msra.mxu0 0.0
      %2897 = vmatprep.subr.mxu0 0.0
      %2898 = vmatpush1.msra.mxu0 0.0
      %2899 = vmatprep.subr.mxu0 0.0
      %2900 = vmatpush1.msra.mxu0 0.0
      %2901 = vmatprep.mubr.f32.mxu0 0.0
      %2902 = vmatmul.mubr.f32.gmra.mrb[0].mxu0 %v2742
      %v2903 = vpop.f32.mrb[0].mxu0
      %v2904 = vadd.f32 0.0, %v2903
      %v2905 = vpop.f32.mrb[0].mxu0
      %2906 = vmatprep.mubr.f32.mxu0 0.0
      %2907 = vmatmul.mubr.f32.gmra.mrb[0].mxu0 %v2745
      %v2908 = vpop.f32.mrb[0].mxu0
      %v2909 = vadd.f32 0.0, %v2908
      %v2910 = vpop.f32.mrb[0].mxu0
      %2911 = vmatprep.mubr.f32.mxu0 0.0
      %2912 = vmatmul.mubr.f32.gmra.mrb[0].mxu0 %v2748
      %v2913 = vpop.f32.mrb[0].mxu0
      %v2914 = vadd.f32 0.0, %v2913
      %v2915 = vpop.f32.mrb[0].mxu0
      %2916 = vmatprep.mubr.f32.mxu0 0.0
      %2917 = vmatmul.mubr.f32.gmra.mrb[0].mxu0 %v2751
      %v2918 = vpop.f32.mrb[0].mxu0
      %v2919 = vadd.f32 0.0, %v2918
      %v2920 = vpop.f32.mrb[0].mxu0
      %2921 = vmatprep.mubr.f32.mxu0 0.0
      %2922 = vmatmul.mubr.f32.gmra.mrb[0].mxu0 %v2754
      %v2923 = vpop.f32.mrb[0].mxu0
      %v2924 = vadd.f32 0.0, %v2923
      %v2925 = vpop.f32.mrb[0].mxu0
      %2926 = vmatprep.mubr.f32.mxu0 0.0
      %2927 = vmatmul.mubr.f32.gmra.mrb[0].mxu0 %v2757
      %v2928 = vpop.f32.mrb[0].mxu0
      %v2929 = vadd.f32 0.0, %v2928
      %v2930 = vpop.f32.mrb[0].mxu0
      %2931 = vmatprep.mubr.f32.mxu0 0.0
      %2932 = vmatmul.mubr.f32.gmra.mrb[0].mxu0 %v2760
      %v2933 = vpop.f32.mrb[0].mxu0
      %v2934 = vadd.f32 0.0, %v2933
      %v2935 = vpop.f32.mrb[0].mxu0
      %2936 = vmatprep.mubr.f32.mxu0 0.0
      %2937 = vmatmul.mubr.f32.gmra.mrb[0].mxu0 %v2763
      %v2938 = vpop.f32.mrb[0].mxu0
      %v2939 = vadd.f32 0.0, %v2938
      %v2940 = vpop.f32.mrb[0].mxu0
      %2941 = vmatprep.mubr.f32.mxu0 0.0
      %2942 = vmatmul.mubr.f32.gmra.mrb[0].mxu0 %v2766
      %v2943 = vpop.f32.mrb[0].mxu0
      %v2944 = vadd.f32 0.0, %v2943
      %v2945 = vpop.f32.mrb[0].mxu0
      %2946 = vmatprep.mubr.f32.mxu0 0.0
      %2947 = vmatmul.mubr.f32.gmra.mrb[0].mxu0 %v2769
      %v2948 = vpop.f32.mrb[0].mxu0
      %v2949 = vadd.f32 0.0, %v2948
      %v2950 = vpop.f32.mrb[0].mxu0
      %2951 = vmatprep.mubr.f32.mxu0 0.0
      %2952 = vmatmul.mubr.f32.gmra.mrb[0].mxu0 %v2772
      %v2953 = vpop.f32.mrb[0].mxu0
      %v2954 = vadd.f32 0.0, %v2953
      %v2955 = vpop.f32.mrb[0].mxu0
      %2956 = vmatprep.mubr.f32.mxu0 0.0
      %2957 = vmatmul.mubr.f32.gmra.mrb[0].mxu0 %v2775
      %v2958 = vpop.f32.mrb[0].mxu0
      %v2959 = vadd.f32 0.0, %v2958
      %v2960 = vpop.f32.mrb[0].mxu0
      %2961 = vmatprep.mubr.f32.mxu0 0.0
      %2962 = vmatmul.mubr.f32.gmra.mrb[0].mxu0 %v2778
      %v2963 = vpop.f32.mrb[0].mxu0
      %v2964 = vadd.f32 0.0, %v2963
      %v2965 = vpop.f32.mrb[0].mxu0
      %2966 = vmatprep.mubr.f32.mxu0 0.0
      %2967 = vmatmul.mubr.f32.gmra.mrb[0].mxu0 %v2781
      %v2968 = vpop.f32.mrb[0].mxu0
      %v2969 = vadd.f32 0.0, %v2968
      %v2970 = vpop.f32.mrb[0].mxu0
      %2971 = vmatprep.mubr.f32.mxu0 0.0
      %2972 = vmatmul.mubr.f32.gmra.mrb[0].mxu0 %v2784
      %v2973 = vpop.f32.mrb[0].mxu0
      %v2974 = vadd.f32 0.0, %v2973
      %v2975 = vpop.f32.mrb[0].mxu0
      %2976 = vmatprep.mubr.f32.mxu0 0.0
      %2977 = vmatmul.mubr.f32.gmra.mrb[0].mxu0 %v2787
      %v2978 = vpop.f32.mrb[0].mxu0
      %v2979 = vadd.f32 0.0, %v2978
      %v2980 = vpop.f32.mrb[0].mxu0
      %2981 = vmatprep.mubr.f32.mxu0 0.0
      %2982 = vmatmul.mubr.f32.gmra.mrb[0].mxu0 %v2790
      %v2983 = vpop.f32.mrb[0].mxu0
      %v2984 = vadd.f32 0.0, %v2983
      %v2985 = vpop.f32.mrb[0].mxu0
      %2986 = vmatprep.mubr.f32.mxu0 0.0
      %2987 = vmatmul.mubr.f32.gmra.mrb[0].mxu0 %v2793
      %v2988 = vpop.f32.mrb[0].mxu0
      %v2989 = vadd.f32 0.0, %v2988
      %v2990 = vpop.f32.mrb[0].mxu0
      %2991 = vmatprep.mubr.f32.mxu0 0.0
      %2992 = vmatmul.mubr.f32.gmra.mrb[0].mxu0 %v2796
      %v2993 = vpop.f32.mrb[0].mxu0
      %v2994 = vadd.f32 0.0, %v2993
      %v2995 = vpop.f32.mrb[0].mxu0
      %2996 = vmatprep.mubr.f32.mxu0 0.0
      %2997 = vmatmul.mubr.f32.gmra.mrb[0].mxu0 %v2799
      %v2998 = vpop.f32.mrb[0].mxu0
      %v2999 = vadd.f32 0.0, %v2998
      %v3000 = vpop.f32.mrb[0].mxu0
      %3001 = vmatprep.mubr.f32.mxu0 0.0
      %3002 = vmatmul.mubr.f32.gmra.mrb[0].mxu0 %v2802
      %v3003 = vpop.f32.mrb[0].mxu0
      %v3004 = vadd.f32 0.0, %v3003
      %v3005 = vpop.f32.mrb[0].mxu0
      %3006 = vmatprep.mubr.f32.mxu0 0.0
      %3007 = vmatmul.mubr.f32.gmra.mrb[0].mxu0 %v2805
      %v3008 = vpop.f32.mrb[0].mxu0
      %v3009 = vadd.f32 0.0, %v3008
      %v3010 = vpop.f32.mrb[0].mxu0
      %3011 = vmatprep.mubr.f32.mxu0 0.0
      %3012 = vmatmul.mubr.f32.gmra.mrb[0].mxu0 %v2808
      %v3013 = vpop.f32.mrb[0].mxu0
      %v3014 = vadd.f32 0.0, %v3013
      %v3015 = vpop.f32.mrb[0].mxu0
      %3016 = vmatprep.mubr.f32.mxu0 0.0
      %3017 = vmatmul.mubr.f32.gmra.mrb[0].mxu0 %v2811
      %v3018 = vpop.f32.mrb[0].mxu0
      %v3019 = vadd.f32 0.0, %v3018
      %v3020 = vpop.f32.mrb[0].mxu0
      %3021 = vmatprep.mubr.f32.mxu0 0.0
      %3022 = vmatmul.mubr.f32.gmra.mrb[0].mxu0 %v2814
      %v3023 = vpop.f32.mrb[0].mxu0
      %v3024 = vadd.f32 0.0, %v3023
      %v3025 = vpop.f32.mrb[0].mxu0
      %3026 = vmatprep.mubr.f32.mxu0 0.0
      %3027 = vmatmul.mubr.f32.gmra.mrb[0].mxu0 %v2817
      %v3028 = vpop.f32.mrb[0].mxu0
      %v3029 = vadd.f32 0.0, %v3028
      %v3030 = vpop.f32.mrb[0].mxu0
      %3031 = vmatprep.mubr.f32.mxu0 0.0
      %3032 = vmatmul.mubr.f32.gmra.mrb[0].mxu0 %v2820
      %v3033 = vpop.f32.mrb[0].mxu0
      %v3034 = vadd.f32 0.0, %v3033
      %v3035 = vpop.f32.mrb[0].mxu0
      %3036 = vmatprep.mubr.f32.mxu0 0.0
      %3037 = vmatmul.mubr.f32.gmra.mrb[0].mxu0 %v2823
      %v3038 = vpop.f32.mrb[0].mxu0
      %v3039 = vadd.f32 0.0, %v3038
      %v3040 = vpop.f32.mrb[0].mxu0
      %3041 = vmatprep.mubr.f32.mxu0 0.0
      %3042 = vmatmul.mubr.f32.gmra.mrb[0].mxu0 %v2826
      %v3043 = vpop.f32.mrb[0].mxu0
      %v3044 = vadd.f32 0.0, %v3043
      %v3045 = vpop.f32.mrb[0].mxu0
      %3046 = vmatprep.mubr.f32.mxu0 0.0
      %3047 = vmatmul.mubr.f32.gmra.mrb[0].mxu0 %v2829
      %v3048 = vpop.f32.mrb[0].mxu0
      %v3049 = vadd.f32 0.0, %v3048
      %v3050 = vpop.f32.mrb[0].mxu0
      %3051 = vmatprep.mubr.f32.mxu0 0.0
      %3052 = vmatmul.mubr.f32.gmra.mrb[0].mxu0 %v2832
      %v3053 = vpop.f32.mrb[0].mxu0
      %v3054 = vadd.f32 0.0, %v3053
      %v3055 = vpop.f32.mrb[0].mxu0
      %3056 = vmatprep.mubr.f32.mxu0 0.0
      %3057 = vmatmul.mubr.f32.gmra.mrb[0].mxu0 %v2835
      %v3058 = vpop.f32.mrb[0].mxu0
      %v3059 = vadd.f32 0.0, %v3058
      %v3060 = vpop.f32.mrb[0].mxu0
      %3061 = vdwg.mxu0
      %v3062 = vadd.f32 %v2676, %v2904
      %v3063 = vadd.f32 %v2677, %v2909
      %v3064 = vadd.f32 %v2678, %v2914
      %v3065 = vadd.f32 %v2679, %v2919
      %v3066 = vadd.f32 %v2680, %v2924
      %v3067 = vadd.f32 %v2681, %v2929
      %v3068 = vadd.f32 %v2682, %v2934
      %v3069 = vadd.f32 %v2683, %v2939
      %v3070 = vadd.f32 %v2684, %v2944
      %v3071 = vadd.f32 %v2685, %v2949
      %v3072 = vadd.f32 %v2686, %v2954
      %v3073 = vadd.f32 %v2687, %v2959
      %v3074 = vadd.f32 %v2688, %v2964
      %v3075 = vadd.f32 %v2689, %v2969
      %v3076 = vadd.f32 %v2690, %v2974
      %v3077 = vadd.f32 %v2691, %v2979
      %v3078 = vadd.f32 %v2692, %v2984
      %v3079 = vadd.f32 %v2693, %v2989
      %v3080 = vadd.f32 %v2694, %v2994
      %v3081 = vadd.f32 %v2695, %v2999
      %v3082 = vadd.f32 %v2696, %v3004
      %v3083 = vadd.f32 %v2697, %v3009
      %v3084 = vadd.f32 %v2698, %v3014
      %v3085 = vadd.f32 %v2699, %v3019
      %v3086 = vadd.f32 %v2700, %v3024
      %v3087 = vadd.f32 %v2701, %v3029
      %v3088 = vadd.f32 %v2702, %v3034
      %v3089 = vadd.f32 %v2703, %v3039
      %v3090 = vadd.f32 %v2704, %v3044
      %v3091 = vadd.f32 %v2705, %v3049
      %v3092 = vadd.f32 %v2706, %v3054
      %v3093 = vadd.f32 %v2707, %v3059
      %v3094 = vld [vmem:[%s2708 + $0x1] sm:$0xff]
      %v3095 = vld [vmem:[%s2708 + $0x9] sm:$0xff]
      %v3096 = vld [vmem:[%s2708 + $0x19] sm:$0xff]
      %v3097 = vld [vmem:[%s2708 + $0x21] sm:$0xff]
      %v3098 = vld [vmem:[%s2708 + $0x31] sm:$0xff]
      %v3099 = vld [vmem:[%s2708 + $0x39] sm:$0xff]
      %v3100 = vld [vmem:[%s2708 + $0x49] sm:$0xff]
      %v3101 = vld [vmem:[%s2708 + $0x51] sm:$0xff]
      %v3102 = vld [vmem:[%s2708 + $0x61] sm:$0xff]
      %v3103 = vld [vmem:[%s2708 + $0x69] sm:$0xff]
      %v3104 = vld [vmem:[%s2708 + $0x79] sm:$0xff]
      %v3105 = vld [vmem:[%s2708 + $0x81] sm:$0xff]
      %v3106 = vld [vmem:[%s2708 + $0x91] sm:$0xff]
      %v3107 = vld [vmem:[%s2708 + $0x99] sm:$0xff]
      %v3108 = vld [vmem:[%s2708 + $0xa9] sm:$0xff]
      %v3109 = vld [vmem:[%s2708 + $0xb1] sm:$0xff]
      %v3110 = vld [vmem:[%s2708 + $0xc1] sm:$0xff]
      %v3111 = vld [vmem:[%s2708 + $0xc9] sm:$0xff]
      %v3112 = vld [vmem:[%s2708 + $0xd9] sm:$0xff]
      %v3113 = vld [vmem:[%s2708 + $0xe1] sm:$0xff]
      %v3114 = vld [vmem:[%s2708 + $0xf1] sm:$0xff]
      %v3115 = vld [vmem:[%s2708 + $0xf9] sm:$0xff]
      %v3116 = vld [vmem:[%s2708 + $0x109] sm:$0xff]
      %v3117 = vld [vmem:[%s2708 + $0x111] sm:$0xff]
      %v3118 = vld [vmem:[%s2708 + $0x121] sm:$0xff]
      %v3119 = vld [vmem:[%s2708 + $0x129] sm:$0xff]
      %v3120 = vld [vmem:[%s2708 + $0x139] sm:$0xff]
      %v3121 = vld [vmem:[%s2708 + $0x141] sm:$0xff]
      %v3122 = vld [vmem:[%s2708 + $0x151] sm:$0xff]
      %v3123 = vld [vmem:[%s2708 + $0x159] sm:$0xff]
      %v3124 = vld [vmem:[%s2708 + $0x169] sm:$0xff]
      %v3125 = vld [vmem:[%s2708 + $0x171] sm:$0xff]
      %v3127 = vsel %vm337, %v3094, 0
      %v3130 = vsel %vm337, %v3095, 0
      %v3133 = vsel %vm337, %v3096, 0
      %v3136 = vsel %vm337, %v3097, 0
      %v3139 = vsel %vm337, %v3098, 0
      %v3142 = vsel %vm337, %v3099, 0
      %v3145 = vsel %vm337, %v3100, 0
      %v3148 = vsel %vm337, %v3101, 0
      %v3151 = vsel %vm337, %v3102, 0
      %v3154 = vsel %vm337, %v3103, 0
      %v3157 = vsel %vm337, %v3104, 0
      %v3160 = vsel %vm337, %v3105, 0
      %v3163 = vsel %vm337, %v3106, 0
      %v3166 = vsel %vm337, %v3107, 0
      %v3169 = vsel %vm337, %v3108, 0
      %v3172 = vsel %vm337, %v3109, 0
      %v3175 = vsel %vm337, %v3110, 0
      %v3178 = vsel %vm337, %v3111, 0
      %v3181 = vsel %vm337, %v3112, 0
      %v3184 = vsel %vm337, %v3113, 0
      %v3187 = vsel %vm337, %v3114, 0
      %v3190 = vsel %vm337, %v3115, 0
      %v3193 = vsel %vm337, %v3116, 0
      %v3196 = vsel %vm337, %v3117, 0
      %v3199 = vsel %vm337, %v3118, 0
      %v3202 = vsel %vm337, %v3119, 0
      %v3205 = vsel %vm337, %v3120, 0
      %v3208 = vsel %vm337, %v3121, 0
      %v3211 = vsel %vm337, %v3122, 0
      %v3214 = vsel %vm337, %v3123, 0
      %v3217 = vsel %vm337, %v3124, 0
      %v3220 = vsel %vm337, %v3125, 0
      %3222 = vmatprep.subr.mxu0 0.0
      %3223 = vmatpush1.msra.mxu0 %v454
      %3224 = vmatprep.subr.mxu0 0.0
      %3225 = vmatpush1.msra.mxu0 %v455
      %3226 = vmatprep.subr.mxu0 0.0
      %3227 = vmatpush1.msra.mxu0 %v456
      %3228 = vmatprep.subr.mxu0 0.0
      %3229 = vmatpush1.msra.mxu0 %v457
      %3230 = vmatprep.subr.mxu0 0.0
      %3231 = vmatpush1.msra.mxu0 0.0
      %3232 = vmatprep.subr.mxu0 0.0
      %3233 = vmatpush1.msra.mxu0 0.0
      %3234 = vmatprep.subr.mxu0 0.0
      %3235 = vmatpush1.msra.mxu0 0.0
      %3236 = vmatprep.subr.mxu0 0.0
      %3237 = vmatpush1.msra.mxu0 0.0
      %3238 = vmatprep.subr.mxu0 0.0
      %3239 = vmatpush1.msra.mxu0 0.0
      %3240 = vmatprep.subr.mxu0 0.0
      %3241 = vmatpush1.msra.mxu0 0.0
      %3242 = vmatprep.subr.mxu0 0.0
      %3243 = vmatpush1.msra.mxu0 0.0
      %3244 = vmatprep.subr.mxu0 0.0
      %3245 = vmatpush1.msra.mxu0 0.0
      %3246 = vmatprep.subr.mxu0 0.0
      %3247 = vmatpush1.msra.mxu0 0.0
      %3248 = vmatprep.subr.mxu0 0.0
      %3249 = vmatpush1.msra.mxu0 0.0
      %3250 = vmatprep.subr.mxu0 0.0
      %3251 = vmatpush1.msra.mxu0 0.0
      %3252 = vmatprep.subr.mxu0 0.0
      %3253 = vmatpush1.msra.mxu0 0.0
      %3254 = vmatprep.subr.mxu0 0.0
      %3255 = vmatpush1.msra.mxu0 0.0
      %3256 = vmatprep.subr.mxu0 0.0
      %3257 = vmatpush1.msra.mxu0 0.0
      %3258 = vmatprep.subr.mxu0 0.0
      %3259 = vmatpush1.msra.mxu0 0.0
      %3260 = vmatprep.subr.mxu0 0.0
      %3261 = vmatpush1.msra.mxu0 0.0
      %3262 = vmatprep.subr.mxu0 0.0
      %3263 = vmatpush1.msra.mxu0 0.0
      %3264 = vmatprep.subr.mxu0 0.0
      %3265 = vmatpush1.msra.mxu0 0.0
      %3266 = vmatprep.subr.mxu0 0.0
      %3267 = vmatpush1.msra.mxu0 0.0
      %3268 = vmatprep.subr.mxu0 0.0
      %3269 = vmatpush1.msra.mxu0 0.0
      %3270 = vmatprep.subr.mxu0 0.0
      %3271 = vmatpush1.msra.mxu0 0.0
      %3272 = vmatprep.subr.mxu0 0.0
      %3273 = vmatpush1.msra.mxu0 0.0
      %3274 = vmatprep.subr.mxu0 0.0
      %3275 = vmatpush1.msra.mxu0 0.0
      %3276 = vmatprep.subr.mxu0 0.0
      %3277 = vmatpush1.msra.mxu0 0.0
      %3278 = vmatprep.subr.mxu0 0.0
      %3279 = vmatpush1.msra.mxu0 0.0
      %3280 = vmatprep.subr.mxu0 0.0
      %3281 = vmatpush1.msra.mxu0 0.0
      %3282 = vmatprep.subr.mxu0 0.0
      %3283 = vmatpush1.msra.mxu0 0.0
      %3284 = vmatprep.subr.mxu0 0.0
      %3285 = vmatpush1.msra.mxu0 0.0
      %3286 = vmatprep.mubr.f32.mxu0 0.0
      %3287 = vmatmul.mubr.f32.gmra.mrb[0].mxu0 %v3127
      %v3288 = vpop.f32.mrb[0].mxu0
      %v3289 = vadd.f32 0.0, %v3288
      %v3290 = vpop.f32.mrb[0].mxu0
      %3291 = vmatprep.mubr.f32.mxu0 0.0
      %3292 = vmatmul.mubr.f32.gmra.mrb[0].mxu0 %v3130
      %v3293 = vpop.f32.mrb[0].mxu0
      %v3294 = vadd.f32 0.0, %v3293
      %v3295 = vpop.f32.mrb[0].mxu0
      %3296 = vmatprep.mubr.f32.mxu0 0.0
      %3297 = vmatmul.mubr.f32.gmra.mrb[0].mxu0 %v3133
      %v3298 = vpop.f32.mrb[0].mxu0
      %v3299 = vadd.f32 0.0, %v3298
      %v3300 = vpop.f32.mrb[0].mxu0
      %3301 = vmatprep.mubr.f32.mxu0 0.0
      %3302 = vmatmul.mubr.f32.gmra.mrb[0].mxu0 %v3136
      %v3303 = vpop.f32.mrb[0].mxu0
      %v3304 = vadd.f32 0.0, %v3303
      %v3305 = vpop.f32.mrb[0].mxu0
      %3306 = vmatprep.mubr.f32.mxu0 0.0
      %3307 = vmatmul.mubr.f32.gmra.mrb[0].mxu0 %v3139
      %v3308 = vpop.f32.mrb[0].mxu0
      %v3309 = vadd.f32 0.0, %v3308
      %v3310 = vpop.f32.mrb[0].mxu0
      %3311 = vmatprep.mubr.f32.mxu0 0.0
      %3312 = vmatmul.mubr.f32.gmra.mrb[0].mxu0 %v3142
      %v3313 = vpop.f32.mrb[0].mxu0
      %v3314 = vadd.f32 0.0, %v3313
      %v3315 = vpop.f32.mrb[0].mxu0
      %3316 = vmatprep.mubr.f32.mxu0 0.0
      %3317 = vmatmul.mubr.f32.gmra.mrb[0].mxu0 %v3145
      %v3318 = vpop.f32.mrb[0].mxu0
      %v3319 = vadd.f32 0.0, %v3318
      %v3320 = vpop.f32.mrb[0].mxu0
      %3321 = vmatprep.mubr.f32.mxu0 0.0
      %3322 = vmatmul.mubr.f32.gmra.mrb[0].mxu0 %v3148
      %v3323 = vpop.f32.mrb[0].mxu0
      %v3324 = vadd.f32 0.0, %v3323
      %v3325 = vpop.f32.mrb[0].mxu0
      %3326 = vmatprep.mubr.f32.mxu0 0.0
      %3327 = vmatmul.mubr.f32.gmra.mrb[0].mxu0 %v3151
      %v3328 = vpop.f32.mrb[0].mxu0
      %v3329 = vadd.f32 0.0, %v3328
      %v3330 = vpop.f32.mrb[0].mxu0
      %3331 = vmatprep.mubr.f32.mxu0 0.0
      %3332 = vmatmul.mubr.f32.gmra.mrb[0].mxu0 %v3154
      %v3333 = vpop.f32.mrb[0].mxu0
      %v3334 = vadd.f32 0.0, %v3333
      %v3335 = vpop.f32.mrb[0].mxu0
      %3336 = vmatprep.mubr.f32.mxu0 0.0
      %3337 = vmatmul.mubr.f32.gmra.mrb[0].mxu0 %v3157
      %v3338 = vpop.f32.mrb[0].mxu0
      %v3339 = vadd.f32 0.0, %v3338
      %v3340 = vpop.f32.mrb[0].mxu0
      %3341 = vmatprep.mubr.f32.mxu0 0.0
      %3342 = vmatmul.mubr.f32.gmra.mrb[0].mxu0 %v3160
      %v3343 = vpop.f32.mrb[0].mxu0
      %v3344 = vadd.f32 0.0, %v3343
      %v3345 = vpop.f32.mrb[0].mxu0
      %3346 = vmatprep.mubr.f32.mxu0 0.0
      %3347 = vmatmul.mubr.f32.gmra.mrb[0].mxu0 %v3163
      %v3348 = vpop.f32.mrb[0].mxu0
      %v3349 = vadd.f32 0.0, %v3348
      %v3350 = vpop.f32.mrb[0].mxu0
      %3351 = vmatprep.mubr.f32.mxu0 0.0
      %3352 = vmatmul.mubr.f32.gmra.mrb[0].mxu0 %v3166
      %v3353 = vpop.f32.mrb[0].mxu0
      %v3354 = vadd.f32 0.0, %v3353
      %v3355 = vpop.f32.mrb[0].mxu0
      %3356 = vmatprep.mubr.f32.mxu0 0.0
      %3357 = vmatmul.mubr.f32.gmra.mrb[0].mxu0 %v3169
      %v3358 = vpop.f32.mrb[0].mxu0
      %v3359 = vadd.f32 0.0, %v3358
      %v3360 = vpop.f32.mrb[0].mxu0
      %3361 = vmatprep.mubr.f32.mxu0 0.0
      %3362 = vmatmul.mubr.f32.gmra.mrb[0].mxu0 %v3172
      %v3363 = vpop.f32.mrb[0].mxu0
      %v3364 = vadd.f32 0.0, %v3363
      %v3365 = vpop.f32.mrb[0].mxu0
      %3366 = vmatprep.mubr.f32.mxu0 0.0
      %3367 = vmatmul.mubr.f32.gmra.mrb[0].mxu0 %v3175
      %v3368 = vpop.f32.mrb[0].mxu0
      %v3369 = vadd.f32 0.0, %v3368
      %v3370 = vpop.f32.mrb[0].mxu0
      %3371 = vmatprep.mubr.f32.mxu0 0.0
      %3372 = vmatmul.mubr.f32.gmra.mrb[0].mxu0 %v3178
      %v3373 = vpop.f32.mrb[0].mxu0
      %v3374 = vadd.f32 0.0, %v3373
      %v3375 = vpop.f32.mrb[0].mxu0
      %3376 = vmatprep.mubr.f32.mxu0 0.0
      %3377 = vmatmul.mubr.f32.gmra.mrb[0].mxu0 %v3181
      %v3378 = vpop.f32.mrb[0].mxu0
      %v3379 = vadd.f32 0.0, %v3378
      %v3380 = vpop.f32.mrb[0].mxu0
      %3381 = vmatprep.mubr.f32.mxu0 0.0
      %3382 = vmatmul.mubr.f32.gmra.mrb[0].mxu0 %v3184
      %v3383 = vpop.f32.mrb[0].mxu0
      %v3384 = vadd.f32 0.0, %v3383
      %v3385 = vpop.f32.mrb[0].mxu0
      %3386 = vmatprep.mubr.f32.mxu0 0.0
      %3387 = vmatmul.mubr.f32.gmra.mrb[0].mxu0 %v3187
      %v3388 = vpop.f32.mrb[0].mxu0
      %v3389 = vadd.f32 0.0, %v3388
      %v3390 = vpop.f32.mrb[0].mxu0
      %3391 = vmatprep.mubr.f32.mxu0 0.0
      %3392 = vmatmul.mubr.f32.gmra.mrb[0].mxu0 %v3190
      %v3393 = vpop.f32.mrb[0].mxu0
      %v3394 = vadd.f32 0.0, %v3393
      %v3395 = vpop.f32.mrb[0].mxu0
      %3396 = vmatprep.mubr.f32.mxu0 0.0
      %3397 = vmatmul.mubr.f32.gmra.mrb[0].mxu0 %v3193
      %v3398 = vpop.f32.mrb[0].mxu0
      %v3399 = vadd.f32 0.0, %v3398
      %v3400 = vpop.f32.mrb[0].mxu0
      %3401 = vmatprep.mubr.f32.mxu0 0.0
      %3402 = vmatmul.mubr.f32.gmra.mrb[0].mxu0 %v3196
      %v3403 = vpop.f32.mrb[0].mxu0
      %v3404 = vadd.f32 0.0, %v3403
      %v3405 = vpop.f32.mrb[0].mxu0
      %3406 = vmatprep.mubr.f32.mxu0 0.0
      %3407 = vmatmul.mubr.f32.gmra.mrb[0].mxu0 %v3199
      %v3408 = vpop.f32.mrb[0].mxu0
      %v3409 = vadd.f32 0.0, %v3408
      %v3410 = vpop.f32.mrb[0].mxu0
      %3411 = vmatprep.mubr.f32.mxu0 0.0
      %3412 = vmatmul.mubr.f32.gmra.mrb[0].mxu0 %v3202
      %v3413 = vpop.f32.mrb[0].mxu0
      %v3414 = vadd.f32 0.0, %v3413
      %v3415 = vpop.f32.mrb[0].mxu0
      %3416 = vmatprep.mubr.f32.mxu0 0.0
      %3417 = vmatmul.mubr.f32.gmra.mrb[0].mxu0 %v3205
      %v3418 = vpop.f32.mrb[0].mxu0
      %v3419 = vadd.f32 0.0, %v3418
      %v3420 = vpop.f32.mrb[0].mxu0
      %3421 = vmatprep.mubr.f32.mxu0 0.0
      %3422 = vmatmul.mubr.f32.gmra.mrb[0].mxu0 %v3208
      %v3423 = vpop.f32.mrb[0].mxu0
      %v3424 = vadd.f32 0.0, %v3423
      %v3425 = vpop.f32.mrb[0].mxu0
      %3426 = vmatprep.mubr.f32.mxu0 0.0
      %3427 = vmatmul.mubr.f32.gmra.mrb[0].mxu0 %v3211
      %v3428 = vpop.f32.mrb[0].mxu0
      %v3429 = vadd.f32 0.0, %v3428
      %v3430 = vpop.f32.mrb[0].mxu0
      %3431 = vmatprep.mubr.f32.mxu0 0.0
      %3432 = vmatmul.mubr.f32.gmra.mrb[0].mxu0 %v3214
      %v3433 = vpop.f32.mrb[0].mxu0
      %v3434 = vadd.f32 0.0, %v3433
      %v3435 = vpop.f32.mrb[0].mxu0
      %3436 = vmatprep.mubr.f32.mxu0 0.0
      %3437 = vmatmul.mubr.f32.gmra.mrb[0].mxu0 %v3217
      %v3438 = vpop.f32.mrb[0].mxu0
      %v3439 = vadd.f32 0.0, %v3438
      %v3440 = vpop.f32.mrb[0].mxu0
      %3441 = vmatprep.mubr.f32.mxu0 0.0
      %3442 = vmatmul.mubr.f32.gmra.mrb[0].mxu0 %v3220
      %v3443 = vpop.f32.mrb[0].mxu0
      %v3444 = vadd.f32 0.0, %v3443
      %v3445 = vpop.f32.mrb[0].mxu0
      %3446 = vdwg.mxu0
      %v3447 = vadd.f32 %v3062, %v3289
      %v3448 = vadd.f32 %v3063, %v3294
      %v3449 = vadd.f32 %v3064, %v3299
      %v3450 = vadd.f32 %v3065, %v3304
      %v3451 = vadd.f32 %v3066, %v3309
      %v3452 = vadd.f32 %v3067, %v3314
      %v3453 = vadd.f32 %v3068, %v3319
      %v3454 = vadd.f32 %v3069, %v3324
      %v3455 = vadd.f32 %v3070, %v3329
      %v3456 = vadd.f32 %v3071, %v3334
      %v3457 = vadd.f32 %v3072, %v3339
      %v3458 = vadd.f32 %v3073, %v3344
      %v3459 = vadd.f32 %v3074, %v3349
      %v3460 = vadd.f32 %v3075, %v3354
      %v3461 = vadd.f32 %v3076, %v3359
      %v3462 = vadd.f32 %v3077, %v3364
      %v3463 = vadd.f32 %v3078, %v3369
      %v3464 = vadd.f32 %v3079, %v3374
      %v3465 = vadd.f32 %v3080, %v3379
      %v3466 = vadd.f32 %v3081, %v3384
      %v3467 = vadd.f32 %v3082, %v3389
      %v3468 = vadd.f32 %v3083, %v3394
      %v3469 = vadd.f32 %v3084, %v3399
      %v3470 = vadd.f32 %v3085, %v3404
      %v3471 = vadd.f32 %v3086, %v3409
      %v3472 = vadd.f32 %v3087, %v3414
      %v3473 = vadd.f32 %v3088, %v3419
      %v3474 = vadd.f32 %v3089, %v3424
      %v3475 = vadd.f32 %v3090, %v3429
      %v3476 = vadd.f32 %v3091, %v3434
      %v3477 = vadd.f32 %v3092, %v3439
      %v3478 = vadd.f32 %v3093, %v3444
      %v3479 = vld [vmem:[%s2708 + $0x2] sm:$0xff]
      %v3480 = vld [vmem:[%s2708 + $0xa] sm:$0xff]
      %v3481 = vld [vmem:[%s2708 + $0x1a] sm:$0xff]
      %v3482 = vld [vmem:[%s2708 + $0x22] sm:$0xff]
      %v3483 = vld [vmem:[%s2708 + $0x32] sm:$0xff]
      %v3484 = vld [vmem:[%s2708 + $0x3a] sm:$0xff]
      %v3485 = vld [vmem:[%s2708 + $0x4a] sm:$0xff]
      %v3486 = vld [vmem:[%s2708 + $0x52] sm:$0xff]
      %v3487 = vld [vmem:[%s2708 + $0x62] sm:$0xff]
      %v3488 = vld [vmem:[%s2708 + $0x6a] sm:$0xff]
      %v3489 = vld [vmem:[%s2708 + $0x7a] sm:$0xff]
      %v3490 = vld [vmem:[%s2708 + $0x82] sm:$0xff]
      %v3491 = vld [vmem:[%s2708 + $0x92] sm:$0xff]
      %v3492 = vld [vmem:[%s2708 + $0x9a] sm:$0xff]
      %v3493 = vld [vmem:[%s2708 + $0xaa] sm:$0xff]
      %v3494 = vld [vmem:[%s2708 + $0xb2] sm:$0xff]
      %v3495 = vld [vmem:[%s2708 + $0xc2] sm:$0xff]
      %v3496 = vld [vmem:[%s2708 + $0xca] sm:$0xff]
      %v3497 = vld [vmem:[%s2708 + $0xda] sm:$0xff]
      %v3498 = vld [vmem:[%s2708 + $0xe2] sm:$0xff]
      %v3499 = vld [vmem:[%s2708 + $0xf2] sm:$0xff]
      %v3500 = vld [vmem:[%s2708 + $0xfa] sm:$0xff]
      %v3501 = vld [vmem:[%s2708 + $0x10a] sm:$0xff]
      %v3502 = vld [vmem:[%s2708 + $0x112] sm:$0xff]
      %v3503 = vld [vmem:[%s2708 + $0x122] sm:$0xff]
      %v3504 = vld [vmem:[%s2708 + $0x12a] sm:$0xff]
      %v3505 = vld [vmem:[%s2708 + $0x13a] sm:$0xff]
      %v3506 = vld [vmem:[%s2708 + $0x142] sm:$0xff]
      %v3507 = vld [vmem:[%s2708 + $0x152] sm:$0xff]
      %v3508 = vld [vmem:[%s2708 + $0x15a] sm:$0xff]
      %v3509 = vld [vmem:[%s2708 + $0x16a] sm:$0xff]
      %v3510 = vld [vmem:[%s2708 + $0x172] sm:$0xff]
      %v3512 = vsel %vm337, %v3479, 0
      %v3515 = vsel %vm337, %v3480, 0
      %v3518 = vsel %vm337, %v3481, 0
      %v3521 = vsel %vm337, %v3482, 0
      %v3524 = vsel %vm337, %v3483, 0
      %v3527 = vsel %vm337, %v3484, 0
      %v3530 = vsel %vm337, %v3485, 0
      %v3533 = vsel %vm337, %v3486, 0
      %v3536 = vsel %vm337, %v3487, 0
      %v3539 = vsel %vm337, %v3488, 0
      %v3542 = vsel %vm337, %v3489, 0
      %v3545 = vsel %vm337, %v3490, 0
      %v3548 = vsel %vm337, %v3491, 0
      %v3551 = vsel %vm337, %v3492, 0
      %v3554 = vsel %vm337, %v3493, 0
      %v3557 = vsel %vm337, %v3494, 0
      %v3560 = vsel %vm337, %v3495, 0
      %v3563 = vsel %vm337, %v3496, 0
      %v3566 = vsel %vm337, %v3497, 0
      %v3569 = vsel %vm337, %v3498, 0
      %v3572 = vsel %vm337, %v3499, 0
      %v3575 = vsel %vm337, %v3500, 0
      %v3578 = vsel %vm337, %v3501, 0
      %v3581 = vsel %vm337, %v3502, 0
      %v3584 = vsel %vm337, %v3503, 0
      %v3587 = vsel %vm337, %v3504, 0
      %v3590 = vsel %vm337, %v3505, 0
      %v3593 = vsel %vm337, %v3506, 0
      %v3596 = vsel %vm337, %v3507, 0
      %v3599 = vsel %vm337, %v3508, 0
      %v3602 = vsel %vm337, %v3509, 0
      %v3605 = vsel %vm337, %v3510, 0
      %3607 = vmatprep.subr.mxu0 0.0
      %3608 = vmatpush1.msra.mxu0 %v458
      %3609 = vmatprep.subr.mxu0 0.0
      %3610 = vmatpush1.msra.mxu0 %v459
      %3611 = vmatprep.subr.mxu0 0.0
      %3612 = vmatpush1.msra.mxu0 %v460
      %3613 = vmatprep.subr.mxu0 0.0
      %3614 = vmatpush1.msra.mxu0 %v461
      %3615 = vmatprep.subr.mxu0 0.0
      %3616 = vmatpush1.msra.mxu0 0.0
      %3617 = vmatprep.subr.mxu0 0.0
      %3618 = vmatpush1.msra.mxu0 0.0
      %3619 = vmatprep.subr.mxu0 0.0
      %3620 = vmatpush1.msra.mxu0 0.0
      %3621 = vmatprep.subr.mxu0 0.0
      %3622 = vmatpush1.msra.mxu0 0.0
      %3623 = vmatprep.subr.mxu0 0.0
      %3624 = vmatpush1.msra.mxu0 0.0
      %3625 = vmatprep.subr.mxu0 0.0
      %3626 = vmatpush1.msra.mxu0 0.0
      %3627 = vmatprep.subr.mxu0 0.0
      %3628 = vmatpush1.msra.mxu0 0.0
      %3629 = vmatprep.subr.mxu0 0.0
      %3630 = vmatpush1.msra.mxu0 0.0
      %3631 = vmatprep.subr.mxu0 0.0
      %3632 = vmatpush1.msra.mxu0 0.0
      %3633 = vmatprep.subr.mxu0 0.0
      %3634 = vmatpush1.msra.mxu0 0.0
      %3635 = vmatprep.subr.mxu0 0.0
      %3636 = vmatpush1.msra.mxu0 0.0
      %3637 = vmatprep.subr.mxu0 0.0
      %3638 = vmatpush1.msra.mxu0 0.0
      %3639 = vmatprep.subr.mxu0 0.0
      %3640 = vmatpush1.msra.mxu0 0.0
      %3641 = vmatprep.subr.mxu0 0.0
      %3642 = vmatpush1.msra.mxu0 0.0
      %3643 = vmatprep.subr.mxu0 0.0
      %3644 = vmatpush1.msra.mxu0 0.0
      %3645 = vmatprep.subr.mxu0 0.0
      %3646 = vmatpush1.msra.mxu0 0.0
      %3647 = vmatprep.subr.mxu0 0.0
      %3648 = vmatpush1.msra.mxu0 0.0
      %3649 = vmatprep.subr.mxu0 0.0
      %3650 = vmatpush1.msra.mxu0 0.0
      %3651 = vmatprep.subr.mxu0 0.0
      %3652 = vmatpush1.msra.mxu0 0.0
      %3653 = vmatprep.subr.mxu0 0.0
      %3654 = vmatpush1.msra.mxu0 0.0
      %3655 = vmatprep.subr.mxu0 0.0
      %3656 = vmatpush1.msra.mxu0 0.0
      %3657 = vmatprep.subr.mxu0 0.0
      %3658 = vmatpush1.msra.mxu0 0.0
      %3659 = vmatprep.subr.mxu0 0.0
      %3660 = vmatpush1.msra.mxu0 0.0
      %3661 = vmatprep.subr.mxu0 0.0
      %3662 = vmatpush1.msra.mxu0 0.0
      %3663 = vmatprep.subr.mxu0 0.0
      %3664 = vmatpush1.msra.mxu0 0.0
      %3665 = vmatprep.subr.mxu0 0.0
      %3666 = vmatpush1.msra.mxu0 0.0
      %3667 = vmatprep.subr.mxu0 0.0
      %3668 = vmatpush1.msra.mxu0 0.0
      %3669 = vmatprep.subr.mxu0 0.0
      %3670 = vmatpush1.msra.mxu0 0.0
      %3671 = vmatprep.mubr.f32.mxu0 0.0
      %3672 = vmatmul.mubr.f32.gmra.mrb[0].mxu0 %v3512
      %v3673 = vpop.f32.mrb[0].mxu0
      %v3674 = vadd.f32 0.0, %v3673
      %v3675 = vpop.f32.mrb[0].mxu0
      %3676 = vmatprep.mubr.f32.mxu0 0.0
      %3677 = vmatmul.mubr.f32.gmra.mrb[0].mxu0 %v3515
      %v3678 = vpop.f32.mrb[0].mxu0
      %v3679 = vadd.f32 0.0, %v3678
      %v3680 = vpop.f32.mrb[0].mxu0
      %3681 = vmatprep.mubr.f32.mxu0 0.0
      %3682 = vmatmul.mubr.f32.gmra.mrb[0].mxu0 %v3518
      %v3683 = vpop.f32.mrb[0].mxu0
      %v3684 = vadd.f32 0.0, %v3683
      %v3685 = vpop.f32.mrb[0].mxu0
      %3686 = vmatprep.mubr.f32.mxu0 0.0
      %3687 = vmatmul.mubr.f32.gmra.mrb[0].mxu0 %v3521
      %v3688 = vpop.f32.mrb[0].mxu0
      %v3689 = vadd.f32 0.0, %v3688
      %v3690 = vpop.f32.mrb[0].mxu0
      %3691 = vmatprep.mubr.f32.mxu0 0.0
      %3692 = vmatmul.mubr.f32.gmra.mrb[0].mxu0 %v3524
      %v3693 = vpop.f32.mrb[0].mxu0
      %v3694 = vadd.f32 0.0, %v3693
      %v3695 = vpop.f32.mrb[0].mxu0
      %3696 = vmatprep.mubr.f32.mxu0 0.0
      %3697 = vmatmul.mubr.f32.gmra.mrb[0].mxu0 %v3527
      %v3698 = vpop.f32.mrb[0].mxu0
      %v3699 = vadd.f32 0.0, %v3698
      %v3700 = vpop.f32.mrb[0].mxu0
      %3701 = vmatprep.mubr.f32.mxu0 0.0
      %3702 = vmatmul.mubr.f32.gmra.mrb[0].mxu0 %v3530
      %v3703 = vpop.f32.mrb[0].mxu0
      %v3704 = vadd.f32 0.0, %v3703
      %v3705 = vpop.f32.mrb[0].mxu0
      %3706 = vmatprep.mubr.f32.mxu0 0.0
      %3707 = vmatmul.mubr.f32.gmra.mrb[0].mxu0 %v3533
      %v3708 = vpop.f32.mrb[0].mxu0
      %v3709 = vadd.f32 0.0, %v3708
      %v3710 = vpop.f32.mrb[0].mxu0
      %3711 = vmatprep.mubr.f32.mxu0 0.0
      %3712 = vmatmul.mubr.f32.gmra.mrb[0].mxu0 %v3536
      %v3713 = vpop.f32.mrb[0].mxu0
      %v3714 = vadd.f32 0.0, %v3713
      %v3715 = vpop.f32.mrb[0].mxu0
      %3716 = vmatprep.mubr.f32.mxu0 0.0
      %3717 = vmatmul.mubr.f32.gmra.mrb[0].mxu0 %v3539
      %v3718 = vpop.f32.mrb[0].mxu0
      %v3719 = vadd.f32 0.0, %v3718
      %v3720 = vpop.f32.mrb[0].mxu0
      %3721 = vmatprep.mubr.f32.mxu0 0.0
      %3722 = vmatmul.mubr.f32.gmra.mrb[0].mxu0 %v3542
      %v3723 = vpop.f32.mrb[0].mxu0
      %v3724 = vadd.f32 0.0, %v3723
      %v3725 = vpop.f32.mrb[0].mxu0
      %3726 = vmatprep.mubr.f32.mxu0 0.0
      %3727 = vmatmul.mubr.f32.gmra.mrb[0].mxu0 %v3545
      %v3728 = vpop.f32.mrb[0].mxu0
      %v3729 = vadd.f32 0.0, %v3728
      %v3730 = vpop.f32.mrb[0].mxu0
      %3731 = vmatprep.mubr.f32.mxu0 0.0
      %3732 = vmatmul.mubr.f32.gmra.mrb[0].mxu0 %v3548
      %v3733 = vpop.f32.mrb[0].mxu0
      %v3734 = vadd.f32 0.0, %v3733
      %v3735 = vpop.f32.mrb[0].mxu0
      %3736 = vmatprep.mubr.f32.mxu0 0.0
      %3737 = vmatmul.mubr.f32.gmra.mrb[0].mxu0 %v3551
      %v3738 = vpop.f32.mrb[0].mxu0
      %v3739 = vadd.f32 0.0, %v3738
      %v3740 = vpop.f32.mrb[0].mxu0
      %3741 = vmatprep.mubr.f32.mxu0 0.0
      %3742 = vmatmul.mubr.f32.gmra.mrb[0].mxu0 %v3554
      %v3743 = vpop.f32.mrb[0].mxu0
      %v3744 = vadd.f32 0.0, %v3743
      %v3745 = vpop.f32.mrb[0].mxu0
      %3746 = vmatprep.mubr.f32.mxu0 0.0
      %3747 = vmatmul.mubr.f32.gmra.mrb[0].mxu0 %v3557
      %v3748 = vpop.f32.mrb[0].mxu0
      %v3749 = vadd.f32 0.0, %v3748
      %v3750 = vpop.f32.mrb[0].mxu0
      %3751 = vmatprep.mubr.f32.mxu0 0.0
      %3752 = vmatmul.mubr.f32.gmra.mrb[0].mxu0 %v3560
      %v3753 = vpop.f32.mrb[0].mxu0
      %v3754 = vadd.f32 0.0, %v3753
      %v3755 = vpop.f32.mrb[0].mxu0
      %3756 = vmatprep.mubr.f32.mxu0 0.0
      %3757 = vmatmul.mubr.f32.gmra.mrb[0].mxu0 %v3563
      %v3758 = vpop.f32.mrb[0].mxu0
      %v3759 = vadd.f32 0.0, %v3758
      %v3760 = vpop.f32.mrb[0].mxu0
      %3761 = vmatprep.mubr.f32.mxu0 0.0
      %3762 = vmatmul.mubr.f32.gmra.mrb[0].mxu0 %v3566
      %v3763 = vpop.f32.mrb[0].mxu0
      %v3764 = vadd.f32 0.0, %v3763
      %v3765 = vpop.f32.mrb[0].mxu0
      %3766 = vmatprep.mubr.f32.mxu0 0.0
      %3767 = vmatmul.mubr.f32.gmra.mrb[0].mxu0 %v3569
      %v3768 = vpop.f32.mrb[0].mxu0
      %v3769 = vadd.f32 0.0, %v3768
      %v3770 = vpop.f32.mrb[0].mxu0
      %3771 = vmatprep.mubr.f32.mxu0 0.0
      %3772 = vmatmul.mubr.f32.gmra.mrb[0].mxu0 %v3572
      %v3773 = vpop.f32.mrb[0].mxu0
      %v3774 = vadd.f32 0.0, %v3773
      %v3775 = vpop.f32.mrb[0].mxu0
      %3776 = vmatprep.mubr.f32.mxu0 0.0
      %3777 = vmatmul.mubr.f32.gmra.mrb[0].mxu0 %v3575
      %v3778 = vpop.f32.mrb[0].mxu0
      %v3779 = vadd.f32 0.0, %v3778
      %v3780 = vpop.f32.mrb[0].mxu0
      %3781 = vmatprep.mubr.f32.mxu0 0.0
      %3782 = vmatmul.mubr.f32.gmra.mrb[0].mxu0 %v3578
      %v3783 = vpop.f32.mrb[0].mxu0
      %v3784 = vadd.f32 0.0, %v3783
      %v3785 = vpop.f32.mrb[0].mxu0
      %3786 = vmatprep.mubr.f32.mxu0 0.0
      %3787 = vmatmul.mubr.f32.gmra.mrb[0].mxu0 %v3581
      %v3788 = vpop.f32.mrb[0].mxu0
      %v3789 = vadd.f32 0.0, %v3788
      %v3790 = vpop.f32.mrb[0].mxu0
      %3791 = vmatprep.mubr.f32.mxu0 0.0
      %3792 = vmatmul.mubr.f32.gmra.mrb[0].mxu0 %v3584
      %v3793 = vpop.f32.mrb[0].mxu0
      %v3794 = vadd.f32 0.0, %v3793
      %v3795 = vpop.f32.mrb[0].mxu0
      %3796 = vmatprep.mubr.f32.mxu0 0.0
      %3797 = vmatmul.mubr.f32.gmra.mrb[0].mxu0 %v3587
      %v3798 = vpop.f32.mrb[0].mxu0
      %v3799 = vadd.f32 0.0, %v3798
      %v3800 = vpop.f32.mrb[0].mxu0
      %3801 = vmatprep.mubr.f32.mxu0 0.0
      %3802 = vmatmul.mubr.f32.gmra.mrb[0].mxu0 %v3590
      %v3803 = vpop.f32.mrb[0].mxu0
      %v3804 = vadd.f32 0.0, %v3803
      %v3805 = vpop.f32.mrb[0].mxu0
      %3806 = vmatprep.mubr.f32.mxu0 0.0
      %3807 = vmatmul.mubr.f32.gmra.mrb[0].mxu0 %v3593
      %v3808 = vpop.f32.mrb[0].mxu0
      %v3809 = vadd.f32 0.0, %v3808
      %v3810 = vpop.f32.mrb[0].mxu0
      %3811 = vmatprep.mubr.f32.mxu0 0.0
      %3812 = vmatmul.mubr.f32.gmra.mrb[0].mxu0 %v3596
      %v3813 = vpop.f32.mrb[0].mxu0
      %v3814 = vadd.f32 0.0, %v3813
      %v3815 = vpop.f32.mrb[0].mxu0
      %3816 = vmatprep.mubr.f32.mxu0 0.0
      %3817 = vmatmul.mubr.f32.gmra.mrb[0].mxu0 %v3599
      %v3818 = vpop.f32.mrb[0].mxu0
      %v3819 = vadd.f32 0.0, %v3818
      %v3820 = vpop.f32.mrb[0].mxu0
      %3821 = vmatprep.mubr.f32.mxu0 0.0
      %3822 = vmatmul.mubr.f32.gmra.mrb[0].mxu0 %v3602
      %v3823 = vpop.f32.mrb[0].mxu0
      %v3824 = vadd.f32 0.0, %v3823
      %v3825 = vpop.f32.mrb[0].mxu0
      %3826 = vmatprep.mubr.f32.mxu0 0.0
      %3827 = vmatmul.mubr.f32.gmra.mrb[0].mxu0 %v3605
      %v3828 = vpop.f32.mrb[0].mxu0
      %v3829 = vadd.f32 0.0, %v3828
      %v3830 = vpop.f32.mrb[0].mxu0
      %3831 = vdwg.mxu0
      %v3832 = vadd.f32 %v3447, %v3674
      %v3833 = vadd.f32 %v3448, %v3679
      %v3834 = vadd.f32 %v3449, %v3684
      %v3835 = vadd.f32 %v3450, %v3689
      %v3836 = vadd.f32 %v3451, %v3694
      %v3837 = vadd.f32 %v3452, %v3699
      %v3838 = vadd.f32 %v3453, %v3704
      %v3839 = vadd.f32 %v3454, %v3709
      %v3840 = vadd.f32 %v3455, %v3714
      %v3841 = vadd.f32 %v3456, %v3719
      %v3842 = vadd.f32 %v3457, %v3724
      %v3843 = vadd.f32 %v3458, %v3729
      %v3844 = vadd.f32 %v3459, %v3734
      %v3845 = vadd.f32 %v3460, %v3739
      %v3846 = vadd.f32 %v3461, %v3744
      %v3847 = vadd.f32 %v3462, %v3749
      %v3848 = vadd.f32 %v3463, %v3754
      %v3849 = vadd.f32 %v3464, %v3759
      %v3850 = vadd.f32 %v3465, %v3764
      %v3851 = vadd.f32 %v3466, %v3769
      %v3852 = vadd.f32 %v3467, %v3774
      %v3853 = vadd.f32 %v3468, %v3779
      %v3854 = vadd.f32 %v3469, %v3784
      %v3855 = vadd.f32 %v3470, %v3789
      %v3856 = vadd.f32 %v3471, %v3794
      %v3857 = vadd.f32 %v3472, %v3799
      %v3858 = vadd.f32 %v3473, %v3804
      %v3859 = vadd.f32 %v3474, %v3809
      %v3860 = vadd.f32 %v3475, %v3814
      %v3861 = vadd.f32 %v3476, %v3819
      %v3862 = vadd.f32 %v3477, %v3824
      %v3863 = vadd.f32 %v3478, %v3829
      %v3864 = vld [vmem:[%s4] sm:$0x1]
      %v3866 = vlaneseq
      %v3867 = vshrl.u32 %v3866, 7
      %v3868 = vsub.s32 0, %v3867
      %v3869 = vrot.slane %v3864, %v3868
      %v3871 = vadd.f32 %v3832, %v3869
      %v3872 = vadd.f32 %v3833, %v3869
      %v3873 = vadd.f32 %v3834, %v3869
      %v3874 = vadd.f32 %v3835, %v3869
      %v3875 = vadd.f32 %v3836, %v3869
      %v3876 = vadd.f32 %v3837, %v3869
      %v3877 = vadd.f32 %v3838, %v3869
      %v3878 = vadd.f32 %v3839, %v3869
      %v3879 = vadd.f32 %v3840, %v3869
      %v3880 = vadd.f32 %v3841, %v3869
      %v3881 = vadd.f32 %v3842, %v3869
      %v3882 = vadd.f32 %v3843, %v3869
      %v3883 = vadd.f32 %v3844, %v3869
      %v3884 = vadd.f32 %v3845, %v3869
      %v3885 = vadd.f32 %v3846, %v3869
      %v3886 = vadd.f32 %v3847, %v3869
      %v3887 = vadd.f32 %v3848, %v3869
      %v3888 = vadd.f32 %v3849, %v3869
      %v3889 = vadd.f32 %v3850, %v3869
      %v3890 = vadd.f32 %v3851, %v3869
      %v3891 = vadd.f32 %v3852, %v3869
      %v3892 = vadd.f32 %v3853, %v3869
      %v3893 = vadd.f32 %v3854, %v3869
      %v3894 = vadd.f32 %v3855, %v3869
      %v3895 = vadd.f32 %v3856, %v3869
      %v3896 = vadd.f32 %v3857, %v3869
      %v3897 = vadd.f32 %v3858, %v3869
      %v3898 = vadd.f32 %v3859, %v3869
      %v3899 = vadd.f32 %v3860, %v3869
      %v3900 = vadd.f32 %v3861, %v3869
      %v3901 = vadd.f32 %v3862, %v3869
      %v3902 = vadd.f32 %v3863, %v3869
      %v3903 = vmul.f32 %v305, 0.5
      %v3904 = vmul.f32 %v306, 0.5
      %v3905 = vmul.f32 %v307, 0.5
      %v3906 = vmul.f32 %v308, 0.5
      %v3907 = vmul.f32 %v309, 0.5
      %v3908 = vmul.f32 %v310, 0.5
      %v3909 = vmul.f32 %v311, 0.5
      %v3910 = vmul.f32 %v312, 0.5
      %v3911 = vmul.f32 %v313, 0.5
      %v3912 = vmul.f32 %v314, 0.5
      %v3913 = vmul.f32 %v315, 0.5
      %v3914 = vmul.f32 %v316, 0.5
      %v3915 = vmul.f32 %v317, 0.5
      %v3916 = vmul.f32 %v318, 0.5
      %v3917 = vmul.f32 %v319, 0.5
      %v3918 = vmul.f32 %v320, 0.5
      %v3919 = vmul.f32 %v321, 0.5
      %v3920 = vmul.f32 %v322, 0.5
      %v3921 = vmul.f32 %v323, 0.5
      %v3922 = vmul.f32 %v324, 0.5
      %v3923 = vmul.f32 %v325, 0.5
      %v3924 = vmul.f32 %v326, 0.5
      %v3925 = vmul.f32 %v327, 0.5
      %v3926 = vmul.f32 %v328, 0.5
      %v3927 = vmul.f32 %v329, 0.5
      %v3928 = vmul.f32 %v330, 0.5
      %v3929 = vmul.f32 %v331, 0.5
      %v3930 = vmul.f32 %v332, 0.5
      %v3931 = vmul.f32 %v333, 0.5
      %v3932 = vmul.f32 %v334, 0.5
      %v3933 = vmul.f32 %v335, 0.5
      %v3934 = vmul.f32 %v336, 0.5
      %v3935 = vmul.f32 %v3871, 0.5
      %v3936 = vmul.f32 %v3872, 0.5
      %v3937 = vmul.f32 %v3873, 0.5
      %v3938 = vmul.f32 %v3874, 0.5
      %v3939 = vmul.f32 %v3875, 0.5
      %v3940 = vmul.f32 %v3876, 0.5
      %v3941 = vmul.f32 %v3877, 0.5
      %v3942 = vmul.f32 %v3878, 0.5
      %v3943 = vmul.f32 %v3879, 0.5
      %v3944 = vmul.f32 %v3880, 0.5
      %v3945 = vmul.f32 %v3881, 0.5
      %v3946 = vmul.f32 %v3882, 0.5
      %v3947 = vmul.f32 %v3883, 0.5
      %v3948 = vmul.f32 %v3884, 0.5
      %v3949 = vmul.f32 %v3885, 0.5
      %v3950 = vmul.f32 %v3886, 0.5
      %v3951 = vmul.f32 %v3887, 0.5
      %v3952 = vmul.f32 %v3888, 0.5
      %v3953 = vmul.f32 %v3889, 0.5
      %v3954 = vmul.f32 %v3890, 0.5
      %v3955 = vmul.f32 %v3891, 0.5
      %v3956 = vmul.f32 %v3892, 0.5
      %v3957 = vmul.f32 %v3893, 0.5
      %v3958 = vmul.f32 %v3894, 0.5
      %v3959 = vmul.f32 %v3895, 0.5
      %v3960 = vmul.f32 %v3896, 0.5
      %v3961 = vmul.f32 %v3897, 0.5
      %v3962 = vmul.f32 %v3898, 0.5
      %v3963 = vmul.f32 %v3899, 0.5
      %v3964 = vmul.f32 %v3900, 0.5
      %v3965 = vmul.f32 %v3901, 0.5
      %v3966 = vmul.f32 %v3902, 0.5
      %v3967 = vadd.f32 %v3903, %v3935
      %v3968 = vadd.f32 %v3904, %v3936
      %v3969 = vadd.f32 %v3905, %v3937
      %v3970 = vadd.f32 %v3906, %v3938
      %v3971 = vadd.f32 %v3907, %v3939
      %v3972 = vadd.f32 %v3908, %v3940
      %v3973 = vadd.f32 %v3909, %v3941
      %v3974 = vadd.f32 %v3910, %v3942
      %v3975 = vadd.f32 %v3911, %v3943
      %v3976 = vadd.f32 %v3912, %v3944
      %v3977 = vadd.f32 %v3913, %v3945
      %v3978 = vadd.f32 %v3914, %v3946
      %v3979 = vadd.f32 %v3915, %v3947
      %v3980 = vadd.f32 %v3916, %v3948
      %v3981 = vadd.f32 %v3917, %v3949
      %v3982 = vadd.f32 %v3918, %v3950
      %v3983 = vadd.f32 %v3919, %v3951
      %v3984 = vadd.f32 %v3920, %v3952
      %v3985 = vadd.f32 %v3921, %v3953
      %v3986 = vadd.f32 %v3922, %v3954
      %v3987 = vadd.f32 %v3923, %v3955
      %v3988 = vadd.f32 %v3924, %v3956
      %v3989 = vadd.f32 %v3925, %v3957
      %v3990 = vadd.f32 %v3926, %v3958
      %v3991 = vadd.f32 %v3927, %v3959
      %v3992 = vadd.f32 %v3928, %v3960
      %v3993 = vadd.f32 %v3929, %v3961
      %v3994 = vadd.f32 %v3930, %v3962
      %v3995 = vadd.f32 %v3931, %v3963
      %v3996 = vadd.f32 %v3932, %v3964
      %v3997 = vadd.f32 %v3933, %v3965
      %v3998 = vadd.f32 %v3934, %v3966
      %v3999 = vld [vmem:[%s294] sm:$0xff]
      %v4000 = vld [vmem:[%s294 + $0x8] sm:$0xff]
      %v4001 = vld [vmem:[%s294 + $0x10] sm:$0xff]
      %v4002 = vld [vmem:[%s294 + $0x18] sm:$0xff]
      %v4003 = vld [vmem:[%s294 + $0x20] sm:$0xff]
      %v4004 = vld [vmem:[%s294 + $0x28] sm:$0xff]
      %v4005 = vld [vmem:[%s294 + $0x30] sm:$0xff]
      %v4006 = vld [vmem:[%s294 + $0x38] sm:$0xff]
      %v4007 = vld [vmem:[%s294 + $0x40] sm:$0xff]
      %v4008 = vld [vmem:[%s294 + $0x48] sm:$0xff]
      %v4009 = vld [vmem:[%s294 + $0x50] sm:$0xff]
      %v4010 = vld [vmem:[%s294 + $0x58] sm:$0xff]
      %v4011 = vld [vmem:[%s294 + $0x60] sm:$0xff]
      %v4012 = vld [vmem:[%s294 + $0x68] sm:$0xff]
      %v4013 = vld [vmem:[%s294 + $0x70] sm:$0xff]
      %v4014 = vld [vmem:[%s294 + $0x78] sm:$0xff]
      %v4015 = vld [vmem:[%s294 + $0x80] sm:$0xff]
      %v4016 = vld [vmem:[%s294 + $0x88] sm:$0xff]
      %v4017 = vld [vmem:[%s294 + $0x90] sm:$0xff]
      %v4018 = vld [vmem:[%s294 + $0x98] sm:$0xff]
      %v4019 = vld [vmem:[%s294 + $0xa0] sm:$0xff]
      %v4020 = vld [vmem:[%s294 + $0xa8] sm:$0xff]
      %v4021 = vld [vmem:[%s294 + $0xb0] sm:$0xff]
      %v4022 = vld [vmem:[%s294 + $0xb8] sm:$0xff]
      %v4023 = vld [vmem:[%s294 + $0xc0] sm:$0xff]
      %v4024 = vld [vmem:[%s294 + $0xc8] sm:$0xff]
      %v4025 = vld [vmem:[%s294 + $0xd0] sm:$0xff]
      %v4026 = vld [vmem:[%s294 + $0xd8] sm:$0xff]
      %v4027 = vld [vmem:[%s294 + $0xe0] sm:$0xff]
      %v4028 = vld [vmem:[%s294 + $0xe8] sm:$0xff]
      %v4029 = vld [vmem:[%s294 + $0xf0] sm:$0xff]
      %v4030 = vld [vmem:[%s294 + $0xf8] sm:$0xff]
      %v4031 = vadd.f32 %v3999, %v3967
      %v4032 = vadd.f32 %v4000, %v3968
      %v4033 = vadd.f32 %v4001, %v3969
      %v4034 = vadd.f32 %v4002, %v3970
      %v4035 = vadd.f32 %v4003, %v3971
      %v4036 = vadd.f32 %v4004, %v3972
      %v4037 = vadd.f32 %v4005, %v3973
      %v4038 = vadd.f32 %v4006, %v3974
      %v4039 = vadd.f32 %v4007, %v3975
      %v4040 = vadd.f32 %v4008, %v3976
      %v4041 = vadd.f32 %v4009, %v3977
      %v4042 = vadd.f32 %v4010, %v3978
      %v4043 = vadd.f32 %v4011, %v3979
      %v4044 = vadd.f32 %v4012, %v3980
      %v4045 = vadd.f32 %v4013, %v3981
      %v4046 = vadd.f32 %v4014, %v3982
      %v4047 = vadd.f32 %v4015, %v3983
      %v4048 = vadd.f32 %v4016, %v3984
      %v4049 = vadd.f32 %v4017, %v3985
      %v4050 = vadd.f32 %v4018, %v3986
      %v4051 = vadd.f32 %v4019, %v3987
      %v4052 = vadd.f32 %v4020, %v3988
      %v4053 = vadd.f32 %v4021, %v3989
      %v4054 = vadd.f32 %v4022, %v3990
      %v4055 = vadd.f32 %v4023, %v3991
      %v4056 = vadd.f32 %v4024, %v3992
      %v4057 = vadd.f32 %v4025, %v3993
      %v4058 = vadd.f32 %v4026, %v3994
      %v4059 = vadd.f32 %v4027, %v3995
      %v4060 = vadd.f32 %v4028, %v3996
      %v4061 = vadd.f32 %v4029, %v3997
      %v4062 = vadd.f32 %v4030, %v3998
      %v4063 = vld [vmem:[%s289] sm:$0xff]
      %v4064 = vld [vmem:[%s289 + $0x8] sm:$0xff]
      %v4065 = vld [vmem:[%s289 + $0x10] sm:$0xff]
      %v4066 = vld [vmem:[%s289 + $0x18] sm:$0xff]
      %v4067 = vld [vmem:[%s289 + $0x20] sm:$0xff]
      %v4068 = vld [vmem:[%s289 + $0x28] sm:$0xff]
      %v4069 = vld [vmem:[%s289 + $0x30] sm:$0xff]
      %v4070 = vld [vmem:[%s289 + $0x38] sm:$0xff]
      %v4071 = vld [vmem:[%s289 + $0x40] sm:$0xff]
      %v4072 = vld [vmem:[%s289 + $0x48] sm:$0xff]
      %v4073 = vld [vmem:[%s289 + $0x50] sm:$0xff]
      %v4074 = vld [vmem:[%s289 + $0x58] sm:$0xff]
      %v4075 = vld [vmem:[%s289 + $0x60] sm:$0xff]
      %v4076 = vld [vmem:[%s289 + $0x68] sm:$0xff]
      %v4077 = vld [vmem:[%s289 + $0x70] sm:$0xff]
      %v4078 = vld [vmem:[%s289 + $0x78] sm:$0xff]
      %v4079 = vld [vmem:[%s289 + $0x80] sm:$0xff]
      %v4080 = vld [vmem:[%s289 + $0x88] sm:$0xff]
      %v4081 = vld [vmem:[%s289 + $0x90] sm:$0xff]
      %v4082 = vld [vmem:[%s289 + $0x98] sm:$0xff]
      %v4083 = vld [vmem:[%s289 + $0xa0] sm:$0xff]
      %v4084 = vld [vmem:[%s289 + $0xa8] sm:$0xff]
      %v4085 = vld [vmem:[%s289 + $0xb0] sm:$0xff]
      %v4086 = vld [vmem:[%s289 + $0xb8] sm:$0xff]
      %v4087 = vld [vmem:[%s289 + $0xc0] sm:$0xff]
      %v4088 = vld [vmem:[%s289 + $0xc8] sm:$0xff]
      %v4089 = vld [vmem:[%s289 + $0xd0] sm:$0xff]
      %v4090 = vld [vmem:[%s289 + $0xd8] sm:$0xff]
      %v4091 = vld [vmem:[%s289 + $0xe0] sm:$0xff]
      %v4092 = vld [vmem:[%s289 + $0xe8] sm:$0xff]
      %v4093 = vld [vmem:[%s289 + $0xf0] sm:$0xff]
      %v4094 = vld [vmem:[%s289 + $0xf8] sm:$0xff]
      %v4095 = vsub.f32 %v4063, %v3967
      %v4096 = vsub.f32 %v4064, %v3968
      %v4097 = vsub.f32 %v4065, %v3969
      %v4098 = vsub.f32 %v4066, %v3970
      %v4099 = vsub.f32 %v4067, %v3971
      %v4100 = vsub.f32 %v4068, %v3972
      %v4101 = vsub.f32 %v4069, %v3973
      %v4102 = vsub.f32 %v4070, %v3974
      %v4103 = vsub.f32 %v4071, %v3975
      %v4104 = vsub.f32 %v4072, %v3976
      %v4105 = vsub.f32 %v4073, %v3977
      %v4106 = vsub.f32 %v4074, %v3978
      %v4107 = vsub.f32 %v4075, %v3979
      %v4108 = vsub.f32 %v4076, %v3980
      %v4109 = vsub.f32 %v4077, %v3981
      %v4110 = vsub.f32 %v4078, %v3982
      %v4111 = vsub.f32 %v4079, %v3983
      %v4112 = vsub.f32 %v4080, %v3984
      %v4113 = vsub.f32 %v4081, %v3985
      %v4114 = vsub.f32 %v4082, %v3986
      %v4115 = vsub.f32 %v4083, %v3987
      %v4116 = vsub.f32 %v4084, %v3988
      %v4117 = vsub.f32 %v4085, %v3989
      %v4118 = vsub.f32 %v4086, %v3990
      %v4119 = vsub.f32 %v4087, %v3991
      %v4120 = vsub.f32 %v4088, %v3992
      %v4121 = vsub.f32 %v4089, %v3993
      %v4122 = vsub.f32 %v4090, %v3994
      %v4123 = vsub.f32 %v4091, %v3995
      %v4124 = vsub.f32 %v4092, %v3996
      %v4125 = vsub.f32 %v4093, %v3997
      %v4126 = vsub.f32 %v4094, %v3998
      %4127 = vst.msk [vmem:[%s299] sm:$0xff] %vm337, %v4031
      %4128 = vst.msk [vmem:[%s299 + $0x8] sm:$0xff] %vm337, %v4032
      %4129 = vst.msk [vmem:[%s299 + $0x10] sm:$0xff] %vm337, %v4033
      %4130 = vst.msk [vmem:[%s299 + $0x18] sm:$0xff] %vm337, %v4034
      %4131 = vst.msk [vmem:[%s299 + $0x20] sm:$0xff] %vm337, %v4035
      %4132 = vst.msk [vmem:[%s299 + $0x28] sm:$0xff] %vm337, %v4036
      %4133 = vst.msk [vmem:[%s299 + $0x30] sm:$0xff] %vm337, %v4037
      %4134 = vst.msk [vmem:[%s299 + $0x38] sm:$0xff] %vm337, %v4038
      %4135 = vst.msk [vmem:[%s299 + $0x40] sm:$0xff] %vm337, %v4039
      %4136 = vst.msk [vmem:[%s299 + $0x48] sm:$0xff] %vm337, %v4040
      %4137 = vst.msk [vmem:[%s299 + $0x50] sm:$0xff] %vm337, %v4041
      %4138 = vst.msk [vmem:[%s299 + $0x58] sm:$0xff] %vm337, %v4042
      %4139 = vst.msk [vmem:[%s299 + $0x60] sm:$0xff] %vm337, %v4043
      %4140 = vst.msk [vmem:[%s299 + $0x68] sm:$0xff] %vm337, %v4044
      %4141 = vst.msk [vmem:[%s299 + $0x70] sm:$0xff] %vm337, %v4045
      %4142 = vst.msk [vmem:[%s299 + $0x78] sm:$0xff] %vm337, %v4046
      %4143 = vst.msk [vmem:[%s299 + $0x80] sm:$0xff] %vm337, %v4047
      %4144 = vst.msk [vmem:[%s299 + $0x88] sm:$0xff] %vm337, %v4048
      %4145 = vst.msk [vmem:[%s299 + $0x90] sm:$0xff] %vm337, %v4049
      %4146 = vst.msk [vmem:[%s299 + $0x98] sm:$0xff] %vm337, %v4050
      %4147 = vst.msk [vmem:[%s299 + $0xa0] sm:$0xff] %vm337, %v4051
      %4148 = vst.msk [vmem:[%s299 + $0xa8] sm:$0xff] %vm337, %v4052
      %4149 = vst.msk [vmem:[%s299 + $0xb0] sm:$0xff] %vm337, %v4053
      %4150 = vst.msk [vmem:[%s299 + $0xb8] sm:$0xff] %vm337, %v4054
      %4151 = vst.msk [vmem:[%s299 + $0xc0] sm:$0xff] %vm337, %v4055
      %4152 = vst.msk [vmem:[%s299 + $0xc8] sm:$0xff] %vm337, %v4056
      %4153 = vst.msk [vmem:[%s299 + $0xd0] sm:$0xff] %vm337, %v4057
      %4154 = vst.msk [vmem:[%s299 + $0xd8] sm:$0xff] %vm337, %v4058
      %4155 = vst.msk [vmem:[%s299 + $0xe0] sm:$0xff] %vm337, %v4059
      %4156 = vst.msk [vmem:[%s299 + $0xe8] sm:$0xff] %vm337, %v4060
      %4157 = vst.msk [vmem:[%s299 + $0xf0] sm:$0xff] %vm337, %v4061
      %4158 = vst.msk [vmem:[%s299 + $0xf8] sm:$0xff] %vm337, %v4062
      %4159 = vst.msk [vmem:[%s304] sm:$0xff] %vm337, %v4095
      %4160 = vst.msk [vmem:[%s304 + $0x8] sm:$0xff] %vm337, %v4096
      %4161 = vst.msk [vmem:[%s304 + $0x10] sm:$0xff] %vm337, %v4097
      %4162 = vst.msk [vmem:[%s304 + $0x18] sm:$0xff] %vm337, %v4098
      %4163 = vst.msk [vmem:[%s304 + $0x20] sm:$0xff] %vm337, %v4099
      %4164 = vst.msk [vmem:[%s304 + $0x28] sm:$0xff] %vm337, %v4100
      %4165 = vst.msk [vmem:[%s304 + $0x30] sm:$0xff] %vm337, %v4101
      %4166 = vst.msk [vmem:[%s304 + $0x38] sm:$0xff] %vm337, %v4102
      %4167 = vst.msk [vmem:[%s304 + $0x40] sm:$0xff] %vm337, %v4103
      %4168 = vst.msk [vmem:[%s304 + $0x48] sm:$0xff] %vm337, %v4104
      %4169 = vst.msk [vmem:[%s304 + $0x50] sm:$0xff] %vm337, %v4105
      %4170 = vst.msk [vmem:[%s304 + $0x58] sm:$0xff] %vm337, %v4106
      %4171 = vst.msk [vmem:[%s304 + $0x60] sm:$0xff] %vm337, %v4107
      %4172 = vst.msk [vmem:[%s304 + $0x68] sm:$0xff] %vm337, %v4108
      %4173 = vst.msk [vmem:[%s304 + $0x70] sm:$0xff] %vm337, %v4109
      %4174 = vst.msk [vmem:[%s304 + $0x78] sm:$0xff] %vm337, %v4110
      %4175 = vst.msk [vmem:[%s304 + $0x80] sm:$0xff] %vm337, %v4111
      %4176 = vst.msk [vmem:[%s304 + $0x88] sm:$0xff] %vm337, %v4112
      %4177 = vst.msk [vmem:[%s304 + $0x90] sm:$0xff] %vm337, %v4113
      %4178 = vst.msk [vmem:[%s304 + $0x98] sm:$0xff] %vm337, %v4114
      %4179 = vst.msk [vmem:[%s304 + $0xa0] sm:$0xff] %vm337, %v4115
      %4180 = vst.msk [vmem:[%s304 + $0xa8] sm:$0xff] %vm337, %v4116
      %4181 = vst.msk [vmem:[%s304 + $0xb0] sm:$0xff] %vm337, %v4117
      %4182 = vst.msk [vmem:[%s304 + $0xb8] sm:$0xff] %vm337, %v4118
      %4183 = vst.msk [vmem:[%s304 + $0xc0] sm:$0xff] %vm337, %v4119
      %4184 = vst.msk [vmem:[%s304 + $0xc8] sm:$0xff] %vm337, %v4120
      %4185 = vst.msk [vmem:[%s304 + $0xd0] sm:$0xff] %vm337, %v4121
      %4186 = vst.msk [vmem:[%s304 + $0xd8] sm:$0xff] %vm337, %v4122
      %4187 = vst.msk [vmem:[%s304 + $0xe0] sm:$0xff] %vm337, %v4123
      %4188 = vst.msk [vmem:[%s304 + $0xe8] sm:$0xff] %vm337, %v4124
      %4189 = vst.msk [vmem:[%s304 + $0xf0] sm:$0xff] %vm337, %v4125
      %4190 = vst.msk [vmem:[%s304 + $0xf8] sm:$0xff] %vm337, %v4126
      %p4191 = scmp.lt.s32.totalorder %s18, 1
      %s4192 = scalar_select %p4191, %s18, 1
      %s4193 = smul.addr %s4192, 32
      %s4194 = smul.addr %s4193, 8
      %s4195 = scalar_lea.vmem %s5, %s4194
      %p4196 = scmp.lt.s32.totalorder %s18, 1
      %s4197 = scalar_select %p4196, %s18, 1
      %s4198 = smul.addr %s4197, 32
      %s4199 = smul.addr %s4198, 8
      %s4200 = scalar_lea.vmem %s6, %s4199
      // Predicated region
      $region41: #{msvq_forward.7} parent=39 // pred_check
        %p4201 = pneg %p156
      $region42: #{msvq_forward.7} parent=39 // pred_check_branch
        %4203 = sbr.rel (%p4201) target = $region44
      $region43: #{msvq_forward.7} parent=39 // pred_region
        _
      $region44: #{msvq_forward.7} parent=39 // pred_fallthru
        _
      // Predicated region
      $region45: #{msvq_forward.7} parent=39 // pred_check
        %p4204 = pneg %p182
      $region46: #{msvq_forward.7} parent=39 // pred_check_branch
        %4206 = sbr.rel (%p4204) target = $region48
      $region47: #{msvq_forward.7} parent=39 // pred_region
        _
      $region48: #{msvq_forward.7} parent=39 // pred_fallthru
        _
    $region40: #{msvq_forward.7} parent=5 // pred_fallthru
      _
    %p4207 = scmp.le.s32.totalorder 2, %s13
    // Predicated region
    $region49: #{msvq_forward.7} parent=5 // pred_check
      %p4208 = pneg %p4207
    $region50: #{msvq_forward.7} parent=5 // pred_check_branch
      %4210 = sbr.rel (%p4208) target = $region52
    $region51: #{msvq_forward.7} parent=5 // pred_region
      %s4211 = ssub.s32 %s13, 2
      // Predicated region
      $region53: #{msvq_forward.7} parent=51 // pred_check
        %p4212 = pneg %p162
      $region54: #{msvq_forward.7} parent=51 // pred_check_branch
        %4214 = sbr.rel (%p4212) target = $region56
      $region55: #{msvq_forward.7} parent=51 // pred_region
        %p4215 = scmp.lt.s32.totalorder %s19, 1
        %s4216 = scalar_select %p4215, %s19, 1
        %s4217 = smul.addr %s4216, 32
        %s4218 = smul.addr %s4217, 8
        %s4219 = scalar_lea.vmem %s5, %s4218
      $region56: #{msvq_forward.7} parent=51 // pred_fallthru
        _
      // Predicated region
      $region57: #{msvq_forward.7} parent=51 // pred_check
        %p4220 = pneg %p188
      $region58: #{msvq_forward.7} parent=51 // pred_check_branch
        %4222 = sbr.rel (%p4220) target = $region60
      $region59: #{msvq_forward.7} parent=51 // pred_region
        %p4223 = scmp.lt.s32.totalorder %s19, 1
        %s4224 = scalar_select %p4223, %s19, 1
        %s4225 = smul.addr %s4224, 32
        %s4226 = smul.addr %s4225, 8
        %s4227 = scalar_lea.vmem %s6, %s4226
      $region60: #{msvq_forward.7} parent=51 // pred_fallthru
        _
    $region52: #{msvq_forward.7} parent=5 // pred_fallthru
      _
  $region6: #{msvq_forward.7} parent=0 // loop_footer
    %s17 = sadd.s32 1, %s13
  $region7: #{msvq_forward.7} parent=0 // loop_footer_branch
    %12 = sbr.rel target = $region3
  $region8: #{msvq_forward.7} parent=0 // loop_exit
    _

</llo_original>
